<compile_context>
chip_gen: v6e
topology: v6e:2x2x1
jax: 0.10.0
libtpu: 0.0.40
codegen_flags: <defaults>
</compile_context>

<pallas_src>
import functools
import math

import jax
import jax.numpy as jnp
from jax.experimental import pallas as pl
from jax.experimental.pallas import tpu as pltpu


# ----------------------------------------------------------------------------
# Tiling helper
# ----------------------------------------------------------------------------
def _pick_tile(dim, target, granule):
    """Largest tile <= target that divides dim (granule-aligned), else the full dim."""
    if dim <= target:
        return dim
    t = target
    while t > granule and dim % t:
        t //= 2
    return t if dim % t == 0 else dim


# ----------------------------------------------------------------------------
# Pallas kernels
# ----------------------------------------------------------------------------
def _tap_conv_kernel(x_ref, w_ref, b_ref, o_ref, *, n_taps, relu):
    # x_ref: (T, tm, Cin) bf16, w_ref: (T, Cin, Cout) bf16, b_ref: (1, Cout) f32.
    acc = jnp.dot(x_ref[0], w_ref[0], preferred_element_type=jnp.float32)
    for t in range(1, n_taps):
        acc = acc + jnp.dot(x_ref[t], w_ref[t], preferred_element_type=jnp.float32)
    acc = acc + b_ref[...]
    if relu:
        acc = jnp.maximum(acc, 0.0)
    o_ref[...] = acc.astype(o_ref.dtype)


def tap_conv(taps, w_stack, bias, *, relu=True, out_dtype=jnp.bfloat16,
             target_tile_m=256):
    """taps: (T, M, Cin) bf16; w_stack: (T, Cin, Cout) bf16; bias: (1, Cout) f32."""
    T, M, Cin = taps.shape
    Cout = w_stack.shape[-1]
    tm = _pick_tile(M, target_tile_m, 8)
    grid = (M // tm,)
    return pl.pallas_call(
        functools.partial(_tap_conv_kernel, n_taps=T, relu=relu),
        out_shape=jax.ShapeDtypeStruct((M, Cout), out_dtype),
        grid=grid,
        in_specs=[
            pl.BlockSpec((T, tm, Cin), lambda m: (0, m, 0)),
            pl.BlockSpec((T, Cin, Cout), lambda m: (0, 0, 0)),
            pl.BlockSpec((1, Cout), lambda m: (0, 0)),
        ],
        out_specs=pl.BlockSpec((tm, Cout), lambda m: (m, 0)),
        compiler_params=pltpu.CompilerParams(dimension_semantics=("parallel",)),
    )(taps, w_stack, bias)


def _gemm_kernel(x_ref, w_ref, b_ref, o_ref, acc_ref, *, relu):
    @pl.when(pl.program_id(2) == 0)
    def _():
        acc_ref[...] = jnp.zeros_like(acc_ref)

    acc_ref[...] += jnp.dot(x_ref[...], w_ref[...],
                            preferred_element_type=jnp.float32)

    @pl.when(pl.program_id(2) == pl.num_programs(2) - 1)
    def _():
        y = acc_ref[...] + b_ref[...]
        if relu:
            y = jnp.maximum(y, 0.0)
        o_ref[...] = y.astype(o_ref.dtype)


def gemm_bias_act(x, w, bias, *, relu, out_dtype,
                  tm_target=256, tn_target=256, tk_target=512):
    """x: (M, K) bf16, w: (K, N) bf16, bias: (1, N) or (N,) f32 -> (M, N)."""
    M, K = x.shape
    N = w.shape[1]
    b2 = bias.reshape(1, N).astype(jnp.float32)
    tm = _pick_tile(M, tm_target, 8)
    tn = _pick_tile(N, tn_target, 128)
    tk = _pick_tile(K, tk_target, 128)
    grid = (M // tm, N // tn, K // tk)
    return pl.pallas_call(
        functools.partial(_gemm_kernel, relu=relu),
        out_shape=jax.ShapeDtypeStruct((M, N), out_dtype),
        grid=grid,
        in_specs=[
            pl.BlockSpec((tm, tk), lambda i, j, k: (i, k)),
            pl.BlockSpec((tk, tn), lambda i, j, k: (k, j)),
            pl.BlockSpec((1, tn), lambda i, j, k: (0, j)),
        ],
        out_specs=pl.BlockSpec((tm, tn), lambda i, j, k: (i, j)),
        scratch_shapes=[pltpu.VMEM((tm, tn), jnp.float32)],
        compiler_params=pltpu.CompilerParams(
            dimension_semantics=("parallel", "parallel", "arbitrary")),
    )(x, w, b2)


# ----------------------------------------------------------------------------
# JAX glue: shifted-tap construction (no im2col concat of a giant K axis)
# ----------------------------------------------------------------------------
def _make_taps(x_nhwc, ksize, stride, pad, out_h, out_w):
    n, _, _, c = x_nhwc.shape
    xp = jnp.pad(x_nhwc, ((0, 0), (pad, pad), (pad, pad), (0, 0)))
    taps = []
    for u in range(ksize):
        for v in range(ksize):
            t = xp[:, u:u + stride * (out_h - 1) + 1:stride,
                      v:v + stride * (out_w - 1) + 1:stride, :]
            taps.append(t.reshape(n * out_h * out_w, c))
    return jnp.stack(taps, axis=0)  # (ksize*ksize, M, C)


# ----------------------------------------------------------------------------
# Deterministic raw parameter init (PyTorch layout: Xavier weights, default biases)
# ----------------------------------------------------------------------------
def _xavier_uniform(key, shape, fan_in, fan_out):
    bound = math.sqrt(6.0 / (fan_in + fan_out))
    return jax.random.uniform(key, shape, jnp.float32, -bound, bound)


def _bias_init(key, shape, fan_in):
    bound = 1.0 / math.sqrt(fan_in)
    return jax.random.uniform(key, shape, jnp.float32, -bound, bound)


def init_params(key, input_shape, outputs_count):
    c_in, h, w = input_shape
    fc_inputs = 128 * (w // 16) * (h // 16)
    keys = jax.random.split(key, 16)
    p = {}
    conv_cfg = [(c_in, 64), (64, 64), (64, 128), (128, 128)]
    for i, (ci, co) in enumerate(conv_cfg):
        p[f"conv{i}_w"] = _xavier_uniform(keys[2 * i], (co, ci, 3, 3), ci * 9, co * 9)
        p[f"conv{i}_b"] = _bias_init(keys[2 * i + 1], (co,), ci * 9)
    p["val0_w"] = _xavier_uniform(keys[8], (512, fc_inputs), fc_inputs, 512)
    p["val0_b"] = _bias_init(keys[9], (512,), fc_inputs)
    p["val1_w"] = _xavier_uniform(keys[10], (1, 512), 512, 1)
    p["val1_b"] = _bias_init(keys[11], (1,), 512)
    p["pol0_w"] = _xavier_uniform(keys[12], (512, fc_inputs), fc_inputs, 512)
    p["pol0_b"] = _bias_init(keys[13], (512,), fc_inputs)
    p["pol1_w"] = _xavier_uniform(keys[14], (outputs_count, 512), 512, outputs_count)
    p["pol1_b"] = _bias_init(keys[15], (outputs_count,), 512)
    return p


# ----------------------------------------------------------------------------
# One-time weight preparation (layout, pool folding, head fusion, bf16 cast)
# ----------------------------------------------------------------------------
def prepare_params(raw, input_shape, outputs_count):
    _, H, W = input_shape
    hf, wf = H // 16, W // 16            # spatial size after both pools (torch view)
    h8, w8 = H // 8, W // 8              # spatial size fed to the heads here
    bf16 = jnp.bfloat16
    p = {}

    def khwc(wt):  # torch (co, ci, kh, kw) -> (kh, kw, ci, co)
        return jnp.transpose(wt, (2, 3, 1, 0))

    # conv1..conv3: plain 3x3 convs -> (9, Cin, Cout) tap-stacked weights.
    for i, name in enumerate(["c1", "c2", "c3"]):
        wk = khwc(raw[f"conv{i}_w"])
        p[f"{name}_w"] = wk.reshape(9, wk.shape[2], wk.shape[3]).astype(bf16)
        p[f"{name}_b"] = raw[f"conv{i}_b"].reshape(1, -1).astype(jnp.float32)

    # conv4 with the preceding AvgPool2d(2,2) folded in:
    # avgpool -> conv3x3(s1,p1)  ==  conv6x6(s2,p2) with NN-upsampled weight / 4 (exact).
    w4 = khwc(raw["conv3_w"])
    w4 = jnp.repeat(jnp.repeat(w4, 2, axis=0), 2, axis=1) * 0.25
    p["c4_w"] = w4.reshape(36, w4.shape[2], w4.shape[3]).astype(bf16)
    p["c4_b"] = raw["conv3_b"].reshape(1, -1).astype(jnp.float32)

    # Head layer 1: fold the trailing AvgPool2d into the fc weights (2x2 replication /4),
    # permute columns from NCHW-flatten to NHWC-flatten order, fuse value+policy (N=1024).
    def fc_weight(wt):  # (512, 128*hf*wf), NCHW-flatten columns
        o = wt.shape[0]
        w = wt.reshape(o, 128, hf, wf)
        w = jnp.repeat(jnp.repeat(w, 2, axis=2), 2, axis=3) * 0.25
        return jnp.transpose(w, (0, 2, 3, 1)).reshape(o, h8 * w8 * 128)

    w1 = jnp.concatenate([fc_weight(raw["val0_w"]), fc_weight(raw["pol0_w"])], axis=0)
    p["h1_w"] = jnp.transpose(w1).astype(bf16)                      # (128*h8*w8, 1024)
    p["h1_b"] = jnp.concatenate([raw["val0_b"], raw["pol0_b"]]).reshape(1, -1)

    # Head layer 2: block-diagonal fused (value | policy), padded to lane-dense N=128.
    n_out = 1 + outputs_count
    n_pad = max(128, ((n_out + 127) // 128) * 128)
    w2 = jnp.zeros((1024, n_pad), jnp.float32)
    w2 = w2.at[:512, 0:1].set(jnp.transpose(raw["val1_w"]))
    w2 = w2.at[512:, 1:n_out].set(jnp.transpose(raw["pol1_w"]))
    p["h2_w"] = w2.astype(bf16)
    b2 = jnp.zeros((n_pad,), jnp.float32)
    b2 = b2.at[0].set(raw["val1_b"][0])
    b2 = b2.at[1:n_out].set(raw["pol1_b"])
    p["h2_b"] = b2.reshape(1, -1)
    return p


# ----------------------------------------------------------------------------
# Forward pass (matches Model.forward: returns (policy, value))
# ----------------------------------------------------------------------------
def model_forward(params, state_nchw, *, outputs_count):
    x = jnp.transpose(state_nchw, (0, 2, 3, 1)).astype(jnp.bfloat16)  # NCHW -> NHWC
    B, H, W, _ = x.shape

    def conv(x, w, b, ksize, stride, pad, oh, ow):
        taps = _make_taps(x, ksize, stride, pad, oh, ow)
        y = tap_conv(taps, w, b, relu=True)
        return y.reshape(x.shape[0], oh, ow, w.shape[-1])

    x = conv(x, params["c1_w"], params["c1_b"], 3, 2, 1, H // 2, W // 2)   # -> 64
    x = conv(x, params["c2_w"], params["c2_b"], 3, 2, 1, H // 4, W // 4)   # -> 64
    x = conv(x, params["c3_w"], params["c3_b"], 3, 1, 1, H // 4, W // 4)   # -> 128
    # conv4 with the preceding AvgPool folded in (effective 6x6, stride 2, pad 2)
    x = conv(x, params["c4_w"], params["c4_b"], 6, 2, 2, H // 8, W // 8)   # -> 128

    # NHWC flatten; the trailing AvgPool2d is already folded into the head-1 weights,
    # and the head weights were pre-permuted, so no runtime transpose is needed.
    feats = x.reshape(B, -1)

    hid = gemm_bias_act(feats, params["h1_w"], params["h1_b"],
                        relu=True, out_dtype=jnp.bfloat16)          # (B, 1024)
    out = gemm_bias_act(hid, params["h2_w"], params["h2_b"],
                        relu=False, out_dtype=jnp.float32)          # (B, 128) lane-dense
    value = out[:, 0:1]
    policy = out[:, 1:1 + outputs_count]
    return policy, value


if __name__ == "__main__":
    input_shape = (4, 16, 16)   # (C, H, W) -- H, W divisible by 16 as the module requires
    outputs_count = 4
    batch = 2

    key = jax.random.PRNGKey(0)
    pkey, xkey = jax.random.split(key)
    raw = init_params(pkey, input_shape, outputs_count)
    params = prepare_params(raw, input_shape, outputs_count)

    state = jax.random.normal(xkey, (batch,) + input_shape, dtype=jnp.float32)  # NCHW

    fwd = jax.jit(functools.partial(model_forward, outputs_count=outputs_count))
    policy, value = fwd(params, state)
    jax.block_until_ready((policy, value))

    assert policy.shape == (batch, outputs_count)
    assert value.shape == (batch, 1)
    assert bool(jnp.all(jnp.isfinite(policy))) and bool(jnp.all(jnp.isfinite(value)))
    print("KERNEL_OK")
</pallas_src>

<mosaic_0001>
module attributes {stable_mosaic.version = 11 : i64} {
  func.func @_tap_conv_kernel(%arg0: i32, %arg1: memref<9x128x4xbf16, #tpu.memory_space<vmem>>, %arg2: memref<9x4x64xbf16, #tpu.memory_space<vmem>>, %arg3: memref<1x64xf32, #tpu.memory_space<vmem>>, %arg4: memref<128x64xbf16, #tpu.memory_space<vmem>>) attributes {dimension_semantics = [#tpu.dimension_semantics<parallel>], iteration_bounds = array<i64: 1>, scalar_prefetch = 0 : i64, scratch_operands = 0 : i64, tpu.core_type = #tpu.core_type<tc>, window_params = [{transform_indices = @transform_0, window_bounds = array<i64: 9, 128, 4>}, {pipeline_mode = #tpu.pipeline_mode<synchronous>, transform_indices = @transform_1, window_bounds = array<i64: 9, 4, 64>}, {pipeline_mode = #tpu.pipeline_mode<synchronous>, transform_indices = @transform_2, window_bounds = array<i64: 1, 64>}, {transform_indices = @transform_3, window_bounds = array<i64: 128, 64>}]} {
    %c0 = arith.constant 0 : index
    %c0_0 = arith.constant 0 : index
    %c0_1 = arith.constant 0 : index
    %0 = vector.load %arg1[%c0, %c0_0, %c0_1] : memref<9x128x4xbf16, #tpu.memory_space<vmem>>, vector<1x128x4xbf16>
    %1 = vector.shape_cast %0 : vector<1x128x4xbf16> to vector<128x4xbf16>
    %c0_2 = arith.constant 0 : index
    %c0_3 = arith.constant 0 : index
    %c0_4 = arith.constant 0 : index
    %2 = vector.load %arg2[%c0_2, %c0_3, %c0_4] : memref<9x4x64xbf16, #tpu.memory_space<vmem>>, vector<1x4x64xbf16>
    %3 = vector.shape_cast %2 : vector<1x4x64xbf16> to vector<4x64xbf16>
    %cst = arith.constant dense<0.000000e+00> : vector<128x64xf32>
    %4 = tpu.matmul %1, %3, %cst {dimension_numbers = #tpu.dot_dimension_numbers<[1], [0], [0], [1], [0, 0, 1, 1], [], []>} : vector<128x4xbf16>, vector<4x64xbf16>, vector<128x64xf32> -> vector<128x64xf32>
    %c1 = arith.constant 1 : index
    %c0_5 = arith.constant 0 : index
    %c0_6 = arith.constant 0 : index
    %5 = vector.load %arg1[%c1, %c0_5, %c0_6] : memref<9x128x4xbf16, #tpu.memory_space<vmem>>, vector<1x128x4xbf16>
    %6 = vector.shape_cast %5 : vector<1x128x4xbf16> to vector<128x4xbf16>
    %c1_7 = arith.constant 1 : index
    %c0_8 = arith.constant 0 : index
    %c0_9 = arith.constant 0 : index
    %7 = vector.load %arg2[%c1_7, %c0_8, %c0_9] : memref<9x4x64xbf16, #tpu.memory_space<vmem>>, vector<1x4x64xbf16>
    %8 = vector.shape_cast %7 : vector<1x4x64xbf16> to vector<4x64xbf16>
    %cst_10 = arith.constant dense<0.000000e+00> : vector<128x64xf32>
    %9 = tpu.matmul %6, %8, %cst_10 {dimension_numbers = #tpu.dot_dimension_numbers<[1], [0], [0], [1], [0, 0, 1, 1], [], []>} : vector<128x4xbf16>, vector<4x64xbf16>, vector<128x64xf32> -> vector<128x64xf32>
    %10 = arith.addf %4, %9 : vector<128x64xf32>
    %c2 = arith.constant 2 : index
    %c0_11 = arith.constant 0 : index
    %c0_12 = arith.constant 0 : index
    %11 = vector.load %arg1[%c2, %c0_11, %c0_12] : memref<9x128x4xbf16, #tpu.memory_space<vmem>>, vector<1x128x4xbf16>
    %12 = vector.shape_cast %11 : vector<1x128x4xbf16> to vector<128x4xbf16>
    %c2_13 = arith.constant 2 : index
    %c0_14 = arith.constant 0 : index
    %c0_15 = arith.constant 0 : index
    %13 = vector.load %arg2[%c2_13, %c0_14, %c0_15] : memref<9x4x64xbf16, #tpu.memory_space<vmem>>, vector<1x4x64xbf16>
    %14 = vector.shape_cast %13 : vector<1x4x64xbf16> to vector<4x64xbf16>
    %cst_16 = arith.constant dense<0.000000e+00> : vector<128x64xf32>
    %15 = tpu.matmul %12, %14, %cst_16 {dimension_numbers = #tpu.dot_dimension_numbers<[1], [0], [0], [1], [0, 0, 1, 1], [], []>} : vector<128x4xbf16>, vector<4x64xbf16>, vector<128x64xf32> -> vector<128x64xf32>
    %16 = arith.addf %10, %15 : vector<128x64xf32>
    %c3 = arith.constant 3 : index
    %c0_17 = arith.constant 0 : index
    %c0_18 = arith.constant 0 : index
    %17 = vector.load %arg1[%c3, %c0_17, %c0_18] : memref<9x128x4xbf16, #tpu.memory_space<vmem>>, vector<1x128x4xbf16>
    %18 = vector.shape_cast %17 : vector<1x128x4xbf16> to vector<128x4xbf16>
    %c3_19 = arith.constant 3 : index
    %c0_20 = arith.constant 0 : index
    %c0_21 = arith.constant 0 : index
    %19 = vector.load %arg2[%c3_19, %c0_20, %c0_21] : memref<9x4x64xbf16, #tpu.memory_space<vmem>>, vector<1x4x64xbf16>
    %20 = vector.shape_cast %19 : vector<1x4x64xbf16> to vector<4x64xbf16>
    %cst_22 = arith.constant dense<0.000000e+00> : vector<128x64xf32>
    %21 = tpu.matmul %18, %20, %cst_22 {dimension_numbers = #tpu.dot_dimension_numbers<[1], [0], [0], [1], [0, 0, 1, 1], [], []>} : vector<128x4xbf16>, vector<4x64xbf16>, vector<128x64xf32> -> vector<128x64xf32>
    %22 = arith.addf %16, %21 : vector<128x64xf32>
    %c4 = arith.constant 4 : index
    %c0_23 = arith.constant 0 : index
    %c0_24 = arith.constant 0 : index
    %23 = vector.load %arg1[%c4, %c0_23, %c0_24] : memref<9x128x4xbf16, #tpu.memory_space<vmem>>, vector<1x128x4xbf16>
    %24 = vector.shape_cast %23 : vector<1x128x4xbf16> to vector<128x4xbf16>
    %c4_25 = arith.constant 4 : index
    %c0_26 = arith.constant 0 : index
    %c0_27 = arith.constant 0 : index
    %25 = vector.load %arg2[%c4_25, %c0_26, %c0_27] : memref<9x4x64xbf16, #tpu.memory_space<vmem>>, vector<1x4x64xbf16>
    %26 = vector.shape_cast %25 : vector<1x4x64xbf16> to vector<4x64xbf16>
    %cst_28 = arith.constant dense<0.000000e+00> : vector<128x64xf32>
    %27 = tpu.matmul %24, %26, %cst_28 {dimension_numbers = #tpu.dot_dimension_numbers<[1], [0], [0], [1], [0, 0, 1, 1], [], []>} : vector<128x4xbf16>, vector<4x64xbf16>, vector<128x64xf32> -> vector<128x64xf32>
    %28 = arith.addf %22, %27 : vector<128x64xf32>
    %c5 = arith.constant 5 : index
    %c0_29 = arith.constant 0 : index
    %c0_30 = arith.constant 0 : index
    %29 = vector.load %arg1[%c5, %c0_29, %c0_30] : memref<9x128x4xbf16, #tpu.memory_space<vmem>>, vector<1x128x4xbf16>
    %30 = vector.shape_cast %29 : vector<1x128x4xbf16> to vector<128x4xbf16>
    %c5_31 = arith.constant 5 : index
    %c0_32 = arith.constant 0 : index
    %c0_33 = arith.constant 0 : index
    %31 = vector.load %arg2[%c5_31, %c0_32, %c0_33] : memref<9x4x64xbf16, #tpu.memory_space<vmem>>, vector<1x4x64xbf16>
    %32 = vector.shape_cast %31 : vector<1x4x64xbf16> to vector<4x64xbf16>
    %cst_34 = arith.constant dense<0.000000e+00> : vector<128x64xf32>
    %33 = tpu.matmul %30, %32, %cst_34 {dimension_numbers = #tpu.dot_dimension_numbers<[1], [0], [0], [1], [0, 0, 1, 1], [], []>} : vector<128x4xbf16>, vector<4x64xbf16>, vector<128x64xf32> -> vector<128x64xf32>
    %34 = arith.addf %28, %33 : vector<128x64xf32>
    %c6 = arith.constant 6 : index
    %c0_35 = arith.constant 0 : index
    %c0_36 = arith.constant 0 : index
    %35 = vector.load %arg1[%c6, %c0_35, %c0_36] : memref<9x128x4xbf16, #tpu.memory_space<vmem>>, vector<1x128x4xbf16>
    %36 = vector.shape_cast %35 : vector<1x128x4xbf16> to vector<128x4xbf16>
    %c6_37 = arith.constant 6 : index
    %c0_38 = arith.constant 0 : index
    %c0_39 = arith.constant 0 : index
    %37 = vector.load %arg2[%c6_37, %c0_38, %c0_39] : memref<9x4x64xbf16, #tpu.memory_space<vmem>>, vector<1x4x64xbf16>
    %38 = vector.shape_cast %37 : vector<1x4x64xbf16> to vector<4x64xbf16>
    %cst_40 = arith.constant dense<0.000000e+00> : vector<128x64xf32>
    %39 = tpu.matmul %36, %38, %cst_40 {dimension_numbers = #tpu.dot_dimension_numbers<[1], [0], [0], [1], [0, 0, 1, 1], [], []>} : vector<128x4xbf16>, vector<4x64xbf16>, vector<128x64xf32> -> vector<128x64xf32>
    %40 = arith.addf %34, %39 : vector<128x64xf32>
    %c7 = arith.constant 7 : index
    %c0_41 = arith.constant 0 : index
    %c0_42 = arith.constant 0 : index
    %41 = vector.load %arg1[%c7, %c0_41, %c0_42] : memref<9x128x4xbf16, #tpu.memory_space<vmem>>, vector<1x128x4xbf16>
    %42 = vector.shape_cast %41 : vector<1x128x4xbf16> to vector<128x4xbf16>
    %c7_43 = arith.constant 7 : index
    %c0_44 = arith.constant 0 : index
    %c0_45 = arith.constant 0 : index
    %43 = vector.load %arg2[%c7_43, %c0_44, %c0_45] : memref<9x4x64xbf16, #tpu.memory_space<vmem>>, vector<1x4x64xbf16>
    %44 = vector.shape_cast %43 : vector<1x4x64xbf16> to vector<4x64xbf16>
    %cst_46 = arith.constant dense<0.000000e+00> : vector<128x64xf32>
    %45 = tpu.matmul %42, %44, %cst_46 {dimension_numbers = #tpu.dot_dimension_numbers<[1], [0], [0], [1], [0, 0, 1, 1], [], []>} : vector<128x4xbf16>, vector<4x64xbf16>, vector<128x64xf32> -> vector<128x64xf32>
    %46 = arith.addf %40, %45 : vector<128x64xf32>
    %c8 = arith.constant 8 : index
    %c0_47 = arith.constant 0 : index
    %c0_48 = arith.constant 0 : index
    %47 = vector.load %arg1[%c8, %c0_47, %c0_48] : memref<9x128x4xbf16, #tpu.memory_space<vmem>>, vector<1x128x4xbf16>
    %48 = vector.shape_cast %47 : vector<1x128x4xbf16> to vector<128x4xbf16>
    %c8_49 = arith.constant 8 : index
    %c0_50 = arith.constant 0 : index
    %c0_51 = arith.constant 0 : index
    %49 = vector.load %arg2[%c8_49, %c0_50, %c0_51] : memref<9x4x64xbf16, #tpu.memory_space<vmem>>, vector<1x4x64xbf16>
    %50 = vector.shape_cast %49 : vector<1x4x64xbf16> to vector<4x64xbf16>
    %cst_52 = arith.constant dense<0.000000e+00> : vector<128x64xf32>
    %51 = tpu.matmul %48, %50, %cst_52 {dimension_numbers = #tpu.dot_dimension_numbers<[1], [0], [0], [1], [0, 0, 1, 1], [], []>} : vector<128x4xbf16>, vector<4x64xbf16>, vector<128x64xf32> -> vector<128x64xf32>
    %52 = arith.addf %46, %51 : vector<128x64xf32>
    %c0_53 = arith.constant 0 : index
    %c0_54 = arith.constant 0 : index
    %53 = vector.load %arg3[%c0_53, %c0_54] : memref<1x64xf32, #tpu.memory_space<vmem>>, vector<1x64xf32>
    %54 = vector.broadcast %53 : vector<1x64xf32> to vector<128x64xf32>
    %55 = arith.addf %52, %54 : vector<128x64xf32>
    %cst_55 = arith.constant 0.000000e+00 : f32
    %56 = vector.broadcast %cst_55 : f32 to vector<128x64xf32>
    %57 = arith.maximumf %55, %56 : vector<128x64xf32>
    %58 = arith.truncf %57 : vector<128x64xf32> to vector<128x64xbf16>
    %c0_56 = arith.constant 0 : index
    %c0_57 = arith.constant 0 : index
    %59 = vector.load %arg4[%c0_56, %c0_57] : memref<128x64xbf16, #tpu.memory_space<vmem>>, vector<128x64xbf16>
    tpu.vector_store %arg4[%c0_56, %c0_57], %58 {strides = array<i32>} : memref<128x64xbf16, #tpu.memory_space<vmem>>, vector<128x64xbf16>,
    return
  }
  func.func @transform_0(%arg0: i32) -> (i32, i32, i32) {
    %c0_i32 = arith.constant 0 : i32
    %c0_i32_0 = arith.constant 0 : i32
    %c0_i32_1 = arith.constant 0 : i32
    return %c0_i32, %arg0, %c0_i32_0 : i32, i32, i32
  }
  func.func @transform_1(%arg0: i32) -> (i32, i32, i32) {
    %c0_i32 = arith.constant 0 : i32
    %c0_i32_0 = arith.constant 0 : i32
    %c0_i32_1 = arith.constant 0 : i32
    %c0_i32_2 = arith.constant 0 : i32
    return %c0_i32, %c0_i32_0, %c0_i32_1 : i32, i32, i32
  }
  func.func @transform_2(%arg0: i32) -> (i32, i32) {
    %c0_i32 = arith.constant 0 : i32
    %c0_i32_0 = arith.constant 0 : i32
    %c0_i32_1 = arith.constant 0 : i32
    return %c0_i32, %c0_i32_0 : i32, i32
  }
  func.func @transform_3(%arg0: i32) -> (i32, i32) {
    %c0_i32 = arith.constant 0 : i32
    %c0_i32_0 = arith.constant 0 : i32
    return %arg0, %c0_i32 : i32, i32
  }
}

module attributes {stable_mosaic.version = 11 : i64} {
  func.func @_tap_conv_kernel(%arg0: i32, %arg1: memref<9x32x64xbf16, #tpu.memory_space<vmem>>, %arg2: memref<9x64x64xbf16, #tpu.memory_space<vmem>>, %arg3: memref<1x64xf32, #tpu.memory_space<vmem>>, %arg4: memref<32x64xbf16, #tpu.memory_space<vmem>>) attributes {dimension_semantics = [#tpu.dimension_semantics<parallel>], iteration_bounds = array<i64: 1>, scalar_prefetch = 0 : i64, scratch_operands = 0 : i64, tpu.core_type = #tpu.core_type<tc>, window_params = [{transform_indices = @transform_0, window_bounds = array<i64: 9, 32, 64>}, {pipeline_mode = #tpu.pipeline_mode<synchronous>, transform_indices = @transform_1, window_bounds = array<i64: 9, 64, 64>}, {pipeline_mode = #tpu.pipeline_mode<synchronous>, transform_indices = @transform_2, window_bounds = array<i64: 1, 64>}, {transform_indices = @transform_3, window_bounds = array<i64: 32, 64>}]} {
    %c0 = arith.constant 0 : index
    %c0_0 = arith.constant 0 : index
    %c0_1 = arith.constant 0 : index
    %0 = vector.load %arg1[%c0, %c0_0, %c0_1] : memref<9x32x64xbf16, #tpu.memory_space<vmem>>, vector<1x32x64xbf16>
    %1 = vector.shape_cast %0 : vector<1x32x64xbf16> to vector<32x64xbf16>
    %c0_2 = arith.constant 0 : index
    %c0_3 = arith.constant 0 : index
    %c0_4 = arith.constant 0 : index
    %2 = vector.load %arg2[%c0_2, %c0_3, %c0_4] : memref<9x64x64xbf16, #tpu.memory_space<vmem>>, vector<1x64x64xbf16>
    %3 = vector.shape_cast %2 : vector<1x64x64xbf16> to vector<64x64xbf16>
    %cst = arith.constant dense<0.000000e+00> : vector<32x64xf32>
    %4 = tpu.matmul %1, %3, %cst {dimension_numbers = #tpu.dot_dimension_numbers<[1], [0], [0], [1], [0, 0, 1, 1], [], []>} : vector<32x64xbf16>, vector<64x64xbf16>, vector<32x64xf32> -> vector<32x64xf32>
    %c1 = arith.constant 1 : index
    %c0_5 = arith.constant 0 : index
    %c0_6 = arith.constant 0 : index
    %5 = vector.load %arg1[%c1, %c0_5, %c0_6] : memref<9x32x64xbf16, #tpu.memory_space<vmem>>, vector<1x32x64xbf16>
    %6 = vector.shape_cast %5 : vector<1x32x64xbf16> to vector<32x64xbf16>
    %c1_7 = arith.constant 1 : index
    %c0_8 = arith.constant 0 : index
    %c0_9 = arith.constant 0 : index
    %7 = vector.load %arg2[%c1_7, %c0_8, %c0_9] : memref<9x64x64xbf16, #tpu.memory_space<vmem>>, vector<1x64x64xbf16>
    %8 = vector.shape_cast %7 : vector<1x64x64xbf16> to vector<64x64xbf16>
    %cst_10 = arith.constant dense<0.000000e+00> : vector<32x64xf32>
    %9 = tpu.matmul %6, %8, %cst_10 {dimension_numbers = #tpu.dot_dimension_numbers<[1], [0], [0], [1], [0, 0, 1, 1], [], []>} : vector<32x64xbf16>, vector<64x64xbf16>, vector<32x64xf32> -> vector<32x64xf32>
    %10 = arith.addf %4, %9 : vector<32x64xf32>
    %c2 = arith.constant 2 : index
    %c0_11 = arith.constant 0 : index
    %c0_12 = arith.constant 0 : index
    %11 = vector.load %arg1[%c2, %c0_11, %c0_12] : memref<9x32x64xbf16, #tpu.memory_space<vmem>>, vector<1x32x64xbf16>
    %12 = vector.shape_cast %11 : vector<1x32x64xbf16> to vector<32x64xbf16>
    %c2_13 = arith.constant 2 : index
    %c0_14 = arith.constant 0 : index
    %c0_15 = arith.constant 0 : index
    %13 = vector.load %arg2[%c2_13, %c0_14, %c0_15] : memref<9x64x64xbf16, #tpu.memory_space<vmem>>, vector<1x64x64xbf16>
    %14 = vector.shape_cast %13 : vector<1x64x64xbf16> to vector<64x64xbf16>
    %cst_16 = arith.constant dense<0.000000e+00> : vector<32x64xf32>
    %15 = tpu.matmul %12, %14, %cst_16 {dimension_numbers = #tpu.dot_dimension_numbers<[1], [0], [0], [1], [0, 0, 1, 1], [], []>} : vector<32x64xbf16>, vector<64x64xbf16>, vector<32x64xf32> -> vector<32x64xf32>
    %16 = arith.addf %10, %15 : vector<32x64xf32>
    %c3 = arith.constant 3 : index
    %c0_17 = arith.constant 0 : index
    %c0_18 = arith.constant 0 : index
    %17 = vector.load %arg1[%c3, %c0_17, %c0_18] : memref<9x32x64xbf16, #tpu.memory_space<vmem>>, vector<1x32x64xbf16>
    %18 = vector.shape_cast %17 : vector<1x32x64xbf16> to vector<32x64xbf16>
    %c3_19 = arith.constant 3 : index
    %c0_20 = arith.constant 0 : index
    %c0_21 = arith.constant 0 : index
    %19 = vector.load %arg2[%c3_19, %c0_20, %c0_21] : memref<9x64x64xbf16, #tpu.memory_space<vmem>>, vector<1x64x64xbf16>
    %20 = vector.shape_cast %19 : vector<1x64x64xbf16> to vector<64x64xbf16>
    %cst_22 = arith.constant dense<0.000000e+00> : vector<32x64xf32>
    %21 = tpu.matmul %18, %20, %cst_22 {dimension_numbers = #tpu.dot_dimension_numbers<[1], [0], [0], [1], [0, 0, 1, 1], [], []>} : vector<32x64xbf16>, vector<64x64xbf16>, vector<32x64xf32> -> vector<32x64xf32>
    %22 = arith.addf %16, %21 : vector<32x64xf32>
    %c4 = arith.constant 4 : index
    %c0_23 = arith.constant 0 : index
    %c0_24 = arith.constant 0 : index
    %23 = vector.load %arg1[%c4, %c0_23, %c0_24] : memref<9x32x64xbf16, #tpu.memory_space<vmem>>, vector<1x32x64xbf16>
    %24 = vector.shape_cast %23 : vector<1x32x64xbf16> to vector<32x64xbf16>
    %c4_25 = arith.constant 4 : index
    %c0_26 = arith.constant 0 : index
    %c0_27 = arith.constant 0 : index
    %25 = vector.load %arg2[%c4_25, %c0_26, %c0_27] : memref<9x64x64xbf16, #tpu.memory_space<vmem>>, vector<1x64x64xbf16>
    %26 = vector.shape_cast %25 : vector<1x64x64xbf16> to vector<64x64xbf16>
    %cst_28 = arith.constant dense<0.000000e+00> : vector<32x64xf32>
    %27 = tpu.matmul %24, %26, %cst_28 {dimension_numbers = #tpu.dot_dimension_numbers<[1], [0], [0], [1], [0, 0, 1, 1], [], []>} : vector<32x64xbf16>, vector<64x64xbf16>, vector<32x64xf32> -> vector<32x64xf32>
    %28 = arith.addf %22, %27 : vector<32x64xf32>
    %c5 = arith.constant 5 : index
    %c0_29 = arith.constant 0 : index
    %c0_30 = arith.constant 0 : index
    %29 = vector.load %arg1[%c5, %c0_29, %c0_30] : memref<9x32x64xbf16, #tpu.memory_space<vmem>>, vector<1x32x64xbf16>
    %30 = vector.shape_cast %29 : vector<1x32x64xbf16> to vector<32x64xbf16>
    %c5_31 = arith.constant 5 : index
    %c0_32 = arith.constant 0 : index
    %c0_33 = arith.constant 0 : index
    %31 = vector.load %arg2[%c5_31, %c0_32, %c0_33] : memref<9x64x64xbf16, #tpu.memory_space<vmem>>, vector<1x64x64xbf16>
    %32 = vector.shape_cast %31 : vector<1x64x64xbf16> to vector<64x64xbf16>
    %cst_34 = arith.constant dense<0.000000e+00> : vector<32x64xf32>
    %33 = tpu.matmul %30, %32, %cst_34 {dimension_numbers = #tpu.dot_dimension_numbers<[1], [0], [0], [1], [0, 0, 1, 1], [], []>} : vector<32x64xbf16>, vector<64x64xbf16>, vector<32x64xf32> -> vector<32x64xf32>
    %34 = arith.addf %28, %33 : vector<32x64xf32>
    %c6 = arith.constant 6 : index
    %c0_35 = arith.constant 0 : index
    %c0_36 = arith.constant 0 : index
    %35 = vector.load %arg1[%c6, %c0_35, %c0_36] : memref<9x32x64xbf16, #tpu.memory_space<vmem>>, vector<1x32x64xbf16>
    %36 = vector.shape_cast %35 : vector<1x32x64xbf16> to vector<32x64xbf16>
    %c6_37 = arith.constant 6 : index
    %c0_38 = arith.constant 0 : index
    %c0_39 = arith.constant 0 : index
    %37 = vector.load %arg2[%c6_37, %c0_38, %c0_39] : memref<9x64x64xbf16, #tpu.memory_space<vmem>>, vector<1x64x64xbf16>
    %38 = vector.shape_cast %37 : vector<1x64x64xbf16> to vector<64x64xbf16>
    %cst_40 = arith.constant dense<0.000000e+00> : vector<32x64xf32>
    %39 = tpu.matmul %36, %38, %cst_40 {dimension_numbers = #tpu.dot_dimension_numbers<[1], [0], [0], [1], [0, 0, 1, 1], [], []>} : vector<32x64xbf16>, vector<64x64xbf16>, vector<32x64xf32> -> vector<32x64xf32>
    %40 = arith.addf %34, %39 : vector<32x64xf32>
    %c7 = arith.constant 7 : index
    %c0_41 = arith.constant 0 : index
    %c0_42 = arith.constant 0 : index
    %41 = vector.load %arg1[%c7, %c0_41, %c0_42] : memref<9x32x64xbf16, #tpu.memory_space<vmem>>, vector<1x32x64xbf16>
    %42 = vector.shape_cast %41 : vector<1x32x64xbf16> to vector<32x64xbf16>
    %c7_43 = arith.constant 7 : index
    %c0_44 = arith.constant 0 : index
    %c0_45 = arith.constant 0 : index
    %43 = vector.load %arg2[%c7_43, %c0_44, %c0_45] : memref<9x64x64xbf16, #tpu.memory_space<vmem>>, vector<1x64x64xbf16>
    %44 = vector.shape_cast %43 : vector<1x64x64xbf16> to vector<64x64xbf16>
    %cst_46 = arith.constant dense<0.000000e+00> : vector<32x64xf32>
    %45 = tpu.matmul %42, %44, %cst_46 {dimension_numbers = #tpu.dot_dimension_numbers<[1], [0], [0], [1], [0, 0, 1, 1], [], []>} : vector<32x64xbf16>, vector<64x64xbf16>, vector<32x64xf32> -> vector<32x64xf32>
    %46 = arith.addf %40, %45 : vector<32x64xf32>
    %c8 = arith.constant 8 : index
    %c0_47 = arith.constant 0 : index
    %c0_48 = arith.constant 0 : index
    %47 = vector.load %arg1[%c8, %c0_47, %c0_48] : memref<9x32x64xbf16, #tpu.memory_space<vmem>>, vector<1x32x64xbf16>
    %48 = vector.shape_cast %47 : vector<1x32x64xbf16> to vector<32x64xbf16>
    %c8_49 = arith.constant 8 : index
    %c0_50 = arith.constant 0 : index
    %c0_51 = arith.constant 0 : index
    %49 = vector.load %arg2[%c8_49, %c0_50, %c0_51] : memref<9x64x64xbf16, #tpu.memory_space<vmem>>, vector<1x64x64xbf16>
    %50 = vector.shape_cast %49 : vector<1x64x64xbf16> to vector<64x64xbf16>
    %cst_52 = arith.constant dense<0.000000e+00> : vector<32x64xf32>
    %51 = tpu.matmul %48, %50, %cst_52 {dimension_numbers = #tpu.dot_dimension_numbers<[1], [0], [0], [1], [0, 0, 1, 1], [], []>} : vector<32x64xbf16>, vector<64x64xbf16>, vector<32x64xf32> -> vector<32x64xf32>
    %52 = arith.addf %46, %51 : vector<32x64xf32>
    %c0_53 = arith.constant 0 : index
    %c0_54 = arith.constant 0 : index
    %53 = vector.load %arg3[%c0_53, %c0_54] : memref<1x64xf32, #tpu.memory_space<vmem>>, vector<1x64xf32>
    %54 = vector.broadcast %53 : vector<1x64xf32> to vector<32x64xf32>
    %55 = arith.addf %52, %54 : vector<32x64xf32>
    %cst_55 = arith.constant 0.000000e+00 : f32
    %56 = vector.broadcast %cst_55 : f32 to vector<32x64xf32>
    %57 = arith.maximumf %55, %56 : vector<32x64xf32>
    %58 = arith.truncf %57 : vector<32x64xf32> to vector<32x64xbf16>
    %c0_56 = arith.constant 0 : index
    %c0_57 = arith.constant 0 : index
    %59 = vector.load %arg4[%c0_56, %c0_57] : memref<32x64xbf16, #tpu.memory_space<vmem>>, vector<32x64xbf16>
    tpu.vector_store %arg4[%c0_56, %c0_57], %58 {strides = array<i32>} : memref<32x64xbf16, #tpu.memory_space<vmem>>, vector<32x64xbf16>,
    return
  }
  func.func @transform_0(%arg0: i32) -> (i32, i32, i32) {
    %c0_i32 = arith.constant 0 : i32
    %c0_i32_0 = arith.constant 0 : i32
    %c0_i32_1 = arith.constant 0 : i32
    return %c0_i32, %arg0, %c0_i32_0 : i32, i32, i32
  }
  func.func @transform_1(%arg0: i32) -> (i32, i32, i32) {
    %c0_i32 = arith.constant 0 : i32
    %c0_i32_0 = arith.constant 0 : i32
    %c0_i32_1 = arith.constant 0 : i32
    %c0_i32_2 = arith.constant 0 : i32
    return %c0_i32, %c0_i32_0, %c0_i32_1 : i32, i32, i32
  }
  func.func @transform_2(%arg0: i32) -> (i32, i32) {
    %c0_i32 = arith.constant 0 : i32
    %c0_i32_0 = arith.constant 0 : i32
    %c0_i32_1 = arith.constant 0 : i32
    return %c0_i32, %c0_i32_0 : i32, i32
  }
  func.func @transform_3(%arg0: i32) -> (i32, i32) {
    %c0_i32 = arith.constant 0 : i32
    %c0_i32_0 = arith.constant 0 : i32
    return %arg0, %c0_i32 : i32, i32
  }
}

module attributes {stable_mosaic.version = 11 : i64} {
  func.func @_tap_conv_kernel(%arg0: i32, %arg1: memref<9x32x64xbf16, #tpu.memory_space<vmem>>, %arg2: memref<9x64x128xbf16, #tpu.memory_space<vmem>>, %arg3: memref<1x128xf32, #tpu.memory_space<vmem>>, %arg4: memref<32x128xbf16, #tpu.memory_space<vmem>>) attributes {dimension_semantics = [#tpu.dimension_semantics<parallel>], iteration_bounds = array<i64: 1>, scalar_prefetch = 0 : i64, scratch_operands = 0 : i64, tpu.core_type = #tpu.core_type<tc>, window_params = [{transform_indices = @transform_0, window_bounds = array<i64: 9, 32, 64>}, {pipeline_mode = #tpu.pipeline_mode<synchronous>, transform_indices = @transform_1, window_bounds = array<i64: 9, 64, 128>}, {pipeline_mode = #tpu.pipeline_mode<synchronous>, transform_indices = @transform_2, window_bounds = array<i64: 1, 128>}, {transform_indices = @transform_3, window_bounds = array<i64: 32, 128>}]} {
    %c0 = arith.constant 0 : index
    %c0_0 = arith.constant 0 : index
    %c0_1 = arith.constant 0 : index
    %0 = vector.load %arg1[%c0, %c0_0, %c0_1] : memref<9x32x64xbf16, #tpu.memory_space<vmem>>, vector<1x32x64xbf16>
    %1 = vector.shape_cast %0 : vector<1x32x64xbf16> to vector<32x64xbf16>
    %c0_2 = arith.constant 0 : index
    %c0_3 = arith.constant 0 : index
    %c0_4 = arith.constant 0 : index
    %2 = vector.load %arg2[%c0_2, %c0_3, %c0_4] : memref<9x64x128xbf16, #tpu.memory_space<vmem>>, vector<1x64x128xbf16>
    %3 = vector.shape_cast %2 : vector<1x64x128xbf16> to vector<64x128xbf16>
    %cst = arith.constant dense<0.000000e+00> : vector<32x128xf32>
    %4 = tpu.matmul %1, %3, %cst {dimension_numbers = #tpu.dot_dimension_numbers<[1], [0], [0], [1], [0, 0, 1, 1], [], []>} : vector<32x64xbf16>, vector<64x128xbf16>, vector<32x128xf32> -> vector<32x128xf32>
    %c1 = arith.constant 1 : index
    %c0_5 = arith.constant 0 : index
    %c0_6 = arith.constant 0 : index
    %5 = vector.load %arg1[%c1, %c0_5, %c0_6] : memref<9x32x64xbf16, #tpu.memory_space<vmem>>, vector<1x32x64xbf16>
    %6 = vector.shape_cast %5 : vector<1x32x64xbf16> to vector<32x64xbf16>
    %c1_7 = arith.constant 1 : index
    %c0_8 = arith.constant 0 : index
    %c0_9 = arith.constant 0 : index
    %7 = vector.load %arg2[%c1_7, %c0_8, %c0_9] : memref<9x64x128xbf16, #tpu.memory_space<vmem>>, vector<1x64x128xbf16>
    %8 = vector.shape_cast %7 : vector<1x64x128xbf16> to vector<64x128xbf16>
    %cst_10 = arith.constant dense<0.000000e+00> : vector<32x128xf32>
    %9 = tpu.matmul %6, %8, %cst_10 {dimension_numbers = #tpu.dot_dimension_numbers<[1], [0], [0], [1], [0, 0, 1, 1], [], []>} : vector<32x64xbf16>, vector<64x128xbf16>, vector<32x128xf32> -> vector<32x128xf32>
    %10 = arith.addf %4, %9 : vector<32x128xf32>
    %c2 = arith.constant 2 : index
    %c0_11 = arith.constant 0 : index
    %c0_12 = arith.constant 0 : index
    %11 = vector.load %arg1[%c2, %c0_11, %c0_12] : memref<9x32x64xbf16, #tpu.memory_space<vmem>>, vector<1x32x64xbf16>
    %12 = vector.shape_cast %11 : vector<1x32x64xbf16> to vector<32x64xbf16>
    %c2_13 = arith.constant 2 : index
    %c0_14 = arith.constant 0 : index
    %c0_15 = arith.constant 0 : index
    %13 = vector.load %arg2[%c2_13, %c0_14, %c0_15] : memref<9x64x128xbf16, #tpu.memory_space<vmem>>, vector<1x64x128xbf16>
    %14 = vector.shape_cast %13 : vector<1x64x128xbf16> to vector<64x128xbf16>
    %cst_16 = arith.constant dense<0.000000e+00> : vector<32x128xf32>
    %15 = tpu.matmul %12, %14, %cst_16 {dimension_numbers = #tpu.dot_dimension_numbers<[1], [0], [0], [1], [0, 0, 1, 1], [], []>} : vector<32x64xbf16>, vector<64x128xbf16>, vector<32x128xf32> -> vector<32x128xf32>
    %16 = arith.addf %10, %15 : vector<32x128xf32>
    %c3 = arith.constant 3 : index
    %c0_17 = arith.constant 0 : index
    %c0_18 = arith.constant 0 : index
    %17 = vector.load %arg1[%c3, %c0_17, %c0_18] : memref<9x32x64xbf16, #tpu.memory_space<vmem>>, vector<1x32x64xbf16>
    %18 = vector.shape_cast %17 : vector<1x32x64xbf16> to vector<32x64xbf16>
    %c3_19 = arith.constant 3 : index
    %c0_20 = arith.constant 0 : index
    %c0_21 = arith.constant 0 : index
    %19 = vector.load %arg2[%c3_19, %c0_20, %c0_21] : memref<9x64x128xbf16, #tpu.memory_space<vmem>>, vector<1x64x128xbf16>
    %20 = vector.shape_cast %19 : vector<1x64x128xbf16> to vector<64x128xbf16>
    %cst_22 = arith.constant dense<0.000000e+00> : vector<32x128xf32>
    %21 = tpu.matmul %18, %20, %cst_22 {dimension_numbers = #tpu.dot_dimension_numbers<[1], [0], [0], [1], [0, 0, 1, 1], [], []>} : vector<32x64xbf16>, vector<64x128xbf16>, vector<32x128xf32> -> vector<32x128xf32>
    %22 = arith.addf %16, %21 : vector<32x128xf32>
    %c4 = arith.constant 4 : index
    %c0_23 = arith.constant 0 : index
    %c0_24 = arith.constant 0 : index
    %23 = vector.load %arg1[%c4, %c0_23, %c0_24] : memref<9x32x64xbf16, #tpu.memory_space<vmem>>, vector<1x32x64xbf16>
    %24 = vector.shape_cast %23 : vector<1x32x64xbf16> to vector<32x64xbf16>
    %c4_25 = arith.constant 4 : index
    %c0_26 = arith.constant 0 : index
    %c0_27 = arith.constant 0 : index
    %25 = vector.load %arg2[%c4_25, %c0_26, %c0_27] : memref<9x64x128xbf16, #tpu.memory_space<vmem>>, vector<1x64x128xbf16>
    %26 = vector.shape_cast %25 : vector<1x64x128xbf16> to vector<64x128xbf16>
    %cst_28 = arith.constant dense<0.000000e+00> : vector<32x128xf32>
    %27 = tpu.matmul %24, %26, %cst_28 {dimension_numbers = #tpu.dot_dimension_numbers<[1], [0], [0], [1], [0, 0, 1, 1], [], []>} : vector<32x64xbf16>, vector<64x128xbf16>, vector<32x128xf32> -> vector<32x128xf32>
    %28 = arith.addf %22, %27 : vector<32x128xf32>
    %c5 = arith.constant 5 : index
    %c0_29 = arith.constant 0 : index
    %c0_30 = arith.constant 0 : index
    %29 = vector.load %arg1[%c5, %c0_29, %c0_30] : memref<9x32x64xbf16, #tpu.memory_space<vmem>>, vector<1x32x64xbf16>
    %30 = vector.shape_cast %29 : vector<1x32x64xbf16> to vector<32x64xbf16>
    %c5_31 = arith.constant 5 : index
    %c0_32 = arith.constant 0 : index
    %c0_33 = arith.constant 0 : index
    %31 = vector.load %arg2[%c5_31, %c0_32, %c0_33] : memref<9x64x128xbf16, #tpu.memory_space<vmem>>, vector<1x64x128xbf16>
    %32 = vector.shape_cast %31 : vector<1x64x128xbf16> to vector<64x128xbf16>
    %cst_34 = arith.constant dense<0.000000e+00> : vector<32x128xf32>
    %33 = tpu.matmul %30, %32, %cst_34 {dimension_numbers = #tpu.dot_dimension_numbers<[1], [0], [0], [1], [0, 0, 1, 1], [], []>} : vector<32x64xbf16>, vector<64x128xbf16>, vector<32x128xf32> -> vector<32x128xf32>
    %34 = arith.addf %28, %33 : vector<32x128xf32>
    %c6 = arith.constant 6 : index
    %c0_35 = arith.constant 0 : index
    %c0_36 = arith.constant 0 : index
    %35 = vector.load %arg1[%c6, %c0_35, %c0_36] : memref<9x32x64xbf16, #tpu.memory_space<vmem>>, vector<1x32x64xbf16>
    %36 = vector.shape_cast %35 : vector<1x32x64xbf16> to vector<32x64xbf16>
    %c6_37 = arith.constant 6 : index
    %c0_38 = arith.constant 0 : index
    %c0_39 = arith.constant 0 : index
    %37 = vector.load %arg2[%c6_37, %c0_38, %c0_39] : memref<9x64x128xbf16, #tpu.memory_space<vmem>>, vector<1x64x128xbf16>
    %38 = vector.shape_cast %37 : vector<1x64x128xbf16> to vector<64x128xbf16>
    %cst_40 = arith.constant dense<0.000000e+00> : vector<32x128xf32>
    %39 = tpu.matmul %36, %38, %cst_40 {dimension_numbers = #tpu.dot_dimension_numbers<[1], [0], [0], [1], [0, 0, 1, 1], [], []>} : vector<32x64xbf16>, vector<64x128xbf16>, vector<32x128xf32> -> vector<32x128xf32>
    %40 = arith.addf %34, %39 : vector<32x128xf32>
    %c7 = arith.constant 7 : index
    %c0_41 = arith.constant 0 : index
    %c0_42 = arith.constant 0 : index
    %41 = vector.load %arg1[%c7, %c0_41, %c0_42] : memref<9x32x64xbf16, #tpu.memory_space<vmem>>, vector<1x32x64xbf16>
    %42 = vector.shape_cast %41 : vector<1x32x64xbf16> to vector<32x64xbf16>
    %c7_43 = arith.constant 7 : index
    %c0_44 = arith.constant 0 : index
    %c0_45 = arith.constant 0 : index
    %43 = vector.load %arg2[%c7_43, %c0_44, %c0_45] : memref<9x64x128xbf16, #tpu.memory_space<vmem>>, vector<1x64x128xbf16>
    %44 = vector.shape_cast %43 : vector<1x64x128xbf16> to vector<64x128xbf16>
    %cst_46 = arith.constant dense<0.000000e+00> : vector<32x128xf32>
    %45 = tpu.matmul %42, %44, %cst_46 {dimension_numbers = #tpu.dot_dimension_numbers<[1], [0], [0], [1], [0, 0, 1, 1], [], []>} : vector<32x64xbf16>, vector<64x128xbf16>, vector<32x128xf32> -> vector<32x128xf32>
    %46 = arith.addf %40, %45 : vector<32x128xf32>
    %c8 = arith.constant 8 : index
    %c0_47 = arith.constant 0 : index
    %c0_48 = arith.constant 0 : index
    %47 = vector.load %arg1[%c8, %c0_47, %c0_48] : memref<9x32x64xbf16, #tpu.memory_space<vmem>>, vector<1x32x64xbf16>
    %48 = vector.shape_cast %47 : vector<1x32x64xbf16> to vector<32x64xbf16>
    %c8_49 = arith.constant 8 : index
    %c0_50 = arith.constant 0 : index
    %c0_51 = arith.constant 0 : index
    %49 = vector.load %arg2[%c8_49, %c0_50, %c0_51] : memref<9x64x128xbf16, #tpu.memory_space<vmem>>, vector<1x64x128xbf16>
    %50 = vector.shape_cast %49 : vector<1x64x128xbf16> to vector<64x128xbf16>
    %cst_52 = arith.constant dense<0.000000e+00> : vector<32x128xf32>
    %51 = tpu.matmul %48, %50, %cst_52 {dimension_numbers = #tpu.dot_dimension_numbers<[1], [0], [0], [1], [0, 0, 1, 1], [], []>} : vector<32x64xbf16>, vector<64x128xbf16>, vector<32x128xf32> -> vector<32x128xf32>
    %52 = arith.addf %46, %51 : vector<32x128xf32>
    %c0_53 = arith.constant 0 : index
    %c0_54 = arith.constant 0 : index
    %53 = vector.load %arg3[%c0_53, %c0_54] : memref<1x128xf32, #tpu.memory_space<vmem>>, vector<1x128xf32>
    %54 = vector.broadcast %53 : vector<1x128xf32> to vector<32x128xf32>
    %55 = arith.addf %52, %54 : vector<32x128xf32>
    %cst_55 = arith.constant 0.000000e+00 : f32
    %56 = vector.broadcast %cst_55 : f32 to vector<32x128xf32>
    %57 = arith.maximumf %55, %56 : vector<32x128xf32>
    %58 = arith.truncf %57 : vector<32x128xf32> to vector<32x128xbf16>
    %c0_56 = arith.constant 0 : index
    %c0_57 = arith.constant 0 : index
    %59 = vector.load %arg4[%c0_56, %c0_57] : memref<32x128xbf16, #tpu.memory_space<vmem>>, vector<32x128xbf16>
    tpu.vector_store %arg4[%c0_56, %c0_57], %58 {strides = array<i32>} : memref<32x128xbf16, #tpu.memory_space<vmem>>, vector<32x128xbf16>,
    return
  }
  func.func @transform_0(%arg0: i32) -> (i32, i32, i32) {
    %c0_i32 = arith.constant 0 : i32
    %c0_i32_0 = arith.constant 0 : i32
    %c0_i32_1 = arith.constant 0 : i32
    return %c0_i32, %arg0, %c0_i32_0 : i32, i32, i32
  }
  func.func @transform_1(%arg0: i32) -> (i32, i32, i32) {
    %c0_i32 = arith.constant 0 : i32
    %c0_i32_0 = arith.constant 0 : i32
    %c0_i32_1 = arith.constant 0 : i32
    %c0_i32_2 = arith.constant 0 : i32
    return %c0_i32, %c0_i32_0, %c0_i32_1 : i32, i32, i32
  }
  func.func @transform_2(%arg0: i32) -> (i32, i32) {
    %c0_i32 = arith.constant 0 : i32
    %c0_i32_0 = arith.constant 0 : i32
    %c0_i32_1 = arith.constant 0 : i32
    return %c0_i32, %c0_i32_0 : i32, i32
  }
  func.func @transform_3(%arg0: i32) -> (i32, i32) {
    %c0_i32 = arith.constant 0 : i32
    %c0_i32_0 = arith.constant 0 : i32
    return %arg0, %c0_i32 : i32, i32
  }
}

module attributes {stable_mosaic.version = 11 : i64} {
  func.func @_gemm_kernel(%arg0: i32, %arg1: i32, %arg2: i32, %arg3: memref<2x512xbf16, #tpu.memory_space<vmem>>, %arg4: memref<512x128xbf16, #tpu.memory_space<vmem>>, %arg5: memref<1x128xf32, #tpu.memory_space<vmem>>, %arg6: memref<2x128xf32, #tpu.memory_space<vmem>>, %arg7: memref<2x128xf32, #tpu.memory_space<vmem>>) attributes {dimension_semantics = [#tpu.dimension_semantics<parallel>, #tpu.dimension_semantics<parallel>, #tpu.dimension_semantics<arbitrary>], iteration_bounds = array<i64: 1, 1, 2>, scalar_prefetch = 0 : i64, scratch_operands = 1 : i64, tpu.core_type = #tpu.core_type<tc>, window_params = [{transform_indices = @transform_0, window_bounds = array<i64: 2, 512>}, {transform_indices = @transform_1, window_bounds = array<i64: 512, 128>}, {transform_indices = @transform_2, window_bounds = array<i64: 1, 128>}, {transform_indices = @transform_3, window_bounds = array<i64: 2, 128>}]} {
    %c0_i32 = arith.constant 0 : i32
    %0 = arith.cmpi eq, %arg2, %c0_i32 : i32
    %1 = arith.extui %0 : i1 to i32
    %c0_i32_0 = arith.constant 0 : i32
    %2 = arith.cmpi ne, %1, %c0_i32_0 : i32
    scf.if %2 {
      %cst_9 = arith.constant 0.000000e+00 : f32
      %12 = vector.broadcast %cst_9 : f32 to vector<2x128xf32>
      %c0_10 = arith.constant 0 : index
      %c0_11 = arith.constant 0 : index
      %13 = vector.load %arg7[%c0_10, %c0_11] : memref<2x128xf32, #tpu.memory_space<vmem>>, vector<2x128xf32>
      tpu.vector_store %arg7[%c0_10, %c0_11], %12 {strides = array<i32>} : memref<2x128xf32, #tpu.memory_space<vmem>>, vector<2x128xf32>,
    } else {
    }
    %c0 = arith.constant 0 : index
    %c0_1 = arith.constant 0 : index
    %3 = vector.load %arg7[%c0, %c0_1] : memref<2x128xf32, #tpu.memory_space<vmem>>, vector<2x128xf32>
    %c0_2 = arith.constant 0 : index
    %c0_3 = arith.constant 0 : index
    %4 = vector.load %arg3[%c0_2, %c0_3] : memref<2x512xbf16, #tpu.memory_space<vmem>>, vector<2x512xbf16>
    %c0_4 = arith.constant 0 : index
    %c0_5 = arith.constant 0 : index
    %5 = vector.load %arg4[%c0_4, %c0_5] : memref<512x128xbf16, #tpu.memory_space<vmem>>, vector<512x128xbf16>
    %cst = arith.constant dense<0.000000e+00> : vector<2x128xf32>
    %6 = tpu.matmul %4, %5, %cst {dimension_numbers = #tpu.dot_dimension_numbers<[1], [0], [0], [1], [0, 0, 1, 1], [], []>} : vector<2x512xbf16>, vector<512x128xbf16>, vector<2x128xf32> -> vector<2x128xf32>
    %7 = arith.addf %3, %6 : vector<2x128xf32>
    %c0_6 = arith.constant 0 : index
    %c0_7 = arith.constant 0 : index
    %8 = vector.load %arg7[%c0_6, %c0_7] : memref<2x128xf32, #tpu.memory_space<vmem>>, vector<2x128xf32>
    tpu.vector_store %arg7[%c0_6, %c0_7], %7 {strides = array<i32>} : memref<2x128xf32, #tpu.memory_space<vmem>>, vector<2x128xf32>,
    %c1_i32 = arith.constant 1 : i32
    %9 = arith.cmpi eq, %arg2, %c1_i32 : i32
    %10 = arith.extui %9 : i1 to i32
    %c0_i32_8 = arith.constant 0 : i32
    %11 = arith.cmpi ne, %10, %c0_i32_8 : i32
    scf.if %11 {
      %c0_9 = arith.constant 0 : index
      %c0_10 = arith.constant 0 : index
      %12 = vector.load %arg7[%c0_9, %c0_10] : memref<2x128xf32, #tpu.memory_space<vmem>>, vector<2x128xf32>
      %c0_11 = arith.constant 0 : index
      %c0_12 = arith.constant 0 : index
      %13 = vector.load %arg5[%c0_11, %c0_12] : memref<1x128xf32, #tpu.memory_space<vmem>>, vector<1x128xf32>
      %14 = vector.broadcast %13 : vector<1x128xf32> to vector<2x128xf32>
      %15 = arith.addf %12, %14 : vector<2x128xf32>
      %c0_13 = arith.constant 0 : index
      %c0_14 = arith.constant 0 : index
      %16 = vector.load %arg6[%c0_13, %c0_14] : memref<2x128xf32, #tpu.memory_space<vmem>>, vector<2x128xf32>
      tpu.vector_store %arg6[%c0_13, %c0_14], %15 {strides = array<i32>} : memref<2x128xf32, #tpu.memory_space<vmem>>, vector<2x128xf32>,
    } else {
    }
    return
  }
  func.func @transform_0(%arg0: i32, %arg1: i32, %arg2: i32) -> (i32, i32) {
    %c0_i32 = arith.constant 0 : i32
    return %arg0, %arg2 : i32, i32
  }
  func.func @transform_1(%arg0: i32, %arg1: i32, %arg2: i32) -> (i32, i32) {
    %c0_i32 = arith.constant 0 : i32
    return %arg2, %arg1 : i32, i32
  }
  func.func @transform_2(%arg0: i32, %arg1: i32, %arg2: i32) -> (i32, i32) {
    %c0_i32 = arith.constant 0 : i32
    %c0_i32_0 = arith.constant 0 : i32
    return %c0_i32, %arg1 : i32, i32
  }
  func.func @transform_3(%arg0: i32, %arg1: i32, %arg2: i32) -> (i32, i32) {
    %c0_i32 = arith.constant 0 : i32
    return %arg0, %arg1 : i32, i32
  }
}

module attributes {stable_mosaic.version = 11 : i64} {
  func.func @_gemm_kernel(%arg0: i32, %arg1: i32, %arg2: i32, %arg3: memref<2x512xbf16, #tpu.memory_space<vmem>>, %arg4: memref<512x256xbf16, #tpu.memory_space<vmem>>, %arg5: memref<1x256xf32, #tpu.memory_space<vmem>>, %arg6: memref<2x256xbf16, #tpu.memory_space<vmem>>, %arg7: memref<2x256xf32, #tpu.memory_space<vmem>>) attributes {dimension_semantics = [#tpu.dimension_semantics<parallel>, #tpu.dimension_semantics<parallel>, #tpu.dimension_semantics<arbitrary>], iteration_bounds = array<i64: 1, 4, 1>, scalar_prefetch = 0 : i64, scratch_operands = 1 : i64, tpu.core_type = #tpu.core_type<tc>, window_params = [{transform_indices = @transform_0, window_bounds = array<i64: 2, 512>}, {transform_indices = @transform_1, window_bounds = array<i64: 512, 256>}, {transform_indices = @transform_2, window_bounds = array<i64: 1, 256>}, {transform_indices = @transform_3, window_bounds = array<i64: 2, 256>}]} {
    %c0_i32 = arith.constant 0 : i32
    %0 = arith.cmpi eq, %arg2, %c0_i32 : i32
    %1 = arith.extui %0 : i1 to i32
    %c0_i32_0 = arith.constant 0 : i32
    %2 = arith.cmpi ne, %1, %c0_i32_0 : i32
    scf.if %2 {
      %cst_10 = arith.constant 0.000000e+00 : f32
      %12 = vector.broadcast %cst_10 : f32 to vector<2x256xf32>
      %c0_11 = arith.constant 0 : index
      %c0_12 = arith.constant 0 : index
      %13 = vector.load %arg7[%c0_11, %c0_12] : memref<2x256xf32, #tpu.memory_space<vmem>>, vector<2x256xf32>
      tpu.vector_store %arg7[%c0_11, %c0_12], %12 {strides = array<i32>} : memref<2x256xf32, #tpu.memory_space<vmem>>, vector<2x256xf32>,
    } else {
    }
    %c0 = arith.constant 0 : index
    %c0_1 = arith.constant 0 : index
    %3 = vector.load %arg7[%c0, %c0_1] : memref<2x256xf32, #tpu.memory_space<vmem>>, vector<2x256xf32>
    %c0_2 = arith.constant 0 : index
    %c0_3 = arith.constant 0 : index
    %4 = vector.load %arg3[%c0_2, %c0_3] : memref<2x512xbf16, #tpu.memory_space<vmem>>, vector<2x512xbf16>
    %c0_4 = arith.constant 0 : index
    %c0_5 = arith.constant 0 : index
    %5 = vector.load %arg4[%c0_4, %c0_5] : memref<512x256xbf16, #tpu.memory_space<vmem>>, vector<512x256xbf16>
    %cst = arith.constant dense<0.000000e+00> : vector<2x256xf32>
    %6 = tpu.matmul %4, %5, %cst {dimension_numbers = #tpu.dot_dimension_numbers<[1], [0], [0], [1], [0, 0, 1, 1], [], []>} : vector<2x512xbf16>, vector<512x256xbf16>, vector<2x256xf32> -> vector<2x256xf32>
    %7 = arith.addf %3, %6 : vector<2x256xf32>
    %c0_6 = arith.constant 0 : index
    %c0_7 = arith.constant 0 : index
    %8 = vector.load %arg7[%c0_6, %c0_7] : memref<2x256xf32, #tpu.memory_space<vmem>>, vector<2x256xf32>
    tpu.vector_store %arg7[%c0_6, %c0_7], %7 {strides = array<i32>} : memref<2x256xf32, #tpu.memory_space<vmem>>, vector<2x256xf32>,
    %c0_i32_8 = arith.constant 0 : i32
    %9 = arith.cmpi eq, %arg2, %c0_i32_8 : i32
    %10 = arith.extui %9 : i1 to i32
    %c0_i32_9 = arith.constant 0 : i32
    %11 = arith.cmpi ne, %10, %c0_i32_9 : i32
    scf.if %11 {
      %c0_10 = arith.constant 0 : index
      %c0_11 = arith.constant 0 : index
      %12 = vector.load %arg7[%c0_10, %c0_11] : memref<2x256xf32, #tpu.memory_space<vmem>>, vector<2x256xf32>
      %c0_12 = arith.constant 0 : index
      %c0_13 = arith.constant 0 : index
      %13 = vector.load %arg5[%c0_12, %c0_13] : memref<1x256xf32, #tpu.memory_space<vmem>>, vector<1x256xf32>
      %14 = vector.broadcast %13 : vector<1x256xf32> to vector<2x256xf32>
      %15 = arith.addf %12, %14 : vector<2x256xf32>
      %cst_14 = arith.constant 0.000000e+00 : f32
      %16 = vector.broadcast %cst_14 : f32 to vector<2x256xf32>
      %17 = arith.maximumf %15, %16 : vector<2x256xf32>
      %18 = arith.truncf %17 : vector<2x256xf32> to vector<2x256xbf16>
      %c0_15 = arith.constant 0 : index
      %c0_16 = arith.constant 0 : index
      %19 = vector.load %arg6[%c0_15, %c0_16] : memref<2x256xbf16, #tpu.memory_space<vmem>>, vector<2x256xbf16>
      tpu.vector_store %arg6[%c0_15, %c0_16], %18 {strides = array<i32>} : memref<2x256xbf16, #tpu.memory_space<vmem>>, vector<2x256xbf16>,
    } else {
    }
    return
  }
  func.func @transform_0(%arg0: i32, %arg1: i32, %arg2: i32) -> (i32, i32) {
    %c0_i32 = arith.constant 0 : i32
    return %arg0, %arg2 : i32, i32
  }
  func.func @transform_1(%arg0: i32, %arg1: i32, %arg2: i32) -> (i32, i32) {
    %c0_i32 = arith.constant 0 : i32
    return %arg2, %arg1 : i32, i32
  }
  func.func @transform_2(%arg0: i32, %arg1: i32, %arg2: i32) -> (i32, i32) {
    %c0_i32 = arith.constant 0 : i32
    %c0_i32_0 = arith.constant 0 : i32
    return %c0_i32, %arg1 : i32, i32
  }
  func.func @transform_3(%arg0: i32, %arg1: i32, %arg2: i32) -> (i32, i32) {
    %c0_i32 = arith.constant 0 : i32
    return %arg0, %arg1 : i32, i32
  }
}

module attributes {stable_mosaic.version = 11 : i64} {
  func.func @_tap_conv_kernel(%arg0: i32, %arg1: memref<36x8x128xbf16, #tpu.memory_space<vmem>>, %arg2: memref<36x128x128xbf16, #tpu.memory_space<vmem>>, %arg3: memref<1x128xf32, #tpu.memory_space<vmem>>, %arg4: memref<8x128xbf16, #tpu.memory_space<vmem>>) attributes {dimension_semantics = [#tpu.dimension_semantics<parallel>], iteration_bounds = array<i64: 1>, scalar_prefetch = 0 : i64, scratch_operands = 0 : i64, tpu.core_type = #tpu.core_type<tc>, window_params = [{transform_indices = @transform_0, window_bounds = array<i64: 36, 8, 128>}, {pipeline_mode = #tpu.pipeline_mode<synchronous>, transform_indices = @transform_1, window_bounds = array<i64: 36, 128, 128>}, {pipeline_mode = #tpu.pipeline_mode<synchronous>, transform_indices = @transform_2, window_bounds = array<i64: 1, 128>}, {transform_indices = @transform_3, window_bounds = array<i64: 8, 128>}]} {
    %c0 = arith.constant 0 : index
    %c0_0 = arith.constant 0 : index
    %c0_1 = arith.constant 0 : index
    %0 = vector.load %arg1[%c0, %c0_0, %c0_1] : memref<36x8x128xbf16, #tpu.memory_space<vmem>>, vector<1x8x128xbf16>
    %1 = vector.shape_cast %0 : vector<1x8x128xbf16> to vector<8x128xbf16>
    %c0_2 = arith.constant 0 : index
    %c0_3 = arith.constant 0 : index
    %c0_4 = arith.constant 0 : index
    %2 = vector.load %arg2[%c0_2, %c0_3, %c0_4] : memref<36x128x128xbf16, #tpu.memory_space<vmem>>, vector<1x128x128xbf16>
    %3 = vector.shape_cast %2 : vector<1x128x128xbf16> to vector<128x128xbf16>
    %cst = arith.constant dense<0.000000e+00> : vector<8x128xf32>
    %4 = tpu.matmul %1, %3, %cst {dimension_numbers = #tpu.dot_dimension_numbers<[1], [0], [0], [1], [0, 0, 1, 1], [], []>} : vector<8x128xbf16>, vector<128x128xbf16>, vector<8x128xf32> -> vector<8x128xf32>
    %c1 = arith.constant 1 : index
    %c0_5 = arith.constant 0 : index
    %c0_6 = arith.constant 0 : index
    %5 = vector.load %arg1[%c1, %c0_5, %c0_6] : memref<36x8x128xbf16, #tpu.memory_space<vmem>>, vector<1x8x128xbf16>
    %6 = vector.shape_cast %5 : vector<1x8x128xbf16> to vector<8x128xbf16>
    %c1_7 = arith.constant 1 : index
    %c0_8 = arith.constant 0 : index
    %c0_9 = arith.constant 0 : index
    %7 = vector.load %arg2[%c1_7, %c0_8, %c0_9] : memref<36x128x128xbf16, #tpu.memory_space<vmem>>, vector<1x128x128xbf16>
    %8 = vector.shape_cast %7 : vector<1x128x128xbf16> to vector<128x128xbf16>
    %cst_10 = arith.constant dense<0.000000e+00> : vector<8x128xf32>
    %9 = tpu.matmul %6, %8, %cst_10 {dimension_numbers = #tpu.dot_dimension_numbers<[1], [0], [0], [1], [0, 0, 1, 1], [], []>} : vector<8x128xbf16>, vector<128x128xbf16>, vector<8x128xf32> -> vector<8x128xf32>
    %10 = arith.addf %4, %9 : vector<8x128xf32>
    %c2 = arith.constant 2 : index
    %c0_11 = arith.constant 0 : index
    %c0_12 = arith.constant 0 : index
    %11 = vector.load %arg1[%c2, %c0_11, %c0_12] : memref<36x8x128xbf16, #tpu.memory_space<vmem>>, vector<1x8x128xbf16>
    %12 = vector.shape_cast %11 : vector<1x8x128xbf16> to vector<8x128xbf16>
    %c2_13 = arith.constant 2 : index
    %c0_14 = arith.constant 0 : index
    %c0_15 = arith.constant 0 : index
    %13 = vector.load %arg2[%c2_13, %c0_14, %c0_15] : memref<36x128x128xbf16, #tpu.memory_space<vmem>>, vector<1x128x128xbf16>
    %14 = vector.shape_cast %13 : vector<1x128x128xbf16> to vector<128x128xbf16>
    %cst_16 = arith.constant dense<0.000000e+00> : vector<8x128xf32>
    %15 = tpu.matmul %12, %14, %cst_16 {dimension_numbers = #tpu.dot_dimension_numbers<[1], [0], [0], [1], [0, 0, 1, 1], [], []>} : vector<8x128xbf16>, vector<128x128xbf16>, vector<8x128xf32> -> vector<8x128xf32>
    %16 = arith.addf %10, %15 : vector<8x128xf32>
    %c3 = arith.constant 3 : index
    %c0_17 = arith.constant 0 : index
    %c0_18 = arith.constant 0 : index
    %17 = vector.load %arg1[%c3, %c0_17, %c0_18] : memref<36x8x128xbf16, #tpu.memory_space<vmem>>, vector<1x8x128xbf16>
    %18 = vector.shape_cast %17 : vector<1x8x128xbf16> to vector<8x128xbf16>
    %c3_19 = arith.constant 3 : index
    %c0_20 = arith.constant 0 : index
    %c0_21 = arith.constant 0 : index
    %19 = vector.load %arg2[%c3_19, %c0_20, %c0_21] : memref<36x128x128xbf16, #tpu.memory_space<vmem>>, vector<1x128x128xbf16>
    %20 = vector.shape_cast %19 : vector<1x128x128xbf16> to vector<128x128xbf16>
    %cst_22 = arith.constant dense<0.000000e+00> : vector<8x128xf32>
    %21 = tpu.matmul %18, %20, %cst_22 {dimension_numbers = #tpu.dot_dimension_numbers<[1], [0], [0], [1], [0, 0, 1, 1], [], []>} : vector<8x128xbf16>, vector<128x128xbf16>, vector<8x128xf32> -> vector<8x128xf32>
    %22 = arith.addf %16, %21 : vector<8x128xf32>
    %c4 = arith.constant 4 : index
    %c0_23 = arith.constant 0 : index
    %c0_24 = arith.constant 0 : index
    %23 = vector.load %arg1[%c4, %c0_23, %c0_24] : memref<36x8x128xbf16, #tpu.memory_space<vmem>>, vector<1x8x128xbf16>
    %24 = vector.shape_cast %23 : vector<1x8x128xbf16> to vector<8x128xbf16>
    %c4_25 = arith.constant 4 : index
    %c0_26 = arith.constant 0 : index
    %c0_27 = arith.constant 0 : index
    %25 = vector.load %arg2[%c4_25, %c0_26, %c0_27] : memref<36x128x128xbf16, #tpu.memory_space<vmem>>, vector<1x128x128xbf16>
    %26 = vector.shape_cast %25 : vector<1x128x128xbf16> to vector<128x128xbf16>
    %cst_28 = arith.constant dense<0.000000e+00> : vector<8x128xf32>
    %27 = tpu.matmul %24, %26, %cst_28 {dimension_numbers = #tpu.dot_dimension_numbers<[1], [0], [0], [1], [0, 0, 1, 1], [], []>} : vector<8x128xbf16>, vector<128x128xbf16>, vector<8x128xf32> -> vector<8x128xf32>
    %28 = arith.addf %22, %27 : vector<8x128xf32>
    %c5 = arith.constant 5 : index
    %c0_29 = arith.constant 0 : index
    %c0_30 = arith.constant 0 : index
    %29 = vector.load %arg1[%c5, %c0_29, %c0_30] : memref<36x8x128xbf16, #tpu.memory_space<vmem>>, vector<1x8x128xbf16>
    %30 = vector.shape_cast %29 : vector<1x8x128xbf16> to vector<8x128xbf16>
    %c5_31 = arith.constant 5 : index
    %c0_32 = arith.constant 0 : index
    %c0_33 = arith.constant 0 : index
    %31 = vector.load %arg2[%c5_31, %c0_32, %c0_33] : memref<36x128x128xbf16, #tpu.memory_space<vmem>>, vector<1x128x128xbf16>
    %32 = vector.shape_cast %31 : vector<1x128x128xbf16> to vector<128x128xbf16>
    %cst_34 = arith.constant dense<0.000000e+00> : vector<8x128xf32>
    %33 = tpu.matmul %30, %32, %cst_34 {dimension_numbers = #tpu.dot_dimension_numbers<[1], [0], [0], [1], [0, 0, 1, 1], [], []>} : vector<8x128xbf16>, vector<128x128xbf16>, vector<8x128xf32> -> vector<8x128xf32>
    %34 = arith.addf %28, %33 : vector<8x128xf32>
    %c6 = arith.constant 6 : index
    %c0_35 = arith.constant 0 : index
    %c0_36 = arith.constant 0 : index
    %35 = vector.load %arg1[%c6, %c0_35, %c0_36] : memref<36x8x128xbf16, #tpu.memory_space<vmem>>, vector<1x8x128xbf16>
    %36 = vector.shape_cast %35 : vector<1x8x128xbf16> to vector<8x128xbf16>
    %c6_37 = arith.constant 6 : index
    %c0_38 = arith.constant 0 : index
    %c0_39 = arith.constant 0 : index
    %37 = vector.load %arg2[%c6_37, %c0_38, %c0_39] : memref<36x128x128xbf16, #tpu.memory_space<vmem>>, vector<1x128x128xbf16>
    %38 = vector.shape_cast %37 : vector<1x128x128xbf16> to vector<128x128xbf16>
    %cst_40 = arith.constant dense<0.000000e+00> : vector<8x128xf32>
    %39 = tpu.matmul %36, %38, %cst_40 {dimension_numbers = #tpu.dot_dimension_numbers<[1], [0], [0], [1], [0, 0, 1, 1], [], []>} : vector<8x128xbf16>, vector<128x128xbf16>, vector<8x128xf32> -> vector<8x128xf32>
    %40 = arith.addf %34, %39 : vector<8x128xf32>
    %c7 = arith.constant 7 : index
    %c0_41 = arith.constant 0 : index
    %c0_42 = arith.constant 0 : index
    %41 = vector.load %arg1[%c7, %c0_41, %c0_42] : memref<36x8x128xbf16, #tpu.memory_space<vmem>>, vector<1x8x128xbf16>
    %42 = vector.shape_cast %41 : vector<1x8x128xbf16> to vector<8x128xbf16>
    %c7_43 = arith.constant 7 : index
    %c0_44 = arith.constant 0 : index
    %c0_45 = arith.constant 0 : index
    %43 = vector.load %arg2[%c7_43, %c0_44, %c0_45] : memref<36x128x128xbf16, #tpu.memory_space<vmem>>, vector<1x128x128xbf16>
    %44 = vector.shape_cast %43 : vector<1x128x128xbf16> to vector<128x128xbf16>
    %cst_46 = arith.constant dense<0.000000e+00> : vector<8x128xf32>
    %45 = tpu.matmul %42, %44, %cst_46 {dimension_numbers = #tpu.dot_dimension_numbers<[1], [0], [0], [1], [0, 0, 1, 1], [], []>} : vector<8x128xbf16>, vector<128x128xbf16>, vector<8x128xf32> -> vector<8x128xf32>
    %46 = arith.addf %40, %45 : vector<8x128xf32>
    %c8 = arith.constant 8 : index
    %c0_47 = arith.constant 0 : index
    %c0_48 = arith.constant 0 : index
    %47 = vector.load %arg1[%c8, %c0_47, %c0_48] : memref<36x8x128xbf16, #tpu.memory_space<vmem>>, vector<1x8x128xbf16>
    %48 = vector.shape_cast %47 : vector<1x8x128xbf16> to vector<8x128xbf16>
    %c8_49 = arith.constant 8 : index
    %c0_50 = arith.constant 0 : index
    %c0_51 = arith.constant 0 : index
    %49 = vector.load %arg2[%c8_49, %c0_50, %c0_51] : memref<36x128x128xbf16, #tpu.memory_space<vmem>>, vector<1x128x128xbf16>
    %50 = vector.shape_cast %49 : vector<1x128x128xbf16> to vector<128x128xbf16>
    %cst_52 = arith.constant dense<0.000000e+00> : vector<8x128xf32>
    %51 = tpu.matmul %48, %50, %cst_52 {dimension_numbers = #tpu.dot_dimension_numbers<[1], [0], [0], [1], [0, 0, 1, 1], [], []>} : vector<8x128xbf16>, vector<128x128xbf16>, vector<8x128xf32> -> vector<8x128xf32>
    %52 = arith.addf %46, %51 : vector<8x128xf32>
    %c9 = arith.constant 9 : index
    %c0_53 = arith.constant 0 : index
    %c0_54 = arith.constant 0 : index
    %53 = vector.load %arg1[%c9, %c0_53, %c0_54] : memref<36x8x128xbf16, #tpu.memory_space<vmem>>, vector<1x8x128xbf16>
    %54 = vector.shape_cast %53 : vector<1x8x128xbf16> to vector<8x128xbf16>
    %c9_55 = arith.constant 9 : index
    %c0_56 = arith.constant 0 : index
    %c0_57 = arith.constant 0 : index
    %55 = vector.load %arg2[%c9_55, %c0_56, %c0_57] : memref<36x128x128xbf16, #tpu.memory_space<vmem>>, vector<1x128x128xbf16>
    %56 = vector.shape_cast %55 : vector<1x128x128xbf16> to vector<128x128xbf16>
    %cst_58 = arith.constant dense<0.000000e+00> : vector<8x128xf32>
    %57 = tpu.matmul %54, %56, %cst_58 {dimension_numbers = #tpu.dot_dimension_numbers<[1], [0], [0], [1], [0, 0, 1, 1], [], []>} : vector<8x128xbf16>, vector<128x128xbf16>, vector<8x128xf32> -> vector<8x128xf32>
    %58 = arith.addf %52, %57 : vector<8x128xf32>
    %c10 = arith.constant 10 : index
    %c0_59 = arith.constant 0 : index
    %c0_60 = arith.constant 0 : index
    %59 = vector.load %arg1[%c10, %c0_59, %c0_60] : memref<36x8x128xbf16, #tpu.memory_space<vmem>>, vector<1x8x128xbf16>
    %60 = vector.shape_cast %59 : vector<1x8x128xbf16> to vector<8x128xbf16>
    %c10_61 = arith.constant 10 : index
    %c0_62 = arith.constant 0 : index
    %c0_63 = arith.constant 0 : index
    %61 = vector.load %arg2[%c10_61, %c0_62, %c0_63] : memref<36x128x128xbf16, #tpu.memory_space<vmem>>, vector<1x128x128xbf16>
    %62 = vector.shape_cast %61 : vector<1x128x128xbf16> to vector<128x128xbf16>
    %cst_64 = arith.constant dense<0.000000e+00> : vector<8x128xf32>
    %63 = tpu.matmul %60, %62, %cst_64 {dimension_numbers = #tpu.dot_dimension_numbers<[1], [0], [0], [1], [0, 0, 1, 1], [], []>} : vector<8x128xbf16>, vector<128x128xbf16>, vector<8x128xf32> -> vector<8x128xf32>
    %64 = arith.addf %58, %63 : vector<8x128xf32>
    %c11 = arith.constant 11 : index
    %c0_65 = arith.constant 0 : index
    %c0_66 = arith.constant 0 : index
    %65 = vector.load %arg1[%c11, %c0_65, %c0_66] : memref<36x8x128xbf16, #tpu.memory_space<vmem>>, vector<1x8x128xbf16>
    %66 = vector.shape_cast %65 : vector<1x8x128xbf16> to vector<8x128xbf16>
    %c11_67 = arith.constant 11 : index
    %c0_68 = arith.constant 0 : index
    %c0_69 = arith.constant 0 : index
    %67 = vector.load %arg2[%c11_67, %c0_68, %c0_69] : memref<36x128x128xbf16, #tpu.memory_space<vmem>>, vector<1x128x128xbf16>
    %68 = vector.shape_cast %67 : vector<1x128x128xbf16> to vector<128x128xbf16>
    %cst_70 = arith.constant dense<0.000000e+00> : vector<8x128xf32>
    %69 = tpu.matmul %66, %68, %cst_70 {dimension_numbers = #tpu.dot_dimension_numbers<[1], [0], [0], [1], [0, 0, 1, 1], [], []>} : vector<8x128xbf16>, vector<128x128xbf16>, vector<8x128xf32> -> vector<8x128xf32>
    %70 = arith.addf %64, %69 : vector<8x128xf32>
    %c12 = arith.constant 12 : index
    %c0_71 = arith.constant 0 : index
    %c0_72 = arith.constant 0 : index
    %71 = vector.load %arg1[%c12, %c0_71, %c0_72] : memref<36x8x128xbf16, #tpu.memory_space<vmem>>, vector<1x8x128xbf16>
    %72 = vector.shape_cast %71 : vector<1x8x128xbf16> to vector<8x128xbf16>
    %c12_73 = arith.constant 12 : index
    %c0_74 = arith.constant 0 : index
    %c0_75 = arith.constant 0 : index
    %73 = vector.load %arg2[%c12_73, %c0_74, %c0_75] : memref<36x128x128xbf16, #tpu.memory_space<vmem>>, vector<1x128x128xbf16>
    %74 = vector.shape_cast %73 : vector<1x128x128xbf16> to vector<128x128xbf16>
    %cst_76 = arith.constant dense<0.000000e+00> : vector<8x128xf32>
    %75 = tpu.matmul %72, %74, %cst_76 {dimension_numbers = #tpu.dot_dimension_numbers<[1], [0], [0], [1], [0, 0, 1, 1], [], []>} : vector<8x128xbf16>, vector<128x128xbf16>, vector<8x128xf32> -> vector<8x128xf32>
    %76 = arith.addf %70, %75 : vector<8x128xf32>
    %c13 = arith.constant 13 : index
    %c0_77 = arith.constant 0 : index
    %c0_78 = arith.constant 0 : index
    %77 = vector.load %arg1[%c13, %c0_77, %c0_78] : memref<36x8x128xbf16, #tpu.memory_space<vmem>>, vector<1x8x128xbf16>
    %78 = vector.shape_cast %77 : vector<1x8x128xbf16> to vector<8x128xbf16>
    %c13_79 = arith.constant 13 : index
    %c0_80 = arith.constant 0 : index
    %c0_81 = arith.constant 0 : index
    %79 = vector.load %arg2[%c13_79, %c0_80, %c0_81] : memref<36x128x128xbf16, #tpu.memory_space<vmem>>, vector<1x128x128xbf16>
    %80 = vector.shape_cast %79 : vector<1x128x128xbf16> to vector<128x128xbf16>
    %cst_82 = arith.constant dense<0.000000e+00> : vector<8x128xf32>
    %81 = tpu.matmul %78, %80, %cst_82 {dimension_numbers = #tpu.dot_dimension_numbers<[1], [0], [0], [1], [0, 0, 1, 1], [], []>} : vector<8x128xbf16>, vector<128x128xbf16>, vector<8x128xf32> -> vector<8x128xf32>
    %82 = arith.addf %76, %81 : vector<8x128xf32>
    %c14 = arith.constant 14 : index
    %c0_83 = arith.constant 0 : index
    %c0_84 = arith.constant 0 : index
    %83 = vector.load %arg1[%c14, %c0_83, %c0_84] : memref<36x8x128xbf16, #tpu.memory_space<vmem>>, vector<1x8x128xbf16>
    %84 = vector.shape_cast %83 : vector<1x8x128xbf16> to vector<8x128xbf16>
    %c14_85 = arith.constant 14 : index
    %c0_86 = arith.constant 0 : index
    %c0_87 = arith.constant 0 : index
    %85 = vector.load %arg2[%c14_85, %c0_86, %c0_87] : memref<36x128x128xbf16, #tpu.memory_space<vmem>>, vector<1x128x128xbf16>
    %86 = vector.shape_cast %85 : vector<1x128x128xbf16> to vector<128x128xbf16>
    %cst_88 = arith.constant dense<0.000000e+00> : vector<8x128xf32>
    %87 = tpu.matmul %84, %86, %cst_88 {dimension_numbers = #tpu.dot_dimension_numbers<[1], [0], [0], [1], [0, 0, 1, 1], [], []>} : vector<8x128xbf16>, vector<128x128xbf16>, vector<8x128xf32> -> vector<8x128xf32>
    %88 = arith.addf %82, %87 : vector<8x128xf32>
    %c15 = arith.constant 15 : index
    %c0_89 = arith.constant 0 : index
    %c0_90 = arith.constant 0 : index
    %89 = vector.load %arg1[%c15, %c0_89, %c0_90] : memref<36x8x128xbf16, #tpu.memory_space<vmem>>, vector<1x8x128xbf16>
    %90 = vector.shape_cast %89 : vector<1x8x128xbf16> to vector<8x128xbf16>
    %c15_91 = arith.constant 15 : index
    %c0_92 = arith.constant 0 : index
    %c0_93 = arith.constant 0 : index
    %91 = vector.load %arg2[%c15_91, %c0_92, %c0_93] : memref<36x128x128xbf16, #tpu.memory_space<vmem>>, vector<1x128x128xbf16>
    %92 = vector.shape_cast %91 : vector<1x128x128xbf16> to vector<128x128xbf16>
    %cst_94 = arith.constant dense<0.000000e+00> : vector<8x128xf32>
    %93 = tpu.matmul %90, %92, %cst_94 {dimension_numbers = #tpu.dot_dimension_numbers<[1], [0], [0], [1], [0, 0, 1, 1], [], []>} : vector<8x128xbf16>, vector<128x128xbf16>, vector<8x128xf32> -> vector<8x128xf32>
    %94 = arith.addf %88, %93 : vector<8x128xf32>
    %c16 = arith.constant 16 : index
    %c0_95 = arith.constant 0 : index
    %c0_96 = arith.constant 0 : index
    %95 = vector.load %arg1[%c16, %c0_95, %c0_96] : memref<36x8x128xbf16, #tpu.memory_space<vmem>>, vector<1x8x128xbf16>
    %96 = vector.shape_cast %95 : vector<1x8x128xbf16> to vector<8x128xbf16>
    %c16_97 = arith.constant 16 : index
    %c0_98 = arith.constant 0 : index
    %c0_99 = arith.constant 0 : index
    %97 = vector.load %arg2[%c16_97, %c0_98, %c0_99] : memref<36x128x128xbf16, #tpu.memory_space<vmem>>, vector<1x128x128xbf16>
    %98 = vector.shape_cast %97 : vector<1x128x128xbf16> to vector<128x128xbf16>
    %cst_100 = arith.constant dense<0.000000e+00> : vector<8x128xf32>
    %99 = tpu.matmul %96, %98, %cst_100 {dimension_numbers = #tpu.dot_dimension_numbers<[1], [0], [0], [1], [0, 0, 1, 1], [], []>} : vector<8x128xbf16>, vector<128x128xbf16>, vector<8x128xf32> -> vector<8x128xf32>
    %100 = arith.addf %94, %99 : vector<8x128xf32>
    %c17 = arith.constant 17 : index
    %c0_101 = arith.constant 0 : index
    %c0_102 = arith.constant 0 : index
    %101 = vector.load %arg1[%c17, %c0_101, %c0_102] : memref<36x8x128xbf16, #tpu.memory_space<vmem>>, vector<1x8x128xbf16>
    %102 = vector.shape_cast %101 : vector<1x8x128xbf16> to vector<8x128xbf16>
    %c17_103 = arith.constant 17 : index
    %c0_104 = arith.constant 0 : index
    %c0_105 = arith.constant 0 : index
    %103 = vector.load %arg2[%c17_103, %c0_104, %c0_105] : memref<36x128x128xbf16, #tpu.memory_space<vmem>>, vector<1x128x128xbf16>
    %104 = vector.shape_cast %103 : vector<1x128x128xbf16> to vector<128x128xbf16>
    %cst_106 = arith.constant dense<0.000000e+00> : vector<8x128xf32>
    %105 = tpu.matmul %102, %104, %cst_106 {dimension_numbers = #tpu.dot_dimension_numbers<[1], [0], [0], [1], [0, 0, 1, 1], [], []>} : vector<8x128xbf16>, vector<128x128xbf16>, vector<8x128xf32> -> vector<8x128xf32>
    %106 = arith.addf %100, %105 : vector<8x128xf32>
    %c18 = arith.constant 18 : index
    %c0_107 = arith.constant 0 : index
    %c0_108 = arith.constant 0 : index
    %107 = vector.load %arg1[%c18, %c0_107, %c0_108] : memref<36x8x128xbf16, #tpu.memory_space<vmem>>, vector<1x8x128xbf16>
    %108 = vector.shape_cast %107 : vector<1x8x128xbf16> to vector<8x128xbf16>
    %c18_109 = arith.constant 18 : index
    %c0_110 = arith.constant 0 : index
    %c0_111 = arith.constant 0 : index
    %109 = vector.load %arg2[%c18_109, %c0_110, %c0_111] : memref<36x128x128xbf16, #tpu.memory_space<vmem>>, vector<1x128x128xbf16>
    %110 = vector.shape_cast %109 : vector<1x128x128xbf16> to vector<128x128xbf16>
    %cst_112 = arith.constant dense<0.000000e+00> : vector<8x128xf32>
    %111 = tpu.matmul %108, %110, %cst_112 {dimension_numbers = #tpu.dot_dimension_numbers<[1], [0], [0], [1], [0, 0, 1, 1], [], []>} : vector<8x128xbf16>, vector<128x128xbf16>, vector<8x128xf32> -> vector<8x128xf32>
    %112 = arith.addf %106, %111 : vector<8x128xf32>
    %c19 = arith.constant 19 : index
    %c0_113 = arith.constant 0 : index
    %c0_114 = arith.constant 0 : index
    %113 = vector.load %arg1[%c19, %c0_113, %c0_114] : memref<36x8x128xbf16, #tpu.memory_space<vmem>>, vector<1x8x128xbf16>
    %114 = vector.shape_cast %113 : vector<1x8x128xbf16> to vector<8x128xbf16>
    %c19_115 = arith.constant 19 : index
    %c0_116 = arith.constant 0 : index
    %c0_117 = arith.constant 0 : index
    %115 = vector.load %arg2[%c19_115, %c0_116, %c0_117] : memref<36x128x128xbf16, #tpu.memory_space<vmem>>, vector<1x128x128xbf16>
    %116 = vector.shape_cast %115 : vector<1x128x128xbf16> to vector<128x128xbf16>
    %cst_118 = arith.constant dense<0.000000e+00> : vector<8x128xf32>
    %117 = tpu.matmul %114, %116, %cst_118 {dimension_numbers = #tpu.dot_dimension_numbers<[1], [0], [0], [1], [0, 0, 1, 1], [], []>} : vector<8x128xbf16>, vector<128x128xbf16>, vector<8x128xf32> -> vector<8x128xf32>
    %118 = arith.addf %112, %117 : vector<8x128xf32>
    %c20 = arith.constant 20 : index
    %c0_119 = arith.constant 0 : index
    %c0_120 = arith.constant 0 : index
    %119 = vector.load %arg1[%c20, %c0_119, %c0_120] : memref<36x8x128xbf16, #tpu.memory_space<vmem>>, vector<1x8x128xbf16>
    %120 = vector.shape_cast %119 : vector<1x8x128xbf16> to vector<8x128xbf16>
    %c20_121 = arith.constant 20 : index
    %c0_122 = arith.constant 0 : index
    %c0_123 = arith.constant 0 : index
    %121 = vector.load %arg2[%c20_121, %c0_122, %c0_123] : memref<36x128x128xbf16, #tpu.memory_space<vmem>>, vector<1x128x128xbf16>
    %122 = vector.shape_cast %121 : vector<1x128x128xbf16> to vector<128x128xbf16>
    %cst_124 = arith.constant dense<0.000000e+00> : vector<8x128xf32>
    %123 = tpu.matmul %120, %122, %cst_124 {dimension_numbers = #tpu.dot_dimension_numbers<[1], [0], [0], [1], [0, 0, 1, 1], [], []>} : vector<8x128xbf16>, vector<128x128xbf16>, vector<8x128xf32> -> vector<8x128xf32>
    %124 = arith.addf %118, %123 : vector<8x128xf32>
    %c21 = arith.constant 21 : index
    %c0_125 = arith.constant 0 : index
    %c0_126 = arith.constant 0 : index
    %125 = vector.load %arg1[%c21, %c0_125, %c0_126] : memref<36x8x128xbf16, #tpu.memory_space<vmem>>, vector<1x8x128xbf16>
    %126 = vector.shape_cast %125 : vector<1x8x128xbf16> to vector<8x128xbf16>
    %c21_127 = arith.constant 21 : index
    %c0_128 = arith.constant 0 : index
    %c0_129 = arith.constant 0 : index
    %127 = vector.load %arg2[%c21_127, %c0_128, %c0_129] : memref<36x128x128xbf16, #tpu.memory_space<vmem>>, vector<1x128x128xbf16>
    %128 = vector.shape_cast %127 : vector<1x128x128xbf16> to vector<128x128xbf16>
    %cst_130 = arith.constant dense<0.000000e+00> : vector<8x128xf32>
    %129 = tpu.matmul %126, %128, %cst_130 {dimension_numbers = #tpu.dot_dimension_numbers<[1], [0], [0], [1], [0, 0, 1, 1], [], []>} : vector<8x128xbf16>, vector<128x128xbf16>, vector<8x128xf32> -> vector<8x128xf32>
    %130 = arith.addf %124, %129 : vector<8x128xf32>
    %c22 = arith.constant 22 : index
    %c0_131 = arith.constant 0 : index
    %c0_132 = arith.constant 0 : index
    %131 = vector.load %arg1[%c22, %c0_131, %c0_132] : memref<36x8x128xbf16, #tpu.memory_space<vmem>>, vector<1x8x128xbf16>
    %132 = vector.shape_cast %131 : vector<1x8x128xbf16> to vector<8x128xbf16>
    %c22_133 = arith.constant 22 : index
    %c0_134 = arith.constant 0 : index
    %c0_135 = arith.constant 0 : index
    %133 = vector.load %arg2[%c22_133, %c0_134, %c0_135] : memref<36x128x128xbf16, #tpu.memory_space<vmem>>, vector<1x128x128xbf16>
    %134 = vector.shape_cast %133 : vector<1x128x128xbf16> to vector<128x128xbf16>
    %cst_136 = arith.constant dense<0.000000e+00> : vector<8x128xf32>
    %135 = tpu.matmul %132, %134, %cst_136 {dimension_numbers = #tpu.dot_dimension_numbers<[1], [0], [0], [1], [0, 0, 1, 1], [], []>} : vector<8x128xbf16>, vector<128x128xbf16>, vector<8x128xf32> -> vector<8x128xf32>
    %136 = arith.addf %130, %135 : vector<8x128xf32>
    %c23 = arith.constant 23 : index
    %c0_137 = arith.constant 0 : index
    %c0_138 = arith.constant 0 : index
    %137 = vector.load %arg1[%c23, %c0_137, %c0_138] : memref<36x8x128xbf16, #tpu.memory_space<vmem>>, vector<1x8x128xbf16>
    %138 = vector.shape_cast %137 : vector<1x8x128xbf16> to vector<8x128xbf16>
    %c23_139 = arith.constant 23 : index
    %c0_140 = arith.constant 0 : index
    %c0_141 = arith.constant 0 : index
    %139 = vector.load %arg2[%c23_139, %c0_140, %c0_141] : memref<36x128x128xbf16, #tpu.memory_space<vmem>>, vector<1x128x128xbf16>
    %140 = vector.shape_cast %139 : vector<1x128x128xbf16> to vector<128x128xbf16>
    %cst_142 = arith.constant dense<0.000000e+00> : vector<8x128xf32>
    %141 = tpu.matmul %138, %140, %cst_142 {dimension_numbers = #tpu.dot_dimension_numbers<[1], [0], [0], [1], [0, 0, 1, 1], [], []>} : vector<8x128xbf16>, vector<128x128xbf16>, vector<8x128xf32> -> vector<8x128xf32>
    %142 = arith.addf %136, %141 : vector<8x128xf32>
    %c24 = arith.constant 24 : index
    %c0_143 = arith.constant 0 : index
    %c0_144 = arith.constant 0 : index
    %143 = vector.load %arg1[%c24, %c0_143, %c0_144] : memref<36x8x128xbf16, #tpu.memory_space<vmem>>, vector<1x8x128xbf16>
    %144 = vector.shape_cast %143 : vector<1x8x128xbf16> to vector<8x128xbf16>
    %c24_145 = arith.constant 24 : index
    %c0_146 = arith.constant 0 : index
    %c0_147 = arith.constant 0 : index
    %145 = vector.load %arg2[%c24_145, %c0_146, %c0_147] : memref<36x128x128xbf16, #tpu.memory_space<vmem>>, vector<1x128x128xbf16>
    %146 = vector.shape_cast %145 : vector<1x128x128xbf16> to vector<128x128xbf16>
    %cst_148 = arith.constant dense<0.000000e+00> : vector<8x128xf32>
    %147 = tpu.matmul %144, %146, %cst_148 {dimension_numbers = #tpu.dot_dimension_numbers<[1], [0], [0], [1], [0, 0, 1, 1], [], []>} : vector<8x128xbf16>, vector<128x128xbf16>, vector<8x128xf32> -> vector<8x128xf32>
    %148 = arith.addf %142, %147 : vector<8x128xf32>
    %c25 = arith.constant 25 : index
    %c0_149 = arith.constant 0 : index
    %c0_150 = arith.constant 0 : index
    %149 = vector.load %arg1[%c25, %c0_149, %c0_150] : memref<36x8x128xbf16, #tpu.memory_space<vmem>>, vector<1x8x128xbf16>
    %150 = vector.shape_cast %149 : vector<1x8x128xbf16> to vector<8x128xbf16>
    %c25_151 = arith.constant 25 : index
    %c0_152 = arith.constant 0 : index
    %c0_153 = arith.constant 0 : index
    %151 = vector.load %arg2[%c25_151, %c0_152, %c0_153] : memref<36x128x128xbf16, #tpu.memory_space<vmem>>, vector<1x128x128xbf16>
    %152 = vector.shape_cast %151 : vector<1x128x128xbf16> to vector<128x128xbf16>
    %cst_154 = arith.constant dense<0.000000e+00> : vector<8x128xf32>
    %153 = tpu.matmul %150, %152, %cst_154 {dimension_numbers = #tpu.dot_dimension_numbers<[1], [0], [0], [1], [0, 0, 1, 1], [], []>} : vector<8x128xbf16>, vector<128x128xbf16>, vector<8x128xf32> -> vector<8x128xf32>
    %154 = arith.addf %148, %153 : vector<8x128xf32>
    %c26 = arith.constant 26 : index
    %c0_155 = arith.constant 0 : index
    %c0_156 = arith.constant 0 : index
    %155 = vector.load %arg1[%c26, %c0_155, %c0_156] : memref<36x8x128xbf16, #tpu.memory_space<vmem>>, vector<1x8x128xbf16>
    %156 = vector.shape_cast %155 : vector<1x8x128xbf16> to vector<8x128xbf16>
    %c26_157 = arith.constant 26 : index
    %c0_158 = arith.constant 0 : index
    %c0_159 = arith.constant 0 : index
    %157 = vector.load %arg2[%c26_157, %c0_158, %c0_159] : memref<36x128x128xbf16, #tpu.memory_space<vmem>>, vector<1x128x128xbf16>
    %158 = vector.shape_cast %157 : vector<1x128x128xbf16> to vector<128x128xbf16>
    %cst_160 = arith.constant dense<0.000000e+00> : vector<8x128xf32>
    %159 = tpu.matmul %156, %158, %cst_160 {dimension_numbers = #tpu.dot_dimension_numbers<[1], [0], [0], [1], [0, 0, 1, 1], [], []>} : vector<8x128xbf16>, vector<128x128xbf16>, vector<8x128xf32> -> vector<8x128xf32>
    %160 = arith.addf %154, %159 : vector<8x128xf32>
    %c27 = arith.constant 27 : index
    %c0_161 = arith.constant 0 : index
    %c0_162 = arith.constant 0 : index
    %161 = vector.load %arg1[%c27, %c0_161, %c0_162] : memref<36x8x128xbf16, #tpu.memory_space<vmem>>, vector<1x8x128xbf16>
    %162 = vector.shape_cast %161 : vector<1x8x128xbf16> to vector<8x128xbf16>
    %c27_163 = arith.constant 27 : index
    %c0_164 = arith.constant 0 : index
    %c0_165 = arith.constant 0 : index
    %163 = vector.load %arg2[%c27_163, %c0_164, %c0_165] : memref<36x128x128xbf16, #tpu.memory_space<vmem>>, vector<1x128x128xbf16>
    %164 = vector.shape_cast %163 : vector<1x128x128xbf16> to vector<128x128xbf16>
    %cst_166 = arith.constant dense<0.000000e+00> : vector<8x128xf32>
    %165 = tpu.matmul %162, %164, %cst_166 {dimension_numbers = #tpu.dot_dimension_numbers<[1], [0], [0], [1], [0, 0, 1, 1], [], []>} : vector<8x128xbf16>, vector<128x128xbf16>, vector<8x128xf32> -> vector<8x128xf32>
    %166 = arith.addf %160, %165 : vector<8x128xf32>
    %c28 = arith.constant 28 : index
    %c0_167 = arith.constant 0 : index
    %c0_168 = arith.constant 0 : index
    %167 = vector.load %arg1[%c28, %c0_167, %c0_168] : memref<36x8x128xbf16, #tpu.memory_space<vmem>>, vector<1x8x128xbf16>
    %168 = vector.shape_cast %167 : vector<1x8x128xbf16> to vector<8x128xbf16>
    %c28_169 = arith.constant 28 : index
    %c0_170 = arith.constant 0 : index
    %c0_171 = arith.constant 0 : index
    %169 = vector.load %arg2[%c28_169, %c0_170, %c0_171] : memref<36x128x128xbf16, #tpu.memory_space<vmem>>, vector<1x128x128xbf16>
    %170 = vector.shape_cast %169 : vector<1x128x128xbf16> to vector<128x128xbf16>
    %cst_172 = arith.constant dense<0.000000e+00> : vector<8x128xf32>
    %171 = tpu.matmul %168, %170, %cst_172 {dimension_numbers = #tpu.dot_dimension_numbers<[1], [0], [0], [1], [0, 0, 1, 1], [], []>} : vector<8x128xbf16>, vector<128x128xbf16>, vector<8x128xf32> -> vector<8x128xf32>
    %172 = arith.addf %166, %171 : vector<8x128xf32>
    %c29 = arith.constant 29 : index
    %c0_173 = arith.constant 0 : index
    %c0_174 = arith.constant 0 : index
    %173 = vector.load %arg1[%c29, %c0_173, %c0_174] : memref<36x8x128xbf16, #tpu.memory_space<vmem>>, vector<1x8x128xbf16>
    %174 = vector.shape_cast %173 : vector<1x8x128xbf16> to vector<8x128xbf16>
    %c29_175 = arith.constant 29 : index
    %c0_176 = arith.constant 0 : index
    %c0_177 = arith.constant 0 : index
    %175 = vector.load %arg2[%c29_175, %c0_176, %c0_177] : memref<36x128x128xbf16, #tpu.memory_space<vmem>>, vector<1x128x128xbf16>
    %176 = vector.shape_cast %175 : vector<1x128x128xbf16> to vector<128x128xbf16>
    %cst_178 = arith.constant dense<0.000000e+00> : vector<8x128xf32>
    %177 = tpu.matmul %174, %176, %cst_178 {dimension_numbers = #tpu.dot_dimension_numbers<[1], [0], [0], [1], [0, 0, 1, 1], [], []>} : vector<8x128xbf16>, vector<128x128xbf16>, vector<8x128xf32> -> vector<8x128xf32>
    %178 = arith.addf %172, %177 : vector<8x128xf32>
    %c30 = arith.constant 30 : index
    %c0_179 = arith.constant 0 : index
    %c0_180 = arith.constant 0 : index
    %179 = vector.load %arg1[%c30, %c0_179, %c0_180] : memref<36x8x128xbf16, #tpu.memory_space<vmem>>, vector<1x8x128xbf16>
    %180 = vector.shape_cast %179 : vector<1x8x128xbf16> to vector<8x128xbf16>
    %c30_181 = arith.constant 30 : index
    %c0_182 = arith.constant 0 : index
    %c0_183 = arith.constant 0 : index
    %181 = vector.load %arg2[%c30_181, %c0_182, %c0_183] : memref<36x128x128xbf16, #tpu.memory_space<vmem>>, vector<1x128x128xbf16>
    %182 = vector.shape_cast %181 : vector<1x128x128xbf16> to vector<128x128xbf16>
    %cst_184 = arith.constant dense<0.000000e+00> : vector<8x128xf32>
    %183 = tpu.matmul %180, %182, %cst_184 {dimension_numbers = #tpu.dot_dimension_numbers<[1], [0], [0], [1], [0, 0, 1, 1], [], []>} : vector<8x128xbf16>, vector<128x128xbf16>, vector<8x128xf32> -> vector<8x128xf32>
    %184 = arith.addf %178, %183 : vector<8x128xf32>
    %c31 = arith.constant 31 : index
    %c0_185 = arith.constant 0 : index
    %c0_186 = arith.constant 0 : index
    %185 = vector.load %arg1[%c31, %c0_185, %c0_186] : memref<36x8x128xbf16, #tpu.memory_space<vmem>>, vector<1x8x128xbf16>
    %186 = vector.shape_cast %185 : vector<1x8x128xbf16> to vector<8x128xbf16>
    %c31_187 = arith.constant 31 : index
    %c0_188 = arith.constant 0 : index
    %c0_189 = arith.constant 0 : index
    %187 = vector.load %arg2[%c31_187, %c0_188, %c0_189] : memref<36x128x128xbf16, #tpu.memory_space<vmem>>, vector<1x128x128xbf16>
    %188 = vector.shape_cast %187 : vector<1x128x128xbf16> to vector<128x128xbf16>
    %cst_190 = arith.constant dense<0.000000e+00> : vector<8x128xf32>
    %189 = tpu.matmul %186, %188, %cst_190 {dimension_numbers = #tpu.dot_dimension_numbers<[1], [0], [0], [1], [0, 0, 1, 1], [], []>} : vector<8x128xbf16>, vector<128x128xbf16>, vector<8x128xf32> -> vector<8x128xf32>
    %190 = arith.addf %184, %189 : vector<8x128xf32>
    %c32 = arith.constant 32 : index
    %c0_191 = arith.constant 0 : index
    %c0_192 = arith.constant 0 : index
    %191 = vector.load %arg1[%c32, %c0_191, %c0_192] : memref<36x8x128xbf16, #tpu.memory_space<vmem>>, vector<1x8x128xbf16>
    %192 = vector.shape_cast %191 : vector<1x8x128xbf16> to vector<8x128xbf16>
    %c32_193 = arith.constant 32 : index
    %c0_194 = arith.constant 0 : index
    %c0_195 = arith.constant 0 : index
    %193 = vector.load %arg2[%c32_193, %c0_194, %c0_195] : memref<36x128x128xbf16, #tpu.memory_space<vmem>>, vector<1x128x128xbf16>
    %194 = vector.shape_cast %193 : vector<1x128x128xbf16> to vector<128x128xbf16>
    %cst_196 = arith.constant dense<0.000000e+00> : vector<8x128xf32>
    %195 = tpu.matmul %192, %194, %cst_196 {dimension_numbers = #tpu.dot_dimension_numbers<[1], [0], [0], [1], [0, 0, 1, 1], [], []>} : vector<8x128xbf16>, vector<128x128xbf16>, vector<8x128xf32> -> vector<8x128xf32>
    %196 = arith.addf %190, %195 : vector<8x128xf32>
    %c33 = arith.constant 33 : index
    %c0_197 = arith.constant 0 : index
    %c0_198 = arith.constant 0 : index
    %197 = vector.load %arg1[%c33, %c0_197, %c0_198] : memref<36x8x128xbf16, #tpu.memory_space<vmem>>, vector<1x8x128xbf16>
    %198 = vector.shape_cast %197 : vector<1x8x128xbf16> to vector<8x128xbf16>
    %c33_199 = arith.constant 33 : index
    %c0_200 = arith.constant 0 : index
    %c0_201 = arith.constant 0 : index
    %199 = vector.load %arg2[%c33_199, %c0_200, %c0_201] : memref<36x128x128xbf16, #tpu.memory_space<vmem>>, vector<1x128x128xbf16>
    %200 = vector.shape_cast %199 : vector<1x128x128xbf16> to vector<128x128xbf16>
    %cst_202 = arith.constant dense<0.000000e+00> : vector<8x128xf32>
    %201 = tpu.matmul %198, %200, %cst_202 {dimension_numbers = #tpu.dot_dimension_numbers<[1], [0], [0], [1], [0, 0, 1, 1], [], []>} : vector<8x128xbf16>, vector<128x128xbf16>, vector<8x128xf32> -> vector<8x128xf32>
    %202 = arith.addf %196, %201 : vector<8x128xf32>
    %c34 = arith.constant 34 : index
    %c0_203 = arith.constant 0 : index
    %c0_204 = arith.constant 0 : index
    %203 = vector.load %arg1[%c34, %c0_203, %c0_204] : memref<36x8x128xbf16, #tpu.memory_space<vmem>>, vector<1x8x128xbf16>
    %204 = vector.shape_cast %203 : vector<1x8x128xbf16> to vector<8x128xbf16>
    %c34_205 = arith.constant 34 : index
    %c0_206 = arith.constant 0 : index
    %c0_207 = arith.constant 0 : index
    %205 = vector.load %arg2[%c34_205, %c0_206, %c0_207] : memref<36x128x128xbf16, #tpu.memory_space<vmem>>, vector<1x128x128xbf16>
    %206 = vector.shape_cast %205 : vector<1x128x128xbf16> to vector<128x128xbf16>
    %cst_208 = arith.constant dense<0.000000e+00> : vector<8x128xf32>
    %207 = tpu.matmul %204, %206, %cst_208 {dimension_numbers = #tpu.dot_dimension_numbers<[1], [0], [0], [1], [0, 0, 1, 1], [], []>} : vector<8x128xbf16>, vector<128x128xbf16>, vector<8x128xf32> -> vector<8x128xf32>
    %208 = arith.addf %202, %207 : vector<8x128xf32>
    %c35 = arith.constant 35 : index
    %c0_209 = arith.constant 0 : index
    %c0_210 = arith.constant 0 : index
    %209 = vector.load %arg1[%c35, %c0_209, %c0_210] : memref<36x8x128xbf16, #tpu.memory_space<vmem>>, vector<1x8x128xbf16>
    %210 = vector.shape_cast %209 : vector<1x8x128xbf16> to vector<8x128xbf16>
    %c35_211 = arith.constant 35 : index
    %c0_212 = arith.constant 0 : index
    %c0_213 = arith.constant 0 : index
    %211 = vector.load %arg2[%c35_211, %c0_212, %c0_213] : memref<36x128x128xbf16, #tpu.memory_space<vmem>>, vector<1x128x128xbf16>
    %212 = vector.shape_cast %211 : vector<1x128x128xbf16> to vector<128x128xbf16>
    %cst_214 = arith.constant dense<0.000000e+00> : vector<8x128xf32>
    %213 = tpu.matmul %210, %212, %cst_214 {dimension_numbers = #tpu.dot_dimension_numbers<[1], [0], [0], [1], [0, 0, 1, 1], [], []>} : vector<8x128xbf16>, vector<128x128xbf16>, vector<8x128xf32> -> vector<8x128xf32>
    %214 = arith.addf %208, %213 : vector<8x128xf32>
    %c0_215 = arith.constant 0 : index
    %c0_216 = arith.constant 0 : index
    %215 = vector.load %arg3[%c0_215, %c0_216] : memref<1x128xf32, #tpu.memory_space<vmem>>, vector<1x128xf32>
    %216 = vector.broadcast %215 : vector<1x128xf32> to vector<8x128xf32>
    %217 = arith.addf %214, %216 : vector<8x128xf32>
    %cst_217 = arith.constant 0.000000e+00 : f32
    %218 = vector.broadcast %cst_217 : f32 to vector<8x128xf32>
    %219 = arith.maximumf %217, %218 : vector<8x128xf32>
    %220 = arith.truncf %219 : vector<8x128xf32> to vector<8x128xbf16>
    %c0_218 = arith.constant 0 : index
    %c0_219 = arith.constant 0 : index
    %221 = vector.load %arg4[%c0_218, %c0_219] : memref<8x128xbf16, #tpu.memory_space<vmem>>, vector<8x128xbf16>
    tpu.vector_store %arg4[%c0_218, %c0_219], %220 {strides = array<i32>} : memref<8x128xbf16, #tpu.memory_space<vmem>>, vector<8x128xbf16>,
    return
  }
  func.func @transform_0(%arg0: i32) -> (i32, i32, i32) {
    %c0_i32 = arith.constant 0 : i32
    %c0_i32_0 = arith.constant 0 : i32
    %c0_i32_1 = arith.constant 0 : i32
    return %c0_i32, %arg0, %c0_i32_0 : i32, i32, i32
  }
  func.func @transform_1(%arg0: i32) -> (i32, i32, i32) {
    %c0_i32 = arith.constant 0 : i32
    %c0_i32_0 = arith.constant 0 : i32
    %c0_i32_1 = arith.constant 0 : i32
    %c0_i32_2 = arith.constant 0 : i32
    return %c0_i32, %c0_i32_0, %c0_i32_1 : i32, i32, i32
  }
  func.func @transform_2(%arg0: i32) -> (i32, i32) {
    %c0_i32 = arith.constant 0 : i32
    %c0_i32_0 = arith.constant 0 : i32
    %c0_i32_1 = arith.constant 0 : i32
    return %c0_i32, %c0_i32_0 : i32, i32
  }
  func.func @transform_3(%arg0: i32) -> (i32, i32) {
    %c0_i32 = arith.constant 0 : i32
    %c0_i32_0 = arith.constant 0 : i32
    return %arg0, %c0_i32 : i32, i32
  }
}

</mosaic_0001>

<llo_original>
// kernel: model_forward.6
$region0: #{model_forward.6}
  #allocation0 [shape = 'u32[]', space=smem, size = 0x4, offset = 0x4, fixed_abs, tag = 'smem constant byte address 0x4 - core index']
  #allocation1 [shape = 'u32[144,128]{1,0:T(1,128)}', space=vmem, size = 0x12000, scoped, tag = 'internal scratch']
  %s0 = inlined_call_operand.vmem [shape: bf16[9,128,4], index: 0, kind: input, shape index: {}]
  %s1 = inlined_call_operand.vmem [shape: bf16[9,4,64], index: 1, kind: input, shape index: {}]
  %s2 = inlined_call_operand.vmem [shape: f32[1,64], index: 2, kind: input, shape index: {}]
  %s3 = inlined_call_operand.vmem [shape: bf16[128,64], index: 3, kind: output, shape index: {}]
  %s4 = sld [smem:[#allocation0]]
  $region22: #{model_forward.6} parent=0
    _
  %s6 = ssub.s32 1, %s4
  %s7 = scalar_select 0, %s6, %s4
  // Predicated region
  $region2: #{model_forward.6} parent=0 // pred_check
    _
  $region3: #{model_forward.6} parent=0 // pred_check_branch
    %9 = sbr.rel (0) target = $region5
  $region4: #{model_forward.6} parent=0 // pred_region
    _
  $region5: #{model_forward.6} parent=0 // pred_fallthru
    _
  // Predicated region
  $region6: #{model_forward.6} parent=0 // pred_check
    _
  $region7: #{model_forward.6} parent=0 // pred_check_branch
    %11 = sbr.rel (0) target = $region9
  $region8: #{model_forward.6} parent=0 // pred_region
    _
  $region9: #{model_forward.6} parent=0 // pred_fallthru
    _
  // Predicated region
  $region10: #{model_forward.6} parent=0 // pred_check
    _
  $region11: #{model_forward.6} parent=0 // pred_check_branch
    %13 = sbr.rel (0) target = $region13
  $region12: #{model_forward.6} parent=0 // pred_region
    _
  $region13: #{model_forward.6} parent=0 // pred_fallthru
    _
  %v15 = vld [vmem:[%s0] sm:$0xf]
  %v16 = vld [vmem:[%s0 + $0x4] sm:$0xf]
  %v17 = vld [vmem:[%s0 + $0x8] sm:$0xf]
  %v18 = vld [vmem:[%s0 + $0xc] sm:$0xf]
  %v19 = vld [vmem:[%s0 + $0x10] sm:$0xf]
  %v20 = vld [vmem:[%s0 + $0x14] sm:$0xf]
  %v21 = vld [vmem:[%s0 + $0x18] sm:$0xf]
  %v22 = vld [vmem:[%s0 + $0x1c] sm:$0xf]
  %v23 = vld [vmem:[%s0 + $0x20] sm:$0xf]
  %v24 = vld [vmem:[%s0 + $0x24] sm:$0xf]
  %v25 = vld [vmem:[%s0 + $0x28] sm:$0xf]
  %v26 = vld [vmem:[%s0 + $0x2c] sm:$0xf]
  %v27 = vld [vmem:[%s0 + $0x30] sm:$0xf]
  %v28 = vld [vmem:[%s0 + $0x34] sm:$0xf]
  %v29 = vld [vmem:[%s0 + $0x38] sm:$0xf]
  %v30 = vld [vmem:[%s0 + $0x3c] sm:$0xf]
  %v31 = vld [vmem:[%s1] sm:$0x3]
  %s32 = scalar_lea.vmem %s0, 64
  %v33 = vld [vmem:[%s32] sm:$0xf]
  %v34 = vld [vmem:[%s32 + $0x4] sm:$0xf]
  %v35 = vld [vmem:[%s32 + $0x8] sm:$0xf]
  %v36 = vld [vmem:[%s32 + $0xc] sm:$0xf]
  %v37 = vld [vmem:[%s32 + $0x10] sm:$0xf]
  %v38 = vld [vmem:[%s32 + $0x14] sm:$0xf]
  %v39 = vld [vmem:[%s32 + $0x18] sm:$0xf]
  %v40 = vld [vmem:[%s32 + $0x1c] sm:$0xf]
  %v41 = vld [vmem:[%s32 + $0x20] sm:$0xf]
  %v42 = vld [vmem:[%s32 + $0x24] sm:$0xf]
  %v43 = vld [vmem:[%s32 + $0x28] sm:$0xf]
  %v44 = vld [vmem:[%s32 + $0x2c] sm:$0xf]
  %v45 = vld [vmem:[%s32 + $0x30] sm:$0xf]
  %v46 = vld [vmem:[%s32 + $0x34] sm:$0xf]
  %v47 = vld [vmem:[%s32 + $0x38] sm:$0xf]
  %v48 = vld [vmem:[%s32 + $0x3c] sm:$0xf]
  %s49 = scalar_lea.vmem %s1, 2
  %v50 = vld [vmem:[%s49] sm:$0x3]
  %v67 = vunpack.c.l.b16 %v33
  %v68 = vunpack.c.l.b16 %v34
  %v69 = vunpack.c.l.b16 %v35
  %v70 = vunpack.c.l.b16 %v36
  %v71 = vunpack.c.l.b16 %v37
  %v72 = vunpack.c.l.b16 %v38
  %v73 = vunpack.c.l.b16 %v39
  %v74 = vunpack.c.l.b16 %v40
  %v75 = vunpack.c.l.b16 %v41
  %v76 = vunpack.c.l.b16 %v42
  %v77 = vunpack.c.l.b16 %v43
  %v78 = vunpack.c.l.b16 %v44
  %v79 = vunpack.c.l.b16 %v45
  %v80 = vunpack.c.l.b16 %v46
  %v81 = vunpack.c.l.b16 %v47
  %v82 = vunpack.c.l.b16 %v48
  %v83 = vpack.c.b16 %v68, %v67
  %v84 = vpack.c.b16 %v70, %v69
  %v85 = vpack.c.b16 %v72, %v71
  %v86 = vpack.c.b16 %v74, %v73
  %v87 = vpack.c.b16 %v76, %v75
  %v88 = vpack.c.b16 %v78, %v77
  %v89 = vpack.c.b16 %v80, %v79
  %v90 = vpack.c.b16 %v82, %v81
  %vm91 = vcmask 31744
  %v93 = vsel %vm91, %v83, 0
  %v96 = vsel %vm91, %v84, 0
  %v99 = vsel %vm91, %v85, 0
  %v102 = vsel %vm91, %v86, 0
  %v105 = vsel %vm91, %v87, 0
  %v108 = vsel %vm91, %v88, 0
  %v111 = vsel %vm91, %v89, 0
  %v114 = vsel %vm91, %v90, 0
  %vm116 = vcmask 1041408
  %v118 = vsel %vm116, %v50, 0
  %120 = vmatprep.subr.bf16.mxu0 0
  %121 = vmatpush1.bf16.msra.mxu0 0
  %122 = vmatprep.subr.bf16.mxu0 0
  %123 = vmatpush1.bf16.msra.mxu0 0
  %124 = vmatprep.subr.bf16.mxu0 0
  %125 = vmatpush1.bf16.msra.mxu0 0
  %126 = vmatprep.subr.bf16.mxu0 0
  %127 = vmatpush1.bf16.msra.mxu0 0
  %128 = vmatprep.subr.bf16.mxu0 0
  %129 = vmatpush1.bf16.msra.mxu0 0
  %130 = vmatprep.subr.bf16.mxu0 0
  %131 = vmatpush1.bf16.msra.mxu0 0
  %132 = vmatprep.subr.bf16.mxu0 0
  %133 = vmatpush1.bf16.msra.mxu0 0
  %134 = vmatprep.subr.bf16.mxu0 0
  %135 = vmatpush1.bf16.msra.mxu0 %v118
  %136 = vmatprep.subr.bf16.mxu0 0
  %137 = vmatpush2.bf16.msra.mxu0 0
  %138 = vmatprep.subr.bf16.mxu0 0
  %139 = vmatpush2.bf16.msra.mxu0 0
  %140 = vmatprep.subr.bf16.mxu0 0
  %141 = vmatpush2.bf16.msra.mxu0 0
  %142 = vmatprep.subr.bf16.mxu0 0
  %143 = vmatpush2.bf16.msra.mxu0 0
  %144 = vmatprep.subr.bf16.mxu0 0
  %145 = vmatpush2.bf16.msra.mxu0 0
  %146 = vmatprep.subr.bf16.mxu0 0
  %147 = vmatpush2.bf16.msra.mxu0 0
  %148 = vmatprep.subr.bf16.mxu0 0
  %149 = vmatpush2.bf16.msra.mxu0 0
  %150 = vmatprep.subr.bf16.mxu0 0
  %151 = vmatpush2.bf16.msra.mxu0 0
  %152 = vmatprep.mubr.bf16.mxu0 0
  %153 = vmatmul.mubr.bf16.gmra.mxu0 %v93
  %v154 = vpop.f32.mrf.mxu0
  %v155 = vadd.f32 0.0, %v154
  %v156 = vpop.f32.mrf.mxu0
  %v157 = vpop.f32.mrf.mxu0
  %v158 = vadd.f32 0.0, %v157
  %v159 = vpop.f32.mrf.mxu0
  %160 = vmatprep.mubr.bf16.mxu0 0
  %161 = vmatmul.mubr.bf16.gmra.mxu0 %v96
  %v162 = vpop.f32.mrf.mxu0
  %v163 = vadd.f32 0.0, %v162
  %v164 = vpop.f32.mrf.mxu0
  %v165 = vpop.f32.mrf.mxu0
  %v166 = vadd.f32 0.0, %v165
  %v167 = vpop.f32.mrf.mxu0
  %168 = vmatprep.mubr.bf16.mxu0 0
  %169 = vmatmul.mubr.bf16.gmra.mxu0 %v99
  %v170 = vpop.f32.mrf.mxu0
  %v171 = vadd.f32 0.0, %v170
  %v172 = vpop.f32.mrf.mxu0
  %v173 = vpop.f32.mrf.mxu0
  %v174 = vadd.f32 0.0, %v173
  %v175 = vpop.f32.mrf.mxu0
  %176 = vmatprep.mubr.bf16.mxu0 0
  %177 = vmatmul.mubr.bf16.gmra.mxu0 %v102
  %v178 = vpop.f32.mrf.mxu0
  %v179 = vadd.f32 0.0, %v178
  %v180 = vpop.f32.mrf.mxu0
  %v181 = vpop.f32.mrf.mxu0
  %v182 = vadd.f32 0.0, %v181
  %v183 = vpop.f32.mrf.mxu0
  %184 = vmatprep.mubr.bf16.mxu0 0
  %185 = vmatmul.mubr.bf16.gmra.mxu0 %v105
  %v186 = vpop.f32.mrf.mxu0
  %v187 = vadd.f32 0.0, %v186
  %v188 = vpop.f32.mrf.mxu0
  %v189 = vpop.f32.mrf.mxu0
  %v190 = vadd.f32 0.0, %v189
  %v191 = vpop.f32.mrf.mxu0
  %192 = vmatprep.mubr.bf16.mxu0 0
  %193 = vmatmul.mubr.bf16.gmra.mxu0 %v108
  %v194 = vpop.f32.mrf.mxu0
  %v195 = vadd.f32 0.0, %v194
  %v196 = vpop.f32.mrf.mxu0
  %v197 = vpop.f32.mrf.mxu0
  %v198 = vadd.f32 0.0, %v197
  %v199 = vpop.f32.mrf.mxu0
  %200 = vmatprep.mubr.bf16.mxu0 0
  %201 = vmatmul.mubr.bf16.gmra.mxu0 %v111
  %v202 = vpop.f32.mrf.mxu0
  %v203 = vadd.f32 0.0, %v202
  %v204 = vpop.f32.mrf.mxu0
  %v205 = vpop.f32.mrf.mxu0
  %v206 = vadd.f32 0.0, %v205
  %v207 = vpop.f32.mrf.mxu0
  %208 = vmatprep.mubr.bf16.mxu0 0
  %209 = vmatmul.mubr.bf16.gmra.mxu0 %v114
  %v210 = vpop.f32.mrf.mxu0
  %v211 = vadd.f32 0.0, %v210
  %v212 = vpop.f32.mrf.mxu0
  %v213 = vpop.f32.mrf.mxu0
  %v214 = vadd.f32 0.0, %v213
  %v215 = vpop.f32.mrf.mxu0
  %216 = vdwg.mxu0
  %v233 = vunpack.c.l.b16 %v15
  %v234 = vunpack.c.l.b16 %v16
  %v235 = vunpack.c.l.b16 %v17
  %v236 = vunpack.c.l.b16 %v18
  %v237 = vunpack.c.l.b16 %v19
  %v238 = vunpack.c.l.b16 %v20
  %v239 = vunpack.c.l.b16 %v21
  %v240 = vunpack.c.l.b16 %v22
  %v241 = vunpack.c.l.b16 %v23
  %v242 = vunpack.c.l.b16 %v24
  %v243 = vunpack.c.l.b16 %v25
  %v244 = vunpack.c.l.b16 %v26
  %v245 = vunpack.c.l.b16 %v27
  %v246 = vunpack.c.l.b16 %v28
  %v247 = vunpack.c.l.b16 %v29
  %v248 = vunpack.c.l.b16 %v30
  %v249 = vpack.c.b16 %v234, %v233
  %v250 = vpack.c.b16 %v236, %v235
  %v251 = vpack.c.b16 %v238, %v237
  %v252 = vpack.c.b16 %v240, %v239
  %v253 = vpack.c.b16 %v242, %v241
  %v254 = vpack.c.b16 %v244, %v243
  %v255 = vpack.c.b16 %v246, %v245
  %v256 = vpack.c.b16 %v248, %v247
  %v258 = vsel %vm91, %v249, 0
  %v261 = vsel %vm91, %v250, 0
  %v264 = vsel %vm91, %v251, 0
  %v267 = vsel %vm91, %v252, 0
  %v270 = vsel %vm91, %v253, 0
  %v273 = vsel %vm91, %v254, 0
  %v276 = vsel %vm91, %v255, 0
  %v279 = vsel %vm91, %v256, 0
  %v282 = vsel %vm116, %v31, 0
  %284 = vmatprep.subr.bf16.mxu0 0
  %285 = vmatpush1.bf16.msra.mxu0 0
  %286 = vmatprep.subr.bf16.mxu0 0
  %287 = vmatpush1.bf16.msra.mxu0 0
  %288 = vmatprep.subr.bf16.mxu0 0
  %289 = vmatpush1.bf16.msra.mxu0 0
  %290 = vmatprep.subr.bf16.mxu0 0
  %291 = vmatpush1.bf16.msra.mxu0 0
  %292 = vmatprep.subr.bf16.mxu0 0
  %293 = vmatpush1.bf16.msra.mxu0 0
  %294 = vmatprep.subr.bf16.mxu0 0
  %295 = vmatpush1.bf16.msra.mxu0 0
  %296 = vmatprep.subr.bf16.mxu0 0
  %297 = vmatpush1.bf16.msra.mxu0 0
  %298 = vmatprep.subr.bf16.mxu0 0
  %299 = vmatpush1.bf16.msra.mxu0 %v282
  %300 = vmatprep.subr.bf16.mxu0 0
  %301 = vmatpush2.bf16.msra.mxu0 0
  %302 = vmatprep.subr.bf16.mxu0 0
  %303 = vmatpush2.bf16.msra.mxu0 0
  %304 = vmatprep.subr.bf16.mxu0 0
  %305 = vmatpush2.bf16.msra.mxu0 0
  %306 = vmatprep.subr.bf16.mxu0 0
  %307 = vmatpush2.bf16.msra.mxu0 0
  %308 = vmatprep.subr.bf16.mxu0 0
  %309 = vmatpush2.bf16.msra.mxu0 0
  %310 = vmatprep.subr.bf16.mxu0 0
  %311 = vmatpush2.bf16.msra.mxu0 0
  %312 = vmatprep.subr.bf16.mxu0 0
  %313 = vmatpush2.bf16.msra.mxu0 0
  %314 = vmatprep.subr.bf16.mxu0 0
  %315 = vmatpush2.bf16.msra.mxu0 0
  %316 = vmatprep.mubr.bf16.mxu0 0
  %317 = vmatmul.mubr.bf16.gmra.mxu0 %v258
  %v318 = vpop.f32.mrf.mxu0
  %v319 = vadd.f32 %v155, %v318
  %v320 = vpop.f32.mrf.mxu0
  %v321 = vpop.f32.mrf.mxu0
  %v322 = vadd.f32 %v158, %v321
  %v323 = vpop.f32.mrf.mxu0
  %324 = vmatprep.mubr.bf16.mxu0 0
  %325 = vmatmul.mubr.bf16.gmra.mxu0 %v261
  %v326 = vpop.f32.mrf.mxu0
  %v327 = vadd.f32 %v163, %v326
  %v328 = vpop.f32.mrf.mxu0
  %v329 = vpop.f32.mrf.mxu0
  %v330 = vadd.f32 %v166, %v329
  %v331 = vpop.f32.mrf.mxu0
  %332 = vmatprep.mubr.bf16.mxu0 0
  %333 = vmatmul.mubr.bf16.gmra.mxu0 %v264
  %v334 = vpop.f32.mrf.mxu0
  %v335 = vadd.f32 %v171, %v334
  %v336 = vpop.f32.mrf.mxu0
  %v337 = vpop.f32.mrf.mxu0
  %v338 = vadd.f32 %v174, %v337
  %v339 = vpop.f32.mrf.mxu0
  %340 = vmatprep.mubr.bf16.mxu0 0
  %341 = vmatmul.mubr.bf16.gmra.mxu0 %v267
  %v342 = vpop.f32.mrf.mxu0
  %v343 = vadd.f32 %v179, %v342
  %v344 = vpop.f32.mrf.mxu0
  %v345 = vpop.f32.mrf.mxu0
  %v346 = vadd.f32 %v182, %v345
  %v347 = vpop.f32.mrf.mxu0
  %348 = vmatprep.mubr.bf16.mxu0 0
  %349 = vmatmul.mubr.bf16.gmra.mxu0 %v270
  %v350 = vpop.f32.mrf.mxu0
  %v351 = vadd.f32 %v187, %v350
  %v352 = vpop.f32.mrf.mxu0
  %v353 = vpop.f32.mrf.mxu0
  %v354 = vadd.f32 %v190, %v353
  %v355 = vpop.f32.mrf.mxu0
  %356 = vmatprep.mubr.bf16.mxu0 0
  %357 = vmatmul.mubr.bf16.gmra.mxu0 %v273
  %v358 = vpop.f32.mrf.mxu0
  %v359 = vadd.f32 %v195, %v358
  %v360 = vpop.f32.mrf.mxu0
  %v361 = vpop.f32.mrf.mxu0
  %v362 = vadd.f32 %v198, %v361
  %v363 = vpop.f32.mrf.mxu0
  %364 = vmatprep.mubr.bf16.mxu0 0
  %365 = vmatmul.mubr.bf16.gmra.mxu0 %v276
  %v366 = vpop.f32.mrf.mxu0
  %v367 = vadd.f32 %v203, %v366
  %v368 = vpop.f32.mrf.mxu0
  %v369 = vpop.f32.mrf.mxu0
  %v370 = vadd.f32 %v206, %v369
  %v371 = vpop.f32.mrf.mxu0
  %372 = vmatprep.mubr.bf16.mxu0 0
  %373 = vmatmul.mubr.bf16.gmra.mxu0 %v279
  %v374 = vpop.f32.mrf.mxu0
  %v375 = vadd.f32 %v211, %v374
  %v376 = vpop.f32.mrf.mxu0
  %v377 = vpop.f32.mrf.mxu0
  %v378 = vadd.f32 %v214, %v377
  %v379 = vpop.f32.mrf.mxu0
  %380 = vdwg.mxu0
  %s381 = scalar_lea.vmem %s0, 128
  %v382 = vld [vmem:[%s381] sm:$0xf]
  %v383 = vld [vmem:[%s381 + $0x4] sm:$0xf]
  %v384 = vld [vmem:[%s381 + $0x8] sm:$0xf]
  %v385 = vld [vmem:[%s381 + $0xc] sm:$0xf]
  %v386 = vld [vmem:[%s381 + $0x10] sm:$0xf]
  %v387 = vld [vmem:[%s381 + $0x14] sm:$0xf]
  %v388 = vld [vmem:[%s381 + $0x18] sm:$0xf]
  %v389 = vld [vmem:[%s381 + $0x1c] sm:$0xf]
  %v390 = vld [vmem:[%s381 + $0x20] sm:$0xf]
  %v391 = vld [vmem:[%s381 + $0x24] sm:$0xf]
  %v392 = vld [vmem:[%s381 + $0x28] sm:$0xf]
  %v393 = vld [vmem:[%s381 + $0x2c] sm:$0xf]
  %v394 = vld [vmem:[%s381 + $0x30] sm:$0xf]
  %v395 = vld [vmem:[%s381 + $0x34] sm:$0xf]
  %v396 = vld [vmem:[%s381 + $0x38] sm:$0xf]
  %v397 = vld [vmem:[%s381 + $0x3c] sm:$0xf]
  %s398 = scalar_lea.vmem %s1, 4
  %v399 = vld [vmem:[%s398] sm:$0x3]
  %v416 = vunpack.c.l.b16 %v382
  %v417 = vunpack.c.l.b16 %v383
  %v418 = vunpack.c.l.b16 %v384
  %v419 = vunpack.c.l.b16 %v385
  %v420 = vunpack.c.l.b16 %v386
  %v421 = vunpack.c.l.b16 %v387
  %v422 = vunpack.c.l.b16 %v388
  %v423 = vunpack.c.l.b16 %v389
  %v424 = vunpack.c.l.b16 %v390
  %v425 = vunpack.c.l.b16 %v391
  %v426 = vunpack.c.l.b16 %v392
  %v427 = vunpack.c.l.b16 %v393
  %v428 = vunpack.c.l.b16 %v394
  %v429 = vunpack.c.l.b16 %v395
  %v430 = vunpack.c.l.b16 %v396
  %v431 = vunpack.c.l.b16 %v397
  %v432 = vpack.c.b16 %v417, %v416
  %v433 = vpack.c.b16 %v419, %v418
  %v434 = vpack.c.b16 %v421, %v420
  %v435 = vpack.c.b16 %v423, %v422
  %v436 = vpack.c.b16 %v425, %v424
  %v437 = vpack.c.b16 %v427, %v426
  %v438 = vpack.c.b16 %v429, %v428
  %v439 = vpack.c.b16 %v431, %v430
  %v441 = vsel %vm91, %v432, 0
  %v444 = vsel %vm91, %v433, 0
  %v447 = vsel %vm91, %v434, 0
  %v450 = vsel %vm91, %v435, 0
  %v453 = vsel %vm91, %v436, 0
  %v456 = vsel %vm91, %v437, 0
  %v459 = vsel %vm91, %v438, 0
  %v462 = vsel %vm91, %v439, 0
  %v465 = vsel %vm116, %v399, 0
  %467 = vmatprep.subr.bf16.mxu0 0
  %468 = vmatpush1.bf16.msra.mxu0 0
  %469 = vmatprep.subr.bf16.mxu0 0
  %470 = vmatpush1.bf16.msra.mxu0 0
  %471 = vmatprep.subr.bf16.mxu0 0
  %472 = vmatpush1.bf16.msra.mxu0 0
  %473 = vmatprep.subr.bf16.mxu0 0
  %474 = vmatpush1.bf16.msra.mxu0 0
  %475 = vmatprep.subr.bf16.mxu0 0
  %476 = vmatpush1.bf16.msra.mxu0 0
  %477 = vmatprep.subr.bf16.mxu0 0
  %478 = vmatpush1.bf16.msra.mxu0 0
  %479 = vmatprep.subr.bf16.mxu0 0
  %480 = vmatpush1.bf16.msra.mxu0 0
  %481 = vmatprep.subr.bf16.mxu0 0
  %482 = vmatpush1.bf16.msra.mxu0 %v465
  %483 = vmatprep.subr.bf16.mxu0 0
  %484 = vmatpush2.bf16.msra.mxu0 0
  %485 = vmatprep.subr.bf16.mxu0 0
  %486 = vmatpush2.bf16.msra.mxu0 0
  %487 = vmatprep.subr.bf16.mxu0 0
  %488 = vmatpush2.bf16.msra.mxu0 0
  %489 = vmatprep.subr.bf16.mxu0 0
  %490 = vmatpush2.bf16.msra.mxu0 0
  %491 = vmatprep.subr.bf16.mxu0 0
  %492 = vmatpush2.bf16.msra.mxu0 0
  %493 = vmatprep.subr.bf16.mxu0 0
  %494 = vmatpush2.bf16.msra.mxu0 0
  %495 = vmatprep.subr.bf16.mxu0 0
  %496 = vmatpush2.bf16.msra.mxu0 0
  %497 = vmatprep.subr.bf16.mxu0 0
  %498 = vmatpush2.bf16.msra.mxu0 0
  %499 = vmatprep.mubr.bf16.mxu0 0
  %500 = vmatmul.mubr.bf16.gmra.mxu0 %v441
  %v501 = vpop.f32.mrf.mxu0
  %v502 = vadd.f32 0.0, %v501
  %v503 = vpop.f32.mrf.mxu0
  %v504 = vpop.f32.mrf.mxu0
  %v505 = vadd.f32 0.0, %v504
  %v506 = vpop.f32.mrf.mxu0
  %507 = vmatprep.mubr.bf16.mxu0 0
  %508 = vmatmul.mubr.bf16.gmra.mxu0 %v444
  %v509 = vpop.f32.mrf.mxu0
  %v510 = vadd.f32 0.0, %v509
  %v511 = vpop.f32.mrf.mxu0
  %v512 = vpop.f32.mrf.mxu0
  %v513 = vadd.f32 0.0, %v512
  %v514 = vpop.f32.mrf.mxu0
  %515 = vmatprep.mubr.bf16.mxu0 0
  %516 = vmatmul.mubr.bf16.gmra.mxu0 %v447
  %v517 = vpop.f32.mrf.mxu0
  %v518 = vadd.f32 0.0, %v517
  %v519 = vpop.f32.mrf.mxu0
  %v520 = vpop.f32.mrf.mxu0
  %v521 = vadd.f32 0.0, %v520
  %v522 = vpop.f32.mrf.mxu0
  %523 = vmatprep.mubr.bf16.mxu0 0
  %524 = vmatmul.mubr.bf16.gmra.mxu0 %v450
  %v525 = vpop.f32.mrf.mxu0
  %v526 = vadd.f32 0.0, %v525
  %v527 = vpop.f32.mrf.mxu0
  %v528 = vpop.f32.mrf.mxu0
  %v529 = vadd.f32 0.0, %v528
  %v530 = vpop.f32.mrf.mxu0
  %531 = vmatprep.mubr.bf16.mxu0 0
  %532 = vmatmul.mubr.bf16.gmra.mxu0 %v453
  %v533 = vpop.f32.mrf.mxu0
  %v534 = vadd.f32 0.0, %v533
  %v535 = vpop.f32.mrf.mxu0
  %v536 = vpop.f32.mrf.mxu0
  %v537 = vadd.f32 0.0, %v536
  %v538 = vpop.f32.mrf.mxu0
  %539 = vmatprep.mubr.bf16.mxu0 0
  %540 = vmatmul.mubr.bf16.gmra.mxu0 %v456
  %v541 = vpop.f32.mrf.mxu0
  %v542 = vadd.f32 0.0, %v541
  %v543 = vpop.f32.mrf.mxu0
  %v544 = vpop.f32.mrf.mxu0
  %v545 = vadd.f32 0.0, %v544
  %v546 = vpop.f32.mrf.mxu0
  %547 = vmatprep.mubr.bf16.mxu0 0
  %548 = vmatmul.mubr.bf16.gmra.mxu0 %v459
  %v549 = vpop.f32.mrf.mxu0
  %v550 = vadd.f32 0.0, %v549
  %v551 = vpop.f32.mrf.mxu0
  %v552 = vpop.f32.mrf.mxu0
  %v553 = vadd.f32 0.0, %v552
  %v554 = vpop.f32.mrf.mxu0
  %555 = vmatprep.mubr.bf16.mxu0 0
  %556 = vmatmul.mubr.bf16.gmra.mxu0 %v462
  %v557 = vpop.f32.mrf.mxu0
  %v558 = vadd.f32 0.0, %v557
  %v559 = vpop.f32.mrf.mxu0
  %v560 = vpop.f32.mrf.mxu0
  %v561 = vadd.f32 0.0, %v560
  %v562 = vpop.f32.mrf.mxu0
  %563 = vdwg.mxu0
  %v564 = vadd.f32 %v319, %v502
  %v565 = vadd.f32 %v322, %v505
  %v566 = vadd.f32 %v327, %v510
  %v567 = vadd.f32 %v330, %v513
  %v568 = vadd.f32 %v335, %v518
  %v569 = vadd.f32 %v338, %v521
  %v570 = vadd.f32 %v343, %v526
  %v571 = vadd.f32 %v346, %v529
  %v572 = vadd.f32 %v351, %v534
  %v573 = vadd.f32 %v354, %v537
  %v574 = vadd.f32 %v359, %v542
  %v575 = vadd.f32 %v362, %v545
  %v576 = vadd.f32 %v367, %v550
  %v577 = vadd.f32 %v370, %v553
  %v578 = vadd.f32 %v375, %v558
  %v579 = vadd.f32 %v378, %v561
  %s580 = scalar_lea.vmem %s0, 192
  %v581 = vld [vmem:[%s580] sm:$0xf]
  %v582 = vld [vmem:[%s580 + $0x4] sm:$0xf]
  %v583 = vld [vmem:[%s580 + $0x8] sm:$0xf]
  %v584 = vld [vmem:[%s580 + $0xc] sm:$0xf]
  %v585 = vld [vmem:[%s580 + $0x10] sm:$0xf]
  %v586 = vld [vmem:[%s580 + $0x14] sm:$0xf]
  %v587 = vld [vmem:[%s580 + $0x18] sm:$0xf]
  %v588 = vld [vmem:[%s580 + $0x1c] sm:$0xf]
  %v589 = vld [vmem:[%s580 + $0x20] sm:$0xf]
  %v590 = vld [vmem:[%s580 + $0x24] sm:$0xf]
  %v591 = vld [vmem:[%s580 + $0x28] sm:$0xf]
  %v592 = vld [vmem:[%s580 + $0x2c] sm:$0xf]
  %v593 = vld [vmem:[%s580 + $0x30] sm:$0xf]
  %v594 = vld [vmem:[%s580 + $0x34] sm:$0xf]
  %v595 = vld [vmem:[%s580 + $0x38] sm:$0xf]
  %v596 = vld [vmem:[%s580 + $0x3c] sm:$0xf]
  %s597 = scalar_lea.vmem %s1, 6
  %v598 = vld [vmem:[%s597] sm:$0x3]
  %v615 = vunpack.c.l.b16 %v581
  %v616 = vunpack.c.l.b16 %v582
  %v617 = vunpack.c.l.b16 %v583
  %v618 = vunpack.c.l.b16 %v584
  %v619 = vunpack.c.l.b16 %v585
  %v620 = vunpack.c.l.b16 %v586
  %v621 = vunpack.c.l.b16 %v587
  %v622 = vunpack.c.l.b16 %v588
  %v623 = vunpack.c.l.b16 %v589
  %v624 = vunpack.c.l.b16 %v590
  %v625 = vunpack.c.l.b16 %v591
  %v626 = vunpack.c.l.b16 %v592
  %v627 = vunpack.c.l.b16 %v593
  %v628 = vunpack.c.l.b16 %v594
  %v629 = vunpack.c.l.b16 %v595
  %v630 = vunpack.c.l.b16 %v596
  %v631 = vpack.c.b16 %v616, %v615
  %v632 = vpack.c.b16 %v618, %v617
  %v633 = vpack.c.b16 %v620, %v619
  %v634 = vpack.c.b16 %v622, %v621
  %v635 = vpack.c.b16 %v624, %v623
  %v636 = vpack.c.b16 %v626, %v625
  %v637 = vpack.c.b16 %v628, %v627
  %v638 = vpack.c.b16 %v630, %v629
  %v640 = vsel %vm91, %v631, 0
  %v643 = vsel %vm91, %v632, 0
  %v646 = vsel %vm91, %v633, 0
  %v649 = vsel %vm91, %v634, 0
  %v652 = vsel %vm91, %v635, 0
  %v655 = vsel %vm91, %v636, 0
  %v658 = vsel %vm91, %v637, 0
  %v661 = vsel %vm91, %v638, 0
  %v664 = vsel %vm116, %v598, 0
  %666 = vmatprep.subr.bf16.mxu0 0
  %667 = vmatpush1.bf16.msra.mxu0 0
  %668 = vmatprep.subr.bf16.mxu0 0
  %669 = vmatpush1.bf16.msra.mxu0 0
  %670 = vmatprep.subr.bf16.mxu0 0
  %671 = vmatpush1.bf16.msra.mxu0 0
  %672 = vmatprep.subr.bf16.mxu0 0
  %673 = vmatpush1.bf16.msra.mxu0 0
  %674 = vmatprep.subr.bf16.mxu0 0
  %675 = vmatpush1.bf16.msra.mxu0 0
  %676 = vmatprep.subr.bf16.mxu0 0
  %677 = vmatpush1.bf16.msra.mxu0 0
  %678 = vmatprep.subr.bf16.mxu0 0
  %679 = vmatpush1.bf16.msra.mxu0 0
  %680 = vmatprep.subr.bf16.mxu0 0
  %681 = vmatpush1.bf16.msra.mxu0 %v664
  %682 = vmatprep.subr.bf16.mxu0 0
  %683 = vmatpush2.bf16.msra.mxu0 0
  %684 = vmatprep.subr.bf16.mxu0 0
  %685 = vmatpush2.bf16.msra.mxu0 0
  %686 = vmatprep.subr.bf16.mxu0 0
  %687 = vmatpush2.bf16.msra.mxu0 0
  %688 = vmatprep.subr.bf16.mxu0 0
  %689 = vmatpush2.bf16.msra.mxu0 0
  %690 = vmatprep.subr.bf16.mxu0 0
  %691 = vmatpush2.bf16.msra.mxu0 0
  %692 = vmatprep.subr.bf16.mxu0 0
  %693 = vmatpush2.bf16.msra.mxu0 0
  %694 = vmatprep.subr.bf16.mxu0 0
  %695 = vmatpush2.bf16.msra.mxu0 0
  %696 = vmatprep.subr.bf16.mxu0 0
  %697 = vmatpush2.bf16.msra.mxu0 0
  %698 = vmatprep.mubr.bf16.mxu0 0
  %699 = vmatmul.mubr.bf16.gmra.mxu0 %v640
  %v700 = vpop.f32.mrf.mxu0
  %v701 = vadd.f32 0.0, %v700
  %v702 = vpop.f32.mrf.mxu0
  %v703 = vpop.f32.mrf.mxu0
  %v704 = vadd.f32 0.0, %v703
  %v705 = vpop.f32.mrf.mxu0
  %706 = vmatprep.mubr.bf16.mxu0 0
  %707 = vmatmul.mubr.bf16.gmra.mxu0 %v643
  %v708 = vpop.f32.mrf.mxu0
  %v709 = vadd.f32 0.0, %v708
  %v710 = vpop.f32.mrf.mxu0
  %v711 = vpop.f32.mrf.mxu0
  %v712 = vadd.f32 0.0, %v711
  %v713 = vpop.f32.mrf.mxu0
  %714 = vmatprep.mubr.bf16.mxu0 0
  %715 = vmatmul.mubr.bf16.gmra.mxu0 %v646
  %v716 = vpop.f32.mrf.mxu0
  %v717 = vadd.f32 0.0, %v716
  %v718 = vpop.f32.mrf.mxu0
  %v719 = vpop.f32.mrf.mxu0
  %v720 = vadd.f32 0.0, %v719
  %v721 = vpop.f32.mrf.mxu0
  %722 = vmatprep.mubr.bf16.mxu0 0
  %723 = vmatmul.mubr.bf16.gmra.mxu0 %v649
  %v724 = vpop.f32.mrf.mxu0
  %v725 = vadd.f32 0.0, %v724
  %v726 = vpop.f32.mrf.mxu0
  %v727 = vpop.f32.mrf.mxu0
  %v728 = vadd.f32 0.0, %v727
  %v729 = vpop.f32.mrf.mxu0
  %730 = vmatprep.mubr.bf16.mxu0 0
  %731 = vmatmul.mubr.bf16.gmra.mxu0 %v652
  %v732 = vpop.f32.mrf.mxu0
  %v733 = vadd.f32 0.0, %v732
  %v734 = vpop.f32.mrf.mxu0
  %v735 = vpop.f32.mrf.mxu0
  %v736 = vadd.f32 0.0, %v735
  %v737 = vpop.f32.mrf.mxu0
  %738 = vmatprep.mubr.bf16.mxu0 0
  %739 = vmatmul.mubr.bf16.gmra.mxu0 %v655
  %v740 = vpop.f32.mrf.mxu0
  %v741 = vadd.f32 0.0, %v740
  %v742 = vpop.f32.mrf.mxu0
  %v743 = vpop.f32.mrf.mxu0
  %v744 = vadd.f32 0.0, %v743
  %v745 = vpop.f32.mrf.mxu0
  %746 = vmatprep.mubr.bf16.mxu0 0
  %747 = vmatmul.mubr.bf16.gmra.mxu0 %v658
  %v748 = vpop.f32.mrf.mxu0
  %v749 = vadd.f32 0.0, %v748
  %v750 = vpop.f32.mrf.mxu0
  %v751 = vpop.f32.mrf.mxu0
  %v752 = vadd.f32 0.0, %v751
  %v753 = vpop.f32.mrf.mxu0
  %754 = vmatprep.mubr.bf16.mxu0 0
  %755 = vmatmul.mubr.bf16.gmra.mxu0 %v661
  %v756 = vpop.f32.mrf.mxu0
  %v757 = vadd.f32 0.0, %v756
  %v758 = vpop.f32.mrf.mxu0
  %v759 = vpop.f32.mrf.mxu0
  %v760 = vadd.f32 0.0, %v759
  %v761 = vpop.f32.mrf.mxu0
  %762 = vdwg.mxu0
  %v763 = vadd.f32 %v564, %v701
  %v764 = vadd.f32 %v565, %v704
  %v765 = vadd.f32 %v566, %v709
  %v766 = vadd.f32 %v567, %v712
  %v767 = vadd.f32 %v568, %v717
  %v768 = vadd.f32 %v569, %v720
  %v769 = vadd.f32 %v570, %v725
  %v770 = vadd.f32 %v571, %v728
  %v771 = vadd.f32 %v572, %v733
  %v772 = vadd.f32 %v573, %v736
  %v773 = vadd.f32 %v574, %v741
  %v774 = vadd.f32 %v575, %v744
  %v775 = vadd.f32 %v576, %v749
  %v776 = vadd.f32 %v577, %v752
  %v777 = vadd.f32 %v578, %v757
  %v778 = vadd.f32 %v579, %v760
  %s779 = scalar_lea.vmem %s0, 256
  %v780 = vld [vmem:[%s779] sm:$0xf]
  %v781 = vld [vmem:[%s779 + $0x4] sm:$0xf]
  %v782 = vld [vmem:[%s779 + $0x8] sm:$0xf]
  %v783 = vld [vmem:[%s779 + $0xc] sm:$0xf]
  %v784 = vld [vmem:[%s779 + $0x10] sm:$0xf]
  %v785 = vld [vmem:[%s779 + $0x14] sm:$0xf]
  %v786 = vld [vmem:[%s779 + $0x18] sm:$0xf]
  %v787 = vld [vmem:[%s779 + $0x1c] sm:$0xf]
  %v788 = vld [vmem:[%s779 + $0x20] sm:$0xf]
  %v789 = vld [vmem:[%s779 + $0x24] sm:$0xf]
  %v790 = vld [vmem:[%s779 + $0x28] sm:$0xf]
  %v791 = vld [vmem:[%s779 + $0x2c] sm:$0xf]
  %v792 = vld [vmem:[%s779 + $0x30] sm:$0xf]
  %v793 = vld [vmem:[%s779 + $0x34] sm:$0xf]
  %v794 = vld [vmem:[%s779 + $0x38] sm:$0xf]
  %v795 = vld [vmem:[%s779 + $0x3c] sm:$0xf]
  %s796 = scalar_lea.vmem %s1, 8
  %v797 = vld [vmem:[%s796] sm:$0x3]
  %v814 = vunpack.c.l.b16 %v780
  %v815 = vunpack.c.l.b16 %v781
  %v816 = vunpack.c.l.b16 %v782
  %v817 = vunpack.c.l.b16 %v783
  %v818 = vunpack.c.l.b16 %v784
  %v819 = vunpack.c.l.b16 %v785
  %v820 = vunpack.c.l.b16 %v786
  %v821 = vunpack.c.l.b16 %v787
  %v822 = vunpack.c.l.b16 %v788
  %v823 = vunpack.c.l.b16 %v789
  %v824 = vunpack.c.l.b16 %v790
  %v825 = vunpack.c.l.b16 %v791
  %v826 = vunpack.c.l.b16 %v792
  %v827 = vunpack.c.l.b16 %v793
  %v828 = vunpack.c.l.b16 %v794
  %v829 = vunpack.c.l.b16 %v795
  %v830 = vpack.c.b16 %v815, %v814
  %v831 = vpack.c.b16 %v817, %v816
  %v832 = vpack.c.b16 %v819, %v818
  %v833 = vpack.c.b16 %v821, %v820
  %v834 = vpack.c.b16 %v823, %v822
  %v835 = vpack.c.b16 %v825, %v824
  %v836 = vpack.c.b16 %v827, %v826
  %v837 = vpack.c.b16 %v829, %v828
  %v839 = vsel %vm91, %v830, 0
  %v842 = vsel %vm91, %v831, 0
  %v845 = vsel %vm91, %v832, 0
  %v848 = vsel %vm91, %v833, 0
  %v851 = vsel %vm91, %v834, 0
  %v854 = vsel %vm91, %v835, 0
  %v857 = vsel %vm91, %v836, 0
  %v860 = vsel %vm91, %v837, 0
  %v863 = vsel %vm116, %v797, 0
  %865 = vmatprep.subr.bf16.mxu0 0
  %866 = vmatpush1.bf16.msra.mxu0 0
  %867 = vmatprep.subr.bf16.mxu0 0
  %868 = vmatpush1.bf16.msra.mxu0 0
  %869 = vmatprep.subr.bf16.mxu0 0
  %870 = vmatpush1.bf16.msra.mxu0 0
  %871 = vmatprep.subr.bf16.mxu0 0
  %872 = vmatpush1.bf16.msra.mxu0 0
  %873 = vmatprep.subr.bf16.mxu0 0
  %874 = vmatpush1.bf16.msra.mxu0 0
  %875 = vmatprep.subr.bf16.mxu0 0
  %876 = vmatpush1.bf16.msra.mxu0 0
  %877 = vmatprep.subr.bf16.mxu0 0
  %878 = vmatpush1.bf16.msra.mxu0 0
  %879 = vmatprep.subr.bf16.mxu0 0
  %880 = vmatpush1.bf16.msra.mxu0 %v863
  %881 = vmatprep.subr.bf16.mxu0 0
  %882 = vmatpush2.bf16.msra.mxu0 0
  %883 = vmatprep.subr.bf16.mxu0 0
  %884 = vmatpush2.bf16.msra.mxu0 0
  %885 = vmatprep.subr.bf16.mxu0 0
  %886 = vmatpush2.bf16.msra.mxu0 0
  %887 = vmatprep.subr.bf16.mxu0 0
  %888 = vmatpush2.bf16.msra.mxu0 0
  %889 = vmatprep.subr.bf16.mxu0 0
  %890 = vmatpush2.bf16.msra.mxu0 0
  %891 = vmatprep.subr.bf16.mxu0 0
  %892 = vmatpush2.bf16.msra.mxu0 0
  %893 = vmatprep.subr.bf16.mxu0 0
  %894 = vmatpush2.bf16.msra.mxu0 0
  %895 = vmatprep.subr.bf16.mxu0 0
  %896 = vmatpush2.bf16.msra.mxu0 0
  %897 = vmatprep.mubr.bf16.mxu0 0
  %898 = vmatmul.mubr.bf16.gmra.mxu0 %v839
  %v899 = vpop.f32.mrf.mxu0
  %v900 = vadd.f32 0.0, %v899
  %v901 = vpop.f32.mrf.mxu0
  %v902 = vpop.f32.mrf.mxu0
  %v903 = vadd.f32 0.0, %v902
  %v904 = vpop.f32.mrf.mxu0
  %905 = vmatprep.mubr.bf16.mxu0 0
  %906 = vmatmul.mubr.bf16.gmra.mxu0 %v842
  %v907 = vpop.f32.mrf.mxu0
  %v908 = vadd.f32 0.0, %v907
  %v909 = vpop.f32.mrf.mxu0
  %v910 = vpop.f32.mrf.mxu0
  %v911 = vadd.f32 0.0, %v910
  %v912 = vpop.f32.mrf.mxu0
  %913 = vmatprep.mubr.bf16.mxu0 0
  %914 = vmatmul.mubr.bf16.gmra.mxu0 %v845
  %v915 = vpop.f32.mrf.mxu0
  %v916 = vadd.f32 0.0, %v915
  %v917 = vpop.f32.mrf.mxu0
  %v918 = vpop.f32.mrf.mxu0
  %v919 = vadd.f32 0.0, %v918
  %v920 = vpop.f32.mrf.mxu0
  %921 = vmatprep.mubr.bf16.mxu0 0
  %922 = vmatmul.mubr.bf16.gmra.mxu0 %v848
  %v923 = vpop.f32.mrf.mxu0
  %v924 = vadd.f32 0.0, %v923
  %v925 = vpop.f32.mrf.mxu0
  %v926 = vpop.f32.mrf.mxu0
  %v927 = vadd.f32 0.0, %v926
  %v928 = vpop.f32.mrf.mxu0
  %929 = vmatprep.mubr.bf16.mxu0 0
  %930 = vmatmul.mubr.bf16.gmra.mxu0 %v851
  %v931 = vpop.f32.mrf.mxu0
  %v932 = vadd.f32 0.0, %v931
  %v933 = vpop.f32.mrf.mxu0
  %v934 = vpop.f32.mrf.mxu0
  %v935 = vadd.f32 0.0, %v934
  %v936 = vpop.f32.mrf.mxu0
  %937 = vmatprep.mubr.bf16.mxu0 0
  %938 = vmatmul.mubr.bf16.gmra.mxu0 %v854
  %v939 = vpop.f32.mrf.mxu0
  %v940 = vadd.f32 0.0, %v939
  %v941 = vpop.f32.mrf.mxu0
  %v942 = vpop.f32.mrf.mxu0
  %v943 = vadd.f32 0.0, %v942
  %v944 = vpop.f32.mrf.mxu0
  %945 = vmatprep.mubr.bf16.mxu0 0
  %946 = vmatmul.mubr.bf16.gmra.mxu0 %v857
  %v947 = vpop.f32.mrf.mxu0
  %v948 = vadd.f32 0.0, %v947
  %v949 = vpop.f32.mrf.mxu0
  %v950 = vpop.f32.mrf.mxu0
  %v951 = vadd.f32 0.0, %v950
  %v952 = vpop.f32.mrf.mxu0
  %953 = vmatprep.mubr.bf16.mxu0 0
  %954 = vmatmul.mubr.bf16.gmra.mxu0 %v860
  %v955 = vpop.f32.mrf.mxu0
  %v956 = vadd.f32 0.0, %v955
  %v957 = vpop.f32.mrf.mxu0
  %v958 = vpop.f32.mrf.mxu0
  %v959 = vadd.f32 0.0, %v958
  %v960 = vpop.f32.mrf.mxu0
  %961 = vdwg.mxu0
  %v962 = vadd.f32 %v763, %v900
  %v963 = vadd.f32 %v764, %v903
  %v964 = vadd.f32 %v765, %v908
  %v965 = vadd.f32 %v766, %v911
  %v966 = vadd.f32 %v767, %v916
  %v967 = vadd.f32 %v768, %v919
  %v968 = vadd.f32 %v769, %v924
  %v969 = vadd.f32 %v770, %v927
  %v970 = vadd.f32 %v771, %v932
  %v971 = vadd.f32 %v772, %v935
  %v972 = vadd.f32 %v773, %v940
  %v973 = vadd.f32 %v774, %v943
  %v974 = vadd.f32 %v775, %v948
  %v975 = vadd.f32 %v776, %v951
  %v976 = vadd.f32 %v777, %v956
  %v977 = vadd.f32 %v778, %v959
  %s978 = scalar_lea.vmem %s0, 320
  %v979 = vld [vmem:[%s978] sm:$0xf]
  %v980 = vld [vmem:[%s978 + $0x4] sm:$0xf]
  %v981 = vld [vmem:[%s978 + $0x8] sm:$0xf]
  %v982 = vld [vmem:[%s978 + $0xc] sm:$0xf]
  %v983 = vld [vmem:[%s978 + $0x10] sm:$0xf]
  %v984 = vld [vmem:[%s978 + $0x14] sm:$0xf]
  %v985 = vld [vmem:[%s978 + $0x18] sm:$0xf]
  %v986 = vld [vmem:[%s978 + $0x1c] sm:$0xf]
  %v987 = vld [vmem:[%s978 + $0x20] sm:$0xf]
  %v988 = vld [vmem:[%s978 + $0x24] sm:$0xf]
  %v989 = vld [vmem:[%s978 + $0x28] sm:$0xf]
  %v990 = vld [vmem:[%s978 + $0x2c] sm:$0xf]
  %v991 = vld [vmem:[%s978 + $0x30] sm:$0xf]
  %v992 = vld [vmem:[%s978 + $0x34] sm:$0xf]
  %v993 = vld [vmem:[%s978 + $0x38] sm:$0xf]
  %v994 = vld [vmem:[%s978 + $0x3c] sm:$0xf]
  %s995 = scalar_lea.vmem %s1, 10
  %v996 = vld [vmem:[%s995] sm:$0x3]
  %v1013 = vunpack.c.l.b16 %v979
  %v1014 = vunpack.c.l.b16 %v980
  %v1015 = vunpack.c.l.b16 %v981
  %v1016 = vunpack.c.l.b16 %v982
  %v1017 = vunpack.c.l.b16 %v983
  %v1018 = vunpack.c.l.b16 %v984
  %v1019 = vunpack.c.l.b16 %v985
  %v1020 = vunpack.c.l.b16 %v986
  %v1021 = vunpack.c.l.b16 %v987
  %v1022 = vunpack.c.l.b16 %v988
  %v1023 = vunpack.c.l.b16 %v989
  %v1024 = vunpack.c.l.b16 %v990
  %v1025 = vunpack.c.l.b16 %v991
  %v1026 = vunpack.c.l.b16 %v992
  %v1027 = vunpack.c.l.b16 %v993
  %v1028 = vunpack.c.l.b16 %v994
  %v1029 = vpack.c.b16 %v1014, %v1013
  %v1030 = vpack.c.b16 %v1016, %v1015
  %v1031 = vpack.c.b16 %v1018, %v1017
  %v1032 = vpack.c.b16 %v1020, %v1019
  %v1033 = vpack.c.b16 %v1022, %v1021
  %v1034 = vpack.c.b16 %v1024, %v1023
  %v1035 = vpack.c.b16 %v1026, %v1025
  %v1036 = vpack.c.b16 %v1028, %v1027
  %v1038 = vsel %vm91, %v1029, 0
  %v1041 = vsel %vm91, %v1030, 0
  %v1044 = vsel %vm91, %v1031, 0
  %v1047 = vsel %vm91, %v1032, 0
  %v1050 = vsel %vm91, %v1033, 0
  %v1053 = vsel %vm91, %v1034, 0
  %v1056 = vsel %vm91, %v1035, 0
  %v1059 = vsel %vm91, %v1036, 0
  %v1062 = vsel %vm116, %v996, 0
  %1064 = vmatprep.subr.bf16.mxu0 0
  %1065 = vmatpush1.bf16.msra.mxu0 0
  %1066 = vmatprep.subr.bf16.mxu0 0
  %1067 = vmatpush1.bf16.msra.mxu0 0
  %1068 = vmatprep.subr.bf16.mxu0 0
  %1069 = vmatpush1.bf16.msra.mxu0 0
  %1070 = vmatprep.subr.bf16.mxu0 0
  %1071 = vmatpush1.bf16.msra.mxu0 0
  %1072 = vmatprep.subr.bf16.mxu0 0
  %1073 = vmatpush1.bf16.msra.mxu0 0
  %1074 = vmatprep.subr.bf16.mxu0 0
  %1075 = vmatpush1.bf16.msra.mxu0 0
  %1076 = vmatprep.subr.bf16.mxu0 0
  %1077 = vmatpush1.bf16.msra.mxu0 0
  %1078 = vmatprep.subr.bf16.mxu0 0
  %1079 = vmatpush1.bf16.msra.mxu0 %v1062
  %1080 = vmatprep.subr.bf16.mxu0 0
  %1081 = vmatpush2.bf16.msra.mxu0 0
  %1082 = vmatprep.subr.bf16.mxu0 0
  %1083 = vmatpush2.bf16.msra.mxu0 0
  %1084 = vmatprep.subr.bf16.mxu0 0
  %1085 = vmatpush2.bf16.msra.mxu0 0
  %1086 = vmatprep.subr.bf16.mxu0 0
  %1087 = vmatpush2.bf16.msra.mxu0 0
  %1088 = vmatprep.subr.bf16.mxu0 0
  %1089 = vmatpush2.bf16.msra.mxu0 0
  %1090 = vmatprep.subr.bf16.mxu0 0
  %1091 = vmatpush2.bf16.msra.mxu0 0
  %1092 = vmatprep.subr.bf16.mxu0 0
  %1093 = vmatpush2.bf16.msra.mxu0 0
  %1094 = vmatprep.subr.bf16.mxu0 0
  %1095 = vmatpush2.bf16.msra.mxu0 0
  %1096 = vmatprep.mubr.bf16.mxu0 0
  %1097 = vmatmul.mubr.bf16.gmra.mxu0 %v1038
  %v1098 = vpop.f32.mrf.mxu0
  %v1099 = vadd.f32 0.0, %v1098
  %v1100 = vpop.f32.mrf.mxu0
  %v1101 = vpop.f32.mrf.mxu0
  %v1102 = vadd.f32 0.0, %v1101
  %v1103 = vpop.f32.mrf.mxu0
  %1104 = vmatprep.mubr.bf16.mxu0 0
  %1105 = vmatmul.mubr.bf16.gmra.mxu0 %v1041
  %v1106 = vpop.f32.mrf.mxu0
  %v1107 = vadd.f32 0.0, %v1106
  %v1108 = vpop.f32.mrf.mxu0
  %v1109 = vpop.f32.mrf.mxu0
  %v1110 = vadd.f32 0.0, %v1109
  %v1111 = vpop.f32.mrf.mxu0
  %1112 = vmatprep.mubr.bf16.mxu0 0
  %1113 = vmatmul.mubr.bf16.gmra.mxu0 %v1044
  %v1114 = vpop.f32.mrf.mxu0
  %v1115 = vadd.f32 0.0, %v1114
  %v1116 = vpop.f32.mrf.mxu0
  %v1117 = vpop.f32.mrf.mxu0
  %v1118 = vadd.f32 0.0, %v1117
  %v1119 = vpop.f32.mrf.mxu0
  %1120 = vmatprep.mubr.bf16.mxu0 0
  %1121 = vmatmul.mubr.bf16.gmra.mxu0 %v1047
  %v1122 = vpop.f32.mrf.mxu0
  %v1123 = vadd.f32 0.0, %v1122
  %v1124 = vpop.f32.mrf.mxu0
  %v1125 = vpop.f32.mrf.mxu0
  %v1126 = vadd.f32 0.0, %v1125
  %v1127 = vpop.f32.mrf.mxu0
  %1128 = vmatprep.mubr.bf16.mxu0 0
  %1129 = vmatmul.mubr.bf16.gmra.mxu0 %v1050
  %v1130 = vpop.f32.mrf.mxu0
  %v1131 = vadd.f32 0.0, %v1130
  %v1132 = vpop.f32.mrf.mxu0
  %v1133 = vpop.f32.mrf.mxu0
  %v1134 = vadd.f32 0.0, %v1133
  %v1135 = vpop.f32.mrf.mxu0
  %1136 = vmatprep.mubr.bf16.mxu0 0
  %1137 = vmatmul.mubr.bf16.gmra.mxu0 %v1053
  %v1138 = vpop.f32.mrf.mxu0
  %v1139 = vadd.f32 0.0, %v1138
  %v1140 = vpop.f32.mrf.mxu0
  %v1141 = vpop.f32.mrf.mxu0
  %v1142 = vadd.f32 0.0, %v1141
  %v1143 = vpop.f32.mrf.mxu0
  %1144 = vmatprep.mubr.bf16.mxu0 0
  %1145 = vmatmul.mubr.bf16.gmra.mxu0 %v1056
  %v1146 = vpop.f32.mrf.mxu0
  %v1147 = vadd.f32 0.0, %v1146
  %v1148 = vpop.f32.mrf.mxu0
  %v1149 = vpop.f32.mrf.mxu0
  %v1150 = vadd.f32 0.0, %v1149
  %v1151 = vpop.f32.mrf.mxu0
  %1152 = vmatprep.mubr.bf16.mxu0 0
  %1153 = vmatmul.mubr.bf16.gmra.mxu0 %v1059
  %v1154 = vpop.f32.mrf.mxu0
  %v1155 = vadd.f32 0.0, %v1154
  %v1156 = vpop.f32.mrf.mxu0
  %v1157 = vpop.f32.mrf.mxu0
  %v1158 = vadd.f32 0.0, %v1157
  %v1159 = vpop.f32.mrf.mxu0
  %1160 = vdwg.mxu0
  %v1161 = vadd.f32 %v962, %v1099
  %v1162 = vadd.f32 %v963, %v1102
  %v1163 = vadd.f32 %v964, %v1107
  %v1164 = vadd.f32 %v965, %v1110
  %v1165 = vadd.f32 %v966, %v1115
  %v1166 = vadd.f32 %v967, %v1118
  %v1167 = vadd.f32 %v968, %v1123
  %v1168 = vadd.f32 %v969, %v1126
  %v1169 = vadd.f32 %v970, %v1131
  %v1170 = vadd.f32 %v971, %v1134
  %v1171 = vadd.f32 %v972, %v1139
  %v1172 = vadd.f32 %v973, %v1142
  %v1173 = vadd.f32 %v974, %v1147
  %v1174 = vadd.f32 %v975, %v1150
  %v1175 = vadd.f32 %v976, %v1155
  %v1176 = vadd.f32 %v977, %v1158
  %s1177 = scalar_lea.vmem %s0, 384
  %v1178 = vld [vmem:[%s1177] sm:$0xf]
  %v1179 = vld [vmem:[%s1177 + $0x4] sm:$0xf]
  %v1180 = vld [vmem:[%s1177 + $0x8] sm:$0xf]
  %v1181 = vld [vmem:[%s1177 + $0xc] sm:$0xf]
  %v1182 = vld [vmem:[%s1177 + $0x10] sm:$0xf]
  %v1183 = vld [vmem:[%s1177 + $0x14] sm:$0xf]
  %v1184 = vld [vmem:[%s1177 + $0x18] sm:$0xf]
  %v1185 = vld [vmem:[%s1177 + $0x1c] sm:$0xf]
  %v1186 = vld [vmem:[%s1177 + $0x20] sm:$0xf]
  %v1187 = vld [vmem:[%s1177 + $0x24] sm:$0xf]
  %v1188 = vld [vmem:[%s1177 + $0x28] sm:$0xf]
  %v1189 = vld [vmem:[%s1177 + $0x2c] sm:$0xf]
  %v1190 = vld [vmem:[%s1177 + $0x30] sm:$0xf]
  %v1191 = vld [vmem:[%s1177 + $0x34] sm:$0xf]
  %v1192 = vld [vmem:[%s1177 + $0x38] sm:$0xf]
  %v1193 = vld [vmem:[%s1177 + $0x3c] sm:$0xf]
  %s1194 = scalar_lea.vmem %s1, 12
  %v1195 = vld [vmem:[%s1194] sm:$0x3]
  %v1212 = vunpack.c.l.b16 %v1178
  %v1213 = vunpack.c.l.b16 %v1179
  %v1214 = vunpack.c.l.b16 %v1180
  %v1215 = vunpack.c.l.b16 %v1181
  %v1216 = vunpack.c.l.b16 %v1182
  %v1217 = vunpack.c.l.b16 %v1183
  %v1218 = vunpack.c.l.b16 %v1184
  %v1219 = vunpack.c.l.b16 %v1185
  %v1220 = vunpack.c.l.b16 %v1186
  %v1221 = vunpack.c.l.b16 %v1187
  %v1222 = vunpack.c.l.b16 %v1188
  %v1223 = vunpack.c.l.b16 %v1189
  %v1224 = vunpack.c.l.b16 %v1190
  %v1225 = vunpack.c.l.b16 %v1191
  %v1226 = vunpack.c.l.b16 %v1192
  %v1227 = vunpack.c.l.b16 %v1193
  %v1228 = vpack.c.b16 %v1213, %v1212
  %v1229 = vpack.c.b16 %v1215, %v1214
  %v1230 = vpack.c.b16 %v1217, %v1216
  %v1231 = vpack.c.b16 %v1219, %v1218
  %v1232 = vpack.c.b16 %v1221, %v1220
  %v1233 = vpack.c.b16 %v1223, %v1222
  %v1234 = vpack.c.b16 %v1225, %v1224
  %v1235 = vpack.c.b16 %v1227, %v1226
  %v1237 = vsel %vm91, %v1228, 0
  %v1240 = vsel %vm91, %v1229, 0
  %v1243 = vsel %vm91, %v1230, 0
  %v1246 = vsel %vm91, %v1231, 0
  %v1249 = vsel %vm91, %v1232, 0
  %v1252 = vsel %vm91, %v1233, 0
  %v1255 = vsel %vm91, %v1234, 0
  %v1258 = vsel %vm91, %v1235, 0
  %v1261 = vsel %vm116, %v1195, 0
  %1263 = vmatprep.subr.bf16.mxu0 0
  %1264 = vmatpush1.bf16.msra.mxu0 0
  %1265 = vmatprep.subr.bf16.mxu0 0
  %1266 = vmatpush1.bf16.msra.mxu0 0
  %1267 = vmatprep.subr.bf16.mxu0 0
  %1268 = vmatpush1.bf16.msra.mxu0 0
  %1269 = vmatprep.subr.bf16.mxu0 0
  %1270 = vmatpush1.bf16.msra.mxu0 0
  %1271 = vmatprep.subr.bf16.mxu0 0
  %1272 = vmatpush1.bf16.msra.mxu0 0
  %1273 = vmatprep.subr.bf16.mxu0 0
  %1274 = vmatpush1.bf16.msra.mxu0 0
  %1275 = vmatprep.subr.bf16.mxu0 0
  %1276 = vmatpush1.bf16.msra.mxu0 0
  %1277 = vmatprep.subr.bf16.mxu0 0
  %1278 = vmatpush1.bf16.msra.mxu0 %v1261
  %1279 = vmatprep.subr.bf16.mxu0 0
  %1280 = vmatpush2.bf16.msra.mxu0 0
  %1281 = vmatprep.subr.bf16.mxu0 0
  %1282 = vmatpush2.bf16.msra.mxu0 0
  %1283 = vmatprep.subr.bf16.mxu0 0
  %1284 = vmatpush2.bf16.msra.mxu0 0
  %1285 = vmatprep.subr.bf16.mxu0 0
  %1286 = vmatpush2.bf16.msra.mxu0 0
  %1287 = vmatprep.subr.bf16.mxu0 0
  %1288 = vmatpush2.bf16.msra.mxu0 0
  %1289 = vmatprep.subr.bf16.mxu0 0
  %1290 = vmatpush2.bf16.msra.mxu0 0
  %1291 = vmatprep.subr.bf16.mxu0 0
  %1292 = vmatpush2.bf16.msra.mxu0 0
  %1293 = vmatprep.subr.bf16.mxu0 0
  %1294 = vmatpush2.bf16.msra.mxu0 0
  %1295 = vmatprep.mubr.bf16.mxu0 0
  %1296 = vmatmul.mubr.bf16.gmra.mxu0 %v1237
  %v1297 = vpop.f32.mrf.mxu0
  %v1298 = vadd.f32 0.0, %v1297
  %v1299 = vpop.f32.mrf.mxu0
  %v1300 = vpop.f32.mrf.mxu0
  %v1301 = vadd.f32 0.0, %v1300
  %v1302 = vpop.f32.mrf.mxu0
  %1303 = vmatprep.mubr.bf16.mxu0 0
  %1304 = vmatmul.mubr.bf16.gmra.mxu0 %v1240
  %v1305 = vpop.f32.mrf.mxu0
  %v1306 = vadd.f32 0.0, %v1305
  %v1307 = vpop.f32.mrf.mxu0
  %v1308 = vpop.f32.mrf.mxu0
  %v1309 = vadd.f32 0.0, %v1308
  %v1310 = vpop.f32.mrf.mxu0
  %1311 = vmatprep.mubr.bf16.mxu0 0
  %1312 = vmatmul.mubr.bf16.gmra.mxu0 %v1243
  %v1313 = vpop.f32.mrf.mxu0
  %v1314 = vadd.f32 0.0, %v1313
  %v1315 = vpop.f32.mrf.mxu0
  %v1316 = vpop.f32.mrf.mxu0
  %v1317 = vadd.f32 0.0, %v1316
  %v1318 = vpop.f32.mrf.mxu0
  %1319 = vmatprep.mubr.bf16.mxu0 0
  %1320 = vmatmul.mubr.bf16.gmra.mxu0 %v1246
  %v1321 = vpop.f32.mrf.mxu0
  %v1322 = vadd.f32 0.0, %v1321
  %v1323 = vpop.f32.mrf.mxu0
  %v1324 = vpop.f32.mrf.mxu0
  %v1325 = vadd.f32 0.0, %v1324
  %v1326 = vpop.f32.mrf.mxu0
  %1327 = vmatprep.mubr.bf16.mxu0 0
  %1328 = vmatmul.mubr.bf16.gmra.mxu0 %v1249
  %v1329 = vpop.f32.mrf.mxu0
  %v1330 = vadd.f32 0.0, %v1329
  %v1331 = vpop.f32.mrf.mxu0
  %v1332 = vpop.f32.mrf.mxu0
  %v1333 = vadd.f32 0.0, %v1332
  %v1334 = vpop.f32.mrf.mxu0
  %1335 = vmatprep.mubr.bf16.mxu0 0
  %1336 = vmatmul.mubr.bf16.gmra.mxu0 %v1252
  %v1337 = vpop.f32.mrf.mxu0
  %v1338 = vadd.f32 0.0, %v1337
  %v1339 = vpop.f32.mrf.mxu0
  %v1340 = vpop.f32.mrf.mxu0
  %v1341 = vadd.f32 0.0, %v1340
  %v1342 = vpop.f32.mrf.mxu0
  %1343 = vmatprep.mubr.bf16.mxu0 0
  %1344 = vmatmul.mubr.bf16.gmra.mxu0 %v1255
  %v1345 = vpop.f32.mrf.mxu0
  %v1346 = vadd.f32 0.0, %v1345
  %v1347 = vpop.f32.mrf.mxu0
  %v1348 = vpop.f32.mrf.mxu0
  %v1349 = vadd.f32 0.0, %v1348
  %v1350 = vpop.f32.mrf.mxu0
  %1351 = vmatprep.mubr.bf16.mxu0 0
  %1352 = vmatmul.mubr.bf16.gmra.mxu0 %v1258
  %v1353 = vpop.f32.mrf.mxu0
  %v1354 = vadd.f32 0.0, %v1353
  %v1355 = vpop.f32.mrf.mxu0
  %v1356 = vpop.f32.mrf.mxu0
  %v1357 = vadd.f32 0.0, %v1356
  %v1358 = vpop.f32.mrf.mxu0
  %1359 = vdwg.mxu0
  %v1360 = vadd.f32 %v1161, %v1298
  %v1361 = vadd.f32 %v1162, %v1301
  %v1362 = vadd.f32 %v1163, %v1306
  %v1363 = vadd.f32 %v1164, %v1309
  %v1364 = vadd.f32 %v1165, %v1314
  %v1365 = vadd.f32 %v1166, %v1317
  %v1366 = vadd.f32 %v1167, %v1322
  %v1367 = vadd.f32 %v1168, %v1325
  %v1368 = vadd.f32 %v1169, %v1330
  %v1369 = vadd.f32 %v1170, %v1333
  %v1370 = vadd.f32 %v1171, %v1338
  %v1371 = vadd.f32 %v1172, %v1341
  %v1372 = vadd.f32 %v1173, %v1346
  %v1373 = vadd.f32 %v1174, %v1349
  %v1374 = vadd.f32 %v1175, %v1354
  %v1375 = vadd.f32 %v1176, %v1357
  %s1376 = scalar_lea.vmem %s0, 448
  %v1377 = vld [vmem:[%s1376] sm:$0xf]
  %v1378 = vld [vmem:[%s1376 + $0x4] sm:$0xf]
  %v1379 = vld [vmem:[%s1376 + $0x8] sm:$0xf]
  %v1380 = vld [vmem:[%s1376 + $0xc] sm:$0xf]
  %v1381 = vld [vmem:[%s1376 + $0x10] sm:$0xf]
  %v1382 = vld [vmem:[%s1376 + $0x14] sm:$0xf]
  %v1383 = vld [vmem:[%s1376 + $0x18] sm:$0xf]
  %v1384 = vld [vmem:[%s1376 + $0x1c] sm:$0xf]
  %v1385 = vld [vmem:[%s1376 + $0x20] sm:$0xf]
  %v1386 = vld [vmem:[%s1376 + $0x24] sm:$0xf]
  %v1387 = vld [vmem:[%s1376 + $0x28] sm:$0xf]
  %v1388 = vld [vmem:[%s1376 + $0x2c] sm:$0xf]
  %v1389 = vld [vmem:[%s1376 + $0x30] sm:$0xf]
  %v1390 = vld [vmem:[%s1376 + $0x34] sm:$0xf]
  %v1391 = vld [vmem:[%s1376 + $0x38] sm:$0xf]
  %v1392 = vld [vmem:[%s1376 + $0x3c] sm:$0xf]
  %s1393 = scalar_lea.vmem %s1, 14
  %v1394 = vld [vmem:[%s1393] sm:$0x3]
  %v1411 = vunpack.c.l.b16 %v1377
  %v1412 = vunpack.c.l.b16 %v1378
  %v1413 = vunpack.c.l.b16 %v1379
  %v1414 = vunpack.c.l.b16 %v1380
  %v1415 = vunpack.c.l.b16 %v1381
  %v1416 = vunpack.c.l.b16 %v1382
  %v1417 = vunpack.c.l.b16 %v1383
  %v1418 = vunpack.c.l.b16 %v1384
  %v1419 = vunpack.c.l.b16 %v1385
  %v1420 = vunpack.c.l.b16 %v1386
  %v1421 = vunpack.c.l.b16 %v1387
  %v1422 = vunpack.c.l.b16 %v1388
  %v1423 = vunpack.c.l.b16 %v1389
  %v1424 = vunpack.c.l.b16 %v1390
  %v1425 = vunpack.c.l.b16 %v1391
  %v1426 = vunpack.c.l.b16 %v1392
  %v1427 = vpack.c.b16 %v1412, %v1411
  %v1428 = vpack.c.b16 %v1414, %v1413
  %v1429 = vpack.c.b16 %v1416, %v1415
  %v1430 = vpack.c.b16 %v1418, %v1417
  %v1431 = vpack.c.b16 %v1420, %v1419
  %v1432 = vpack.c.b16 %v1422, %v1421
  %v1433 = vpack.c.b16 %v1424, %v1423
  %v1434 = vpack.c.b16 %v1426, %v1425
  %v1436 = vsel %vm91, %v1427, 0
  %v1439 = vsel %vm91, %v1428, 0
  %v1442 = vsel %vm91, %v1429, 0
  %v1445 = vsel %vm91, %v1430, 0
  %v1448 = vsel %vm91, %v1431, 0
  %v1451 = vsel %vm91, %v1432, 0
  %v1454 = vsel %vm91, %v1433, 0
  %v1457 = vsel %vm91, %v1434, 0
  %v1460 = vsel %vm116, %v1394, 0
  %1462 = vmatprep.subr.bf16.mxu0 0
  %1463 = vmatpush1.bf16.msra.mxu0 0
  %1464 = vmatprep.subr.bf16.mxu0 0
  %1465 = vmatpush1.bf16.msra.mxu0 0
  %1466 = vmatprep.subr.bf16.mxu0 0
  %1467 = vmatpush1.bf16.msra.mxu0 0
  %1468 = vmatprep.subr.bf16.mxu0 0
  %1469 = vmatpush1.bf16.msra.mxu0 0
  %1470 = vmatprep.subr.bf16.mxu0 0
  %1471 = vmatpush1.bf16.msra.mxu0 0
  %1472 = vmatprep.subr.bf16.mxu0 0
  %1473 = vmatpush1.bf16.msra.mxu0 0
  %1474 = vmatprep.subr.bf16.mxu0 0
  %1475 = vmatpush1.bf16.msra.mxu0 0
  %1476 = vmatprep.subr.bf16.mxu0 0
  %1477 = vmatpush1.bf16.msra.mxu0 %v1460
  %1478 = vmatprep.subr.bf16.mxu0 0
  %1479 = vmatpush2.bf16.msra.mxu0 0
  %1480 = vmatprep.subr.bf16.mxu0 0
  %1481 = vmatpush2.bf16.msra.mxu0 0
  %1482 = vmatprep.subr.bf16.mxu0 0
  %1483 = vmatpush2.bf16.msra.mxu0 0
  %1484 = vmatprep.subr.bf16.mxu0 0
  %1485 = vmatpush2.bf16.msra.mxu0 0
  %1486 = vmatprep.subr.bf16.mxu0 0
  %1487 = vmatpush2.bf16.msra.mxu0 0
  %1488 = vmatprep.subr.bf16.mxu0 0
  %1489 = vmatpush2.bf16.msra.mxu0 0
  %1490 = vmatprep.subr.bf16.mxu0 0
  %1491 = vmatpush2.bf16.msra.mxu0 0
  %1492 = vmatprep.subr.bf16.mxu0 0
  %1493 = vmatpush2.bf16.msra.mxu0 0
  %1494 = vmatprep.mubr.bf16.mxu0 0
  %1495 = vmatmul.mubr.bf16.gmra.mxu0 %v1436
  %v1496 = vpop.f32.mrf.mxu0
  %v1497 = vadd.f32 0.0, %v1496
  %v1498 = vpop.f32.mrf.mxu0
  %v1499 = vpop.f32.mrf.mxu0
  %v1500 = vadd.f32 0.0, %v1499
  %v1501 = vpop.f32.mrf.mxu0
  %1502 = vmatprep.mubr.bf16.mxu0 0
  %1503 = vmatmul.mubr.bf16.gmra.mxu0 %v1439
  %v1504 = vpop.f32.mrf.mxu0
  %v1505 = vadd.f32 0.0, %v1504
  %v1506 = vpop.f32.mrf.mxu0
  %v1507 = vpop.f32.mrf.mxu0
  %v1508 = vadd.f32 0.0, %v1507
  %v1509 = vpop.f32.mrf.mxu0
  %1510 = vmatprep.mubr.bf16.mxu0 0
  %1511 = vmatmul.mubr.bf16.gmra.mxu0 %v1442
  %v1512 = vpop.f32.mrf.mxu0
  %v1513 = vadd.f32 0.0, %v1512
  %v1514 = vpop.f32.mrf.mxu0
  %v1515 = vpop.f32.mrf.mxu0
  %v1516 = vadd.f32 0.0, %v1515
  %v1517 = vpop.f32.mrf.mxu0
  %1518 = vmatprep.mubr.bf16.mxu0 0
  %1519 = vmatmul.mubr.bf16.gmra.mxu0 %v1445
  %v1520 = vpop.f32.mrf.mxu0
  %v1521 = vadd.f32 0.0, %v1520
  %v1522 = vpop.f32.mrf.mxu0
  %v1523 = vpop.f32.mrf.mxu0
  %v1524 = vadd.f32 0.0, %v1523
  %v1525 = vpop.f32.mrf.mxu0
  %1526 = vmatprep.mubr.bf16.mxu0 0
  %1527 = vmatmul.mubr.bf16.gmra.mxu0 %v1448
  %v1528 = vpop.f32.mrf.mxu0
  %v1529 = vadd.f32 0.0, %v1528
  %v1530 = vpop.f32.mrf.mxu0
  %v1531 = vpop.f32.mrf.mxu0
  %v1532 = vadd.f32 0.0, %v1531
  %v1533 = vpop.f32.mrf.mxu0
  %1534 = vmatprep.mubr.bf16.mxu0 0
  %1535 = vmatmul.mubr.bf16.gmra.mxu0 %v1451
  %v1536 = vpop.f32.mrf.mxu0
  %v1537 = vadd.f32 0.0, %v1536
  %v1538 = vpop.f32.mrf.mxu0
  %v1539 = vpop.f32.mrf.mxu0
  %v1540 = vadd.f32 0.0, %v1539
  %v1541 = vpop.f32.mrf.mxu0
  %1542 = vmatprep.mubr.bf16.mxu0 0
  %1543 = vmatmul.mubr.bf16.gmra.mxu0 %v1454
  %v1544 = vpop.f32.mrf.mxu0
  %v1545 = vadd.f32 0.0, %v1544
  %v1546 = vpop.f32.mrf.mxu0
  %v1547 = vpop.f32.mrf.mxu0
  %v1548 = vadd.f32 0.0, %v1547
  %v1549 = vpop.f32.mrf.mxu0
  %1550 = vmatprep.mubr.bf16.mxu0 0
  %1551 = vmatmul.mubr.bf16.gmra.mxu0 %v1457
  %v1552 = vpop.f32.mrf.mxu0
  %v1553 = vadd.f32 0.0, %v1552
  %v1554 = vpop.f32.mrf.mxu0
  %v1555 = vpop.f32.mrf.mxu0
  %v1556 = vadd.f32 0.0, %v1555
  %v1557 = vpop.f32.mrf.mxu0
  %1558 = vdwg.mxu0
  %v1559 = vadd.f32 %v1360, %v1497
  %v1560 = vadd.f32 %v1361, %v1500
  %v1561 = vadd.f32 %v1362, %v1505
  %v1562 = vadd.f32 %v1363, %v1508
  %v1563 = vadd.f32 %v1364, %v1513
  %v1564 = vadd.f32 %v1365, %v1516
  %v1565 = vadd.f32 %v1366, %v1521
  %v1566 = vadd.f32 %v1367, %v1524
  %v1567 = vadd.f32 %v1368, %v1529
  %v1568 = vadd.f32 %v1369, %v1532
  %v1569 = vadd.f32 %v1370, %v1537
  %v1570 = vadd.f32 %v1371, %v1540
  %v1571 = vadd.f32 %v1372, %v1545
  %v1572 = vadd.f32 %v1373, %v1548
  %v1573 = vadd.f32 %v1374, %v1553
  %v1574 = vadd.f32 %v1375, %v1556
  %s1575 = scalar_lea.vmem %s0, 512
  %v1576 = vld [vmem:[%s1575] sm:$0xf]
  %v1577 = vld [vmem:[%s1575 + $0x4] sm:$0xf]
  %v1578 = vld [vmem:[%s1575 + $0x8] sm:$0xf]
  %v1579 = vld [vmem:[%s1575 + $0xc] sm:$0xf]
  %v1580 = vld [vmem:[%s1575 + $0x10] sm:$0xf]
  %v1581 = vld [vmem:[%s1575 + $0x14] sm:$0xf]
  %v1582 = vld [vmem:[%s1575 + $0x18] sm:$0xf]
  %v1583 = vld [vmem:[%s1575 + $0x1c] sm:$0xf]
  %v1584 = vld [vmem:[%s1575 + $0x20] sm:$0xf]
  %v1585 = vld [vmem:[%s1575 + $0x24] sm:$0xf]
  %v1586 = vld [vmem:[%s1575 + $0x28] sm:$0xf]
  %v1587 = vld [vmem:[%s1575 + $0x2c] sm:$0xf]
  %v1588 = vld [vmem:[%s1575 + $0x30] sm:$0xf]
  %v1589 = vld [vmem:[%s1575 + $0x34] sm:$0xf]
  %v1590 = vld [vmem:[%s1575 + $0x38] sm:$0xf]
  %v1591 = vld [vmem:[%s1575 + $0x3c] sm:$0xf]
  %s1592 = scalar_lea.vmem %s1, 16
  %v1593 = vld [vmem:[%s1592] sm:$0x3]
  %v1610 = vunpack.c.l.b16 %v1576
  %v1611 = vunpack.c.l.b16 %v1577
  %v1612 = vunpack.c.l.b16 %v1578
  %v1613 = vunpack.c.l.b16 %v1579
  %v1614 = vunpack.c.l.b16 %v1580
  %v1615 = vunpack.c.l.b16 %v1581
  %v1616 = vunpack.c.l.b16 %v1582
  %v1617 = vunpack.c.l.b16 %v1583
  %v1618 = vunpack.c.l.b16 %v1584
  %v1619 = vunpack.c.l.b16 %v1585
  %v1620 = vunpack.c.l.b16 %v1586
  %v1621 = vunpack.c.l.b16 %v1587
  %v1622 = vunpack.c.l.b16 %v1588
  %v1623 = vunpack.c.l.b16 %v1589
  %v1624 = vunpack.c.l.b16 %v1590
  %v1625 = vunpack.c.l.b16 %v1591
  %v1626 = vpack.c.b16 %v1611, %v1610
  %v1627 = vpack.c.b16 %v1613, %v1612
  %v1628 = vpack.c.b16 %v1615, %v1614
  %v1629 = vpack.c.b16 %v1617, %v1616
  %v1630 = vpack.c.b16 %v1619, %v1618
  %v1631 = vpack.c.b16 %v1621, %v1620
  %v1632 = vpack.c.b16 %v1623, %v1622
  %v1633 = vpack.c.b16 %v1625, %v1624
  %v1635 = vsel %vm91, %v1626, 0
  %v1638 = vsel %vm91, %v1627, 0
  %v1641 = vsel %vm91, %v1628, 0
  %v1644 = vsel %vm91, %v1629, 0
  %v1647 = vsel %vm91, %v1630, 0
  %v1650 = vsel %vm91, %v1631, 0
  %v1653 = vsel %vm91, %v1632, 0
  %v1656 = vsel %vm91, %v1633, 0
  %v1659 = vsel %vm116, %v1593, 0
  %1661 = vmatprep.subr.bf16.mxu0 0
  %1662 = vmatpush1.bf16.msra.mxu0 0
  %1663 = vmatprep.subr.bf16.mxu0 0
  %1664 = vmatpush1.bf16.msra.mxu0 0
  %1665 = vmatprep.subr.bf16.mxu0 0
  %1666 = vmatpush1.bf16.msra.mxu0 0
  %1667 = vmatprep.subr.bf16.mxu0 0
  %1668 = vmatpush1.bf16.msra.mxu0 0
  %1669 = vmatprep.subr.bf16.mxu0 0
  %1670 = vmatpush1.bf16.msra.mxu0 0
  %1671 = vmatprep.subr.bf16.mxu0 0
  %1672 = vmatpush1.bf16.msra.mxu0 0
  %1673 = vmatprep.subr.bf16.mxu0 0
  %1674 = vmatpush1.bf16.msra.mxu0 0
  %1675 = vmatprep.subr.bf16.mxu0 0
  %1676 = vmatpush1.bf16.msra.mxu0 %v1659
  %1677 = vmatprep.subr.bf16.mxu0 0
  %1678 = vmatpush2.bf16.msra.mxu0 0
  %1679 = vmatprep.subr.bf16.mxu0 0
  %1680 = vmatpush2.bf16.msra.mxu0 0
  %1681 = vmatprep.subr.bf16.mxu0 0
  %1682 = vmatpush2.bf16.msra.mxu0 0
  %1683 = vmatprep.subr.bf16.mxu0 0
  %1684 = vmatpush2.bf16.msra.mxu0 0
  %1685 = vmatprep.subr.bf16.mxu0 0
  %1686 = vmatpush2.bf16.msra.mxu0 0
  %1687 = vmatprep.subr.bf16.mxu0 0
  %1688 = vmatpush2.bf16.msra.mxu0 0
  %1689 = vmatprep.subr.bf16.mxu0 0
  %1690 = vmatpush2.bf16.msra.mxu0 0
  %1691 = vmatprep.subr.bf16.mxu0 0
  %1692 = vmatpush2.bf16.msra.mxu0 0
  %1693 = vmatprep.mubr.bf16.mxu0 0
  %1694 = vmatmul.mubr.bf16.gmra.mxu0 %v1635
  %v1695 = vpop.f32.mrf.mxu0
  %v1696 = vadd.f32 0.0, %v1695
  %v1697 = vpop.f32.mrf.mxu0
  %v1698 = vpop.f32.mrf.mxu0
  %v1699 = vadd.f32 0.0, %v1698
  %v1700 = vpop.f32.mrf.mxu0
  %1701 = vmatprep.mubr.bf16.mxu0 0
  %1702 = vmatmul.mubr.bf16.gmra.mxu0 %v1638
  %v1703 = vpop.f32.mrf.mxu0
  %v1704 = vadd.f32 0.0, %v1703
  %v1705 = vpop.f32.mrf.mxu0
  %v1706 = vpop.f32.mrf.mxu0
  %v1707 = vadd.f32 0.0, %v1706
  %v1708 = vpop.f32.mrf.mxu0
  %1709 = vmatprep.mubr.bf16.mxu0 0
  %1710 = vmatmul.mubr.bf16.gmra.mxu0 %v1641
  %v1711 = vpop.f32.mrf.mxu0
  %v1712 = vadd.f32 0.0, %v1711
  %v1713 = vpop.f32.mrf.mxu0
  %v1714 = vpop.f32.mrf.mxu0
  %v1715 = vadd.f32 0.0, %v1714
  %v1716 = vpop.f32.mrf.mxu0
  %1717 = vmatprep.mubr.bf16.mxu0 0
  %1718 = vmatmul.mubr.bf16.gmra.mxu0 %v1644
  %v1719 = vpop.f32.mrf.mxu0
  %v1720 = vadd.f32 0.0, %v1719
  %v1721 = vpop.f32.mrf.mxu0
  %v1722 = vpop.f32.mrf.mxu0
  %v1723 = vadd.f32 0.0, %v1722
  %v1724 = vpop.f32.mrf.mxu0
  %1725 = vmatprep.mubr.bf16.mxu0 0
  %1726 = vmatmul.mubr.bf16.gmra.mxu0 %v1647
  %v1727 = vpop.f32.mrf.mxu0
  %v1728 = vadd.f32 0.0, %v1727
  %v1729 = vpop.f32.mrf.mxu0
  %v1730 = vpop.f32.mrf.mxu0
  %v1731 = vadd.f32 0.0, %v1730
  %v1732 = vpop.f32.mrf.mxu0
  %1733 = vmatprep.mubr.bf16.mxu0 0
  %1734 = vmatmul.mubr.bf16.gmra.mxu0 %v1650
  %v1735 = vpop.f32.mrf.mxu0
  %v1736 = vadd.f32 0.0, %v1735
  %v1737 = vpop.f32.mrf.mxu0
  %v1738 = vpop.f32.mrf.mxu0
  %v1739 = vadd.f32 0.0, %v1738
  %v1740 = vpop.f32.mrf.mxu0
  %1741 = vmatprep.mubr.bf16.mxu0 0
  %1742 = vmatmul.mubr.bf16.gmra.mxu0 %v1653
  %v1743 = vpop.f32.mrf.mxu0
  %v1744 = vadd.f32 0.0, %v1743
  %v1745 = vpop.f32.mrf.mxu0
  %v1746 = vpop.f32.mrf.mxu0
  %v1747 = vadd.f32 0.0, %v1746
  %v1748 = vpop.f32.mrf.mxu0
  %1749 = vmatprep.mubr.bf16.mxu0 0
  %1750 = vmatmul.mubr.bf16.gmra.mxu0 %v1656
  %v1751 = vpop.f32.mrf.mxu0
  %v1752 = vadd.f32 0.0, %v1751
  %v1753 = vpop.f32.mrf.mxu0
  %v1754 = vpop.f32.mrf.mxu0
  %v1755 = vadd.f32 0.0, %v1754
  %v1756 = vpop.f32.mrf.mxu0
  %1757 = vdwg.mxu0
  %v1758 = vadd.f32 %v1559, %v1696
  %v1759 = vadd.f32 %v1560, %v1699
  %v1760 = vadd.f32 %v1561, %v1704
  %v1761 = vadd.f32 %v1562, %v1707
  %v1762 = vadd.f32 %v1563, %v1712
  %v1763 = vadd.f32 %v1564, %v1715
  %v1764 = vadd.f32 %v1565, %v1720
  %v1765 = vadd.f32 %v1566, %v1723
  %v1766 = vadd.f32 %v1567, %v1728
  %v1767 = vadd.f32 %v1568, %v1731
  %v1768 = vadd.f32 %v1569, %v1736
  %v1769 = vadd.f32 %v1570, %v1739
  %v1770 = vadd.f32 %v1571, %v1744
  %v1771 = vadd.f32 %v1572, %v1747
  %v1772 = vadd.f32 %v1573, %v1752
  %v1773 = vadd.f32 %v1574, %v1755
  %v1774 = vld [vmem:[%s2] sm:$0x1]
  %v1776 = vlaneseq
  %v1777 = vshrl.u32 %v1776, 7
  %v1778 = vsub.s32 0, %v1777
  %v1779 = vrot.slane %v1774, %v1778
  %v1781 = vadd.f32 %v1758, %v1779
  %v1782 = vadd.f32 %v1759, %v1779
  %v1783 = vadd.f32 %v1760, %v1779
  %v1784 = vadd.f32 %v1761, %v1779
  %v1785 = vadd.f32 %v1762, %v1779
  %v1786 = vadd.f32 %v1763, %v1779
  %v1787 = vadd.f32 %v1764, %v1779
  %v1788 = vadd.f32 %v1765, %v1779
  %v1789 = vadd.f32 %v1766, %v1779
  %v1790 = vadd.f32 %v1767, %v1779
  %v1791 = vadd.f32 %v1768, %v1779
  %v1792 = vadd.f32 %v1769, %v1779
  %v1793 = vadd.f32 %v1770, %v1779
  %v1794 = vadd.f32 %v1771, %v1779
  %v1795 = vadd.f32 %v1772, %v1779
  %v1796 = vadd.f32 %v1773, %v1779
  %v1797 = vmax.f32 %v1781, 0.0
  %v1798 = vmax.f32 %v1782, 0.0
  %v1799 = vmax.f32 %v1783, 0.0
  %v1800 = vmax.f32 %v1784, 0.0
  %v1801 = vmax.f32 %v1785, 0.0
  %v1802 = vmax.f32 %v1786, 0.0
  %v1803 = vmax.f32 %v1787, 0.0
  %v1804 = vmax.f32 %v1788, 0.0
  %v1805 = vmax.f32 %v1789, 0.0
  %v1806 = vmax.f32 %v1790, 0.0
  %v1807 = vmax.f32 %v1791, 0.0
  %v1808 = vmax.f32 %v1792, 0.0
  %v1809 = vmax.f32 %v1793, 0.0
  %v1810 = vmax.f32 %v1794, 0.0
  %v1811 = vmax.f32 %v1795, 0.0
  %v1812 = vmax.f32 %v1796, 0.0
  %v1813 = vpack.c.bf16 %v1798, %v1797
  %v1814 = vpack.c.bf16 %v1800, %v1799
  %v1815 = vpack.c.bf16 %v1802, %v1801
  %v1816 = vpack.c.bf16 %v1804, %v1803
  %v1817 = vpack.c.bf16 %v1806, %v1805
  %v1818 = vpack.c.bf16 %v1808, %v1807
  %v1819 = vpack.c.bf16 %v1810, %v1809
  %v1820 = vpack.c.bf16 %v1812, %v1811
  %v1829 = vunpack.c.l.b16 %v1813
  %v1830 = vunpack.c.h.b16 %v1813
  %v1831 = vunpack.c.l.b16 %v1814
  %v1832 = vunpack.c.h.b16 %v1814
  %v1833 = vunpack.c.l.b16 %v1815
  %v1834 = vunpack.c.h.b16 %v1815
  %v1835 = vunpack.c.l.b16 %v1816
  %v1836 = vunpack.c.h.b16 %v1816
  %v1837 = vunpack.c.l.b16 %v1817
  %v1838 = vunpack.c.h.b16 %v1817
  %v1839 = vunpack.c.l.b16 %v1818
  %v1840 = vunpack.c.h.b16 %v1818
  %v1841 = vunpack.c.l.b16 %v1819
  %v1842 = vunpack.c.h.b16 %v1819
  %v1843 = vunpack.c.l.b16 %v1820
  %v1844 = vunpack.c.h.b16 %v1820
  %v1845 = vpack.c.b16 %v1829, %v1829
  %v1846 = vpack.c.b16 %v1830, %v1830
  %v1847 = vpack.c.b16 %v1831, %v1831
  %v1848 = vpack.c.b16 %v1832, %v1832
  %v1849 = vpack.c.b16 %v1833, %v1833
  %v1850 = vpack.c.b16 %v1834, %v1834
  %v1851 = vpack.c.b16 %v1835, %v1835
  %v1852 = vpack.c.b16 %v1836, %v1836
  %v1853 = vpack.c.b16 %v1837, %v1837
  %v1854 = vpack.c.b16 %v1838, %v1838
  %v1855 = vpack.c.b16 %v1839, %v1839
  %v1856 = vpack.c.b16 %v1840, %v1840
  %v1857 = vpack.c.b16 %v1841, %v1841
  %v1858 = vpack.c.b16 %v1842, %v1842
  %v1859 = vpack.c.b16 %v1843, %v1843
  %v1860 = vpack.c.b16 %v1844, %v1844
  %vm1877 = vcmask 519168
  %1878 = vst.msk [vmem:[%s3] sm:$0xf] %vm1877, %v1845
  %1879 = vst.msk [vmem:[%s3 + $0x4] sm:$0xf] %vm1877, %v1846
  %1880 = vst.msk [vmem:[%s3 + $0x8] sm:$0xf] %vm1877, %v1847
  %1881 = vst.msk [vmem:[%s3 + $0xc] sm:$0xf] %vm1877, %v1848
  %1882 = vst.msk [vmem:[%s3 + $0x10] sm:$0xf] %vm1877, %v1849
  %1883 = vst.msk [vmem:[%s3 + $0x14] sm:$0xf] %vm1877, %v1850
  %1884 = vst.msk [vmem:[%s3 + $0x18] sm:$0xf] %vm1877, %v1851
  %1885 = vst.msk [vmem:[%s3 + $0x1c] sm:$0xf] %vm1877, %v1852
  %1886 = vst.msk [vmem:[%s3 + $0x20] sm:$0xf] %vm1877, %v1853
  %1887 = vst.msk [vmem:[%s3 + $0x24] sm:$0xf] %vm1877, %v1854
  %1888 = vst.msk [vmem:[%s3 + $0x28] sm:$0xf] %vm1877, %v1855
  %1889 = vst.msk [vmem:[%s3 + $0x2c] sm:$0xf] %vm1877, %v1856
  %1890 = vst.msk [vmem:[%s3 + $0x30] sm:$0xf] %vm1877, %v1857
  %1891 = vst.msk [vmem:[%s3 + $0x34] sm:$0xf] %vm1877, %v1858
  %1892 = vst.msk [vmem:[%s3 + $0x38] sm:$0xf] %vm1877, %v1859
  %1893 = vst.msk [vmem:[%s3 + $0x3c] sm:$0xf] %vm1877, %v1860
  // Predicated region
  $region14: #{model_forward.6} parent=0 // pred_check
    _
  $region15: #{model_forward.6} parent=0 // pred_check_branch
    %1895 = sbr.rel (0) target = $region17
  $region16: #{model_forward.6} parent=0 // pred_region
    _
  $region17: #{model_forward.6} parent=0 // pred_fallthru
    _
  // Predicated region
  $region18: #{model_forward.6} parent=0 // pred_check
    _
  $region19: #{model_forward.6} parent=0 // pred_check_branch
    %1897 = sbr.rel (0) target = $region21
  $region20: #{model_forward.6} parent=0 // pred_region
    _
  $region21: #{model_forward.6} parent=0 // pred_fallthru
    _

// kernel: model_forward.7
$region0: #{model_forward.7}
  #allocation0 [shape = 'u32[]', space=smem, size = 0x4, offset = 0x4, fixed_abs, tag = 'smem constant byte address 0x4 - core index']
  #allocation1 [shape = 'u32[144,128]{1,0:T(1,128)}', space=vmem, size = 0x12000, scoped, tag = 'internal scratch']
  %s0 = inlined_call_operand.vmem [shape: bf16[9,32,64], index: 0, kind: input, shape index: {}]
  %s1 = inlined_call_operand.vmem [shape: bf16[9,64,64], index: 1, kind: input, shape index: {}]
  %s2 = inlined_call_operand.vmem [shape: f32[1,64], index: 2, kind: input, shape index: {}]
  %s3 = inlined_call_operand.vmem [shape: bf16[32,64], index: 3, kind: output, shape index: {}]
  %s4 = sld [smem:[#allocation0]]
  $region22: #{model_forward.7} parent=0
    _
  %s6 = ssub.s32 1, %s4
  %s7 = scalar_select 0, %s6, %s4
  // Predicated region
  $region2: #{model_forward.7} parent=0 // pred_check
    _
  $region3: #{model_forward.7} parent=0 // pred_check_branch
    %9 = sbr.rel (0) target = $region5
  $region4: #{model_forward.7} parent=0 // pred_region
    _
  $region5: #{model_forward.7} parent=0 // pred_fallthru
    _
  // Predicated region
  $region6: #{model_forward.7} parent=0 // pred_check
    _
  $region7: #{model_forward.7} parent=0 // pred_check_branch
    %11 = sbr.rel (0) target = $region9
  $region8: #{model_forward.7} parent=0 // pred_region
    _
  $region9: #{model_forward.7} parent=0 // pred_fallthru
    _
  // Predicated region
  $region10: #{model_forward.7} parent=0 // pred_check
    _
  $region11: #{model_forward.7} parent=0 // pred_check_branch
    %13 = sbr.rel (0) target = $region13
  $region12: #{model_forward.7} parent=0 // pred_region
    _
  $region13: #{model_forward.7} parent=0 // pred_fallthru
    _
  %v15 = vld [vmem:[%s0] sm:$0xf]
  %v16 = vld [vmem:[%s0 + $0x4] sm:$0xf]
  %v17 = vld [vmem:[%s0 + $0x8] sm:$0xf]
  %v18 = vld [vmem:[%s0 + $0xc] sm:$0xf]
  %v19 = vld [vmem:[%s1] sm:$0xf]
  %v20 = vld [vmem:[%s1 + $0x4] sm:$0xf]
  %v21 = vld [vmem:[%s1 + $0x8] sm:$0xf]
  %v22 = vld [vmem:[%s1 + $0xc] sm:$0xf]
  %v23 = vld [vmem:[%s1 + $0x10] sm:$0xf]
  %v24 = vld [vmem:[%s1 + $0x14] sm:$0xf]
  %v25 = vld [vmem:[%s1 + $0x18] sm:$0xf]
  %v26 = vld [vmem:[%s1 + $0x1c] sm:$0xf]
  %s27 = scalar_lea.vmem %s0, 16
  %v28 = vld [vmem:[%s27] sm:$0xf]
  %v29 = vld [vmem:[%s27 + $0x4] sm:$0xf]
  %v30 = vld [vmem:[%s27 + $0x8] sm:$0xf]
  %v31 = vld [vmem:[%s27 + $0xc] sm:$0xf]
  %s32 = scalar_lea.vmem %s1, 32
  %v33 = vld [vmem:[%s32] sm:$0xf]
  %v34 = vld [vmem:[%s32 + $0x4] sm:$0xf]
  %v35 = vld [vmem:[%s32 + $0x8] sm:$0xf]
  %v36 = vld [vmem:[%s32 + $0xc] sm:$0xf]
  %v37 = vld [vmem:[%s32 + $0x10] sm:$0xf]
  %v38 = vld [vmem:[%s32 + $0x14] sm:$0xf]
  %v39 = vld [vmem:[%s32 + $0x18] sm:$0xf]
  %v40 = vld [vmem:[%s32 + $0x1c] sm:$0xf]
  %v45 = vunpack.c.l.b16 %v28
  %v46 = vunpack.c.l.b16 %v29
  %v47 = vunpack.c.l.b16 %v30
  %v48 = vunpack.c.l.b16 %v31
  %v49 = vpack.c.b16 %v46, %v45
  %v50 = vpack.c.b16 %v48, %v47
  %v59 = vunpack.c.l.b16 %v33
  %v60 = vunpack.c.l.b16 %v34
  %v61 = vunpack.c.l.b16 %v35
  %v62 = vunpack.c.l.b16 %v36
  %v63 = vunpack.c.l.b16 %v37
  %v64 = vunpack.c.l.b16 %v38
  %v65 = vunpack.c.l.b16 %v39
  %v66 = vunpack.c.l.b16 %v40
  %v67 = vpack.c.b16 %v60, %v59
  %v68 = vpack.c.b16 %v62, %v61
  %v69 = vpack.c.b16 %v64, %v63
  %v70 = vpack.c.b16 %v66, %v65
  %vm75 = vcmask 523264
  %v77 = vsel %vm75, %v49, 0
  %v80 = vsel %vm75, %v50, 0
  %82 = vmatprep.subr.bf16.mxu0 0
  %83 = vmatpush1.bf16.msra.mxu0 0
  %84 = vmatprep.subr.bf16.mxu0 0
  %85 = vmatpush1.bf16.msra.mxu0 0
  %86 = vmatprep.subr.bf16.mxu0 0
  %87 = vmatpush1.bf16.msra.mxu0 0
  %88 = vmatprep.subr.bf16.mxu0 0
  %89 = vmatpush1.bf16.msra.mxu0 0
  %90 = vmatprep.subr.bf16.mxu0 0
  %91 = vmatpush1.bf16.msra.mxu0 %v70
  %92 = vmatprep.subr.bf16.mxu0 0
  %93 = vmatpush1.bf16.msra.mxu0 %v69
  %94 = vmatprep.subr.bf16.mxu0 0
  %95 = vmatpush1.bf16.msra.mxu0 %v68
  %96 = vmatprep.subr.bf16.mxu0 0
  %97 = vmatpush1.bf16.msra.mxu0 %v67
  %98 = vmatprep.subr.bf16.mxu0 0
  %99 = vmatpush2.bf16.msra.mxu0 0
  %100 = vmatprep.subr.bf16.mxu0 0
  %101 = vmatpush2.bf16.msra.mxu0 0
  %102 = vmatprep.subr.bf16.mxu0 0
  %103 = vmatpush2.bf16.msra.mxu0 0
  %104 = vmatprep.subr.bf16.mxu0 0
  %105 = vmatpush2.bf16.msra.mxu0 0
  %106 = vmatprep.subr.bf16.mxu0 0
  %107 = vmatpush2.bf16.msra.mxu0 0
  %108 = vmatprep.subr.bf16.mxu0 0
  %109 = vmatpush2.bf16.msra.mxu0 0
  %110 = vmatprep.subr.bf16.mxu0 0
  %111 = vmatpush2.bf16.msra.mxu0 0
  %112 = vmatprep.subr.bf16.mxu0 0
  %113 = vmatpush2.bf16.msra.mxu0 0
  %114 = vmatprep.mubr.bf16.mxu0 0
  %115 = vmatmul.mubr.bf16.gmra.mxu0 %v77
  %v116 = vpop.f32.mrf.mxu0
  %v117 = vadd.f32 0.0, %v116
  %v118 = vpop.f32.mrf.mxu0
  %v119 = vpop.f32.mrf.mxu0
  %v120 = vadd.f32 0.0, %v119
  %v121 = vpop.f32.mrf.mxu0
  %122 = vmatprep.mubr.bf16.mxu0 0
  %123 = vmatmul.mubr.bf16.gmra.mxu0 %v80
  %v124 = vpop.f32.mrf.mxu0
  %v125 = vadd.f32 0.0, %v124
  %v126 = vpop.f32.mrf.mxu0
  %v127 = vpop.f32.mrf.mxu0
  %v128 = vadd.f32 0.0, %v127
  %v129 = vpop.f32.mrf.mxu0
  %130 = vdwg.mxu0
  %v135 = vunpack.c.l.b16 %v15
  %v136 = vunpack.c.l.b16 %v16
  %v137 = vunpack.c.l.b16 %v17
  %v138 = vunpack.c.l.b16 %v18
  %v139 = vpack.c.b16 %v136, %v135
  %v140 = vpack.c.b16 %v138, %v137
  %v149 = vunpack.c.l.b16 %v19
  %v150 = vunpack.c.l.b16 %v20
  %v151 = vunpack.c.l.b16 %v21
  %v152 = vunpack.c.l.b16 %v22
  %v153 = vunpack.c.l.b16 %v23
  %v154 = vunpack.c.l.b16 %v24
  %v155 = vunpack.c.l.b16 %v25
  %v156 = vunpack.c.l.b16 %v26
  %v157 = vpack.c.b16 %v150, %v149
  %v158 = vpack.c.b16 %v152, %v151
  %v159 = vpack.c.b16 %v154, %v153
  %v160 = vpack.c.b16 %v156, %v155
  %v166 = vsel %vm75, %v139, 0
  %v169 = vsel %vm75, %v140, 0
  %171 = vmatprep.subr.bf16.mxu0 0
  %172 = vmatpush1.bf16.msra.mxu0 0
  %173 = vmatprep.subr.bf16.mxu0 0
  %174 = vmatpush1.bf16.msra.mxu0 0
  %175 = vmatprep.subr.bf16.mxu0 0
  %176 = vmatpush1.bf16.msra.mxu0 0
  %177 = vmatprep.subr.bf16.mxu0 0
  %178 = vmatpush1.bf16.msra.mxu0 0
  %179 = vmatprep.subr.bf16.mxu0 0
  %180 = vmatpush1.bf16.msra.mxu0 %v160
  %181 = vmatprep.subr.bf16.mxu0 0
  %182 = vmatpush1.bf16.msra.mxu0 %v159
  %183 = vmatprep.subr.bf16.mxu0 0
  %184 = vmatpush1.bf16.msra.mxu0 %v158
  %185 = vmatprep.subr.bf16.mxu0 0
  %186 = vmatpush1.bf16.msra.mxu0 %v157
  %187 = vmatprep.subr.bf16.mxu0 0
  %188 = vmatpush2.bf16.msra.mxu0 0
  %189 = vmatprep.subr.bf16.mxu0 0
  %190 = vmatpush2.bf16.msra.mxu0 0
  %191 = vmatprep.subr.bf16.mxu0 0
  %192 = vmatpush2.bf16.msra.mxu0 0
  %193 = vmatprep.subr.bf16.mxu0 0
  %194 = vmatpush2.bf16.msra.mxu0 0
  %195 = vmatprep.subr.bf16.mxu0 0
  %196 = vmatpush2.bf16.msra.mxu0 0
  %197 = vmatprep.subr.bf16.mxu0 0
  %198 = vmatpush2.bf16.msra.mxu0 0
  %199 = vmatprep.subr.bf16.mxu0 0
  %200 = vmatpush2.bf16.msra.mxu0 0
  %201 = vmatprep.subr.bf16.mxu0 0
  %202 = vmatpush2.bf16.msra.mxu0 0
  %203 = vmatprep.mubr.bf16.mxu0 0
  %204 = vmatmul.mubr.bf16.gmra.mxu0 %v166
  %v205 = vpop.f32.mrf.mxu0
  %v206 = vadd.f32 %v117, %v205
  %v207 = vpop.f32.mrf.mxu0
  %v208 = vpop.f32.mrf.mxu0
  %v209 = vadd.f32 %v120, %v208
  %v210 = vpop.f32.mrf.mxu0
  %211 = vmatprep.mubr.bf16.mxu0 0
  %212 = vmatmul.mubr.bf16.gmra.mxu0 %v169
  %v213 = vpop.f32.mrf.mxu0
  %v214 = vadd.f32 %v125, %v213
  %v215 = vpop.f32.mrf.mxu0
  %v216 = vpop.f32.mrf.mxu0
  %v217 = vadd.f32 %v128, %v216
  %v218 = vpop.f32.mrf.mxu0
  %219 = vdwg.mxu0
  %s220 = scalar_lea.vmem %s0, 32
  %v221 = vld [vmem:[%s220] sm:$0xf]
  %v222 = vld [vmem:[%s220 + $0x4] sm:$0xf]
  %v223 = vld [vmem:[%s220 + $0x8] sm:$0xf]
  %v224 = vld [vmem:[%s220 + $0xc] sm:$0xf]
  %s225 = scalar_lea.vmem %s1, 64
  %v226 = vld [vmem:[%s225] sm:$0xf]
  %v227 = vld [vmem:[%s225 + $0x4] sm:$0xf]
  %v228 = vld [vmem:[%s225 + $0x8] sm:$0xf]
  %v229 = vld [vmem:[%s225 + $0xc] sm:$0xf]
  %v230 = vld [vmem:[%s225 + $0x10] sm:$0xf]
  %v231 = vld [vmem:[%s225 + $0x14] sm:$0xf]
  %v232 = vld [vmem:[%s225 + $0x18] sm:$0xf]
  %v233 = vld [vmem:[%s225 + $0x1c] sm:$0xf]
  %v238 = vunpack.c.l.b16 %v221
  %v239 = vunpack.c.l.b16 %v222
  %v240 = vunpack.c.l.b16 %v223
  %v241 = vunpack.c.l.b16 %v224
  %v242 = vpack.c.b16 %v239, %v238
  %v243 = vpack.c.b16 %v241, %v240
  %v252 = vunpack.c.l.b16 %v226
  %v253 = vunpack.c.l.b16 %v227
  %v254 = vunpack.c.l.b16 %v228
  %v255 = vunpack.c.l.b16 %v229
  %v256 = vunpack.c.l.b16 %v230
  %v257 = vunpack.c.l.b16 %v231
  %v258 = vunpack.c.l.b16 %v232
  %v259 = vunpack.c.l.b16 %v233
  %v260 = vpack.c.b16 %v253, %v252
  %v261 = vpack.c.b16 %v255, %v254
  %v262 = vpack.c.b16 %v257, %v256
  %v263 = vpack.c.b16 %v259, %v258
  %v269 = vsel %vm75, %v242, 0
  %v272 = vsel %vm75, %v243, 0
  %274 = vmatprep.subr.bf16.mxu0 0
  %275 = vmatpush1.bf16.msra.mxu0 0
  %276 = vmatprep.subr.bf16.mxu0 0
  %277 = vmatpush1.bf16.msra.mxu0 0
  %278 = vmatprep.subr.bf16.mxu0 0
  %279 = vmatpush1.bf16.msra.mxu0 0
  %280 = vmatprep.subr.bf16.mxu0 0
  %281 = vmatpush1.bf16.msra.mxu0 0
  %282 = vmatprep.subr.bf16.mxu0 0
  %283 = vmatpush1.bf16.msra.mxu0 %v263
  %284 = vmatprep.subr.bf16.mxu0 0
  %285 = vmatpush1.bf16.msra.mxu0 %v262
  %286 = vmatprep.subr.bf16.mxu0 0
  %287 = vmatpush1.bf16.msra.mxu0 %v261
  %288 = vmatprep.subr.bf16.mxu0 0
  %289 = vmatpush1.bf16.msra.mxu0 %v260
  %290 = vmatprep.subr.bf16.mxu0 0
  %291 = vmatpush2.bf16.msra.mxu0 0
  %292 = vmatprep.subr.bf16.mxu0 0
  %293 = vmatpush2.bf16.msra.mxu0 0
  %294 = vmatprep.subr.bf16.mxu0 0
  %295 = vmatpush2.bf16.msra.mxu0 0
  %296 = vmatprep.subr.bf16.mxu0 0
  %297 = vmatpush2.bf16.msra.mxu0 0
  %298 = vmatprep.subr.bf16.mxu0 0
  %299 = vmatpush2.bf16.msra.mxu0 0
  %300 = vmatprep.subr.bf16.mxu0 0
  %301 = vmatpush2.bf16.msra.mxu0 0
  %302 = vmatprep.subr.bf16.mxu0 0
  %303 = vmatpush2.bf16.msra.mxu0 0
  %304 = vmatprep.subr.bf16.mxu0 0
  %305 = vmatpush2.bf16.msra.mxu0 0
  %306 = vmatprep.mubr.bf16.mxu0 0
  %307 = vmatmul.mubr.bf16.gmra.mxu0 %v269
  %v308 = vpop.f32.mrf.mxu0
  %v309 = vadd.f32 0.0, %v308
  %v310 = vpop.f32.mrf.mxu0
  %v311 = vpop.f32.mrf.mxu0
  %v312 = vadd.f32 0.0, %v311
  %v313 = vpop.f32.mrf.mxu0
  %314 = vmatprep.mubr.bf16.mxu0 0
  %315 = vmatmul.mubr.bf16.gmra.mxu0 %v272
  %v316 = vpop.f32.mrf.mxu0
  %v317 = vadd.f32 0.0, %v316
  %v318 = vpop.f32.mrf.mxu0
  %v319 = vpop.f32.mrf.mxu0
  %v320 = vadd.f32 0.0, %v319
  %v321 = vpop.f32.mrf.mxu0
  %322 = vdwg.mxu0
  %v323 = vadd.f32 %v206, %v309
  %v324 = vadd.f32 %v209, %v312
  %v325 = vadd.f32 %v214, %v317
  %v326 = vadd.f32 %v217, %v320
  %s327 = scalar_lea.vmem %s0, 48
  %v328 = vld [vmem:[%s327] sm:$0xf]
  %v329 = vld [vmem:[%s327 + $0x4] sm:$0xf]
  %v330 = vld [vmem:[%s327 + $0x8] sm:$0xf]
  %v331 = vld [vmem:[%s327 + $0xc] sm:$0xf]
  %s332 = scalar_lea.vmem %s1, 96
  %v333 = vld [vmem:[%s332] sm:$0xf]
  %v334 = vld [vmem:[%s332 + $0x4] sm:$0xf]
  %v335 = vld [vmem:[%s332 + $0x8] sm:$0xf]
  %v336 = vld [vmem:[%s332 + $0xc] sm:$0xf]
  %v337 = vld [vmem:[%s332 + $0x10] sm:$0xf]
  %v338 = vld [vmem:[%s332 + $0x14] sm:$0xf]
  %v339 = vld [vmem:[%s332 + $0x18] sm:$0xf]
  %v340 = vld [vmem:[%s332 + $0x1c] sm:$0xf]
  %v345 = vunpack.c.l.b16 %v328
  %v346 = vunpack.c.l.b16 %v329
  %v347 = vunpack.c.l.b16 %v330
  %v348 = vunpack.c.l.b16 %v331
  %v349 = vpack.c.b16 %v346, %v345
  %v350 = vpack.c.b16 %v348, %v347
  %v359 = vunpack.c.l.b16 %v333
  %v360 = vunpack.c.l.b16 %v334
  %v361 = vunpack.c.l.b16 %v335
  %v362 = vunpack.c.l.b16 %v336
  %v363 = vunpack.c.l.b16 %v337
  %v364 = vunpack.c.l.b16 %v338
  %v365 = vunpack.c.l.b16 %v339
  %v366 = vunpack.c.l.b16 %v340
  %v367 = vpack.c.b16 %v360, %v359
  %v368 = vpack.c.b16 %v362, %v361
  %v369 = vpack.c.b16 %v364, %v363
  %v370 = vpack.c.b16 %v366, %v365
  %v376 = vsel %vm75, %v349, 0
  %v379 = vsel %vm75, %v350, 0
  %381 = vmatprep.subr.bf16.mxu0 0
  %382 = vmatpush1.bf16.msra.mxu0 0
  %383 = vmatprep.subr.bf16.mxu0 0
  %384 = vmatpush1.bf16.msra.mxu0 0
  %385 = vmatprep.subr.bf16.mxu0 0
  %386 = vmatpush1.bf16.msra.mxu0 0
  %387 = vmatprep.subr.bf16.mxu0 0
  %388 = vmatpush1.bf16.msra.mxu0 0
  %389 = vmatprep.subr.bf16.mxu0 0
  %390 = vmatpush1.bf16.msra.mxu0 %v370
  %391 = vmatprep.subr.bf16.mxu0 0
  %392 = vmatpush1.bf16.msra.mxu0 %v369
  %393 = vmatprep.subr.bf16.mxu0 0
  %394 = vmatpush1.bf16.msra.mxu0 %v368
  %395 = vmatprep.subr.bf16.mxu0 0
  %396 = vmatpush1.bf16.msra.mxu0 %v367
  %397 = vmatprep.subr.bf16.mxu0 0
  %398 = vmatpush2.bf16.msra.mxu0 0
  %399 = vmatprep.subr.bf16.mxu0 0
  %400 = vmatpush2.bf16.msra.mxu0 0
  %401 = vmatprep.subr.bf16.mxu0 0
  %402 = vmatpush2.bf16.msra.mxu0 0
  %403 = vmatprep.subr.bf16.mxu0 0
  %404 = vmatpush2.bf16.msra.mxu0 0
  %405 = vmatprep.subr.bf16.mxu0 0
  %406 = vmatpush2.bf16.msra.mxu0 0
  %407 = vmatprep.subr.bf16.mxu0 0
  %408 = vmatpush2.bf16.msra.mxu0 0
  %409 = vmatprep.subr.bf16.mxu0 0
  %410 = vmatpush2.bf16.msra.mxu0 0
  %411 = vmatprep.subr.bf16.mxu0 0
  %412 = vmatpush2.bf16.msra.mxu0 0
  %413 = vmatprep.mubr.bf16.mxu0 0
  %414 = vmatmul.mubr.bf16.gmra.mxu0 %v376
  %v415 = vpop.f32.mrf.mxu0
  %v416 = vadd.f32 0.0, %v415
  %v417 = vpop.f32.mrf.mxu0
  %v418 = vpop.f32.mrf.mxu0
  %v419 = vadd.f32 0.0, %v418
  %v420 = vpop.f32.mrf.mxu0
  %421 = vmatprep.mubr.bf16.mxu0 0
  %422 = vmatmul.mubr.bf16.gmra.mxu0 %v379
  %v423 = vpop.f32.mrf.mxu0
  %v424 = vadd.f32 0.0, %v423
  %v425 = vpop.f32.mrf.mxu0
  %v426 = vpop.f32.mrf.mxu0
  %v427 = vadd.f32 0.0, %v426
  %v428 = vpop.f32.mrf.mxu0
  %429 = vdwg.mxu0
  %v430 = vadd.f32 %v323, %v416
  %v431 = vadd.f32 %v324, %v419
  %v432 = vadd.f32 %v325, %v424
  %v433 = vadd.f32 %v326, %v427
  %s434 = scalar_lea.vmem %s0, 64
  %v435 = vld [vmem:[%s434] sm:$0xf]
  %v436 = vld [vmem:[%s434 + $0x4] sm:$0xf]
  %v437 = vld [vmem:[%s434 + $0x8] sm:$0xf]
  %v438 = vld [vmem:[%s434 + $0xc] sm:$0xf]
  %s439 = scalar_lea.vmem %s1, 128
  %v440 = vld [vmem:[%s439] sm:$0xf]
  %v441 = vld [vmem:[%s439 + $0x4] sm:$0xf]
  %v442 = vld [vmem:[%s439 + $0x8] sm:$0xf]
  %v443 = vld [vmem:[%s439 + $0xc] sm:$0xf]
  %v444 = vld [vmem:[%s439 + $0x10] sm:$0xf]
  %v445 = vld [vmem:[%s439 + $0x14] sm:$0xf]
  %v446 = vld [vmem:[%s439 + $0x18] sm:$0xf]
  %v447 = vld [vmem:[%s439 + $0x1c] sm:$0xf]
  %v452 = vunpack.c.l.b16 %v435
  %v453 = vunpack.c.l.b16 %v436
  %v454 = vunpack.c.l.b16 %v437
  %v455 = vunpack.c.l.b16 %v438
  %v456 = vpack.c.b16 %v453, %v452
  %v457 = vpack.c.b16 %v455, %v454
  %v466 = vunpack.c.l.b16 %v440
  %v467 = vunpack.c.l.b16 %v441
  %v468 = vunpack.c.l.b16 %v442
  %v469 = vunpack.c.l.b16 %v443
  %v470 = vunpack.c.l.b16 %v444
  %v471 = vunpack.c.l.b16 %v445
  %v472 = vunpack.c.l.b16 %v446
  %v473 = vunpack.c.l.b16 %v447
  %v474 = vpack.c.b16 %v467, %v466
  %v475 = vpack.c.b16 %v469, %v468
  %v476 = vpack.c.b16 %v471, %v470
  %v477 = vpack.c.b16 %v473, %v472
  %v483 = vsel %vm75, %v456, 0
  %v486 = vsel %vm75, %v457, 0
  %488 = vmatprep.subr.bf16.mxu0 0
  %489 = vmatpush1.bf16.msra.mxu0 0
  %490 = vmatprep.subr.bf16.mxu0 0
  %491 = vmatpush1.bf16.msra.mxu0 0
  %492 = vmatprep.subr.bf16.mxu0 0
  %493 = vmatpush1.bf16.msra.mxu0 0
  %494 = vmatprep.subr.bf16.mxu0 0
  %495 = vmatpush1.bf16.msra.mxu0 0
  %496 = vmatprep.subr.bf16.mxu0 0
  %497 = vmatpush1.bf16.msra.mxu0 %v477
  %498 = vmatprep.subr.bf16.mxu0 0
  %499 = vmatpush1.bf16.msra.mxu0 %v476
  %500 = vmatprep.subr.bf16.mxu0 0
  %501 = vmatpush1.bf16.msra.mxu0 %v475
  %502 = vmatprep.subr.bf16.mxu0 0
  %503 = vmatpush1.bf16.msra.mxu0 %v474
  %504 = vmatprep.subr.bf16.mxu0 0
  %505 = vmatpush2.bf16.msra.mxu0 0
  %506 = vmatprep.subr.bf16.mxu0 0
  %507 = vmatpush2.bf16.msra.mxu0 0
  %508 = vmatprep.subr.bf16.mxu0 0
  %509 = vmatpush2.bf16.msra.mxu0 0
  %510 = vmatprep.subr.bf16.mxu0 0
  %511 = vmatpush2.bf16.msra.mxu0 0
  %512 = vmatprep.subr.bf16.mxu0 0
  %513 = vmatpush2.bf16.msra.mxu0 0
  %514 = vmatprep.subr.bf16.mxu0 0
  %515 = vmatpush2.bf16.msra.mxu0 0
  %516 = vmatprep.subr.bf16.mxu0 0
  %517 = vmatpush2.bf16.msra.mxu0 0
  %518 = vmatprep.subr.bf16.mxu0 0
  %519 = vmatpush2.bf16.msra.mxu0 0
  %520 = vmatprep.mubr.bf16.mxu0 0
  %521 = vmatmul.mubr.bf16.gmra.mxu0 %v483
  %v522 = vpop.f32.mrf.mxu0
  %v523 = vadd.f32 0.0, %v522
  %v524 = vpop.f32.mrf.mxu0
  %v525 = vpop.f32.mrf.mxu0
  %v526 = vadd.f32 0.0, %v525
  %v527 = vpop.f32.mrf.mxu0
  %528 = vmatprep.mubr.bf16.mxu0 0
  %529 = vmatmul.mubr.bf16.gmra.mxu0 %v486
  %v530 = vpop.f32.mrf.mxu0
  %v531 = vadd.f32 0.0, %v530
  %v532 = vpop.f32.mrf.mxu0
  %v533 = vpop.f32.mrf.mxu0
  %v534 = vadd.f32 0.0, %v533
  %v535 = vpop.f32.mrf.mxu0
  %536 = vdwg.mxu0
  %v537 = vadd.f32 %v430, %v523
  %v538 = vadd.f32 %v431, %v526
  %v539 = vadd.f32 %v432, %v531
  %v540 = vadd.f32 %v433, %v534
  %s541 = scalar_lea.vmem %s0, 80
  %v542 = vld [vmem:[%s541] sm:$0xf]
  %v543 = vld [vmem:[%s541 + $0x4] sm:$0xf]
  %v544 = vld [vmem:[%s541 + $0x8] sm:$0xf]
  %v545 = vld [vmem:[%s541 + $0xc] sm:$0xf]
  %s546 = scalar_lea.vmem %s1, 160
  %v547 = vld [vmem:[%s546] sm:$0xf]
  %v548 = vld [vmem:[%s546 + $0x4] sm:$0xf]
  %v549 = vld [vmem:[%s546 + $0x8] sm:$0xf]
  %v550 = vld [vmem:[%s546 + $0xc] sm:$0xf]
  %v551 = vld [vmem:[%s546 + $0x10] sm:$0xf]
  %v552 = vld [vmem:[%s546 + $0x14] sm:$0xf]
  %v553 = vld [vmem:[%s546 + $0x18] sm:$0xf]
  %v554 = vld [vmem:[%s546 + $0x1c] sm:$0xf]
  %v559 = vunpack.c.l.b16 %v542
  %v560 = vunpack.c.l.b16 %v543
  %v561 = vunpack.c.l.b16 %v544
  %v562 = vunpack.c.l.b16 %v545
  %v563 = vpack.c.b16 %v560, %v559
  %v564 = vpack.c.b16 %v562, %v561
  %v573 = vunpack.c.l.b16 %v547
  %v574 = vunpack.c.l.b16 %v548
  %v575 = vunpack.c.l.b16 %v549
  %v576 = vunpack.c.l.b16 %v550
  %v577 = vunpack.c.l.b16 %v551
  %v578 = vunpack.c.l.b16 %v552
  %v579 = vunpack.c.l.b16 %v553
  %v580 = vunpack.c.l.b16 %v554
  %v581 = vpack.c.b16 %v574, %v573
  %v582 = vpack.c.b16 %v576, %v575
  %v583 = vpack.c.b16 %v578, %v577
  %v584 = vpack.c.b16 %v580, %v579
  %v590 = vsel %vm75, %v563, 0
  %v593 = vsel %vm75, %v564, 0
  %595 = vmatprep.subr.bf16.mxu0 0
  %596 = vmatpush1.bf16.msra.mxu0 0
  %597 = vmatprep.subr.bf16.mxu0 0
  %598 = vmatpush1.bf16.msra.mxu0 0
  %599 = vmatprep.subr.bf16.mxu0 0
  %600 = vmatpush1.bf16.msra.mxu0 0
  %601 = vmatprep.subr.bf16.mxu0 0
  %602 = vmatpush1.bf16.msra.mxu0 0
  %603 = vmatprep.subr.bf16.mxu0 0
  %604 = vmatpush1.bf16.msra.mxu0 %v584
  %605 = vmatprep.subr.bf16.mxu0 0
  %606 = vmatpush1.bf16.msra.mxu0 %v583
  %607 = vmatprep.subr.bf16.mxu0 0
  %608 = vmatpush1.bf16.msra.mxu0 %v582
  %609 = vmatprep.subr.bf16.mxu0 0
  %610 = vmatpush1.bf16.msra.mxu0 %v581
  %611 = vmatprep.subr.bf16.mxu0 0
  %612 = vmatpush2.bf16.msra.mxu0 0
  %613 = vmatprep.subr.bf16.mxu0 0
  %614 = vmatpush2.bf16.msra.mxu0 0
  %615 = vmatprep.subr.bf16.mxu0 0
  %616 = vmatpush2.bf16.msra.mxu0 0
  %617 = vmatprep.subr.bf16.mxu0 0
  %618 = vmatpush2.bf16.msra.mxu0 0
  %619 = vmatprep.subr.bf16.mxu0 0
  %620 = vmatpush2.bf16.msra.mxu0 0
  %621 = vmatprep.subr.bf16.mxu0 0
  %622 = vmatpush2.bf16.msra.mxu0 0
  %623 = vmatprep.subr.bf16.mxu0 0
  %624 = vmatpush2.bf16.msra.mxu0 0
  %625 = vmatprep.subr.bf16.mxu0 0
  %626 = vmatpush2.bf16.msra.mxu0 0
  %627 = vmatprep.mubr.bf16.mxu0 0
  %628 = vmatmul.mubr.bf16.gmra.mxu0 %v590
  %v629 = vpop.f32.mrf.mxu0
  %v630 = vadd.f32 0.0, %v629
  %v631 = vpop.f32.mrf.mxu0
  %v632 = vpop.f32.mrf.mxu0
  %v633 = vadd.f32 0.0, %v632
  %v634 = vpop.f32.mrf.mxu0
  %635 = vmatprep.mubr.bf16.mxu0 0
  %636 = vmatmul.mubr.bf16.gmra.mxu0 %v593
  %v637 = vpop.f32.mrf.mxu0
  %v638 = vadd.f32 0.0, %v637
  %v639 = vpop.f32.mrf.mxu0
  %v640 = vpop.f32.mrf.mxu0
  %v641 = vadd.f32 0.0, %v640
  %v642 = vpop.f32.mrf.mxu0
  %643 = vdwg.mxu0
  %v644 = vadd.f32 %v537, %v630
  %v645 = vadd.f32 %v538, %v633
  %v646 = vadd.f32 %v539, %v638
  %v647 = vadd.f32 %v540, %v641
  %s648 = scalar_lea.vmem %s0, 96
  %v649 = vld [vmem:[%s648] sm:$0xf]
  %v650 = vld [vmem:[%s648 + $0x4] sm:$0xf]
  %v651 = vld [vmem:[%s648 + $0x8] sm:$0xf]
  %v652 = vld [vmem:[%s648 + $0xc] sm:$0xf]
  %s653 = scalar_lea.vmem %s1, 192
  %v654 = vld [vmem:[%s653] sm:$0xf]
  %v655 = vld [vmem:[%s653 + $0x4] sm:$0xf]
  %v656 = vld [vmem:[%s653 + $0x8] sm:$0xf]
  %v657 = vld [vmem:[%s653 + $0xc] sm:$0xf]
  %v658 = vld [vmem:[%s653 + $0x10] sm:$0xf]
  %v659 = vld [vmem:[%s653 + $0x14] sm:$0xf]
  %v660 = vld [vmem:[%s653 + $0x18] sm:$0xf]
  %v661 = vld [vmem:[%s653 + $0x1c] sm:$0xf]
  %v666 = vunpack.c.l.b16 %v649
  %v667 = vunpack.c.l.b16 %v650
  %v668 = vunpack.c.l.b16 %v651
  %v669 = vunpack.c.l.b16 %v652
  %v670 = vpack.c.b16 %v667, %v666
  %v671 = vpack.c.b16 %v669, %v668
  %v680 = vunpack.c.l.b16 %v654
  %v681 = vunpack.c.l.b16 %v655
  %v682 = vunpack.c.l.b16 %v656
  %v683 = vunpack.c.l.b16 %v657
  %v684 = vunpack.c.l.b16 %v658
  %v685 = vunpack.c.l.b16 %v659
  %v686 = vunpack.c.l.b16 %v660
  %v687 = vunpack.c.l.b16 %v661
  %v688 = vpack.c.b16 %v681, %v680
  %v689 = vpack.c.b16 %v683, %v682
  %v690 = vpack.c.b16 %v685, %v684
  %v691 = vpack.c.b16 %v687, %v686
  %v697 = vsel %vm75, %v670, 0
  %v700 = vsel %vm75, %v671, 0
  %702 = vmatprep.subr.bf16.mxu0 0
  %703 = vmatpush1.bf16.msra.mxu0 0
  %704 = vmatprep.subr.bf16.mxu0 0
  %705 = vmatpush1.bf16.msra.mxu0 0
  %706 = vmatprep.subr.bf16.mxu0 0
  %707 = vmatpush1.bf16.msra.mxu0 0
  %708 = vmatprep.subr.bf16.mxu0 0
  %709 = vmatpush1.bf16.msra.mxu0 0
  %710 = vmatprep.subr.bf16.mxu0 0
  %711 = vmatpush1.bf16.msra.mxu0 %v691
  %712 = vmatprep.subr.bf16.mxu0 0
  %713 = vmatpush1.bf16.msra.mxu0 %v690
  %714 = vmatprep.subr.bf16.mxu0 0
  %715 = vmatpush1.bf16.msra.mxu0 %v689
  %716 = vmatprep.subr.bf16.mxu0 0
  %717 = vmatpush1.bf16.msra.mxu0 %v688
  %718 = vmatprep.subr.bf16.mxu0 0
  %719 = vmatpush2.bf16.msra.mxu0 0
  %720 = vmatprep.subr.bf16.mxu0 0
  %721 = vmatpush2.bf16.msra.mxu0 0
  %722 = vmatprep.subr.bf16.mxu0 0
  %723 = vmatpush2.bf16.msra.mxu0 0
  %724 = vmatprep.subr.bf16.mxu0 0
  %725 = vmatpush2.bf16.msra.mxu0 0
  %726 = vmatprep.subr.bf16.mxu0 0
  %727 = vmatpush2.bf16.msra.mxu0 0
  %728 = vmatprep.subr.bf16.mxu0 0
  %729 = vmatpush2.bf16.msra.mxu0 0
  %730 = vmatprep.subr.bf16.mxu0 0
  %731 = vmatpush2.bf16.msra.mxu0 0
  %732 = vmatprep.subr.bf16.mxu0 0
  %733 = vmatpush2.bf16.msra.mxu0 0
  %734 = vmatprep.mubr.bf16.mxu0 0
  %735 = vmatmul.mubr.bf16.gmra.mxu0 %v697
  %v736 = vpop.f32.mrf.mxu0
  %v737 = vadd.f32 0.0, %v736
  %v738 = vpop.f32.mrf.mxu0
  %v739 = vpop.f32.mrf.mxu0
  %v740 = vadd.f32 0.0, %v739
  %v741 = vpop.f32.mrf.mxu0
  %742 = vmatprep.mubr.bf16.mxu0 0
  %743 = vmatmul.mubr.bf16.gmra.mxu0 %v700
  %v744 = vpop.f32.mrf.mxu0
  %v745 = vadd.f32 0.0, %v744
  %v746 = vpop.f32.mrf.mxu0
  %v747 = vpop.f32.mrf.mxu0
  %v748 = vadd.f32 0.0, %v747
  %v749 = vpop.f32.mrf.mxu0
  %750 = vdwg.mxu0
  %v751 = vadd.f32 %v644, %v737
  %v752 = vadd.f32 %v645, %v740
  %v753 = vadd.f32 %v646, %v745
  %v754 = vadd.f32 %v647, %v748
  %s755 = scalar_lea.vmem %s0, 112
  %v756 = vld [vmem:[%s755] sm:$0xf]
  %v757 = vld [vmem:[%s755 + $0x4] sm:$0xf]
  %v758 = vld [vmem:[%s755 + $0x8] sm:$0xf]
  %v759 = vld [vmem:[%s755 + $0xc] sm:$0xf]
  %s760 = scalar_lea.vmem %s1, 224
  %v761 = vld [vmem:[%s760] sm:$0xf]
  %v762 = vld [vmem:[%s760 + $0x4] sm:$0xf]
  %v763 = vld [vmem:[%s760 + $0x8] sm:$0xf]
  %v764 = vld [vmem:[%s760 + $0xc] sm:$0xf]
  %v765 = vld [vmem:[%s760 + $0x10] sm:$0xf]
  %v766 = vld [vmem:[%s760 + $0x14] sm:$0xf]
  %v767 = vld [vmem:[%s760 + $0x18] sm:$0xf]
  %v768 = vld [vmem:[%s760 + $0x1c] sm:$0xf]
  %v773 = vunpack.c.l.b16 %v756
  %v774 = vunpack.c.l.b16 %v757
  %v775 = vunpack.c.l.b16 %v758
  %v776 = vunpack.c.l.b16 %v759
  %v777 = vpack.c.b16 %v774, %v773
  %v778 = vpack.c.b16 %v776, %v775
  %v787 = vunpack.c.l.b16 %v761
  %v788 = vunpack.c.l.b16 %v762
  %v789 = vunpack.c.l.b16 %v763
  %v790 = vunpack.c.l.b16 %v764
  %v791 = vunpack.c.l.b16 %v765
  %v792 = vunpack.c.l.b16 %v766
  %v793 = vunpack.c.l.b16 %v767
  %v794 = vunpack.c.l.b16 %v768
  %v795 = vpack.c.b16 %v788, %v787
  %v796 = vpack.c.b16 %v790, %v789
  %v797 = vpack.c.b16 %v792, %v791
  %v798 = vpack.c.b16 %v794, %v793
  %v804 = vsel %vm75, %v777, 0
  %v807 = vsel %vm75, %v778, 0
  %809 = vmatprep.subr.bf16.mxu0 0
  %810 = vmatpush1.bf16.msra.mxu0 0
  %811 = vmatprep.subr.bf16.mxu0 0
  %812 = vmatpush1.bf16.msra.mxu0 0
  %813 = vmatprep.subr.bf16.mxu0 0
  %814 = vmatpush1.bf16.msra.mxu0 0
  %815 = vmatprep.subr.bf16.mxu0 0
  %816 = vmatpush1.bf16.msra.mxu0 0
  %817 = vmatprep.subr.bf16.mxu0 0
  %818 = vmatpush1.bf16.msra.mxu0 %v798
  %819 = vmatprep.subr.bf16.mxu0 0
  %820 = vmatpush1.bf16.msra.mxu0 %v797
  %821 = vmatprep.subr.bf16.mxu0 0
  %822 = vmatpush1.bf16.msra.mxu0 %v796
  %823 = vmatprep.subr.bf16.mxu0 0
  %824 = vmatpush1.bf16.msra.mxu0 %v795
  %825 = vmatprep.subr.bf16.mxu0 0
  %826 = vmatpush2.bf16.msra.mxu0 0
  %827 = vmatprep.subr.bf16.mxu0 0
  %828 = vmatpush2.bf16.msra.mxu0 0
  %829 = vmatprep.subr.bf16.mxu0 0
  %830 = vmatpush2.bf16.msra.mxu0 0
  %831 = vmatprep.subr.bf16.mxu0 0
  %832 = vmatpush2.bf16.msra.mxu0 0
  %833 = vmatprep.subr.bf16.mxu0 0
  %834 = vmatpush2.bf16.msra.mxu0 0
  %835 = vmatprep.subr.bf16.mxu0 0
  %836 = vmatpush2.bf16.msra.mxu0 0
  %837 = vmatprep.subr.bf16.mxu0 0
  %838 = vmatpush2.bf16.msra.mxu0 0
  %839 = vmatprep.subr.bf16.mxu0 0
  %840 = vmatpush2.bf16.msra.mxu0 0
  %841 = vmatprep.mubr.bf16.mxu0 0
  %842 = vmatmul.mubr.bf16.gmra.mxu0 %v804
  %v843 = vpop.f32.mrf.mxu0
  %v844 = vadd.f32 0.0, %v843
  %v845 = vpop.f32.mrf.mxu0
  %v846 = vpop.f32.mrf.mxu0
  %v847 = vadd.f32 0.0, %v846
  %v848 = vpop.f32.mrf.mxu0
  %849 = vmatprep.mubr.bf16.mxu0 0
  %850 = vmatmul.mubr.bf16.gmra.mxu0 %v807
  %v851 = vpop.f32.mrf.mxu0
  %v852 = vadd.f32 0.0, %v851
  %v853 = vpop.f32.mrf.mxu0
  %v854 = vpop.f32.mrf.mxu0
  %v855 = vadd.f32 0.0, %v854
  %v856 = vpop.f32.mrf.mxu0
  %857 = vdwg.mxu0
  %v858 = vadd.f32 %v751, %v844
  %v859 = vadd.f32 %v752, %v847
  %v860 = vadd.f32 %v753, %v852
  %v861 = vadd.f32 %v754, %v855
  %s862 = scalar_lea.vmem %s0, 128
  %v863 = vld [vmem:[%s862] sm:$0xf]
  %v864 = vld [vmem:[%s862 + $0x4] sm:$0xf]
  %v865 = vld [vmem:[%s862 + $0x8] sm:$0xf]
  %v866 = vld [vmem:[%s862 + $0xc] sm:$0xf]
  %s867 = scalar_lea.vmem %s1, 256
  %v868 = vld [vmem:[%s867] sm:$0xf]
  %v869 = vld [vmem:[%s867 + $0x4] sm:$0xf]
  %v870 = vld [vmem:[%s867 + $0x8] sm:$0xf]
  %v871 = vld [vmem:[%s867 + $0xc] sm:$0xf]
  %v872 = vld [vmem:[%s867 + $0x10] sm:$0xf]
  %v873 = vld [vmem:[%s867 + $0x14] sm:$0xf]
  %v874 = vld [vmem:[%s867 + $0x18] sm:$0xf]
  %v875 = vld [vmem:[%s867 + $0x1c] sm:$0xf]
  %v880 = vunpack.c.l.b16 %v863
  %v881 = vunpack.c.l.b16 %v864
  %v882 = vunpack.c.l.b16 %v865
  %v883 = vunpack.c.l.b16 %v866
  %v884 = vpack.c.b16 %v881, %v880
  %v885 = vpack.c.b16 %v883, %v882
  %v894 = vunpack.c.l.b16 %v868
  %v895 = vunpack.c.l.b16 %v869
  %v896 = vunpack.c.l.b16 %v870
  %v897 = vunpack.c.l.b16 %v871
  %v898 = vunpack.c.l.b16 %v872
  %v899 = vunpack.c.l.b16 %v873
  %v900 = vunpack.c.l.b16 %v874
  %v901 = vunpack.c.l.b16 %v875
  %v902 = vpack.c.b16 %v895, %v894
  %v903 = vpack.c.b16 %v897, %v896
  %v904 = vpack.c.b16 %v899, %v898
  %v905 = vpack.c.b16 %v901, %v900
  %v911 = vsel %vm75, %v884, 0
  %v914 = vsel %vm75, %v885, 0
  %916 = vmatprep.subr.bf16.mxu0 0
  %917 = vmatpush1.bf16.msra.mxu0 0
  %918 = vmatprep.subr.bf16.mxu0 0
  %919 = vmatpush1.bf16.msra.mxu0 0
  %920 = vmatprep.subr.bf16.mxu0 0
  %921 = vmatpush1.bf16.msra.mxu0 0
  %922 = vmatprep.subr.bf16.mxu0 0
  %923 = vmatpush1.bf16.msra.mxu0 0
  %924 = vmatprep.subr.bf16.mxu0 0
  %925 = vmatpush1.bf16.msra.mxu0 %v905
  %926 = vmatprep.subr.bf16.mxu0 0
  %927 = vmatpush1.bf16.msra.mxu0 %v904
  %928 = vmatprep.subr.bf16.mxu0 0
  %929 = vmatpush1.bf16.msra.mxu0 %v903
  %930 = vmatprep.subr.bf16.mxu0 0
  %931 = vmatpush1.bf16.msra.mxu0 %v902
  %932 = vmatprep.subr.bf16.mxu0 0
  %933 = vmatpush2.bf16.msra.mxu0 0
  %934 = vmatprep.subr.bf16.mxu0 0
  %935 = vmatpush2.bf16.msra.mxu0 0
  %936 = vmatprep.subr.bf16.mxu0 0
  %937 = vmatpush2.bf16.msra.mxu0 0
  %938 = vmatprep.subr.bf16.mxu0 0
  %939 = vmatpush2.bf16.msra.mxu0 0
  %940 = vmatprep.subr.bf16.mxu0 0
  %941 = vmatpush2.bf16.msra.mxu0 0
  %942 = vmatprep.subr.bf16.mxu0 0
  %943 = vmatpush2.bf16.msra.mxu0 0
  %944 = vmatprep.subr.bf16.mxu0 0
  %945 = vmatpush2.bf16.msra.mxu0 0
  %946 = vmatprep.subr.bf16.mxu0 0
  %947 = vmatpush2.bf16.msra.mxu0 0
  %948 = vmatprep.mubr.bf16.mxu0 0
  %949 = vmatmul.mubr.bf16.gmra.mxu0 %v911
  %v950 = vpop.f32.mrf.mxu0
  %v951 = vadd.f32 0.0, %v950
  %v952 = vpop.f32.mrf.mxu0
  %v953 = vpop.f32.mrf.mxu0
  %v954 = vadd.f32 0.0, %v953
  %v955 = vpop.f32.mrf.mxu0
  %956 = vmatprep.mubr.bf16.mxu0 0
  %957 = vmatmul.mubr.bf16.gmra.mxu0 %v914
  %v958 = vpop.f32.mrf.mxu0
  %v959 = vadd.f32 0.0, %v958
  %v960 = vpop.f32.mrf.mxu0
  %v961 = vpop.f32.mrf.mxu0
  %v962 = vadd.f32 0.0, %v961
  %v963 = vpop.f32.mrf.mxu0
  %964 = vdwg.mxu0
  %v965 = vadd.f32 %v858, %v951
  %v966 = vadd.f32 %v859, %v954
  %v967 = vadd.f32 %v860, %v959
  %v968 = vadd.f32 %v861, %v962
  %v969 = vld [vmem:[%s2] sm:$0x1]
  %v971 = vlaneseq
  %v972 = vshrl.u32 %v971, 7
  %v973 = vsub.s32 0, %v972
  %v974 = vrot.slane %v969, %v973
  %v976 = vadd.f32 %v965, %v974
  %v977 = vadd.f32 %v966, %v974
  %v978 = vadd.f32 %v967, %v974
  %v979 = vadd.f32 %v968, %v974
  %v980 = vmax.f32 %v976, 0.0
  %v981 = vmax.f32 %v977, 0.0
  %v982 = vmax.f32 %v978, 0.0
  %v983 = vmax.f32 %v979, 0.0
  %v984 = vpack.c.bf16 %v981, %v980
  %v985 = vpack.c.bf16 %v983, %v982
  %v988 = vunpack.c.l.b16 %v984
  %v989 = vunpack.c.h.b16 %v984
  %v990 = vunpack.c.l.b16 %v985
  %v991 = vunpack.c.h.b16 %v985
  %v992 = vpack.c.b16 %v988, %v988
  %v993 = vpack.c.b16 %v989, %v989
  %v994 = vpack.c.b16 %v990, %v990
  %v995 = vpack.c.b16 %v991, %v991
  %vm1000 = vcmask 519168
  %1001 = vst.msk [vmem:[%s3] sm:$0xf] %vm1000, %v992
  %1002 = vst.msk [vmem:[%s3 + $0x4] sm:$0xf] %vm1000, %v993
  %1003 = vst.msk [vmem:[%s3 + $0x8] sm:$0xf] %vm1000, %v994
  %1004 = vst.msk [vmem:[%s3 + $0xc] sm:$0xf] %vm1000, %v995
  // Predicated region
  $region14: #{model_forward.7} parent=0 // pred_check
    _
  $region15: #{model_forward.7} parent=0 // pred_check_branch
    %1006 = sbr.rel (0) target = $region17
  $region16: #{model_forward.7} parent=0 // pred_region
    _
  $region17: #{model_forward.7} parent=0 // pred_fallthru
    _
  // Predicated region
  $region18: #{model_forward.7} parent=0 // pred_check
    _
  $region19: #{model_forward.7} parent=0 // pred_check_branch
    %1008 = sbr.rel (0) target = $region21
  $region20: #{model_forward.7} parent=0 // pred_region
    _
  $region21: #{model_forward.7} parent=0 // pred_fallthru
    _

// kernel: model_forward.8
$region0: #{model_forward.8}
  #allocation0 [shape = 'u32[]', space=smem, size = 0x4, offset = 0x4, fixed_abs, tag = 'smem constant byte address 0x4 - core index']
  #allocation1 [shape = 'u32[144,128]{1,0:T(1,128)}', space=vmem, size = 0x12000, scoped, tag = 'internal scratch']
  %s0 = inlined_call_operand.vmem [shape: bf16[9,32,64], index: 0, kind: input, shape index: {}]
  %s1 = inlined_call_operand.vmem [shape: bf16[9,64,128], index: 1, kind: input, shape index: {}]
  %s2 = inlined_call_operand.vmem [shape: f32[1,128], index: 2, kind: input, shape index: {}]
  %s3 = inlined_call_operand.vmem [shape: bf16[32,128], index: 3, kind: output, shape index: {}]
  %s4 = sld [smem:[#allocation0]]
  $region22: #{model_forward.8} parent=0
    _
  %s6 = ssub.s32 1, %s4
  %s7 = scalar_select 0, %s6, %s4
  // Predicated region
  $region2: #{model_forward.8} parent=0 // pred_check
    _
  $region3: #{model_forward.8} parent=0 // pred_check_branch
    %9 = sbr.rel (0) target = $region5
  $region4: #{model_forward.8} parent=0 // pred_region
    _
  $region5: #{model_forward.8} parent=0 // pred_fallthru
    _
  // Predicated region
  $region6: #{model_forward.8} parent=0 // pred_check
    _
  $region7: #{model_forward.8} parent=0 // pred_check_branch
    %11 = sbr.rel (0) target = $region9
  $region8: #{model_forward.8} parent=0 // pred_region
    _
  $region9: #{model_forward.8} parent=0 // pred_fallthru
    _
  // Predicated region
  $region10: #{model_forward.8} parent=0 // pred_check
    _
  $region11: #{model_forward.8} parent=0 // pred_check_branch
    %13 = sbr.rel (0) target = $region13
  $region12: #{model_forward.8} parent=0 // pred_region
    _
  $region13: #{model_forward.8} parent=0 // pred_fallthru
    _
  %v15 = vld [vmem:[%s0] sm:$0xf]
  %v16 = vld [vmem:[%s0 + $0x4] sm:$0xf]
  %v17 = vld [vmem:[%s0 + $0x8] sm:$0xf]
  %v18 = vld [vmem:[%s0 + $0xc] sm:$0xf]
  %v19 = vld [vmem:[%s1] sm:$0xf]
  %v20 = vld [vmem:[%s1 + $0x4] sm:$0xf]
  %v21 = vld [vmem:[%s1 + $0x8] sm:$0xf]
  %v22 = vld [vmem:[%s1 + $0xc] sm:$0xf]
  %v23 = vld [vmem:[%s1 + $0x10] sm:$0xf]
  %v24 = vld [vmem:[%s1 + $0x14] sm:$0xf]
  %v25 = vld [vmem:[%s1 + $0x18] sm:$0xf]
  %v26 = vld [vmem:[%s1 + $0x1c] sm:$0xf]
  %s27 = scalar_lea.vmem %s0, 16
  %v28 = vld [vmem:[%s27] sm:$0xf]
  %v29 = vld [vmem:[%s27 + $0x4] sm:$0xf]
  %v30 = vld [vmem:[%s27 + $0x8] sm:$0xf]
  %v31 = vld [vmem:[%s27 + $0xc] sm:$0xf]
  %s32 = scalar_lea.vmem %s1, 32
  %v33 = vld [vmem:[%s32] sm:$0xf]
  %v34 = vld [vmem:[%s32 + $0x4] sm:$0xf]
  %v35 = vld [vmem:[%s32 + $0x8] sm:$0xf]
  %v36 = vld [vmem:[%s32 + $0xc] sm:$0xf]
  %v37 = vld [vmem:[%s32 + $0x10] sm:$0xf]
  %v38 = vld [vmem:[%s32 + $0x14] sm:$0xf]
  %v39 = vld [vmem:[%s32 + $0x18] sm:$0xf]
  %v40 = vld [vmem:[%s32 + $0x1c] sm:$0xf]
  %v45 = vunpack.c.l.b16 %v28
  %v46 = vunpack.c.l.b16 %v29
  %v47 = vunpack.c.l.b16 %v30
  %v48 = vunpack.c.l.b16 %v31
  %v49 = vpack.c.b16 %v46, %v45
  %v50 = vpack.c.b16 %v48, %v47
  %v59 = vunpack.c.l.b16 %v33
  %v60 = vunpack.c.l.b16 %v34
  %v61 = vunpack.c.l.b16 %v35
  %v62 = vunpack.c.l.b16 %v36
  %v63 = vunpack.c.l.b16 %v37
  %v64 = vunpack.c.l.b16 %v38
  %v65 = vunpack.c.l.b16 %v39
  %v66 = vunpack.c.l.b16 %v40
  %v67 = vpack.c.b16 %v60, %v59
  %v68 = vpack.c.b16 %v62, %v61
  %v69 = vpack.c.b16 %v64, %v63
  %v70 = vpack.c.b16 %v66, %v65
  %vm75 = vcmask 523264
  %v77 = vsel %vm75, %v49, 0
  %v80 = vsel %vm75, %v50, 0
  %82 = vmatprep.subr.bf16.mxu0 0
  %83 = vmatpush1.bf16.msra.mxu0 0
  %84 = vmatprep.subr.bf16.mxu0 0
  %85 = vmatpush1.bf16.msra.mxu0 0
  %86 = vmatprep.subr.bf16.mxu0 0
  %87 = vmatpush1.bf16.msra.mxu0 0
  %88 = vmatprep.subr.bf16.mxu0 0
  %89 = vmatpush1.bf16.msra.mxu0 0
  %90 = vmatprep.subr.bf16.mxu0 0
  %91 = vmatpush1.bf16.msra.mxu0 %v70
  %92 = vmatprep.subr.bf16.mxu0 0
  %93 = vmatpush1.bf16.msra.mxu0 %v69
  %94 = vmatprep.subr.bf16.mxu0 0
  %95 = vmatpush1.bf16.msra.mxu0 %v68
  %96 = vmatprep.subr.bf16.mxu0 0
  %97 = vmatpush1.bf16.msra.mxu0 %v67
  %98 = vmatprep.subr.bf16.mxu0 0
  %99 = vmatpush2.bf16.msra.mxu0 0
  %100 = vmatprep.subr.bf16.mxu0 0
  %101 = vmatpush2.bf16.msra.mxu0 0
  %102 = vmatprep.subr.bf16.mxu0 0
  %103 = vmatpush2.bf16.msra.mxu0 0
  %104 = vmatprep.subr.bf16.mxu0 0
  %105 = vmatpush2.bf16.msra.mxu0 0
  %106 = vmatprep.subr.bf16.mxu0 0
  %107 = vmatpush2.bf16.msra.mxu0 0
  %108 = vmatprep.subr.bf16.mxu0 0
  %109 = vmatpush2.bf16.msra.mxu0 0
  %110 = vmatprep.subr.bf16.mxu0 0
  %111 = vmatpush2.bf16.msra.mxu0 0
  %112 = vmatprep.subr.bf16.mxu0 0
  %113 = vmatpush2.bf16.msra.mxu0 0
  %114 = vmatprep.mubr.bf16.mxu0 0
  %115 = vmatmul.mubr.bf16.gmra.mxu0 %v77
  %v116 = vpop.f32.mrf.mxu0
  %v117 = vadd.f32 0.0, %v116
  %v118 = vpop.f32.mrf.mxu0
  %v119 = vpop.f32.mrf.mxu0
  %v120 = vadd.f32 0.0, %v119
  %v121 = vpop.f32.mrf.mxu0
  %122 = vmatprep.mubr.bf16.mxu0 0
  %123 = vmatmul.mubr.bf16.gmra.mxu0 %v80
  %v124 = vpop.f32.mrf.mxu0
  %v125 = vadd.f32 0.0, %v124
  %v126 = vpop.f32.mrf.mxu0
  %v127 = vpop.f32.mrf.mxu0
  %v128 = vadd.f32 0.0, %v127
  %v129 = vpop.f32.mrf.mxu0
  %130 = vdwg.mxu0
  %v135 = vunpack.c.l.b16 %v15
  %v136 = vunpack.c.l.b16 %v16
  %v137 = vunpack.c.l.b16 %v17
  %v138 = vunpack.c.l.b16 %v18
  %v139 = vpack.c.b16 %v136, %v135
  %v140 = vpack.c.b16 %v138, %v137
  %v149 = vunpack.c.l.b16 %v19
  %v150 = vunpack.c.l.b16 %v20
  %v151 = vunpack.c.l.b16 %v21
  %v152 = vunpack.c.l.b16 %v22
  %v153 = vunpack.c.l.b16 %v23
  %v154 = vunpack.c.l.b16 %v24
  %v155 = vunpack.c.l.b16 %v25
  %v156 = vunpack.c.l.b16 %v26
  %v157 = vpack.c.b16 %v150, %v149
  %v158 = vpack.c.b16 %v152, %v151
  %v159 = vpack.c.b16 %v154, %v153
  %v160 = vpack.c.b16 %v156, %v155
  %v166 = vsel %vm75, %v139, 0
  %v169 = vsel %vm75, %v140, 0
  %171 = vmatprep.subr.bf16.mxu0 0
  %172 = vmatpush1.bf16.msra.mxu0 0
  %173 = vmatprep.subr.bf16.mxu0 0
  %174 = vmatpush1.bf16.msra.mxu0 0
  %175 = vmatprep.subr.bf16.mxu0 0
  %176 = vmatpush1.bf16.msra.mxu0 0
  %177 = vmatprep.subr.bf16.mxu0 0
  %178 = vmatpush1.bf16.msra.mxu0 0
  %179 = vmatprep.subr.bf16.mxu0 0
  %180 = vmatpush1.bf16.msra.mxu0 %v160
  %181 = vmatprep.subr.bf16.mxu0 0
  %182 = vmatpush1.bf16.msra.mxu0 %v159
  %183 = vmatprep.subr.bf16.mxu0 0
  %184 = vmatpush1.bf16.msra.mxu0 %v158
  %185 = vmatprep.subr.bf16.mxu0 0
  %186 = vmatpush1.bf16.msra.mxu0 %v157
  %187 = vmatprep.subr.bf16.mxu0 0
  %188 = vmatpush2.bf16.msra.mxu0 0
  %189 = vmatprep.subr.bf16.mxu0 0
  %190 = vmatpush2.bf16.msra.mxu0 0
  %191 = vmatprep.subr.bf16.mxu0 0
  %192 = vmatpush2.bf16.msra.mxu0 0
  %193 = vmatprep.subr.bf16.mxu0 0
  %194 = vmatpush2.bf16.msra.mxu0 0
  %195 = vmatprep.subr.bf16.mxu0 0
  %196 = vmatpush2.bf16.msra.mxu0 0
  %197 = vmatprep.subr.bf16.mxu0 0
  %198 = vmatpush2.bf16.msra.mxu0 0
  %199 = vmatprep.subr.bf16.mxu0 0
  %200 = vmatpush2.bf16.msra.mxu0 0
  %201 = vmatprep.subr.bf16.mxu0 0
  %202 = vmatpush2.bf16.msra.mxu0 0
  %203 = vmatprep.mubr.bf16.mxu0 0
  %204 = vmatmul.mubr.bf16.gmra.mxu0 %v166
  %v205 = vpop.f32.mrf.mxu0
  %v206 = vadd.f32 %v117, %v205
  %v207 = vpop.f32.mrf.mxu0
  %v208 = vpop.f32.mrf.mxu0
  %v209 = vadd.f32 %v120, %v208
  %v210 = vpop.f32.mrf.mxu0
  %211 = vmatprep.mubr.bf16.mxu0 0
  %212 = vmatmul.mubr.bf16.gmra.mxu0 %v169
  %v213 = vpop.f32.mrf.mxu0
  %v214 = vadd.f32 %v125, %v213
  %v215 = vpop.f32.mrf.mxu0
  %v216 = vpop.f32.mrf.mxu0
  %v217 = vadd.f32 %v128, %v216
  %v218 = vpop.f32.mrf.mxu0
  %219 = vdwg.mxu0
  %s220 = scalar_lea.vmem %s0, 32
  %v221 = vld [vmem:[%s220] sm:$0xf]
  %v222 = vld [vmem:[%s220 + $0x4] sm:$0xf]
  %v223 = vld [vmem:[%s220 + $0x8] sm:$0xf]
  %v224 = vld [vmem:[%s220 + $0xc] sm:$0xf]
  %s225 = scalar_lea.vmem %s1, 64
  %v226 = vld [vmem:[%s225] sm:$0xf]
  %v227 = vld [vmem:[%s225 + $0x4] sm:$0xf]
  %v228 = vld [vmem:[%s225 + $0x8] sm:$0xf]
  %v229 = vld [vmem:[%s225 + $0xc] sm:$0xf]
  %v230 = vld [vmem:[%s225 + $0x10] sm:$0xf]
  %v231 = vld [vmem:[%s225 + $0x14] sm:$0xf]
  %v232 = vld [vmem:[%s225 + $0x18] sm:$0xf]
  %v233 = vld [vmem:[%s225 + $0x1c] sm:$0xf]
  %v238 = vunpack.c.l.b16 %v221
  %v239 = vunpack.c.l.b16 %v222
  %v240 = vunpack.c.l.b16 %v223
  %v241 = vunpack.c.l.b16 %v224
  %v242 = vpack.c.b16 %v239, %v238
  %v243 = vpack.c.b16 %v241, %v240
  %v252 = vunpack.c.l.b16 %v226
  %v253 = vunpack.c.l.b16 %v227
  %v254 = vunpack.c.l.b16 %v228
  %v255 = vunpack.c.l.b16 %v229
  %v256 = vunpack.c.l.b16 %v230
  %v257 = vunpack.c.l.b16 %v231
  %v258 = vunpack.c.l.b16 %v232
  %v259 = vunpack.c.l.b16 %v233
  %v260 = vpack.c.b16 %v253, %v252
  %v261 = vpack.c.b16 %v255, %v254
  %v262 = vpack.c.b16 %v257, %v256
  %v263 = vpack.c.b16 %v259, %v258
  %v269 = vsel %vm75, %v242, 0
  %v272 = vsel %vm75, %v243, 0
  %274 = vmatprep.subr.bf16.mxu0 0
  %275 = vmatpush1.bf16.msra.mxu0 0
  %276 = vmatprep.subr.bf16.mxu0 0
  %277 = vmatpush1.bf16.msra.mxu0 0
  %278 = vmatprep.subr.bf16.mxu0 0
  %279 = vmatpush1.bf16.msra.mxu0 0
  %280 = vmatprep.subr.bf16.mxu0 0
  %281 = vmatpush1.bf16.msra.mxu0 0
  %282 = vmatprep.subr.bf16.mxu0 0
  %283 = vmatpush1.bf16.msra.mxu0 %v263
  %284 = vmatprep.subr.bf16.mxu0 0
  %285 = vmatpush1.bf16.msra.mxu0 %v262
  %286 = vmatprep.subr.bf16.mxu0 0
  %287 = vmatpush1.bf16.msra.mxu0 %v261
  %288 = vmatprep.subr.bf16.mxu0 0
  %289 = vmatpush1.bf16.msra.mxu0 %v260
  %290 = vmatprep.subr.bf16.mxu0 0
  %291 = vmatpush2.bf16.msra.mxu0 0
  %292 = vmatprep.subr.bf16.mxu0 0
  %293 = vmatpush2.bf16.msra.mxu0 0
  %294 = vmatprep.subr.bf16.mxu0 0
  %295 = vmatpush2.bf16.msra.mxu0 0
  %296 = vmatprep.subr.bf16.mxu0 0
  %297 = vmatpush2.bf16.msra.mxu0 0
  %298 = vmatprep.subr.bf16.mxu0 0
  %299 = vmatpush2.bf16.msra.mxu0 0
  %300 = vmatprep.subr.bf16.mxu0 0
  %301 = vmatpush2.bf16.msra.mxu0 0
  %302 = vmatprep.subr.bf16.mxu0 0
  %303 = vmatpush2.bf16.msra.mxu0 0
  %304 = vmatprep.subr.bf16.mxu0 0
  %305 = vmatpush2.bf16.msra.mxu0 0
  %306 = vmatprep.mubr.bf16.mxu0 0
  %307 = vmatmul.mubr.bf16.gmra.mxu0 %v269
  %v308 = vpop.f32.mrf.mxu0
  %v309 = vadd.f32 0.0, %v308
  %v310 = vpop.f32.mrf.mxu0
  %v311 = vpop.f32.mrf.mxu0
  %v312 = vadd.f32 0.0, %v311
  %v313 = vpop.f32.mrf.mxu0
  %314 = vmatprep.mubr.bf16.mxu0 0
  %315 = vmatmul.mubr.bf16.gmra.mxu0 %v272
  %v316 = vpop.f32.mrf.mxu0
  %v317 = vadd.f32 0.0, %v316
  %v318 = vpop.f32.mrf.mxu0
  %v319 = vpop.f32.mrf.mxu0
  %v320 = vadd.f32 0.0, %v319
  %v321 = vpop.f32.mrf.mxu0
  %322 = vdwg.mxu0
  %v323 = vadd.f32 %v206, %v309
  %v324 = vadd.f32 %v209, %v312
  %v325 = vadd.f32 %v214, %v317
  %v326 = vadd.f32 %v217, %v320
  %s327 = scalar_lea.vmem %s0, 48
  %v328 = vld [vmem:[%s327] sm:$0xf]
  %v329 = vld [vmem:[%s327 + $0x4] sm:$0xf]
  %v330 = vld [vmem:[%s327 + $0x8] sm:$0xf]
  %v331 = vld [vmem:[%s327 + $0xc] sm:$0xf]
  %s332 = scalar_lea.vmem %s1, 96
  %v333 = vld [vmem:[%s332] sm:$0xf]
  %v334 = vld [vmem:[%s332 + $0x4] sm:$0xf]
  %v335 = vld [vmem:[%s332 + $0x8] sm:$0xf]
  %v336 = vld [vmem:[%s332 + $0xc] sm:$0xf]
  %v337 = vld [vmem:[%s332 + $0x10] sm:$0xf]
  %v338 = vld [vmem:[%s332 + $0x14] sm:$0xf]
  %v339 = vld [vmem:[%s332 + $0x18] sm:$0xf]
  %v340 = vld [vmem:[%s332 + $0x1c] sm:$0xf]
  %v345 = vunpack.c.l.b16 %v328
  %v346 = vunpack.c.l.b16 %v329
  %v347 = vunpack.c.l.b16 %v330
  %v348 = vunpack.c.l.b16 %v331
  %v349 = vpack.c.b16 %v346, %v345
  %v350 = vpack.c.b16 %v348, %v347
  %v359 = vunpack.c.l.b16 %v333
  %v360 = vunpack.c.l.b16 %v334
  %v361 = vunpack.c.l.b16 %v335
  %v362 = vunpack.c.l.b16 %v336
  %v363 = vunpack.c.l.b16 %v337
  %v364 = vunpack.c.l.b16 %v338
  %v365 = vunpack.c.l.b16 %v339
  %v366 = vunpack.c.l.b16 %v340
  %v367 = vpack.c.b16 %v360, %v359
  %v368 = vpack.c.b16 %v362, %v361
  %v369 = vpack.c.b16 %v364, %v363
  %v370 = vpack.c.b16 %v366, %v365
  %v376 = vsel %vm75, %v349, 0
  %v379 = vsel %vm75, %v350, 0
  %381 = vmatprep.subr.bf16.mxu0 0
  %382 = vmatpush1.bf16.msra.mxu0 0
  %383 = vmatprep.subr.bf16.mxu0 0
  %384 = vmatpush1.bf16.msra.mxu0 0
  %385 = vmatprep.subr.bf16.mxu0 0
  %386 = vmatpush1.bf16.msra.mxu0 0
  %387 = vmatprep.subr.bf16.mxu0 0
  %388 = vmatpush1.bf16.msra.mxu0 0
  %389 = vmatprep.subr.bf16.mxu0 0
  %390 = vmatpush1.bf16.msra.mxu0 %v370
  %391 = vmatprep.subr.bf16.mxu0 0
  %392 = vmatpush1.bf16.msra.mxu0 %v369
  %393 = vmatprep.subr.bf16.mxu0 0
  %394 = vmatpush1.bf16.msra.mxu0 %v368
  %395 = vmatprep.subr.bf16.mxu0 0
  %396 = vmatpush1.bf16.msra.mxu0 %v367
  %397 = vmatprep.subr.bf16.mxu0 0
  %398 = vmatpush2.bf16.msra.mxu0 0
  %399 = vmatprep.subr.bf16.mxu0 0
  %400 = vmatpush2.bf16.msra.mxu0 0
  %401 = vmatprep.subr.bf16.mxu0 0
  %402 = vmatpush2.bf16.msra.mxu0 0
  %403 = vmatprep.subr.bf16.mxu0 0
  %404 = vmatpush2.bf16.msra.mxu0 0
  %405 = vmatprep.subr.bf16.mxu0 0
  %406 = vmatpush2.bf16.msra.mxu0 0
  %407 = vmatprep.subr.bf16.mxu0 0
  %408 = vmatpush2.bf16.msra.mxu0 0
  %409 = vmatprep.subr.bf16.mxu0 0
  %410 = vmatpush2.bf16.msra.mxu0 0
  %411 = vmatprep.subr.bf16.mxu0 0
  %412 = vmatpush2.bf16.msra.mxu0 0
  %413 = vmatprep.mubr.bf16.mxu0 0
  %414 = vmatmul.mubr.bf16.gmra.mxu0 %v376
  %v415 = vpop.f32.mrf.mxu0
  %v416 = vadd.f32 0.0, %v415
  %v417 = vpop.f32.mrf.mxu0
  %v418 = vpop.f32.mrf.mxu0
  %v419 = vadd.f32 0.0, %v418
  %v420 = vpop.f32.mrf.mxu0
  %421 = vmatprep.mubr.bf16.mxu0 0
  %422 = vmatmul.mubr.bf16.gmra.mxu0 %v379
  %v423 = vpop.f32.mrf.mxu0
  %v424 = vadd.f32 0.0, %v423
  %v425 = vpop.f32.mrf.mxu0
  %v426 = vpop.f32.mrf.mxu0
  %v427 = vadd.f32 0.0, %v426
  %v428 = vpop.f32.mrf.mxu0
  %429 = vdwg.mxu0
  %v430 = vadd.f32 %v323, %v416
  %v431 = vadd.f32 %v324, %v419
  %v432 = vadd.f32 %v325, %v424
  %v433 = vadd.f32 %v326, %v427
  %s434 = scalar_lea.vmem %s0, 64
  %v435 = vld [vmem:[%s434] sm:$0xf]
  %v436 = vld [vmem:[%s434 + $0x4] sm:$0xf]
  %v437 = vld [vmem:[%s434 + $0x8] sm:$0xf]
  %v438 = vld [vmem:[%s434 + $0xc] sm:$0xf]
  %s439 = scalar_lea.vmem %s1, 128
  %v440 = vld [vmem:[%s439] sm:$0xf]
  %v441 = vld [vmem:[%s439 + $0x4] sm:$0xf]
  %v442 = vld [vmem:[%s439 + $0x8] sm:$0xf]
  %v443 = vld [vmem:[%s439 + $0xc] sm:$0xf]
  %v444 = vld [vmem:[%s439 + $0x10] sm:$0xf]
  %v445 = vld [vmem:[%s439 + $0x14] sm:$0xf]
  %v446 = vld [vmem:[%s439 + $0x18] sm:$0xf]
  %v447 = vld [vmem:[%s439 + $0x1c] sm:$0xf]
  %v452 = vunpack.c.l.b16 %v435
  %v453 = vunpack.c.l.b16 %v436
  %v454 = vunpack.c.l.b16 %v437
  %v455 = vunpack.c.l.b16 %v438
  %v456 = vpack.c.b16 %v453, %v452
  %v457 = vpack.c.b16 %v455, %v454
  %v466 = vunpack.c.l.b16 %v440
  %v467 = vunpack.c.l.b16 %v441
  %v468 = vunpack.c.l.b16 %v442
  %v469 = vunpack.c.l.b16 %v443
  %v470 = vunpack.c.l.b16 %v444
  %v471 = vunpack.c.l.b16 %v445
  %v472 = vunpack.c.l.b16 %v446
  %v473 = vunpack.c.l.b16 %v447
  %v474 = vpack.c.b16 %v467, %v466
  %v475 = vpack.c.b16 %v469, %v468
  %v476 = vpack.c.b16 %v471, %v470
  %v477 = vpack.c.b16 %v473, %v472
  %v483 = vsel %vm75, %v456, 0
  %v486 = vsel %vm75, %v457, 0
  %488 = vmatprep.subr.bf16.mxu0 0
  %489 = vmatpush1.bf16.msra.mxu0 0
  %490 = vmatprep.subr.bf16.mxu0 0
  %491 = vmatpush1.bf16.msra.mxu0 0
  %492 = vmatprep.subr.bf16.mxu0 0
  %493 = vmatpush1.bf16.msra.mxu0 0
  %494 = vmatprep.subr.bf16.mxu0 0
  %495 = vmatpush1.bf16.msra.mxu0 0
  %496 = vmatprep.subr.bf16.mxu0 0
  %497 = vmatpush1.bf16.msra.mxu0 %v477
  %498 = vmatprep.subr.bf16.mxu0 0
  %499 = vmatpush1.bf16.msra.mxu0 %v476
  %500 = vmatprep.subr.bf16.mxu0 0
  %501 = vmatpush1.bf16.msra.mxu0 %v475
  %502 = vmatprep.subr.bf16.mxu0 0
  %503 = vmatpush1.bf16.msra.mxu0 %v474
  %504 = vmatprep.subr.bf16.mxu0 0
  %505 = vmatpush2.bf16.msra.mxu0 0
  %506 = vmatprep.subr.bf16.mxu0 0
  %507 = vmatpush2.bf16.msra.mxu0 0
  %508 = vmatprep.subr.bf16.mxu0 0
  %509 = vmatpush2.bf16.msra.mxu0 0
  %510 = vmatprep.subr.bf16.mxu0 0
  %511 = vmatpush2.bf16.msra.mxu0 0
  %512 = vmatprep.subr.bf16.mxu0 0
  %513 = vmatpush2.bf16.msra.mxu0 0
  %514 = vmatprep.subr.bf16.mxu0 0
  %515 = vmatpush2.bf16.msra.mxu0 0
  %516 = vmatprep.subr.bf16.mxu0 0
  %517 = vmatpush2.bf16.msra.mxu0 0
  %518 = vmatprep.subr.bf16.mxu0 0
  %519 = vmatpush2.bf16.msra.mxu0 0
  %520 = vmatprep.mubr.bf16.mxu0 0
  %521 = vmatmul.mubr.bf16.gmra.mxu0 %v483
  %v522 = vpop.f32.mrf.mxu0
  %v523 = vadd.f32 0.0, %v522
  %v524 = vpop.f32.mrf.mxu0
  %v525 = vpop.f32.mrf.mxu0
  %v526 = vadd.f32 0.0, %v525
  %v527 = vpop.f32.mrf.mxu0
  %528 = vmatprep.mubr.bf16.mxu0 0
  %529 = vmatmul.mubr.bf16.gmra.mxu0 %v486
  %v530 = vpop.f32.mrf.mxu0
  %v531 = vadd.f32 0.0, %v530
  %v532 = vpop.f32.mrf.mxu0
  %v533 = vpop.f32.mrf.mxu0
  %v534 = vadd.f32 0.0, %v533
  %v535 = vpop.f32.mrf.mxu0
  %536 = vdwg.mxu0
  %v537 = vadd.f32 %v430, %v523
  %v538 = vadd.f32 %v431, %v526
  %v539 = vadd.f32 %v432, %v531
  %v540 = vadd.f32 %v433, %v534
  %s541 = scalar_lea.vmem %s0, 80
  %v542 = vld [vmem:[%s541] sm:$0xf]
  %v543 = vld [vmem:[%s541 + $0x4] sm:$0xf]
  %v544 = vld [vmem:[%s541 + $0x8] sm:$0xf]
  %v545 = vld [vmem:[%s541 + $0xc] sm:$0xf]
  %s546 = scalar_lea.vmem %s1, 160
  %v547 = vld [vmem:[%s546] sm:$0xf]
  %v548 = vld [vmem:[%s546 + $0x4] sm:$0xf]
  %v549 = vld [vmem:[%s546 + $0x8] sm:$0xf]
  %v550 = vld [vmem:[%s546 + $0xc] sm:$0xf]
  %v551 = vld [vmem:[%s546 + $0x10] sm:$0xf]
  %v552 = vld [vmem:[%s546 + $0x14] sm:$0xf]
  %v553 = vld [vmem:[%s546 + $0x18] sm:$0xf]
  %v554 = vld [vmem:[%s546 + $0x1c] sm:$0xf]
  %v559 = vunpack.c.l.b16 %v542
  %v560 = vunpack.c.l.b16 %v543
  %v561 = vunpack.c.l.b16 %v544
  %v562 = vunpack.c.l.b16 %v545
  %v563 = vpack.c.b16 %v560, %v559
  %v564 = vpack.c.b16 %v562, %v561
  %v573 = vunpack.c.l.b16 %v547
  %v574 = vunpack.c.l.b16 %v548
  %v575 = vunpack.c.l.b16 %v549
  %v576 = vunpack.c.l.b16 %v550
  %v577 = vunpack.c.l.b16 %v551
  %v578 = vunpack.c.l.b16 %v552
  %v579 = vunpack.c.l.b16 %v553
  %v580 = vunpack.c.l.b16 %v554
  %v581 = vpack.c.b16 %v574, %v573
  %v582 = vpack.c.b16 %v576, %v575
  %v583 = vpack.c.b16 %v578, %v577
  %v584 = vpack.c.b16 %v580, %v579
  %v590 = vsel %vm75, %v563, 0
  %v593 = vsel %vm75, %v564, 0
  %595 = vmatprep.subr.bf16.mxu0 0
  %596 = vmatpush1.bf16.msra.mxu0 0
  %597 = vmatprep.subr.bf16.mxu0 0
  %598 = vmatpush1.bf16.msra.mxu0 0
  %599 = vmatprep.subr.bf16.mxu0 0
  %600 = vmatpush1.bf16.msra.mxu0 0
  %601 = vmatprep.subr.bf16.mxu0 0
  %602 = vmatpush1.bf16.msra.mxu0 0
  %603 = vmatprep.subr.bf16.mxu0 0
  %604 = vmatpush1.bf16.msra.mxu0 %v584
  %605 = vmatprep.subr.bf16.mxu0 0
  %606 = vmatpush1.bf16.msra.mxu0 %v583
  %607 = vmatprep.subr.bf16.mxu0 0
  %608 = vmatpush1.bf16.msra.mxu0 %v582
  %609 = vmatprep.subr.bf16.mxu0 0
  %610 = vmatpush1.bf16.msra.mxu0 %v581
  %611 = vmatprep.subr.bf16.mxu0 0
  %612 = vmatpush2.bf16.msra.mxu0 0
  %613 = vmatprep.subr.bf16.mxu0 0
  %614 = vmatpush2.bf16.msra.mxu0 0
  %615 = vmatprep.subr.bf16.mxu0 0
  %616 = vmatpush2.bf16.msra.mxu0 0
  %617 = vmatprep.subr.bf16.mxu0 0
  %618 = vmatpush2.bf16.msra.mxu0 0
  %619 = vmatprep.subr.bf16.mxu0 0
  %620 = vmatpush2.bf16.msra.mxu0 0
  %621 = vmatprep.subr.bf16.mxu0 0
  %622 = vmatpush2.bf16.msra.mxu0 0
  %623 = vmatprep.subr.bf16.mxu0 0
  %624 = vmatpush2.bf16.msra.mxu0 0
  %625 = vmatprep.subr.bf16.mxu0 0
  %626 = vmatpush2.bf16.msra.mxu0 0
  %627 = vmatprep.mubr.bf16.mxu0 0
  %628 = vmatmul.mubr.bf16.gmra.mxu0 %v590
  %v629 = vpop.f32.mrf.mxu0
  %v630 = vadd.f32 0.0, %v629
  %v631 = vpop.f32.mrf.mxu0
  %v632 = vpop.f32.mrf.mxu0
  %v633 = vadd.f32 0.0, %v632
  %v634 = vpop.f32.mrf.mxu0
  %635 = vmatprep.mubr.bf16.mxu0 0
  %636 = vmatmul.mubr.bf16.gmra.mxu0 %v593
  %v637 = vpop.f32.mrf.mxu0
  %v638 = vadd.f32 0.0, %v637
  %v639 = vpop.f32.mrf.mxu0
  %v640 = vpop.f32.mrf.mxu0
  %v641 = vadd.f32 0.0, %v640
  %v642 = vpop.f32.mrf.mxu0
  %643 = vdwg.mxu0
  %v644 = vadd.f32 %v537, %v630
  %v645 = vadd.f32 %v538, %v633
  %v646 = vadd.f32 %v539, %v638
  %v647 = vadd.f32 %v540, %v641
  %s648 = scalar_lea.vmem %s0, 96
  %v649 = vld [vmem:[%s648] sm:$0xf]
  %v650 = vld [vmem:[%s648 + $0x4] sm:$0xf]
  %v651 = vld [vmem:[%s648 + $0x8] sm:$0xf]
  %v652 = vld [vmem:[%s648 + $0xc] sm:$0xf]
  %s653 = scalar_lea.vmem %s1, 192
  %v654 = vld [vmem:[%s653] sm:$0xf]
  %v655 = vld [vmem:[%s653 + $0x4] sm:$0xf]
  %v656 = vld [vmem:[%s653 + $0x8] sm:$0xf]
  %v657 = vld [vmem:[%s653 + $0xc] sm:$0xf]
  %v658 = vld [vmem:[%s653 + $0x10] sm:$0xf]
  %v659 = vld [vmem:[%s653 + $0x14] sm:$0xf]
  %v660 = vld [vmem:[%s653 + $0x18] sm:$0xf]
  %v661 = vld [vmem:[%s653 + $0x1c] sm:$0xf]
  %v666 = vunpack.c.l.b16 %v649
  %v667 = vunpack.c.l.b16 %v650
  %v668 = vunpack.c.l.b16 %v651
  %v669 = vunpack.c.l.b16 %v652
  %v670 = vpack.c.b16 %v667, %v666
  %v671 = vpack.c.b16 %v669, %v668
  %v680 = vunpack.c.l.b16 %v654
  %v681 = vunpack.c.l.b16 %v655
  %v682 = vunpack.c.l.b16 %v656
  %v683 = vunpack.c.l.b16 %v657
  %v684 = vunpack.c.l.b16 %v658
  %v685 = vunpack.c.l.b16 %v659
  %v686 = vunpack.c.l.b16 %v660
  %v687 = vunpack.c.l.b16 %v661
  %v688 = vpack.c.b16 %v681, %v680
  %v689 = vpack.c.b16 %v683, %v682
  %v690 = vpack.c.b16 %v685, %v684
  %v691 = vpack.c.b16 %v687, %v686
  %v697 = vsel %vm75, %v670, 0
  %v700 = vsel %vm75, %v671, 0
  %702 = vmatprep.subr.bf16.mxu0 0
  %703 = vmatpush1.bf16.msra.mxu0 0
  %704 = vmatprep.subr.bf16.mxu0 0
  %705 = vmatpush1.bf16.msra.mxu0 0
  %706 = vmatprep.subr.bf16.mxu0 0
  %707 = vmatpush1.bf16.msra.mxu0 0
  %708 = vmatprep.subr.bf16.mxu0 0
  %709 = vmatpush1.bf16.msra.mxu0 0
  %710 = vmatprep.subr.bf16.mxu0 0
  %711 = vmatpush1.bf16.msra.mxu0 %v691
  %712 = vmatprep.subr.bf16.mxu0 0
  %713 = vmatpush1.bf16.msra.mxu0 %v690
  %714 = vmatprep.subr.bf16.mxu0 0
  %715 = vmatpush1.bf16.msra.mxu0 %v689
  %716 = vmatprep.subr.bf16.mxu0 0
  %717 = vmatpush1.bf16.msra.mxu0 %v688
  %718 = vmatprep.subr.bf16.mxu0 0
  %719 = vmatpush2.bf16.msra.mxu0 0
  %720 = vmatprep.subr.bf16.mxu0 0
  %721 = vmatpush2.bf16.msra.mxu0 0
  %722 = vmatprep.subr.bf16.mxu0 0
  %723 = vmatpush2.bf16.msra.mxu0 0
  %724 = vmatprep.subr.bf16.mxu0 0
  %725 = vmatpush2.bf16.msra.mxu0 0
  %726 = vmatprep.subr.bf16.mxu0 0
  %727 = vmatpush2.bf16.msra.mxu0 0
  %728 = vmatprep.subr.bf16.mxu0 0
  %729 = vmatpush2.bf16.msra.mxu0 0
  %730 = vmatprep.subr.bf16.mxu0 0
  %731 = vmatpush2.bf16.msra.mxu0 0
  %732 = vmatprep.subr.bf16.mxu0 0
  %733 = vmatpush2.bf16.msra.mxu0 0
  %734 = vmatprep.mubr.bf16.mxu0 0
  %735 = vmatmul.mubr.bf16.gmra.mxu0 %v697
  %v736 = vpop.f32.mrf.mxu0
  %v737 = vadd.f32 0.0, %v736
  %v738 = vpop.f32.mrf.mxu0
  %v739 = vpop.f32.mrf.mxu0
  %v740 = vadd.f32 0.0, %v739
  %v741 = vpop.f32.mrf.mxu0
  %742 = vmatprep.mubr.bf16.mxu0 0
  %743 = vmatmul.mubr.bf16.gmra.mxu0 %v700
  %v744 = vpop.f32.mrf.mxu0
  %v745 = vadd.f32 0.0, %v744
  %v746 = vpop.f32.mrf.mxu0
  %v747 = vpop.f32.mrf.mxu0
  %v748 = vadd.f32 0.0, %v747
  %v749 = vpop.f32.mrf.mxu0
  %750 = vdwg.mxu0
  %v751 = vadd.f32 %v644, %v737
  %v752 = vadd.f32 %v645, %v740
  %v753 = vadd.f32 %v646, %v745
  %v754 = vadd.f32 %v647, %v748
  %s755 = scalar_lea.vmem %s0, 112
  %v756 = vld [vmem:[%s755] sm:$0xf]
  %v757 = vld [vmem:[%s755 + $0x4] sm:$0xf]
  %v758 = vld [vmem:[%s755 + $0x8] sm:$0xf]
  %v759 = vld [vmem:[%s755 + $0xc] sm:$0xf]
  %s760 = scalar_lea.vmem %s1, 224
  %v761 = vld [vmem:[%s760] sm:$0xf]
  %v762 = vld [vmem:[%s760 + $0x4] sm:$0xf]
  %v763 = vld [vmem:[%s760 + $0x8] sm:$0xf]
  %v764 = vld [vmem:[%s760 + $0xc] sm:$0xf]
  %v765 = vld [vmem:[%s760 + $0x10] sm:$0xf]
  %v766 = vld [vmem:[%s760 + $0x14] sm:$0xf]
  %v767 = vld [vmem:[%s760 + $0x18] sm:$0xf]
  %v768 = vld [vmem:[%s760 + $0x1c] sm:$0xf]
  %v773 = vunpack.c.l.b16 %v756
  %v774 = vunpack.c.l.b16 %v757
  %v775 = vunpack.c.l.b16 %v758
  %v776 = vunpack.c.l.b16 %v759
  %v777 = vpack.c.b16 %v774, %v773
  %v778 = vpack.c.b16 %v776, %v775
  %v787 = vunpack.c.l.b16 %v761
  %v788 = vunpack.c.l.b16 %v762
  %v789 = vunpack.c.l.b16 %v763
  %v790 = vunpack.c.l.b16 %v764
  %v791 = vunpack.c.l.b16 %v765
  %v792 = vunpack.c.l.b16 %v766
  %v793 = vunpack.c.l.b16 %v767
  %v794 = vunpack.c.l.b16 %v768
  %v795 = vpack.c.b16 %v788, %v787
  %v796 = vpack.c.b16 %v790, %v789
  %v797 = vpack.c.b16 %v792, %v791
  %v798 = vpack.c.b16 %v794, %v793
  %v804 = vsel %vm75, %v777, 0
  %v807 = vsel %vm75, %v778, 0
  %809 = vmatprep.subr.bf16.mxu0 0
  %810 = vmatpush1.bf16.msra.mxu0 0
  %811 = vmatprep.subr.bf16.mxu0 0
  %812 = vmatpush1.bf16.msra.mxu0 0
  %813 = vmatprep.subr.bf16.mxu0 0
  %814 = vmatpush1.bf16.msra.mxu0 0
  %815 = vmatprep.subr.bf16.mxu0 0
  %816 = vmatpush1.bf16.msra.mxu0 0
  %817 = vmatprep.subr.bf16.mxu0 0
  %818 = vmatpush1.bf16.msra.mxu0 %v798
  %819 = vmatprep.subr.bf16.mxu0 0
  %820 = vmatpush1.bf16.msra.mxu0 %v797
  %821 = vmatprep.subr.bf16.mxu0 0
  %822 = vmatpush1.bf16.msra.mxu0 %v796
  %823 = vmatprep.subr.bf16.mxu0 0
  %824 = vmatpush1.bf16.msra.mxu0 %v795
  %825 = vmatprep.subr.bf16.mxu0 0
  %826 = vmatpush2.bf16.msra.mxu0 0
  %827 = vmatprep.subr.bf16.mxu0 0
  %828 = vmatpush2.bf16.msra.mxu0 0
  %829 = vmatprep.subr.bf16.mxu0 0
  %830 = vmatpush2.bf16.msra.mxu0 0
  %831 = vmatprep.subr.bf16.mxu0 0
  %832 = vmatpush2.bf16.msra.mxu0 0
  %833 = vmatprep.subr.bf16.mxu0 0
  %834 = vmatpush2.bf16.msra.mxu0 0
  %835 = vmatprep.subr.bf16.mxu0 0
  %836 = vmatpush2.bf16.msra.mxu0 0
  %837 = vmatprep.subr.bf16.mxu0 0
  %838 = vmatpush2.bf16.msra.mxu0 0
  %839 = vmatprep.subr.bf16.mxu0 0
  %840 = vmatpush2.bf16.msra.mxu0 0
  %841 = vmatprep.mubr.bf16.mxu0 0
  %842 = vmatmul.mubr.bf16.gmra.mxu0 %v804
  %v843 = vpop.f32.mrf.mxu0
  %v844 = vadd.f32 0.0, %v843
  %v845 = vpop.f32.mrf.mxu0
  %v846 = vpop.f32.mrf.mxu0
  %v847 = vadd.f32 0.0, %v846
  %v848 = vpop.f32.mrf.mxu0
  %849 = vmatprep.mubr.bf16.mxu0 0
  %850 = vmatmul.mubr.bf16.gmra.mxu0 %v807
  %v851 = vpop.f32.mrf.mxu0
  %v852 = vadd.f32 0.0, %v851
  %v853 = vpop.f32.mrf.mxu0
  %v854 = vpop.f32.mrf.mxu0
  %v855 = vadd.f32 0.0, %v854
  %v856 = vpop.f32.mrf.mxu0
  %857 = vdwg.mxu0
  %v858 = vadd.f32 %v751, %v844
  %v859 = vadd.f32 %v752, %v847
  %v860 = vadd.f32 %v753, %v852
  %v861 = vadd.f32 %v754, %v855
  %s862 = scalar_lea.vmem %s0, 128
  %v863 = vld [vmem:[%s862] sm:$0xf]
  %v864 = vld [vmem:[%s862 + $0x4] sm:$0xf]
  %v865 = vld [vmem:[%s862 + $0x8] sm:$0xf]
  %v866 = vld [vmem:[%s862 + $0xc] sm:$0xf]
  %s867 = scalar_lea.vmem %s1, 256
  %v868 = vld [vmem:[%s867] sm:$0xf]
  %v869 = vld [vmem:[%s867 + $0x4] sm:$0xf]
  %v870 = vld [vmem:[%s867 + $0x8] sm:$0xf]
  %v871 = vld [vmem:[%s867 + $0xc] sm:$0xf]
  %v872 = vld [vmem:[%s867 + $0x10] sm:$0xf]
  %v873 = vld [vmem:[%s867 + $0x14] sm:$0xf]
  %v874 = vld [vmem:[%s867 + $0x18] sm:$0xf]
  %v875 = vld [vmem:[%s867 + $0x1c] sm:$0xf]
  %v880 = vunpack.c.l.b16 %v863
  %v881 = vunpack.c.l.b16 %v864
  %v882 = vunpack.c.l.b16 %v865
  %v883 = vunpack.c.l.b16 %v866
  %v884 = vpack.c.b16 %v881, %v880
  %v885 = vpack.c.b16 %v883, %v882
  %v894 = vunpack.c.l.b16 %v868
  %v895 = vunpack.c.l.b16 %v869
  %v896 = vunpack.c.l.b16 %v870
  %v897 = vunpack.c.l.b16 %v871
  %v898 = vunpack.c.l.b16 %v872
  %v899 = vunpack.c.l.b16 %v873
  %v900 = vunpack.c.l.b16 %v874
  %v901 = vunpack.c.l.b16 %v875
  %v902 = vpack.c.b16 %v895, %v894
  %v903 = vpack.c.b16 %v897, %v896
  %v904 = vpack.c.b16 %v899, %v898
  %v905 = vpack.c.b16 %v901, %v900
  %v911 = vsel %vm75, %v884, 0
  %v914 = vsel %vm75, %v885, 0
  %916 = vmatprep.subr.bf16.mxu0 0
  %917 = vmatpush1.bf16.msra.mxu0 0
  %918 = vmatprep.subr.bf16.mxu0 0
  %919 = vmatpush1.bf16.msra.mxu0 0
  %920 = vmatprep.subr.bf16.mxu0 0
  %921 = vmatpush1.bf16.msra.mxu0 0
  %922 = vmatprep.subr.bf16.mxu0 0
  %923 = vmatpush1.bf16.msra.mxu0 0
  %924 = vmatprep.subr.bf16.mxu0 0
  %925 = vmatpush1.bf16.msra.mxu0 %v905
  %926 = vmatprep.subr.bf16.mxu0 0
  %927 = vmatpush1.bf16.msra.mxu0 %v904
  %928 = vmatprep.subr.bf16.mxu0 0
  %929 = vmatpush1.bf16.msra.mxu0 %v903
  %930 = vmatprep.subr.bf16.mxu0 0
  %931 = vmatpush1.bf16.msra.mxu0 %v902
  %932 = vmatprep.subr.bf16.mxu0 0
  %933 = vmatpush2.bf16.msra.mxu0 0
  %934 = vmatprep.subr.bf16.mxu0 0
  %935 = vmatpush2.bf16.msra.mxu0 0
  %936 = vmatprep.subr.bf16.mxu0 0
  %937 = vmatpush2.bf16.msra.mxu0 0
  %938 = vmatprep.subr.bf16.mxu0 0
  %939 = vmatpush2.bf16.msra.mxu0 0
  %940 = vmatprep.subr.bf16.mxu0 0
  %941 = vmatpush2.bf16.msra.mxu0 0
  %942 = vmatprep.subr.bf16.mxu0 0
  %943 = vmatpush2.bf16.msra.mxu0 0
  %944 = vmatprep.subr.bf16.mxu0 0
  %945 = vmatpush2.bf16.msra.mxu0 0
  %946 = vmatprep.subr.bf16.mxu0 0
  %947 = vmatpush2.bf16.msra.mxu0 0
  %948 = vmatprep.mubr.bf16.mxu0 0
  %949 = vmatmul.mubr.bf16.gmra.mxu0 %v911
  %v950 = vpop.f32.mrf.mxu0
  %v951 = vadd.f32 0.0, %v950
  %v952 = vpop.f32.mrf.mxu0
  %v953 = vpop.f32.mrf.mxu0
  %v954 = vadd.f32 0.0, %v953
  %v955 = vpop.f32.mrf.mxu0
  %956 = vmatprep.mubr.bf16.mxu0 0
  %957 = vmatmul.mubr.bf16.gmra.mxu0 %v914
  %v958 = vpop.f32.mrf.mxu0
  %v959 = vadd.f32 0.0, %v958
  %v960 = vpop.f32.mrf.mxu0
  %v961 = vpop.f32.mrf.mxu0
  %v962 = vadd.f32 0.0, %v961
  %v963 = vpop.f32.mrf.mxu0
  %964 = vdwg.mxu0
  %v965 = vadd.f32 %v858, %v951
  %v966 = vadd.f32 %v859, %v954
  %v967 = vadd.f32 %v860, %v959
  %v968 = vadd.f32 %v861, %v962
  %v969 = vld [vmem:[%s2] sm:$0x1]
  %v971 = vlaneseq
  %v972 = vshrl.u32 %v971, 7
  %v973 = vsub.s32 0, %v972
  %v974 = vrot.slane %v969, %v973
  %v976 = vadd.f32 %v965, %v974
  %v977 = vadd.f32 %v966, %v974
  %v978 = vadd.f32 %v967, %v974
  %v979 = vadd.f32 %v968, %v974
  %v980 = vmax.f32 %v976, 0.0
  %v981 = vmax.f32 %v977, 0.0
  %v982 = vmax.f32 %v978, 0.0
  %v983 = vmax.f32 %v979, 0.0
  %v984 = vpack.c.bf16 %v981, %v980
  %v985 = vpack.c.bf16 %v983, %v982
  %v988 = vunpack.c.l.b16 %v984
  %v989 = vunpack.c.h.b16 %v984
  %v990 = vunpack.c.l.b16 %v985
  %v991 = vunpack.c.h.b16 %v985
  %v992 = vpack.c.b16 %v988, %v988
  %v993 = vpack.c.b16 %v989, %v989
  %v994 = vpack.c.b16 %v990, %v990
  %v995 = vpack.c.b16 %v991, %v991
  %1000 = vst [vmem:[%s3] sm:$0xf] %v992
  %1001 = vst [vmem:[%s3 + $0x4] sm:$0xf] %v993
  %1002 = vst [vmem:[%s3 + $0x8] sm:$0xf] %v994
  %1003 = vst [vmem:[%s3 + $0xc] sm:$0xf] %v995
  // Predicated region
  $region14: #{model_forward.8} parent=0 // pred_check
    _
  $region15: #{model_forward.8} parent=0 // pred_check_branch
    %1005 = sbr.rel (0) target = $region17
  $region16: #{model_forward.8} parent=0 // pred_region
    _
  $region17: #{model_forward.8} parent=0 // pred_fallthru
    _
  // Predicated region
  $region18: #{model_forward.8} parent=0 // pred_check
    _
  $region19: #{model_forward.8} parent=0 // pred_check_branch
    %1007 = sbr.rel (0) target = $region21
  $region20: #{model_forward.8} parent=0 // pred_region
    _
  $region21: #{model_forward.8} parent=0 // pred_fallthru
    _

// kernel: model_forward.11
$region0: #{model_forward.11}
  #allocation0 [shape = 'u32[]', space=smem, size = 0x4, offset = 0x4, fixed_abs, tag = 'smem constant byte address 0x4 - core index']
  #allocation1 [shape = 'u32[144,128]{1,0:T(1,128)}', space=vmem, size = 0x12000, scoped, tag = 'internal scratch']
  #allocation2 [shape = 'f32[2,128]{1,0:T(2,128)}', space=vmem, size = 0x400, scoped, tag = 'scratch operand']
  %s0 = inlined_call_operand.vmem [shape: bf16[2,1024], index: 0, kind: input, shape index: {}]
  %s1 = inlined_call_operand.vmem [shape: bf16[1024,128], index: 1, kind: input, shape index: {}]
  %s2 = inlined_call_operand.vmem [shape: f32[1,128], index: 2, kind: input, shape index: {}]
  %s3 = inlined_call_operand.vmem [shape: f32[2,128], index: 3, kind: output, shape index: {}]
  %s4 = sld [smem:[#allocation0]]
  $region53: #{model_forward.11} parent=0
    _
  %s6 = ssub.s32 1, %s4
  %s7 = scalar_select 0, %s6, %s4
  loop: start=0, step=1, limit=4
  $region2: #{model_forward.11} parent=0 // loop_pre_header
    _
  $region3: #{model_forward.11} parent=0 // loop_header
    %s9 = sphi 0, %s13
    %p10 = scmp.ge.s32.totalorder %s9, 4
    %s16 = sphi 0, %s35
    %s17 = sphi 0, %s31
    %s18 = sphi 0, %s27
    %s19 = sphi 0, %s16
    %s20 = sphi 0, %s17
    %s21 = sphi 0, %s18
    %s22 = sphi 0, %s19
    %s23 = sphi 0, %s20
    %s24 = sphi 0, %s21
    %s40 = sphi 0, %s42
    %s43 = sphi 0, %s40
    %s44 = sphi 0, %s43
    %s60 = sphi 0, %s44
    %s68 = sphi 0, %s70
    %s71 = sphi 0, %s68
    %s72 = sphi 0, %s71
    %s88 = sphi 0, %s72
    %s94 = sphi 0, %s96
    %s97 = sphi 0, %s94
    %s98 = sphi 0, %s97
    %s114 = sphi 0, %s98
    %s122 = sphi 0, %s124
    %s125 = sphi 0, %s122
    %s126 = sphi 0, %s125
    %s142 = sphi 0, %s126
  $region4: #{model_forward.11} parent=0 // loop_header_branch
    %12 = sbr.rel (%p10) target = $region8
  $region5: #{model_forward.11} parent=0 // loop_body
    %s14 = ssub.s32 %s9, 1
    %s15 = ssub.s32 %s9, 2
    %s25 = sadd.s32 1, %s18
    %p26 = scmp.ge.s32.totalorder %s25, 2
    %s27 = scalar_select %p26, 0, %s25
    %s28 = sadd.s32 1, %s17
    %s29 = scalar_select %p26, %s28, %s17
    %p30 = scmp.ge.s32.totalorder %s29, 1
    %s31 = scalar_select %p30, 0, %s29
    %s32 = sadd.s32 1, %s16
    %s33 = scalar_select %p30, %s32, %s16
    %p34 = scmp.ge.s32.totalorder %s33, 1
    %s35 = scalar_select %p34, 0, %s33
    %s36 = ssub.s32 %s16, %s35
    %s37 = ssub.s32 %s18, %s27
    %s38 = sor.u32 %s36, %s37
    %p39 = scmp.eq.s32.totalorder %s38, 0
    %s41 = sadd.s32 %s40, 1
    %s42 = scalar_select %p39, %s40, %s41
    %p45 = pneg %p39
    %p46 = scmp.eq.s32.totalorder %s9, 1
    %p47 = por %p45, %p46
    %p48 = scmp.ne.s32.totalorder %s40, %s43
    %p49 = scmp.eq.s32.totalorder %s9, 0
    %p50 = por %p48, %p49
    %p51 = scmp.ne.s32.totalorder %s40, %s43
    %p52 = scmp.eq.s32.totalorder %s14, 1
    %p53 = por %p51, %p52
    %p54 = scmp.ne.s32.totalorder %s43, %s44
    %p55 = scmp.eq.s32.totalorder %s14, 0
    %p56 = por %p54, %p55
    %p57 = scmp.ne.s32.totalorder %s43, %s44
    %p58 = scmp.eq.s32.totalorder %s15, 1
    %p59 = por %p57, %p58
    %p61 = scmp.ne.s32.totalorder %s44, %s60
    %p62 = scmp.eq.s32.totalorder %s15, 0
    %p63 = por %p61, %p62
    %s64 = ssub.s32 %s18, %s27
    %s65 = ssub.s32 %s17, %s31
    %s66 = sor.u32 %s64, %s65
    %p67 = scmp.eq.s32.totalorder %s66, 0
    %s69 = sadd.s32 %s68, 1
    %s70 = scalar_select %p67, %s68, %s69
    %p73 = pneg %p67
    %p74 = scmp.eq.s32.totalorder %s9, 1
    %p75 = por %p73, %p74
    %p76 = scmp.ne.s32.totalorder %s68, %s71
    %p77 = scmp.eq.s32.totalorder %s9, 0
    %p78 = por %p76, %p77
    %p79 = scmp.ne.s32.totalorder %s68, %s71
    %p80 = scmp.eq.s32.totalorder %s14, 1
    %p81 = por %p79, %p80
    %p82 = scmp.ne.s32.totalorder %s71, %s72
    %p83 = scmp.eq.s32.totalorder %s14, 0
    %p84 = por %p82, %p83
    %p85 = scmp.ne.s32.totalorder %s71, %s72
    %p86 = scmp.eq.s32.totalorder %s15, 1
    %p87 = por %p85, %p86
    %p89 = scmp.ne.s32.totalorder %s72, %s88
    %p90 = scmp.eq.s32.totalorder %s15, 0
    %p91 = por %p89, %p90
    %s92 = ssub.s32 %s17, %s31
    %p93 = scmp.eq.s32.totalorder %s92, 0
    %s95 = sadd.s32 %s94, 1
    %s96 = scalar_select %p93, %s94, %s95
    %p99 = pneg %p93
    %p100 = scmp.eq.s32.totalorder %s9, 1
    %p101 = por %p99, %p100
    %p102 = scmp.ne.s32.totalorder %s94, %s97
    %p103 = scmp.eq.s32.totalorder %s9, 0
    %p104 = por %p102, %p103
    %p105 = scmp.ne.s32.totalorder %s94, %s97
    %p106 = scmp.eq.s32.totalorder %s14, 1
    %p107 = por %p105, %p106
    %p108 = scmp.ne.s32.totalorder %s97, %s98
    %p109 = scmp.eq.s32.totalorder %s14, 0
    %p110 = por %p108, %p109
    %p111 = scmp.ne.s32.totalorder %s97, %s98
    %p112 = scmp.eq.s32.totalorder %s15, 1
    %p113 = por %p111, %p112
    %p115 = scmp.ne.s32.totalorder %s98, %s114
    %p116 = scmp.eq.s32.totalorder %s15, 0
    %p117 = por %p115, %p116
    %s118 = ssub.s32 %s16, %s35
    %s119 = ssub.s32 %s17, %s31
    %s120 = sor.u32 %s118, %s119
    %p121 = scmp.eq.s32.totalorder %s120, 0
    %s123 = sadd.s32 %s122, 1
    %s124 = scalar_select %p121, %s122, %s123
    %p127 = pneg %p121
    %p128 = scmp.eq.s32.totalorder %s9, 1
    %p129 = por %p127, %p128
    %p130 = scmp.ne.s32.totalorder %s122, %s125
    %p131 = scmp.eq.s32.totalorder %s9, 0
    %p132 = por %p130, %p131
    %p133 = scmp.ne.s32.totalorder %s122, %s125
    %p134 = scmp.eq.s32.totalorder %s14, 1
    %p135 = por %p133, %p134
    %p136 = scmp.ne.s32.totalorder %s125, %s126
    %p137 = scmp.eq.s32.totalorder %s14, 0
    %p138 = por %p136, %p137
    %p139 = scmp.ne.s32.totalorder %s125, %s126
    %p140 = scmp.eq.s32.totalorder %s15, 1
    %p141 = por %p139, %p140
    %p143 = scmp.ne.s32.totalorder %s126, %s142
    %p144 = scmp.eq.s32.totalorder %s15, 0
    %p145 = por %p143, %p144
    %p146 = scmp.le.s32.totalorder 1, %s9
    %p147 = scmp.lt.s32.totalorder %s9, 3
    %p148 = pnand %p146, %p147
    %p149 = pneg %p148
    // Predicated region
    $region9: #{model_forward.11} parent=5 // pred_check
      _
    $region10: #{model_forward.11} parent=5 // pred_check_branch
      %151 = sbr.rel (%p148) target = $region12
    $region11: #{model_forward.11} parent=5 // pred_region
      %s152 = ssub.s32 %s9, 1
      // Predicated region
      $region13: #{model_forward.11} parent=11 // pred_check
        %p153 = pneg %p110
      $region14: #{model_forward.11} parent=11 // pred_check_branch
        %155 = sbr.rel (%p153) target = $region16
      $region15: #{model_forward.11} parent=11 // pred_region
        %p156 = scmp.lt.s32.totalorder %s20, 0
        %s157 = scalar_select %p156, %s20, 0
        %s158 = scalar_lea.vmem %s2, %s157
      $region16: #{model_forward.11} parent=11 // pred_fallthru
        _
    $region12: #{model_forward.11} parent=5 // pred_fallthru
      _
    %p159 = scmp.lt.s32.totalorder %s9, 2
    // Predicated region
    $region17: #{model_forward.11} parent=5 // pred_check
      %p160 = pneg %p159
    $region18: #{model_forward.11} parent=5 // pred_check_branch
      %162 = sbr.rel (%p160) target = $region20
    $region19: #{model_forward.11} parent=5 // pred_region
      // Predicated region
      $region21: #{model_forward.11} parent=19 // pred_check
        %p163 = pneg %p50
      $region22: #{model_forward.11} parent=19 // pred_check_branch
        %165 = sbr.rel (%p163) target = $region24
      $region23: #{model_forward.11} parent=19 // pred_region
        %s166 = smul.u32 4, %s18
        %p167 = scmp.lt.s32.totalorder %s16, 0
        %s168 = scalar_select %p167, %s16, 0
        %p169 = scmp.lt.s32.totalorder %s166, 7
        %s170 = scalar_select %p169, %s166, 7
        %s171 = smul.addr %s168, 8
        %s172 = sadd.s32 %s170, %s171
        %s173 = scalar_lea.vmem %s0, %s172
        %s174 = smul.u32 4, %s18
      $region24: #{model_forward.11} parent=19 // pred_fallthru
        _
      // Predicated region
      $region25: #{model_forward.11} parent=19 // pred_check
        %p175 = pneg %p78
      $region26: #{model_forward.11} parent=19 // pred_check_branch
        %177 = sbr.rel (%p175) target = $region28
      $region27: #{model_forward.11} parent=19 // pred_region
        %s178 = smul.u32 64, %s18
        %p179 = scmp.lt.s32.totalorder %s178, 127
        %s180 = scalar_select %p179, %s178, 127
        %p181 = scmp.lt.s32.totalorder %s17, 0
        %s182 = scalar_select %p181, %s17, 0
        %s183 = sadd.s32 %s182, %s180
        %s184 = smul.addr %s183, 4
        %s185 = scalar_lea.vmem %s1, %s184
        %s186 = smul.u32 64, %s18
      $region28: #{model_forward.11} parent=19 // pred_fallthru
        _
    $region20: #{model_forward.11} parent=5 // pred_fallthru
      _
    %p187 = scmp.le.s32.totalorder 1, %s9
    %p188 = scmp.lt.s32.totalorder %s9, 3
    %p189 = pnand %p187, %p188
    %p190 = pneg %p189
    // Predicated region
    $region29: #{model_forward.11} parent=5 // pred_check
      _
    $region30: #{model_forward.11} parent=5 // pred_check_branch
      %192 = sbr.rel (%p189) target = $region32
    $region31: #{model_forward.11} parent=5 // pred_region
      %s193 = ssub.s32 %s9, 1
      %s194 = smul.u32 4, %s21
      %p195 = scmp.lt.s32.totalorder %s19, 0
      %s196 = scalar_select %p195, %s19, 0
      %p197 = scmp.lt.s32.totalorder %s194, 7
      %s198 = scalar_select %p197, %s194, 7
      %s199 = smul.addr %s196, 8
      %s200 = sadd.s32 %s198, %s199
      %s201 = scalar_lea.vmem %s0, %s200
      %p202 = pneg %p56
      %p203 = pneg %p53
      %s204 = smul.u32 64, %s21
      %p205 = scmp.lt.s32.totalorder %s204, 127
      %s206 = scalar_select %p205, %s204, 127
      %p207 = scmp.lt.s32.totalorder %s20, 0
      %s208 = scalar_select %p207, %s20, 0
      %s209 = sadd.s32 %s208, %s206
      %s210 = smul.addr %s209, 4
      %s211 = scalar_lea.vmem %s1, %s210
      %p212 = pneg %p84
      %p213 = pneg %p81
      %p214 = scmp.lt.s32.totalorder %s20, 0
      %s215 = scalar_select %p214, %s20, 0
      %s216 = scalar_lea.vmem %s2, %s215
      %p217 = pneg %p110
      %p218 = pneg %p107
      %p219 = pneg %p138
      %p220 = pneg %p135
      %p221 = scmp.lt.s32.totalorder %s19, 0
      %s222 = scalar_select %p221, %s19, 0
      %p223 = scmp.lt.s32.totalorder %s20, 0
      %s224 = scalar_select %p223, %s20, 0
      %s225 = sadd.s32 %s224, %s222
      %s226 = smul.addr %s225, 2
      %s227 = scalar_lea.vmem %s3, %s226
      %s228 = smul.u32 4, %s21
      %p229 = scmp.lt.s32.totalorder %s19, 0
      %s230 = scalar_select %p229, %s19, 0
      %p231 = scmp.lt.s32.totalorder %s228, 7
      %s232 = scalar_select %p231, %s228, 7
      %s233 = smul.addr %s230, 8
      %s234 = sadd.s32 %s232, %s233
      %s235 = scalar_lea.vmem %s0, %s234
      %s236 = smul.u32 4, %s21
      %s237 = smul.u32 64, %s21
      %p238 = scmp.lt.s32.totalorder %s237, 127
      %s239 = scalar_select %p238, %s237, 127
      %p240 = scmp.lt.s32.totalorder %s20, 0
      %s241 = scalar_select %p240, %s20, 0
      %s242 = sadd.s32 %s241, %s239
      %s243 = smul.addr %s242, 4
      %s244 = scalar_lea.vmem %s1, %s243
      %s245 = smul.u32 64, %s21
      %p246 = scmp.lt.s32.totalorder %s20, 0
      %s247 = scalar_select %p246, %s20, 0
      %s248 = scalar_lea.vmem %s2, %s247
      %p249 = scmp.lt.s32.totalorder %s19, 0
      %s250 = scalar_select %p249, %s19, 0
      %p251 = scmp.lt.s32.totalorder %s20, 0
      %s252 = scalar_select %p251, %s20, 0
      %s253 = sadd.s32 %s252, %s250
      %s254 = smul.addr %s253, 2
      %s255 = scalar_lea.vmem %s3, %s254
      %p257 = scmp.eq.s32.totalorder %s21, 0
      // Predicated region
      $region33: #{model_forward.11} parent=31 // pred_check
        %p258 = pneg %p257
      $region34: #{model_forward.11} parent=31 // pred_check_branch
        %260 = sbr.rel (%p258) target = $region36
      $region35: #{model_forward.11} parent=31 // pred_region
        %261 = vst [vmem:[#allocation2] sm:$0x3] 0.0
      $region36: #{model_forward.11} parent=31 // pred_fallthru
        _
      %v262 = vld [vmem:[#allocation2] sm:$0x3]
      %v263 = vld [vmem:[%s235] sm:$0xf]
      %v264 = vld [vmem:[%s244] sm:$0xf]
      %v265 = vld [vmem:[%s244 + $0x4] sm:$0xf]
      %v266 = vld [vmem:[%s244 + $0x8] sm:$0xf]
      %v267 = vld [vmem:[%s244 + $0xc] sm:$0xf]
      %v268 = vld [vmem:[%s244 + $0x10] sm:$0xf]
      %v269 = vld [vmem:[%s244 + $0x14] sm:$0xf]
      %v270 = vld [vmem:[%s244 + $0x18] sm:$0xf]
      %v271 = vld [vmem:[%s244 + $0x1c] sm:$0xf]
      %v272 = vld [vmem:[%s244 + $0x20] sm:$0xf]
      %v273 = vld [vmem:[%s244 + $0x24] sm:$0xf]
      %v274 = vld [vmem:[%s244 + $0x28] sm:$0xf]
      %v275 = vld [vmem:[%s244 + $0x2c] sm:$0xf]
      %v276 = vld [vmem:[%s244 + $0x30] sm:$0xf]
      %v277 = vld [vmem:[%s244 + $0x34] sm:$0xf]
      %v278 = vld [vmem:[%s244 + $0x38] sm:$0xf]
      %v279 = vld [vmem:[%s244 + $0x3c] sm:$0xf]
      %v280 = vld [vmem:[%s244 + $0x40] sm:$0xf]
      %v281 = vld [vmem:[%s244 + $0x44] sm:$0xf]
      %v282 = vld [vmem:[%s244 + $0x48] sm:$0xf]
      %v283 = vld [vmem:[%s244 + $0x4c] sm:$0xf]
      %v284 = vld [vmem:[%s244 + $0x50] sm:$0xf]
      %v285 = vld [vmem:[%s244 + $0x54] sm:$0xf]
      %v286 = vld [vmem:[%s244 + $0x58] sm:$0xf]
      %v287 = vld [vmem:[%s244 + $0x5c] sm:$0xf]
      %v288 = vld [vmem:[%s244 + $0x60] sm:$0xf]
      %v289 = vld [vmem:[%s244 + $0x64] sm:$0xf]
      %v290 = vld [vmem:[%s244 + $0x68] sm:$0xf]
      %v291 = vld [vmem:[%s244 + $0x6c] sm:$0xf]
      %v292 = vld [vmem:[%s244 + $0x70] sm:$0xf]
      %v293 = vld [vmem:[%s244 + $0x74] sm:$0xf]
      %v294 = vld [vmem:[%s244 + $0x78] sm:$0xf]
      %v295 = vld [vmem:[%s244 + $0x7c] sm:$0xf]
      %v296 = vld [vmem:[%s244 + $0x80] sm:$0xf]
      %v297 = vld [vmem:[%s244 + $0x84] sm:$0xf]
      %v298 = vld [vmem:[%s244 + $0x88] sm:$0xf]
      %v299 = vld [vmem:[%s244 + $0x8c] sm:$0xf]
      %v300 = vld [vmem:[%s244 + $0x90] sm:$0xf]
      %v301 = vld [vmem:[%s244 + $0x94] sm:$0xf]
      %v302 = vld [vmem:[%s244 + $0x98] sm:$0xf]
      %v303 = vld [vmem:[%s244 + $0x9c] sm:$0xf]
      %v304 = vld [vmem:[%s244 + $0xa0] sm:$0xf]
      %v305 = vld [vmem:[%s244 + $0xa4] sm:$0xf]
      %v306 = vld [vmem:[%s244 + $0xa8] sm:$0xf]
      %v307 = vld [vmem:[%s244 + $0xac] sm:$0xf]
      %v308 = vld [vmem:[%s244 + $0xb0] sm:$0xf]
      %v309 = vld [vmem:[%s244 + $0xb4] sm:$0xf]
      %v310 = vld [vmem:[%s244 + $0xb8] sm:$0xf]
      %v311 = vld [vmem:[%s244 + $0xbc] sm:$0xf]
      %v312 = vld [vmem:[%s244 + $0xc0] sm:$0xf]
      %v313 = vld [vmem:[%s244 + $0xc4] sm:$0xf]
      %v314 = vld [vmem:[%s244 + $0xc8] sm:$0xf]
      %v315 = vld [vmem:[%s244 + $0xcc] sm:$0xf]
      %v316 = vld [vmem:[%s244 + $0xd0] sm:$0xf]
      %v317 = vld [vmem:[%s244 + $0xd4] sm:$0xf]
      %v318 = vld [vmem:[%s244 + $0xd8] sm:$0xf]
      %v319 = vld [vmem:[%s244 + $0xdc] sm:$0xf]
      %v320 = vld [vmem:[%s244 + $0xe0] sm:$0xf]
      %v321 = vld [vmem:[%s244 + $0xe4] sm:$0xf]
      %v322 = vld [vmem:[%s244 + $0xe8] sm:$0xf]
      %v323 = vld [vmem:[%s244 + $0xec] sm:$0xf]
      %v324 = vld [vmem:[%s244 + $0xf0] sm:$0xf]
      %v325 = vld [vmem:[%s244 + $0xf4] sm:$0xf]
      %v326 = vld [vmem:[%s244 + $0xf8] sm:$0xf]
      %v327 = vld [vmem:[%s244 + $0xfc] sm:$0xf]
      %v330 = vunpack.c.l.s4 1966171168
      %v331 = vunpack.c.0.s8 %v330
      %v332 = vlaneseq
      %v333 = vshrl.u32 %v332, 7
      %v334 = vsub.s32 %v331, %v333
      %v335 = vrot.slane %v263, %v334
      %v336 = vcombine.high %v335, %v335
      %v338 = vunpack.c.l.s4 1966171168
      %v339 = vunpack.c.0.s8 %v338
      %v340 = vlaneseq
      %v341 = vshrl.u32 %v340, 7
      %v342 = vsub.s32 %v339, %v341
      %v343 = vrot.slane %v335, %v342
      %v345 = vunpack.c.l.s4 1966171168
      %v346 = vunpack.c.0.s8 %v345
      %v347 = vlaneseq
      %v348 = vshrl.u32 %v347, 7
      %v349 = vsub.s32 %v346, %v348
      %v350 = vrot.slane %v336, %v349
      %v351 = vcombine.high %v343, %v343
      %v352 = vcombine.high %v350, %v350
      %v421 = vunpack.c.l.b16 %v264
      %v422 = vunpack.c.l.b16 %v265
      %v423 = vunpack.c.l.b16 %v266
      %v424 = vunpack.c.l.b16 %v267
      %v425 = vunpack.c.l.b16 %v268
      %v426 = vunpack.c.l.b16 %v269
      %v427 = vunpack.c.l.b16 %v270
      %v428 = vunpack.c.l.b16 %v271
      %v429 = vunpack.c.l.b16 %v272
      %v430 = vunpack.c.l.b16 %v273
      %v431 = vunpack.c.l.b16 %v274
      %v432 = vunpack.c.l.b16 %v275
      %v433 = vunpack.c.l.b16 %v276
      %v434 = vunpack.c.l.b16 %v277
      %v435 = vunpack.c.l.b16 %v278
      %v436 = vunpack.c.l.b16 %v279
      %v437 = vunpack.c.l.b16 %v280
      %v438 = vunpack.c.l.b16 %v281
      %v439 = vunpack.c.l.b16 %v282
      %v440 = vunpack.c.l.b16 %v283
      %v441 = vunpack.c.l.b16 %v284
      %v442 = vunpack.c.l.b16 %v285
      %v443 = vunpack.c.l.b16 %v286
      %v444 = vunpack.c.l.b16 %v287
      %v445 = vunpack.c.l.b16 %v288
      %v446 = vunpack.c.l.b16 %v289
      %v447 = vunpack.c.l.b16 %v290
      %v448 = vunpack.c.l.b16 %v291
      %v449 = vunpack.c.l.b16 %v292
      %v450 = vunpack.c.l.b16 %v293
      %v451 = vunpack.c.l.b16 %v294
      %v452 = vunpack.c.l.b16 %v295
      %v453 = vunpack.c.l.b16 %v296
      %v454 = vunpack.c.l.b16 %v297
      %v455 = vunpack.c.l.b16 %v298
      %v456 = vunpack.c.l.b16 %v299
      %v457 = vunpack.c.l.b16 %v300
      %v458 = vunpack.c.l.b16 %v301
      %v459 = vunpack.c.l.b16 %v302
      %v460 = vunpack.c.l.b16 %v303
      %v461 = vunpack.c.l.b16 %v304
      %v462 = vunpack.c.l.b16 %v305
      %v463 = vunpack.c.l.b16 %v306
      %v464 = vunpack.c.l.b16 %v307
      %v465 = vunpack.c.l.b16 %v308
      %v466 = vunpack.c.l.b16 %v309
      %v467 = vunpack.c.l.b16 %v310
      %v468 = vunpack.c.l.b16 %v311
      %v469 = vunpack.c.l.b16 %v312
      %v470 = vunpack.c.l.b16 %v313
      %v471 = vunpack.c.l.b16 %v314
      %v472 = vunpack.c.l.b16 %v315
      %v473 = vunpack.c.l.b16 %v316
      %v474 = vunpack.c.l.b16 %v317
      %v475 = vunpack.c.l.b16 %v318
      %v476 = vunpack.c.l.b16 %v319
      %v477 = vunpack.c.l.b16 %v320
      %v478 = vunpack.c.l.b16 %v321
      %v479 = vunpack.c.l.b16 %v322
      %v480 = vunpack.c.l.b16 %v323
      %v481 = vunpack.c.l.b16 %v324
      %v482 = vunpack.c.l.b16 %v325
      %v483 = vunpack.c.l.b16 %v326
      %v484 = vunpack.c.l.b16 %v327
      %v485 = vpack.c.b16 %v422, %v421
      %v486 = vpack.c.b16 %v424, %v423
      %v487 = vpack.c.b16 %v426, %v425
      %v488 = vpack.c.b16 %v428, %v427
      %v489 = vpack.c.b16 %v430, %v429
      %v490 = vpack.c.b16 %v432, %v431
      %v491 = vpack.c.b16 %v434, %v433
      %v492 = vpack.c.b16 %v436, %v435
      %v493 = vpack.c.b16 %v438, %v437
      %v494 = vpack.c.b16 %v440, %v439
      %v495 = vpack.c.b16 %v442, %v441
      %v496 = vpack.c.b16 %v444, %v443
      %v497 = vpack.c.b16 %v446, %v445
      %v498 = vpack.c.b16 %v448, %v447
      %v499 = vpack.c.b16 %v450, %v449
      %v500 = vpack.c.b16 %v452, %v451
      %v501 = vpack.c.b16 %v454, %v453
      %v502 = vpack.c.b16 %v456, %v455
      %v503 = vpack.c.b16 %v458, %v457
      %v504 = vpack.c.b16 %v460, %v459
      %v505 = vpack.c.b16 %v462, %v461
      %v506 = vpack.c.b16 %v464, %v463
      %v507 = vpack.c.b16 %v466, %v465
      %v508 = vpack.c.b16 %v468, %v467
      %v509 = vpack.c.b16 %v470, %v469
      %v510 = vpack.c.b16 %v472, %v471
      %v511 = vpack.c.b16 %v474, %v473
      %v512 = vpack.c.b16 %v476, %v475
      %v513 = vpack.c.b16 %v478, %v477
      %v514 = vpack.c.b16 %v480, %v479
      %v515 = vpack.c.b16 %v482, %v481
      %v516 = vpack.c.b16 %v484, %v483
      %549 = vmatprep.subr.bf16.mxu0 0
      %550 = vmatpush1.bf16.msra.mxu0 %v492
      %551 = vmatprep.subr.bf16.mxu0 0
      %552 = vmatpush1.bf16.msra.mxu0 %v491
      %553 = vmatprep.subr.bf16.mxu0 0
      %554 = vmatpush1.bf16.msra.mxu0 %v490
      %555 = vmatprep.subr.bf16.mxu0 0
      %556 = vmatpush1.bf16.msra.mxu0 %v489
      %557 = vmatprep.subr.bf16.mxu0 0
      %558 = vmatpush1.bf16.msra.mxu0 %v488
      %559 = vmatprep.subr.bf16.mxu0 0
      %560 = vmatpush1.bf16.msra.mxu0 %v487
      %561 = vmatprep.subr.bf16.mxu0 0
      %562 = vmatpush1.bf16.msra.mxu0 %v486
      %563 = vmatprep.subr.bf16.mxu0 0
      %564 = vmatpush1.bf16.msra.mxu0 %v485
      %565 = vmatprep.subr.bf16.mxu0 0
      %566 = vmatpush2.bf16.msra.mxu0 %v500
      %567 = vmatprep.subr.bf16.mxu0 0
      %568 = vmatpush2.bf16.msra.mxu0 %v499
      %569 = vmatprep.subr.bf16.mxu0 0
      %570 = vmatpush2.bf16.msra.mxu0 %v498
      %571 = vmatprep.subr.bf16.mxu0 0
      %572 = vmatpush2.bf16.msra.mxu0 %v497
      %573 = vmatprep.subr.bf16.mxu0 0
      %574 = vmatpush2.bf16.msra.mxu0 %v496
      %575 = vmatprep.subr.bf16.mxu0 0
      %576 = vmatpush2.bf16.msra.mxu0 %v495
      %577 = vmatprep.subr.bf16.mxu0 0
      %578 = vmatpush2.bf16.msra.mxu0 %v494
      %579 = vmatprep.subr.bf16.mxu0 0
      %580 = vmatpush2.bf16.msra.mxu0 %v493
      %581 = vmatprep.mubr.bf16.mxu0 %v350
      %582 = vmatmul.mubr.bf16.gmra.mxu0 %v343
      %v583 = vpop.f32.mrf.mxu0
      %v584 = vadd.f32 0.0, %v583
      %v585 = vpop.f32.mrf.mxu0
      %v586 = vpop.f32.mrf.mxu0
      %v587 = vpop.f32.mrf.mxu0
      %588 = vdwg.mxu0
      %589 = vmatprep.subr.bf16.mxu0 0
      %590 = vmatpush1.bf16.msra.mxu0 %v508
      %591 = vmatprep.subr.bf16.mxu0 0
      %592 = vmatpush1.bf16.msra.mxu0 %v507
      %593 = vmatprep.subr.bf16.mxu0 0
      %594 = vmatpush1.bf16.msra.mxu0 %v506
      %595 = vmatprep.subr.bf16.mxu0 0
      %596 = vmatpush1.bf16.msra.mxu0 %v505
      %597 = vmatprep.subr.bf16.mxu0 0
      %598 = vmatpush1.bf16.msra.mxu0 %v504
      %599 = vmatprep.subr.bf16.mxu0 0
      %600 = vmatpush1.bf16.msra.mxu0 %v503
      %601 = vmatprep.subr.bf16.mxu0 0
      %602 = vmatpush1.bf16.msra.mxu0 %v502
      %603 = vmatprep.subr.bf16.mxu0 0
      %604 = vmatpush1.bf16.msra.mxu0 %v501
      %605 = vmatprep.subr.bf16.mxu0 0
      %606 = vmatpush2.bf16.msra.mxu0 %v516
      %607 = vmatprep.subr.bf16.mxu0 0
      %608 = vmatpush2.bf16.msra.mxu0 %v515
      %609 = vmatprep.subr.bf16.mxu0 0
      %610 = vmatpush2.bf16.msra.mxu0 %v514
      %611 = vmatprep.subr.bf16.mxu0 0
      %612 = vmatpush2.bf16.msra.mxu0 %v513
      %613 = vmatprep.subr.bf16.mxu0 0
      %614 = vmatpush2.bf16.msra.mxu0 %v512
      %615 = vmatprep.subr.bf16.mxu0 0
      %616 = vmatpush2.bf16.msra.mxu0 %v511
      %617 = vmatprep.subr.bf16.mxu0 0
      %618 = vmatpush2.bf16.msra.mxu0 %v510
      %619 = vmatprep.subr.bf16.mxu0 0
      %620 = vmatpush2.bf16.msra.mxu0 %v509
      %621 = vmatprep.mubr.bf16.mxu0 %v352
      %622 = vmatmul.mubr.bf16.gmra.mxu0 %v351
      %v623 = vpop.f32.mrf.mxu0
      %v624 = vadd.f32 %v584, %v623
      %v625 = vpop.f32.mrf.mxu0
      %v626 = vpop.f32.mrf.mxu0
      %v627 = vpop.f32.mrf.mxu0
      %628 = vdwg.mxu0
      %v629 = vadd.f32 %v262, %v624
      %630 = vst [vmem:[#allocation2] sm:$0x3] %v629
      %p631 = scmp.eq.s32.totalorder %s21, 1
      // Predicated region
      $region37: #{model_forward.11} parent=31 // pred_check
        %p632 = pneg %p631
      $region38: #{model_forward.11} parent=31 // pred_check_branch
        %634 = sbr.rel (%p632) target = $region40
      $region39: #{model_forward.11} parent=31 // pred_region
        %v635 = vld [vmem:[#allocation2] sm:$0x3]
        %v636 = vld [vmem:[%s248] sm:$0x1]
        %v638 = vlaneseq
        %v639 = vshrl.u32 %v638, 7
        %v640 = vsub.s32 0, %v639
        %v641 = vrot.slane %v636, %v640
        %v643 = vadd.f32 %v635, %v641
        %644 = vst [vmem:[%s255] sm:$0x3] %v643
      $region40: #{model_forward.11} parent=31 // pred_fallthru
        _
      %p645 = scmp.lt.s32.totalorder %s19, 0
      %s646 = scalar_select %p645, %s19, 0
      %p647 = scmp.lt.s32.totalorder %s20, 0
      %s648 = scalar_select %p647, %s20, 0
      %s649 = sadd.s32 %s648, %s646
      %s650 = smul.addr %s649, 2
      %s651 = scalar_lea.vmem %s3, %s650
      // Predicated region
      $region41: #{model_forward.11} parent=31 // pred_check
        %p652 = pneg %p135
      $region42: #{model_forward.11} parent=31 // pred_check_branch
        %654 = sbr.rel (%p652) target = $region44
      $region43: #{model_forward.11} parent=31 // pred_region
        _
      $region44: #{model_forward.11} parent=31 // pred_fallthru
        _
      // Predicated region
      $region45: #{model_forward.11} parent=31 // pred_check
        %p655 = pneg %p135
      $region46: #{model_forward.11} parent=31 // pred_check_branch
        %657 = sbr.rel (%p655) target = $region48
      $region47: #{model_forward.11} parent=31 // pred_region
        %p658 = scmp.lt.s32.totalorder %s19, 0
        %s659 = scalar_select %p658, %s19, 0
        %p660 = scmp.lt.s32.totalorder %s20, 0
        %s661 = scalar_select %p660, %s20, 0
        %s662 = sadd.s32 %s661, %s659
        %s663 = smul.addr %s662, 2
        %s664 = scalar_lea.vmem %s3, %s663
      $region48: #{model_forward.11} parent=31 // pred_fallthru
        _
    $region32: #{model_forward.11} parent=5 // pred_fallthru
      _
    %p665 = scmp.le.s32.totalorder 2, %s9
    // Predicated region
    $region49: #{model_forward.11} parent=5 // pred_check
      %p666 = pneg %p665
    $region50: #{model_forward.11} parent=5 // pred_check_branch
      %668 = sbr.rel (%p666) target = $region52
    $region51: #{model_forward.11} parent=5 // pred_region
      %s669 = ssub.s32 %s9, 2
    $region52: #{model_forward.11} parent=5 // pred_fallthru
      _
  $region6: #{model_forward.11} parent=0 // loop_footer
    %s13 = sadd.s32 1, %s9
  $region7: #{model_forward.11} parent=0 // loop_footer_branch
    %8 = sbr.rel target = $region3
  $region8: #{model_forward.11} parent=0 // loop_exit
    _

// kernel: model_forward.10
$region0: #{model_forward.10}
  #allocation0 [shape = 'u32[]', space=smem, size = 0x4, offset = 0x4, fixed_abs, tag = 'smem constant byte address 0x4 - core index']
  #allocation1 [shape = 'u32[144,128]{1,0:T(1,128)}', space=vmem, size = 0x12000, scoped, tag = 'internal scratch']
  #allocation2 [shape = 'f32[2,256]{1,0:T(2,128)}', space=vmem, size = 0x800, scoped, tag = 'scratch operand']
  %s0 = inlined_call_operand.vmem [shape: bf16[2,512], index: 0, kind: input, shape index: {}]
  %s1 = inlined_call_operand.vmem [shape: bf16[512,1024], index: 1, kind: input, shape index: {}]
  %s2 = inlined_call_operand.vmem [shape: f32[1,1024], index: 2, kind: input, shape index: {}]
  %s3 = inlined_call_operand.vmem [shape: bf16[2,1024], index: 3, kind: output, shape index: {}]
  %s4 = sld [smem:[#allocation0]]
  $region91: #{model_forward.10} parent=0
    _
  %s6 = ssub.s32 1, %s4
  %s7 = scalar_select 0, %s6, %s4
  $region1: #{model_forward.10} parent=0
    #allocation3 [shape = 'u8[524288]{0}', space=vmem, size = 0x80000, scoped, tag = 'input window, operand 1']
    loop: start=0, step=1, limit=6
    $region2: #{model_forward.10} parent=1 // loop_pre_header
      _
    $region3: #{model_forward.10} parent=1 // loop_header
      %s9 = sphi 0, %s13
      %p10 = scmp.ge.s32.totalorder %s9, 6
      %s16 = sphi 0, %s35
      %s17 = sphi 0, %s31
      %s18 = sphi 0, %s27
      %s19 = sphi 0, %s16
      %s20 = sphi 0, %s17
      %s21 = sphi 0, %s18
      %s22 = sphi 0, %s19
      %s23 = sphi 0, %s20
      %s24 = sphi 0, %s21
      %s40 = sphi 0, %s42
      %s43 = sphi 0, %s40
      %s44 = sphi 0, %s43
      %s60 = sphi 0, %s44
      %s68 = sphi 0, %s70
      %s71 = sphi 0, %s68
      %s72 = sphi 0, %s71
      %s88 = sphi 0, %s72
      %s94 = sphi 0, %s96
      %s97 = sphi 0, %s94
      %s98 = sphi 0, %s97
      %s114 = sphi 0, %s98
      %s122 = sphi 0, %s124
      %s125 = sphi 0, %s122
      %s126 = sphi 0, %s125
      %s142 = sphi 0, %s126
    $region4: #{model_forward.10} parent=1 // loop_header_branch
      %12 = sbr.rel (%p10) target = $region8
    $region5: #{model_forward.10} parent=1 // loop_body
      %s14 = ssub.s32 %s9, 1
      %s15 = ssub.s32 %s9, 2
      %s25 = sadd.s32 1, %s18
      %p26 = scmp.ge.s32.totalorder %s25, 1
      %s27 = scalar_select %p26, 0, %s25
      %s28 = sadd.s32 1, %s17
      %s29 = scalar_select %p26, %s28, %s17
      %p30 = scmp.ge.s32.totalorder %s29, 4
      %s31 = scalar_select %p30, 0, %s29
      %s32 = sadd.s32 1, %s16
      %s33 = scalar_select %p30, %s32, %s16
      %p34 = scmp.ge.s32.totalorder %s33, 1
      %s35 = scalar_select %p34, 0, %s33
      %s36 = ssub.s32 %s16, %s35
      %s37 = ssub.s32 %s18, %s27
      %s38 = sor.u32 %s36, %s37
      %p39 = scmp.eq.s32.totalorder %s38, 0
      %s41 = sadd.s32 %s40, 1
      %s42 = scalar_select %p39, %s40, %s41
      %p45 = pneg %p39
      %p46 = scmp.eq.s32.totalorder %s9, 3
      %p47 = por %p45, %p46
      %p48 = scmp.ne.s32.totalorder %s40, %s43
      %p49 = scmp.eq.s32.totalorder %s9, 0
      %p50 = por %p48, %p49
      %p51 = scmp.ne.s32.totalorder %s40, %s43
      %p52 = scmp.eq.s32.totalorder %s14, 3
      %p53 = por %p51, %p52
      %p54 = scmp.ne.s32.totalorder %s43, %s44
      %p55 = scmp.eq.s32.totalorder %s14, 0
      %p56 = por %p54, %p55
      %p57 = scmp.ne.s32.totalorder %s43, %s44
      %p58 = scmp.eq.s32.totalorder %s15, 3
      %p59 = por %p57, %p58
      %p61 = scmp.ne.s32.totalorder %s44, %s60
      %p62 = scmp.eq.s32.totalorder %s15, 0
      %p63 = por %p61, %p62
      %s64 = ssub.s32 %s18, %s27
      %s65 = ssub.s32 %s17, %s31
      %s66 = sor.u32 %s64, %s65
      %p67 = scmp.eq.s32.totalorder %s66, 0
      %s69 = sadd.s32 %s68, 1
      %s70 = scalar_select %p67, %s68, %s69
      %p73 = pneg %p67
      %p74 = scmp.eq.s32.totalorder %s9, 3
      %p75 = por %p73, %p74
      %p76 = scmp.ne.s32.totalorder %s68, %s71
      %p77 = scmp.eq.s32.totalorder %s9, 0
      %p78 = por %p76, %p77
      %p79 = scmp.ne.s32.totalorder %s68, %s71
      %p80 = scmp.eq.s32.totalorder %s14, 3
      %p81 = por %p79, %p80
      %p82 = scmp.ne.s32.totalorder %s71, %s72
      %p83 = scmp.eq.s32.totalorder %s14, 0
      %p84 = por %p82, %p83
      %p85 = scmp.ne.s32.totalorder %s71, %s72
      %p86 = scmp.eq.s32.totalorder %s15, 3
      %p87 = por %p85, %p86
      %p89 = scmp.ne.s32.totalorder %s72, %s88
      %p90 = scmp.eq.s32.totalorder %s15, 0
      %p91 = por %p89, %p90
      %s92 = ssub.s32 %s17, %s31
      %p93 = scmp.eq.s32.totalorder %s92, 0
      %s95 = sadd.s32 %s94, 1
      %s96 = scalar_select %p93, %s94, %s95
      %p99 = pneg %p93
      %p100 = scmp.eq.s32.totalorder %s9, 3
      %p101 = por %p99, %p100
      %p102 = scmp.ne.s32.totalorder %s94, %s97
      %p103 = scmp.eq.s32.totalorder %s9, 0
      %p104 = por %p102, %p103
      %p105 = scmp.ne.s32.totalorder %s94, %s97
      %p106 = scmp.eq.s32.totalorder %s14, 3
      %p107 = por %p105, %p106
      %p108 = scmp.ne.s32.totalorder %s97, %s98
      %p109 = scmp.eq.s32.totalorder %s14, 0
      %p110 = por %p108, %p109
      %p111 = scmp.ne.s32.totalorder %s97, %s98
      %p112 = scmp.eq.s32.totalorder %s15, 3
      %p113 = por %p111, %p112
      %p115 = scmp.ne.s32.totalorder %s98, %s114
      %p116 = scmp.eq.s32.totalorder %s15, 0
      %p117 = por %p115, %p116
      %s118 = ssub.s32 %s16, %s35
      %s119 = ssub.s32 %s17, %s31
      %s120 = sor.u32 %s118, %s119
      %p121 = scmp.eq.s32.totalorder %s120, 0
      %s123 = sadd.s32 %s122, 1
      %s124 = scalar_select %p121, %s122, %s123
      %p127 = pneg %p121
      %p128 = scmp.eq.s32.totalorder %s9, 3
      %p129 = por %p127, %p128
      %p130 = scmp.ne.s32.totalorder %s122, %s125
      %p131 = scmp.eq.s32.totalorder %s9, 0
      %p132 = por %p130, %p131
      %p133 = scmp.ne.s32.totalorder %s122, %s125
      %p134 = scmp.eq.s32.totalorder %s14, 3
      %p135 = por %p133, %p134
      %p136 = scmp.ne.s32.totalorder %s125, %s126
      %p137 = scmp.eq.s32.totalorder %s14, 0
      %p138 = por %p136, %p137
      %p139 = scmp.ne.s32.totalorder %s125, %s126
      %p140 = scmp.eq.s32.totalorder %s15, 3
      %p141 = por %p139, %p140
      %p143 = scmp.ne.s32.totalorder %s126, %s142
      %p144 = scmp.eq.s32.totalorder %s15, 0
      %p145 = por %p143, %p144
      %p146 = scmp.le.s32.totalorder 1, %s9
      %p147 = scmp.lt.s32.totalorder %s9, 5
      %p148 = pnand %p146, %p147
      %p149 = pneg %p148
      // Predicated region
      $region9: #{model_forward.10} parent=5 // pred_check
        _
      $region10: #{model_forward.10} parent=5 // pred_check_branch
        %151 = sbr.rel (%p148) target = $region12
      $region11: #{model_forward.10} parent=5 // pred_region
        %s152 = ssub.s32 %s9, 1
        // Predicated region
        $region13: #{model_forward.10} parent=11 // pred_check
          %p153 = pneg %p56
        $region14: #{model_forward.10} parent=11 // pred_check_branch
          %155 = sbr.rel (%p153) target = $region16
        $region15: #{model_forward.10} parent=11 // pred_region
          %s156 = smul.u32 4, %s21
          %p157 = scmp.lt.s32.totalorder %s19, 0
          %s158 = scalar_select %p157, %s19, 0
          %p159 = scmp.lt.s32.totalorder %s156, 3
          %s160 = scalar_select %p159, %s156, 3
          %s161 = smul.addr %s158, 4
          %s162 = sadd.s32 %s160, %s161
          %s163 = scalar_lea.vmem %s0, %s162
          %s164 = smul.u32 4, %s21
        $region16: #{model_forward.10} parent=11 // pred_fallthru
          _
      $region12: #{model_forward.10} parent=5 // pred_fallthru
        _
      %p165 = scmp.lt.s32.totalorder %s9, 4
      // Predicated region
      $region17: #{model_forward.10} parent=5 // pred_check
        %p166 = pneg %p165
      $region18: #{model_forward.10} parent=5 // pred_check_branch
        %168 = sbr.rel (%p166) target = $region20
      $region19: #{model_forward.10} parent=5 // pred_region
        // Predicated region
        $region21: #{model_forward.10} parent=19 // pred_check
          %p169 = pneg %p78
        $region22: #{model_forward.10} parent=19 // pred_check_branch
          %171 = sbr.rel (%p169) target = $region24
        $region23: #{model_forward.10} parent=19 // pred_region
          %s172 = sand.u32 %s68, 1
          %s173 = sand.u32 %s68, 1
          %s174 = smul.addr %s173, 512
          %s175 = scalar_lea.vmem [#allocation3], %s174
          %s176 = smul.u32 64, %s18
          %s177 = smul.u32 2, %s17
          %s178 = smul.addr %s176, 8
          %s179 = sadd.s32 %s177, %s178
          %s180 = smul.addr %s179, 4
          %s181 = scalar_lea.vmem %s1, %s180
          // Predicated region
          $region25: #{model_forward.10} parent=23 // pred_check
            _
          $region26: #{model_forward.10} parent=23 // pred_check_branch
            %183 = sbr.rel (0) target = $region28
          $region27: #{model_forward.10} parent=23 // pred_region
            // Predicated region
            $region29: #{model_forward.10} parent=27 // pred_check
              _
            $region30: #{model_forward.10} parent=27 // pred_check_branch
              %185 = sbr.rel (0) target = $region32
            $region31: #{model_forward.10} parent=27 // pred_region
              // Predicated region
              $region44: #{model_forward.10} parent=31 // pred_check
                _
              $region45: #{model_forward.10} parent=31 // pred_check_branch
                %327 = sbr.rel (0) target = $region47
              $region46: #{model_forward.10} parent=31 // pred_region
                loop: start=0, step=1, limit=1
                $region48: #{model_forward.10} parent=46 // loop_pre_header
                  _
                $region49: #{model_forward.10} parent=46 // loop_header
                  %s329 = sphi 0, %s333
                  %p330 = scmp.ge.s32.totalorder %s329, 1
                  %s334 = sphi %s181, %s181
                  %s335 = sphi %s175, %s175
                $region50: #{model_forward.10} parent=46 // loop_header_branch
                  %332 = sbr.rel (%p330) target = $region54
                $region51: #{model_forward.10} parent=46 // loop_body
                  %v336 = vld [vmem:[%s334] sm:$0xff]
                  %337 = vst [vmem:[%s335] sm:$0xff] %v336
                  %v338 = vld [vmem:[%s334 + $0x20] sm:$0xff]
                  %339 = vst [vmem:[%s335 + $0x8] sm:$0xff] %v338
                  %v340 = vld [vmem:[%s334 + $0x40] sm:$0xff]
                  %341 = vst [vmem:[%s335 + $0x10] sm:$0xff] %v340
                  %v342 = vld [vmem:[%s334 + $0x60] sm:$0xff]
                  %343 = vst [vmem:[%s335 + $0x18] sm:$0xff] %v342
                  %v344 = vld [vmem:[%s334 + $0x80] sm:$0xff]
                  %345 = vst [vmem:[%s335 + $0x20] sm:$0xff] %v344
                  %v346 = vld [vmem:[%s334 + $0xa0] sm:$0xff]
                  %347 = vst [vmem:[%s335 + $0x28] sm:$0xff] %v346
                  %v348 = vld [vmem:[%s334 + $0xc0] sm:$0xff]
                  %349 = vst [vmem:[%s335 + $0x30] sm:$0xff] %v348
                  %v350 = vld [vmem:[%s334 + $0xe0] sm:$0xff]
                  %351 = vst [vmem:[%s335 + $0x38] sm:$0xff] %v350
                  %v352 = vld [vmem:[%s334 + $0x100] sm:$0xff]
                  %353 = vst [vmem:[%s335 + $0x40] sm:$0xff] %v352
                  %v354 = vld [vmem:[%s334 + $0x120] sm:$0xff]
                  %355 = vst [vmem:[%s335 + $0x48] sm:$0xff] %v354
                  %v356 = vld [vmem:[%s334 + $0x140] sm:$0xff]
                  %357 = vst [vmem:[%s335 + $0x50] sm:$0xff] %v356
                  %v358 = vld [vmem:[%s334 + $0x160] sm:$0xff]
                  %359 = vst [vmem:[%s335 + $0x58] sm:$0xff] %v358
                  %v360 = vld [vmem:[%s334 + $0x180] sm:$0xff]
                  %361 = vst [vmem:[%s335 + $0x60] sm:$0xff] %v360
                  %v362 = vld [vmem:[%s334 + $0x1a0] sm:$0xff]
                  %363 = vst [vmem:[%s335 + $0x68] sm:$0xff] %v362
                  %v364 = vld [vmem:[%s334 + $0x1c0] sm:$0xff]
                  %365 = vst [vmem:[%s335 + $0x70] sm:$0xff] %v364
                  %v366 = vld [vmem:[%s334 + $0x1e0] sm:$0xff]
                  %367 = vst [vmem:[%s335 + $0x78] sm:$0xff] %v366
                  %v368 = vld [vmem:[%s334 + $0x200] sm:$0xff]
                  %369 = vst [vmem:[%s335 + $0x80] sm:$0xff] %v368
                  %v370 = vld [vmem:[%s334 + $0x220] sm:$0xff]
                  %371 = vst [vmem:[%s335 + $0x88] sm:$0xff] %v370
                  %v372 = vld [vmem:[%s334 + $0x240] sm:$0xff]
                  %373 = vst [vmem:[%s335 + $0x90] sm:$0xff] %v372
                  %v374 = vld [vmem:[%s334 + $0x260] sm:$0xff]
                  %375 = vst [vmem:[%s335 + $0x98] sm:$0xff] %v374
                  %v376 = vld [vmem:[%s334 + $0x280] sm:$0xff]
                  %377 = vst [vmem:[%s335 + $0xa0] sm:$0xff] %v376
                  %v378 = vld [vmem:[%s334 + $0x2a0] sm:$0xff]
                  %379 = vst [vmem:[%s335 + $0xa8] sm:$0xff] %v378
                  %v380 = vld [vmem:[%s334 + $0x2c0] sm:$0xff]
                  %381 = vst [vmem:[%s335 + $0xb0] sm:$0xff] %v380
                  %v382 = vld [vmem:[%s334 + $0x2e0] sm:$0xff]
                  %383 = vst [vmem:[%s335 + $0xb8] sm:$0xff] %v382
                  %v384 = vld [vmem:[%s334 + $0x300] sm:$0xff]
                  %385 = vst [vmem:[%s335 + $0xc0] sm:$0xff] %v384
                  %v386 = vld [vmem:[%s334 + $0x320] sm:$0xff]
                  %387 = vst [vmem:[%s335 + $0xc8] sm:$0xff] %v386
                  %v388 = vld [vmem:[%s334 + $0x340] sm:$0xff]
                  %389 = vst [vmem:[%s335 + $0xd0] sm:$0xff] %v388
                  %v390 = vld [vmem:[%s334 + $0x360] sm:$0xff]
                  %391 = vst [vmem:[%s335 + $0xd8] sm:$0xff] %v390
                  %v392 = vld [vmem:[%s334 + $0x380] sm:$0xff]
                  %393 = vst [vmem:[%s335 + $0xe0] sm:$0xff] %v392
                  %v394 = vld [vmem:[%s334 + $0x3a0] sm:$0xff]
                  %395 = vst [vmem:[%s335 + $0xe8] sm:$0xff] %v394
                  %v396 = vld [vmem:[%s334 + $0x3c0] sm:$0xff]
                  %397 = vst [vmem:[%s335 + $0xf0] sm:$0xff] %v396
                  %v398 = vld [vmem:[%s334 + $0x3e0] sm:$0xff]
                  %399 = vst [vmem:[%s335 + $0xf8] sm:$0xff] %v398
                  %v400 = vld [vmem:[%s334 + $0x400] sm:$0xff]
                  %401 = vst [vmem:[%s335 + $0x100] sm:$0xff] %v400
                  %v402 = vld [vmem:[%s334 + $0x420] sm:$0xff]
                  %403 = vst [vmem:[%s335 + $0x108] sm:$0xff] %v402
                  %v404 = vld [vmem:[%s334 + $0x440] sm:$0xff]
                  %405 = vst [vmem:[%s335 + $0x110] sm:$0xff] %v404
                  %v406 = vld [vmem:[%s334 + $0x460] sm:$0xff]
                  %407 = vst [vmem:[%s335 + $0x118] sm:$0xff] %v406
                  %v408 = vld [vmem:[%s334 + $0x480] sm:$0xff]
                  %409 = vst [vmem:[%s335 + $0x120] sm:$0xff] %v408
                  %v410 = vld [vmem:[%s334 + $0x4a0] sm:$0xff]
                  %411 = vst [vmem:[%s335 + $0x128] sm:$0xff] %v410
                  %v412 = vld [vmem:[%s334 + $0x4c0] sm:$0xff]
                  %413 = vst [vmem:[%s335 + $0x130] sm:$0xff] %v412
                  %v414 = vld [vmem:[%s334 + $0x4e0] sm:$0xff]
                  %415 = vst [vmem:[%s335 + $0x138] sm:$0xff] %v414
                  %v416 = vld [vmem:[%s334 + $0x500] sm:$0xff]
                  %417 = vst [vmem:[%s335 + $0x140] sm:$0xff] %v416
                  %v418 = vld [vmem:[%s334 + $0x520] sm:$0xff]
                  %419 = vst [vmem:[%s335 + $0x148] sm:$0xff] %v418
                  %v420 = vld [vmem:[%s334 + $0x540] sm:$0xff]
                  %421 = vst [vmem:[%s335 + $0x150] sm:$0xff] %v420
                  %v422 = vld [vmem:[%s334 + $0x560] sm:$0xff]
                  %423 = vst [vmem:[%s335 + $0x158] sm:$0xff] %v422
                  %v424 = vld [vmem:[%s334 + $0x580] sm:$0xff]
                  %425 = vst [vmem:[%s335 + $0x160] sm:$0xff] %v424
                  %v426 = vld [vmem:[%s334 + $0x5a0] sm:$0xff]
                  %427 = vst [vmem:[%s335 + $0x168] sm:$0xff] %v426
                  %v428 = vld [vmem:[%s334 + $0x5c0] sm:$0xff]
                  %429 = vst [vmem:[%s335 + $0x170] sm:$0xff] %v428
                  %v430 = vld [vmem:[%s334 + $0x5e0] sm:$0xff]
                  %431 = vst [vmem:[%s335 + $0x178] sm:$0xff] %v430
                  %v432 = vld [vmem:[%s334 + $0x600] sm:$0xff]
                  %433 = vst [vmem:[%s335 + $0x180] sm:$0xff] %v432
                  %v434 = vld [vmem:[%s334 + $0x620] sm:$0xff]
                  %435 = vst [vmem:[%s335 + $0x188] sm:$0xff] %v434
                  %v436 = vld [vmem:[%s334 + $0x640] sm:$0xff]
                  %437 = vst [vmem:[%s335 + $0x190] sm:$0xff] %v436
                  %v438 = vld [vmem:[%s334 + $0x660] sm:$0xff]
                  %439 = vst [vmem:[%s335 + $0x198] sm:$0xff] %v438
                  %v440 = vld [vmem:[%s334 + $0x680] sm:$0xff]
                  %441 = vst [vmem:[%s335 + $0x1a0] sm:$0xff] %v440
                  %v442 = vld [vmem:[%s334 + $0x6a0] sm:$0xff]
                  %443 = vst [vmem:[%s335 + $0x1a8] sm:$0xff] %v442
                  %v444 = vld [vmem:[%s334 + $0x6c0] sm:$0xff]
                  %445 = vst [vmem:[%s335 + $0x1b0] sm:$0xff] %v444
                  %v446 = vld [vmem:[%s334 + $0x6e0] sm:$0xff]
                  %447 = vst [vmem:[%s335 + $0x1b8] sm:$0xff] %v446
                  %v448 = vld [vmem:[%s334 + $0x700] sm:$0xff]
                  %449 = vst [vmem:[%s335 + $0x1c0] sm:$0xff] %v448
                  %v450 = vld [vmem:[%s334 + $0x720] sm:$0xff]
                  %451 = vst [vmem:[%s335 + $0x1c8] sm:$0xff] %v450
                  %v452 = vld [vmem:[%s334 + $0x740] sm:$0xff]
                  %453 = vst [vmem:[%s335 + $0x1d0] sm:$0xff] %v452
                  %v454 = vld [vmem:[%s334 + $0x760] sm:$0xff]
                  %455 = vst [vmem:[%s335 + $0x1d8] sm:$0xff] %v454
                  %v456 = vld [vmem:[%s334 + $0x780] sm:$0xff]
                  %457 = vst [vmem:[%s335 + $0x1e0] sm:$0xff] %v456
                  %v458 = vld [vmem:[%s334 + $0x7a0] sm:$0xff]
                  %459 = vst [vmem:[%s335 + $0x1e8] sm:$0xff] %v458
                  %v460 = vld [vmem:[%s334 + $0x7c0] sm:$0xff]
                  %461 = vst [vmem:[%s335 + $0x1f0] sm:$0xff] %v460
                  %v462 = vld [vmem:[%s334 + $0x7e0] sm:$0xff]
                  %463 = vst [vmem:[%s335 + $0x1f8] sm:$0xff] %v462
                $region52: #{model_forward.10} parent=46 // loop_footer
                  %s333 = sadd.s32 1, %s329
                $region53: #{model_forward.10} parent=46 // loop_footer_branch
                  %328 = sbr.rel target = $region49
                $region54: #{model_forward.10} parent=46 // loop_exit
                  _
              $region47: #{model_forward.10} parent=31 // pred_fallthru
                _
              // Predicated region
              $region55: #{model_forward.10} parent=31 // pred_check
                _
              $region56: #{model_forward.10} parent=31 // pred_check_branch
                %465 = sbr.rel target = $region58
              $region57: #{model_forward.10} parent=31 // pred_region
                _
              $region58: #{model_forward.10} parent=31 // pred_fallthru
                _
            $region32: #{model_forward.10} parent=27 // pred_fallthru
              _
            // Predicated region
            $region33: #{model_forward.10} parent=27 // pred_check
              _
            $region34: #{model_forward.10} parent=27 // pred_check_branch
              %187 = sbr.rel target = $region36
            $region35: #{model_forward.10} parent=27 // pred_region
              %s189 = ssub.s32 256, 1
              loop: start=0, step=1, limit=1
              $region37: #{model_forward.10} parent=35 // loop_pre_header
                _
              $region38: #{model_forward.10} parent=35 // loop_header
                %s191 = sphi 0, %s195
                %p192 = scmp.ge.s32.totalorder %s191, 1
                %s196 = sphi %s181, %s181
                %s197 = sphi %s175, %s175
              $region39: #{model_forward.10} parent=35 // loop_header_branch
                %194 = sbr.rel (%p192) target = $region43
              $region40: #{model_forward.10} parent=35 // loop_body
                %v198 = vld [vmem:[%s196] sm:%s189]
                %199 = vst [vmem:[%s197] sm:%s189] %v198
                %v200 = vld [vmem:[%s196 + $0x20] sm:%s189]
                %201 = vst [vmem:[%s197 + $0x8] sm:%s189] %v200
                %v202 = vld [vmem:[%s196 + $0x40] sm:%s189]
                %203 = vst [vmem:[%s197 + $0x10] sm:%s189] %v202
                %v204 = vld [vmem:[%s196 + $0x60] sm:%s189]
                %205 = vst [vmem:[%s197 + $0x18] sm:%s189] %v204
                %v206 = vld [vmem:[%s196 + $0x80] sm:%s189]
                %207 = vst [vmem:[%s197 + $0x20] sm:%s189] %v206
                %v208 = vld [vmem:[%s196 + $0xa0] sm:%s189]
                %209 = vst [vmem:[%s197 + $0x28] sm:%s189] %v208
                %v210 = vld [vmem:[%s196 + $0xc0] sm:%s189]
                %211 = vst [vmem:[%s197 + $0x30] sm:%s189] %v210
                %v212 = vld [vmem:[%s196 + $0xe0] sm:%s189]
                %213 = vst [vmem:[%s197 + $0x38] sm:%s189] %v212
                %v214 = vld [vmem:[%s196 + $0x100] sm:%s189]
                %215 = vst [vmem:[%s197 + $0x40] sm:%s189] %v214
                %v216 = vld [vmem:[%s196 + $0x120] sm:%s189]
                %217 = vst [vmem:[%s197 + $0x48] sm:%s189] %v216
                %v218 = vld [vmem:[%s196 + $0x140] sm:%s189]
                %219 = vst [vmem:[%s197 + $0x50] sm:%s189] %v218
                %v220 = vld [vmem:[%s196 + $0x160] sm:%s189]
                %221 = vst [vmem:[%s197 + $0x58] sm:%s189] %v220
                %v222 = vld [vmem:[%s196 + $0x180] sm:%s189]
                %223 = vst [vmem:[%s197 + $0x60] sm:%s189] %v222
                %v224 = vld [vmem:[%s196 + $0x1a0] sm:%s189]
                %225 = vst [vmem:[%s197 + $0x68] sm:%s189] %v224
                %v226 = vld [vmem:[%s196 + $0x1c0] sm:%s189]
                %227 = vst [vmem:[%s197 + $0x70] sm:%s189] %v226
                %v228 = vld [vmem:[%s196 + $0x1e0] sm:%s189]
                %229 = vst [vmem:[%s197 + $0x78] sm:%s189] %v228
                %v230 = vld [vmem:[%s196 + $0x200] sm:%s189]
                %231 = vst [vmem:[%s197 + $0x80] sm:%s189] %v230
                %v232 = vld [vmem:[%s196 + $0x220] sm:%s189]
                %233 = vst [vmem:[%s197 + $0x88] sm:%s189] %v232
                %v234 = vld [vmem:[%s196 + $0x240] sm:%s189]
                %235 = vst [vmem:[%s197 + $0x90] sm:%s189] %v234
                %v236 = vld [vmem:[%s196 + $0x260] sm:%s189]
                %237 = vst [vmem:[%s197 + $0x98] sm:%s189] %v236
                %v238 = vld [vmem:[%s196 + $0x280] sm:%s189]
                %239 = vst [vmem:[%s197 + $0xa0] sm:%s189] %v238
                %v240 = vld [vmem:[%s196 + $0x2a0] sm:%s189]
                %241 = vst [vmem:[%s197 + $0xa8] sm:%s189] %v240
                %v242 = vld [vmem:[%s196 + $0x2c0] sm:%s189]
                %243 = vst [vmem:[%s197 + $0xb0] sm:%s189] %v242
                %v244 = vld [vmem:[%s196 + $0x2e0] sm:%s189]
                %245 = vst [vmem:[%s197 + $0xb8] sm:%s189] %v244
                %v246 = vld [vmem:[%s196 + $0x300] sm:%s189]
                %247 = vst [vmem:[%s197 + $0xc0] sm:%s189] %v246
                %v248 = vld [vmem:[%s196 + $0x320] sm:%s189]
                %249 = vst [vmem:[%s197 + $0xc8] sm:%s189] %v248
                %v250 = vld [vmem:[%s196 + $0x340] sm:%s189]
                %251 = vst [vmem:[%s197 + $0xd0] sm:%s189] %v250
                %v252 = vld [vmem:[%s196 + $0x360] sm:%s189]
                %253 = vst [vmem:[%s197 + $0xd8] sm:%s189] %v252
                %v254 = vld [vmem:[%s196 + $0x380] sm:%s189]
                %255 = vst [vmem:[%s197 + $0xe0] sm:%s189] %v254
                %v256 = vld [vmem:[%s196 + $0x3a0] sm:%s189]
                %257 = vst [vmem:[%s197 + $0xe8] sm:%s189] %v256
                %v258 = vld [vmem:[%s196 + $0x3c0] sm:%s189]
                %259 = vst [vmem:[%s197 + $0xf0] sm:%s189] %v258
                %v260 = vld [vmem:[%s196 + $0x3e0] sm:%s189]
                %261 = vst [vmem:[%s197 + $0xf8] sm:%s189] %v260
                %v262 = vld [vmem:[%s196 + $0x400] sm:%s189]
                %263 = vst [vmem:[%s197 + $0x100] sm:%s189] %v262
                %v264 = vld [vmem:[%s196 + $0x420] sm:%s189]
                %265 = vst [vmem:[%s197 + $0x108] sm:%s189] %v264
                %v266 = vld [vmem:[%s196 + $0x440] sm:%s189]
                %267 = vst [vmem:[%s197 + $0x110] sm:%s189] %v266
                %v268 = vld [vmem:[%s196 + $0x460] sm:%s189]
                %269 = vst [vmem:[%s197 + $0x118] sm:%s189] %v268
                %v270 = vld [vmem:[%s196 + $0x480] sm:%s189]
                %271 = vst [vmem:[%s197 + $0x120] sm:%s189] %v270
                %v272 = vld [vmem:[%s196 + $0x4a0] sm:%s189]
                %273 = vst [vmem:[%s197 + $0x128] sm:%s189] %v272
                %v274 = vld [vmem:[%s196 + $0x4c0] sm:%s189]
                %275 = vst [vmem:[%s197 + $0x130] sm:%s189] %v274
                %v276 = vld [vmem:[%s196 + $0x4e0] sm:%s189]
                %277 = vst [vmem:[%s197 + $0x138] sm:%s189] %v276
                %v278 = vld [vmem:[%s196 + $0x500] sm:%s189]
                %279 = vst [vmem:[%s197 + $0x140] sm:%s189] %v278
                %v280 = vld [vmem:[%s196 + $0x520] sm:%s189]
                %281 = vst [vmem:[%s197 + $0x148] sm:%s189] %v280
                %v282 = vld [vmem:[%s196 + $0x540] sm:%s189]
                %283 = vst [vmem:[%s197 + $0x150] sm:%s189] %v282
                %v284 = vld [vmem:[%s196 + $0x560] sm:%s189]
                %285 = vst [vmem:[%s197 + $0x158] sm:%s189] %v284
                %v286 = vld [vmem:[%s196 + $0x580] sm:%s189]
                %287 = vst [vmem:[%s197 + $0x160] sm:%s189] %v286
                %v288 = vld [vmem:[%s196 + $0x5a0] sm:%s189]
                %289 = vst [vmem:[%s197 + $0x168] sm:%s189] %v288
                %v290 = vld [vmem:[%s196 + $0x5c0] sm:%s189]
                %291 = vst [vmem:[%s197 + $0x170] sm:%s189] %v290
                %v292 = vld [vmem:[%s196 + $0x5e0] sm:%s189]
                %293 = vst [vmem:[%s197 + $0x178] sm:%s189] %v292
                %v294 = vld [vmem:[%s196 + $0x600] sm:%s189]
                %295 = vst [vmem:[%s197 + $0x180] sm:%s189] %v294
                %v296 = vld [vmem:[%s196 + $0x620] sm:%s189]
                %297 = vst [vmem:[%s197 + $0x188] sm:%s189] %v296
                %v298 = vld [vmem:[%s196 + $0x640] sm:%s189]
                %299 = vst [vmem:[%s197 + $0x190] sm:%s189] %v298
                %v300 = vld [vmem:[%s196 + $0x660] sm:%s189]
                %301 = vst [vmem:[%s197 + $0x198] sm:%s189] %v300
                %v302 = vld [vmem:[%s196 + $0x680] sm:%s189]
                %303 = vst [vmem:[%s197 + $0x1a0] sm:%s189] %v302
                %v304 = vld [vmem:[%s196 + $0x6a0] sm:%s189]
                %305 = vst [vmem:[%s197 + $0x1a8] sm:%s189] %v304
                %v306 = vld [vmem:[%s196 + $0x6c0] sm:%s189]
                %307 = vst [vmem:[%s197 + $0x1b0] sm:%s189] %v306
                %v308 = vld [vmem:[%s196 + $0x6e0] sm:%s189]
                %309 = vst [vmem:[%s197 + $0x1b8] sm:%s189] %v308
                %v310 = vld [vmem:[%s196 + $0x700] sm:%s189]
                %311 = vst [vmem:[%s197 + $0x1c0] sm:%s189] %v310
                %v312 = vld [vmem:[%s196 + $0x720] sm:%s189]
                %313 = vst [vmem:[%s197 + $0x1c8] sm:%s189] %v312
                %v314 = vld [vmem:[%s196 + $0x740] sm:%s189]
                %315 = vst [vmem:[%s197 + $0x1d0] sm:%s189] %v314
                %v316 = vld [vmem:[%s196 + $0x760] sm:%s189]
                %317 = vst [vmem:[%s197 + $0x1d8] sm:%s189] %v316
                %v318 = vld [vmem:[%s196 + $0x780] sm:%s189]
                %319 = vst [vmem:[%s197 + $0x1e0] sm:%s189] %v318
                %v320 = vld [vmem:[%s196 + $0x7a0] sm:%s189]
                %321 = vst [vmem:[%s197 + $0x1e8] sm:%s189] %v320
                %v322 = vld [vmem:[%s196 + $0x7c0] sm:%s189]
                %323 = vst [vmem:[%s197 + $0x1f0] sm:%s189] %v322
                %v324 = vld [vmem:[%s196 + $0x7e0] sm:%s189]
                %325 = vst [vmem:[%s197 + $0x1f8] sm:%s189] %v324
              $region41: #{model_forward.10} parent=35 // loop_footer
                %s195 = sadd.s32 1, %s191
              $region42: #{model_forward.10} parent=35 // loop_footer_branch
                %190 = sbr.rel target = $region38
              $region43: #{model_forward.10} parent=35 // loop_exit
                _
            $region36: #{model_forward.10} parent=27 // pred_fallthru
              _
          $region28: #{model_forward.10} parent=23 // pred_fallthru
            _
          %466 = vnop
        $region24: #{model_forward.10} parent=19 // pred_fallthru
          _
        // Predicated region
        $region59: #{model_forward.10} parent=19 // pred_check
          %p467 = pneg %p104
        $region60: #{model_forward.10} parent=19 // pred_check_branch
          %469 = sbr.rel (%p467) target = $region62
        $region61: #{model_forward.10} parent=19 // pred_region
          %s470 = smul.u32 2, %s17
          %p471 = scmp.lt.s32.totalorder %s470, 7
          %s472 = scalar_select %p471, %s470, 7
          %s473 = scalar_lea.vmem %s2, %s472
          %s474 = smul.u32 2, %s17
        $region62: #{model_forward.10} parent=19 // pred_fallthru
          _
      $region20: #{model_forward.10} parent=5 // pred_fallthru
        _
      %p475 = scmp.le.s32.totalorder 1, %s9
      %p476 = scmp.lt.s32.totalorder %s9, 5
      %p477 = pnand %p475, %p476
      %p478 = pneg %p477
      // Predicated region
      $region63: #{model_forward.10} parent=5 // pred_check
        _
      $region64: #{model_forward.10} parent=5 // pred_check_branch
        %480 = sbr.rel (%p477) target = $region66
      $region65: #{model_forward.10} parent=5 // pred_region
        %s481 = ssub.s32 %s9, 1
        %s482 = sand.u32 %s71, 1
        %s483 = sand.u32 %s71, 1
        %s484 = smul.addr %s483, 512
        %s485 = scalar_lea.vmem [#allocation3], %s484
        // Predicated region
        $region67: #{model_forward.10} parent=65 // pred_check
          %p486 = pneg %p84
        $region68: #{model_forward.10} parent=65 // pred_check_branch
          %488 = sbr.rel (%p486) target = $region70
        $region69: #{model_forward.10} parent=65 // pred_region
          _
        $region70: #{model_forward.10} parent=65 // pred_fallthru
          _
        %s489 = smul.u32 4, %s21
        %p490 = scmp.lt.s32.totalorder %s19, 0
        %s491 = scalar_select %p490, %s19, 0
        %p492 = scmp.lt.s32.totalorder %s489, 3
        %s493 = scalar_select %p492, %s489, 3
        %s494 = smul.addr %s491, 4
        %s495 = sadd.s32 %s493, %s494
        %s496 = scalar_lea.vmem %s0, %s495
        %p497 = pneg %p56
        %p498 = pneg %p53
        %s499 = sand.u32 %s71, 1
        %s500 = sand.u32 %s71, 1
        %s501 = smul.addr %s500, 512
        %s502 = scalar_lea.vmem [#allocation3], %s501
        %p503 = pneg %p84
        %p504 = pneg %p81
        %s505 = smul.u32 2, %s20
        %p506 = scmp.lt.s32.totalorder %s505, 7
        %s507 = scalar_select %p506, %s505, 7
        %s508 = scalar_lea.vmem %s2, %s507
        %p509 = pneg %p110
        %p510 = pneg %p107
        %p511 = pneg %p138
        %p512 = pneg %p135
        %s513 = smul.u32 2, %s20
        %p514 = scmp.lt.s32.totalorder %s19, 0
        %s515 = scalar_select %p514, %s19, 0
        %p516 = scmp.lt.s32.totalorder %s513, 7
        %s517 = scalar_select %p516, %s513, 7
        %s518 = smul.addr %s515, 8
        %s519 = sadd.s32 %s517, %s518
        %s520 = scalar_lea.vmem %s3, %s519
        %s521 = smul.u32 4, %s21
        %p522 = scmp.lt.s32.totalorder %s19, 0
        %s523 = scalar_select %p522, %s19, 0
        %p524 = scmp.lt.s32.totalorder %s521, 3
        %s525 = scalar_select %p524, %s521, 3
        %s526 = smul.addr %s523, 4
        %s527 = sadd.s32 %s525, %s526
        %s528 = scalar_lea.vmem %s0, %s527
        %s529 = smul.u32 4, %s21
        %s530 = smul.u32 64, %s21
        %s531 = smul.u32 2, %s20
        %s532 = smul.u32 2, %s20
        %p533 = scmp.lt.s32.totalorder %s532, 7
        %s534 = scalar_select %p533, %s532, 7
        %s535 = scalar_lea.vmem %s2, %s534
        %s536 = smul.u32 2, %s20
        %s537 = smul.u32 2, %s20
        %p538 = scmp.lt.s32.totalorder %s19, 0
        %s539 = scalar_select %p538, %s19, 0
        %p540 = scmp.lt.s32.totalorder %s537, 7
        %s541 = scalar_select %p540, %s537, 7
        %s542 = smul.addr %s539, 8
        %s543 = sadd.s32 %s541, %s542
        %s544 = scalar_lea.vmem %s3, %s543
        %s545 = smul.u32 2, %s20
        %p546 = scmp.eq.s32.totalorder %s21, 0
        // Predicated region
        $region71: #{model_forward.10} parent=65 // pred_check
          %p547 = pneg %p546
        $region72: #{model_forward.10} parent=65 // pred_check_branch
          %549 = sbr.rel (%p547) target = $region74
        $region73: #{model_forward.10} parent=65 // pred_region
          %550 = vst [vmem:[#allocation2] sm:$0xf] 0.0
        $region74: #{model_forward.10} parent=65 // pred_fallthru
          _
        %v551 = vld [vmem:[#allocation2] sm:$0xf]
        %v552 = vld [vmem:[%s528] sm:$0xf]
        %v553 = vld [vmem:[%s485] sm:$0xff]
        %v554 = vld [vmem:[%s485 + $0x8] sm:$0xff]
        %v555 = vld [vmem:[%s485 + $0x10] sm:$0xff]
        %v556 = vld [vmem:[%s485 + $0x18] sm:$0xff]
        %v557 = vld [vmem:[%s485 + $0x20] sm:$0xff]
        %v558 = vld [vmem:[%s485 + $0x28] sm:$0xff]
        %v559 = vld [vmem:[%s485 + $0x30] sm:$0xff]
        %v560 = vld [vmem:[%s485 + $0x38] sm:$0xff]
        %v561 = vld [vmem:[%s485 + $0x40] sm:$0xff]
        %v562 = vld [vmem:[%s485 + $0x48] sm:$0xff]
        %v563 = vld [vmem:[%s485 + $0x50] sm:$0xff]
        %v564 = vld [vmem:[%s485 + $0x58] sm:$0xff]
        %v565 = vld [vmem:[%s485 + $0x60] sm:$0xff]
        %v566 = vld [vmem:[%s485 + $0x68] sm:$0xff]
        %v567 = vld [vmem:[%s485 + $0x70] sm:$0xff]
        %v568 = vld [vmem:[%s485 + $0x78] sm:$0xff]
        %v569 = vld [vmem:[%s485 + $0x80] sm:$0xff]
        %v570 = vld [vmem:[%s485 + $0x88] sm:$0xff]
        %v571 = vld [vmem:[%s485 + $0x90] sm:$0xff]
        %v572 = vld [vmem:[%s485 + $0x98] sm:$0xff]
        %v573 = vld [vmem:[%s485 + $0xa0] sm:$0xff]
        %v574 = vld [vmem:[%s485 + $0xa8] sm:$0xff]
        %v575 = vld [vmem:[%s485 + $0xb0] sm:$0xff]
        %v576 = vld [vmem:[%s485 + $0xb8] sm:$0xff]
        %v577 = vld [vmem:[%s485 + $0xc0] sm:$0xff]
        %v578 = vld [vmem:[%s485 + $0xc8] sm:$0xff]
        %v579 = vld [vmem:[%s485 + $0xd0] sm:$0xff]
        %v580 = vld [vmem:[%s485 + $0xd8] sm:$0xff]
        %v581 = vld [vmem:[%s485 + $0xe0] sm:$0xff]
        %v582 = vld [vmem:[%s485 + $0xe8] sm:$0xff]
        %v583 = vld [vmem:[%s485 + $0xf0] sm:$0xff]
        %v584 = vld [vmem:[%s485 + $0xf8] sm:$0xff]
        %v585 = vld [vmem:[%s485 + $0x100] sm:$0xff]
        %v586 = vld [vmem:[%s485 + $0x108] sm:$0xff]
        %v587 = vld [vmem:[%s485 + $0x110] sm:$0xff]
        %v588 = vld [vmem:[%s485 + $0x118] sm:$0xff]
        %v589 = vld [vmem:[%s485 + $0x120] sm:$0xff]
        %v590 = vld [vmem:[%s485 + $0x128] sm:$0xff]
        %v591 = vld [vmem:[%s485 + $0x130] sm:$0xff]
        %v592 = vld [vmem:[%s485 + $0x138] sm:$0xff]
        %v593 = vld [vmem:[%s485 + $0x140] sm:$0xff]
        %v594 = vld [vmem:[%s485 + $0x148] sm:$0xff]
        %v595 = vld [vmem:[%s485 + $0x150] sm:$0xff]
        %v596 = vld [vmem:[%s485 + $0x158] sm:$0xff]
        %v597 = vld [vmem:[%s485 + $0x160] sm:$0xff]
        %v598 = vld [vmem:[%s485 + $0x168] sm:$0xff]
        %v599 = vld [vmem:[%s485 + $0x170] sm:$0xff]
        %v600 = vld [vmem:[%s485 + $0x178] sm:$0xff]
        %v601 = vld [vmem:[%s485 + $0x180] sm:$0xff]
        %v602 = vld [vmem:[%s485 + $0x188] sm:$0xff]
        %v603 = vld [vmem:[%s485 + $0x190] sm:$0xff]
        %v604 = vld [vmem:[%s485 + $0x198] sm:$0xff]
        %v605 = vld [vmem:[%s485 + $0x1a0] sm:$0xff]
        %v606 = vld [vmem:[%s485 + $0x1a8] sm:$0xff]
        %v607 = vld [vmem:[%s485 + $0x1b0] sm:$0xff]
        %v608 = vld [vmem:[%s485 + $0x1b8] sm:$0xff]
        %v609 = vld [vmem:[%s485 + $0x1c0] sm:$0xff]
        %v610 = vld [vmem:[%s485 + $0x1c8] sm:$0xff]
        %v611 = vld [vmem:[%s485 + $0x1d0] sm:$0xff]
        %v612 = vld [vmem:[%s485 + $0x1d8] sm:$0xff]
        %v613 = vld [vmem:[%s485 + $0x1e0] sm:$0xff]
        %v614 = vld [vmem:[%s485 + $0x1e8] sm:$0xff]
        %v615 = vld [vmem:[%s485 + $0x1f0] sm:$0xff]
        %v616 = vld [vmem:[%s485 + $0x1f8] sm:$0xff]
        %v619 = vunpack.c.l.s4 1966171168
        %v620 = vunpack.c.0.s8 %v619
        %v621 = vlaneseq
        %v622 = vshrl.u32 %v621, 7
        %v623 = vsub.s32 %v620, %v622
        %v624 = vrot.slane %v552, %v623
        %v625 = vcombine.high %v624, %v624
        %v627 = vunpack.c.l.s4 1966171168
        %v628 = vunpack.c.0.s8 %v627
        %v629 = vlaneseq
        %v630 = vshrl.u32 %v629, 7
        %v631 = vsub.s32 %v628, %v630
        %v632 = vrot.slane %v624, %v631
        %v634 = vunpack.c.l.s4 1966171168
        %v635 = vunpack.c.0.s8 %v634
        %v636 = vlaneseq
        %v637 = vshrl.u32 %v636, 7
        %v638 = vsub.s32 %v635, %v637
        %v639 = vrot.slane %v625, %v638
        %v640 = vcombine.high %v632, %v632
        %v641 = vcombine.high %v639, %v639
        %v710 = vunpack.c.l.b16 %v553
        %v711 = vunpack.c.h.b16 %v553
        %v712 = vunpack.c.l.b16 %v554
        %v713 = vunpack.c.h.b16 %v554
        %v714 = vunpack.c.l.b16 %v555
        %v715 = vunpack.c.h.b16 %v555
        %v716 = vunpack.c.l.b16 %v556
        %v717 = vunpack.c.h.b16 %v556
        %v718 = vunpack.c.l.b16 %v557
        %v719 = vunpack.c.h.b16 %v557
        %v720 = vunpack.c.l.b16 %v558
        %v721 = vunpack.c.h.b16 %v558
        %v722 = vunpack.c.l.b16 %v559
        %v723 = vunpack.c.h.b16 %v559
        %v724 = vunpack.c.l.b16 %v560
        %v725 = vunpack.c.h.b16 %v560
        %v726 = vunpack.c.l.b16 %v561
        %v727 = vunpack.c.h.b16 %v561
        %v728 = vunpack.c.l.b16 %v562
        %v729 = vunpack.c.h.b16 %v562
        %v730 = vunpack.c.l.b16 %v563
        %v731 = vunpack.c.h.b16 %v563
        %v732 = vunpack.c.l.b16 %v564
        %v733 = vunpack.c.h.b16 %v564
        %v734 = vunpack.c.l.b16 %v565
        %v735 = vunpack.c.h.b16 %v565
        %v736 = vunpack.c.l.b16 %v566
        %v737 = vunpack.c.h.b16 %v566
        %v738 = vunpack.c.l.b16 %v567
        %v739 = vunpack.c.h.b16 %v567
        %v740 = vunpack.c.l.b16 %v568
        %v741 = vunpack.c.h.b16 %v568
        %v742 = vunpack.c.l.b16 %v569
        %v743 = vunpack.c.h.b16 %v569
        %v744 = vunpack.c.l.b16 %v570
        %v745 = vunpack.c.h.b16 %v570
        %v746 = vunpack.c.l.b16 %v571
        %v747 = vunpack.c.h.b16 %v571
        %v748 = vunpack.c.l.b16 %v572
        %v749 = vunpack.c.h.b16 %v572
        %v750 = vunpack.c.l.b16 %v573
        %v751 = vunpack.c.h.b16 %v573
        %v752 = vunpack.c.l.b16 %v574
        %v753 = vunpack.c.h.b16 %v574
        %v754 = vunpack.c.l.b16 %v575
        %v755 = vunpack.c.h.b16 %v575
        %v756 = vunpack.c.l.b16 %v576
        %v757 = vunpack.c.h.b16 %v576
        %v758 = vunpack.c.l.b16 %v577
        %v759 = vunpack.c.h.b16 %v577
        %v760 = vunpack.c.l.b16 %v578
        %v761 = vunpack.c.h.b16 %v578
        %v762 = vunpack.c.l.b16 %v579
        %v763 = vunpack.c.h.b16 %v579
        %v764 = vunpack.c.l.b16 %v580
        %v765 = vunpack.c.h.b16 %v580
        %v766 = vunpack.c.l.b16 %v581
        %v767 = vunpack.c.h.b16 %v581
        %v768 = vunpack.c.l.b16 %v582
        %v769 = vunpack.c.h.b16 %v582
        %v770 = vunpack.c.l.b16 %v583
        %v771 = vunpack.c.h.b16 %v583
        %v772 = vunpack.c.l.b16 %v584
        %v773 = vunpack.c.h.b16 %v584
        %v774 = vunpack.c.l.b16 %v585
        %v775 = vunpack.c.h.b16 %v585
        %v776 = vunpack.c.l.b16 %v586
        %v777 = vunpack.c.h.b16 %v586
        %v778 = vunpack.c.l.b16 %v587
        %v779 = vunpack.c.h.b16 %v587
        %v780 = vunpack.c.l.b16 %v588
        %v781 = vunpack.c.h.b16 %v588
        %v782 = vunpack.c.l.b16 %v589
        %v783 = vunpack.c.h.b16 %v589
        %v784 = vunpack.c.l.b16 %v590
        %v785 = vunpack.c.h.b16 %v590
        %v786 = vunpack.c.l.b16 %v591
        %v787 = vunpack.c.h.b16 %v591
        %v788 = vunpack.c.l.b16 %v592
        %v789 = vunpack.c.h.b16 %v592
        %v790 = vunpack.c.l.b16 %v593
        %v791 = vunpack.c.h.b16 %v593
        %v792 = vunpack.c.l.b16 %v594
        %v793 = vunpack.c.h.b16 %v594
        %v794 = vunpack.c.l.b16 %v595
        %v795 = vunpack.c.h.b16 %v595
        %v796 = vunpack.c.l.b16 %v596
        %v797 = vunpack.c.h.b16 %v596
        %v798 = vunpack.c.l.b16 %v597
        %v799 = vunpack.c.h.b16 %v597
        %v800 = vunpack.c.l.b16 %v598
        %v801 = vunpack.c.h.b16 %v598
        %v802 = vunpack.c.l.b16 %v599
        %v803 = vunpack.c.h.b16 %v599
        %v804 = vunpack.c.l.b16 %v600
        %v805 = vunpack.c.h.b16 %v600
        %v806 = vunpack.c.l.b16 %v601
        %v807 = vunpack.c.h.b16 %v601
        %v808 = vunpack.c.l.b16 %v602
        %v809 = vunpack.c.h.b16 %v602
        %v810 = vunpack.c.l.b16 %v603
        %v811 = vunpack.c.h.b16 %v603
        %v812 = vunpack.c.l.b16 %v604
        %v813 = vunpack.c.h.b16 %v604
        %v814 = vunpack.c.l.b16 %v605
        %v815 = vunpack.c.h.b16 %v605
        %v816 = vunpack.c.l.b16 %v606
        %v817 = vunpack.c.h.b16 %v606
        %v818 = vunpack.c.l.b16 %v607
        %v819 = vunpack.c.h.b16 %v607
        %v820 = vunpack.c.l.b16 %v608
        %v821 = vunpack.c.h.b16 %v608
        %v822 = vunpack.c.l.b16 %v609
        %v823 = vunpack.c.h.b16 %v609
        %v824 = vunpack.c.l.b16 %v610
        %v825 = vunpack.c.h.b16 %v610
        %v826 = vunpack.c.l.b16 %v611
        %v827 = vunpack.c.h.b16 %v611
        %v828 = vunpack.c.l.b16 %v612
        %v829 = vunpack.c.h.b16 %v612
        %v830 = vunpack.c.l.b16 %v613
        %v831 = vunpack.c.h.b16 %v613
        %v832 = vunpack.c.l.b16 %v614
        %v833 = vunpack.c.h.b16 %v614
        %v834 = vunpack.c.l.b16 %v615
        %v835 = vunpack.c.h.b16 %v615
        %v836 = vunpack.c.l.b16 %v616
        %v837 = vunpack.c.h.b16 %v616
        %v838 = vpack.c.b16 %v712, %v710
        %v839 = vpack.c.b16 %v713, %v711
        %v840 = vpack.c.b16 %v716, %v714
        %v841 = vpack.c.b16 %v717, %v715
        %v842 = vpack.c.b16 %v720, %v718
        %v843 = vpack.c.b16 %v721, %v719
        %v844 = vpack.c.b16 %v724, %v722
        %v845 = vpack.c.b16 %v725, %v723
        %v846 = vpack.c.b16 %v728, %v726
        %v847 = vpack.c.b16 %v729, %v727
        %v848 = vpack.c.b16 %v732, %v730
        %v849 = vpack.c.b16 %v733, %v731
        %v850 = vpack.c.b16 %v736, %v734
        %v851 = vpack.c.b16 %v737, %v735
        %v852 = vpack.c.b16 %v740, %v738
        %v853 = vpack.c.b16 %v741, %v739
        %v854 = vpack.c.b16 %v744, %v742
        %v855 = vpack.c.b16 %v745, %v743
        %v856 = vpack.c.b16 %v748, %v746
        %v857 = vpack.c.b16 %v749, %v747
        %v858 = vpack.c.b16 %v752, %v750
        %v859 = vpack.c.b16 %v753, %v751
        %v860 = vpack.c.b16 %v756, %v754
        %v861 = vpack.c.b16 %v757, %v755
        %v862 = vpack.c.b16 %v760, %v758
        %v863 = vpack.c.b16 %v761, %v759
        %v864 = vpack.c.b16 %v764, %v762
        %v865 = vpack.c.b16 %v765, %v763
        %v866 = vpack.c.b16 %v768, %v766
        %v867 = vpack.c.b16 %v769, %v767
        %v868 = vpack.c.b16 %v772, %v770
        %v869 = vpack.c.b16 %v773, %v771
        %v870 = vpack.c.b16 %v776, %v774
        %v871 = vpack.c.b16 %v777, %v775
        %v872 = vpack.c.b16 %v780, %v778
        %v873 = vpack.c.b16 %v781, %v779
        %v874 = vpack.c.b16 %v784, %v782
        %v875 = vpack.c.b16 %v785, %v783
        %v876 = vpack.c.b16 %v788, %v786
        %v877 = vpack.c.b16 %v789, %v787
        %v878 = vpack.c.b16 %v792, %v790
        %v879 = vpack.c.b16 %v793, %v791
        %v880 = vpack.c.b16 %v796, %v794
        %v881 = vpack.c.b16 %v797, %v795
        %v882 = vpack.c.b16 %v800, %v798
        %v883 = vpack.c.b16 %v801, %v799
        %v884 = vpack.c.b16 %v804, %v802
        %v885 = vpack.c.b16 %v805, %v803
        %v886 = vpack.c.b16 %v808, %v806
        %v887 = vpack.c.b16 %v809, %v807
        %v888 = vpack.c.b16 %v812, %v810
        %v889 = vpack.c.b16 %v813, %v811
        %v890 = vpack.c.b16 %v816, %v814
        %v891 = vpack.c.b16 %v817, %v815
        %v892 = vpack.c.b16 %v820, %v818
        %v893 = vpack.c.b16 %v821, %v819
        %v894 = vpack.c.b16 %v824, %v822
        %v895 = vpack.c.b16 %v825, %v823
        %v896 = vpack.c.b16 %v828, %v826
        %v897 = vpack.c.b16 %v829, %v827
        %v898 = vpack.c.b16 %v832, %v830
        %v899 = vpack.c.b16 %v833, %v831
        %v900 = vpack.c.b16 %v836, %v834
        %v901 = vpack.c.b16 %v837, %v835
        %966 = vmatprep.subr.bf16.mxu0 %v853
        %967 = vmatpush1.bf16.msra.mxu0 %v852
        %968 = vmatprep.subr.bf16.mxu0 %v851
        %969 = vmatpush1.bf16.msra.mxu0 %v850
        %970 = vmatprep.subr.bf16.mxu0 %v849
        %971 = vmatpush1.bf16.msra.mxu0 %v848
        %972 = vmatprep.subr.bf16.mxu0 %v847
        %973 = vmatpush1.bf16.msra.mxu0 %v846
        %974 = vmatprep.subr.bf16.mxu0 %v845
        %975 = vmatpush1.bf16.msra.mxu0 %v844
        %976 = vmatprep.subr.bf16.mxu0 %v843
        %977 = vmatpush1.bf16.msra.mxu0 %v842
        %978 = vmatprep.subr.bf16.mxu0 %v841
        %979 = vmatpush1.bf16.msra.mxu0 %v840
        %980 = vmatprep.subr.bf16.mxu0 %v839
        %981 = vmatpush1.bf16.msra.mxu0 %v838
        %982 = vmatprep.subr.bf16.mxu0 %v869
        %983 = vmatpush2.bf16.msra.mxu0 %v868
        %984 = vmatprep.subr.bf16.mxu0 %v867
        %985 = vmatpush2.bf16.msra.mxu0 %v866
        %986 = vmatprep.subr.bf16.mxu0 %v865
        %987 = vmatpush2.bf16.msra.mxu0 %v864
        %988 = vmatprep.subr.bf16.mxu0 %v863
        %989 = vmatpush2.bf16.msra.mxu0 %v862
        %990 = vmatprep.subr.bf16.mxu0 %v861
        %991 = vmatpush2.bf16.msra.mxu0 %v860
        %992 = vmatprep.subr.bf16.mxu0 %v859
        %993 = vmatpush2.bf16.msra.mxu0 %v858
        %994 = vmatprep.subr.bf16.mxu0 %v857
        %995 = vmatpush2.bf16.msra.mxu0 %v856
        %996 = vmatprep.subr.bf16.mxu0 %v855
        %997 = vmatpush2.bf16.msra.mxu0 %v854
        %998 = vmatprep.mubr.bf16.mxu0 %v639
        %999 = vmatmul.mubr.bf16.gmra.mxu0 %v632
        %v1000 = vpop.f32.mrf.mxu0
        %v1001 = vadd.f32 0.0, %v1000
        %v1002 = vpop.f32.mrf.mxu0
        %v1003 = vadd.f32 0.0, %v1002
        %v1004 = vpop.f32.mrf.mxu0
        %v1005 = vpop.f32.mrf.mxu0
        %1006 = vdwg.mxu0
        %1007 = vmatprep.subr.bf16.mxu0 %v885
        %1008 = vmatpush1.bf16.msra.mxu0 %v884
        %1009 = vmatprep.subr.bf16.mxu0 %v883
        %1010 = vmatpush1.bf16.msra.mxu0 %v882
        %1011 = vmatprep.subr.bf16.mxu0 %v881
        %1012 = vmatpush1.bf16.msra.mxu0 %v880
        %1013 = vmatprep.subr.bf16.mxu0 %v879
        %1014 = vmatpush1.bf16.msra.mxu0 %v878
        %1015 = vmatprep.subr.bf16.mxu0 %v877
        %1016 = vmatpush1.bf16.msra.mxu0 %v876
        %1017 = vmatprep.subr.bf16.mxu0 %v875
        %1018 = vmatpush1.bf16.msra.mxu0 %v874
        %1019 = vmatprep.subr.bf16.mxu0 %v873
        %1020 = vmatpush1.bf16.msra.mxu0 %v872
        %1021 = vmatprep.subr.bf16.mxu0 %v871
        %1022 = vmatpush1.bf16.msra.mxu0 %v870
        %1023 = vmatprep.subr.bf16.mxu0 %v901
        %1024 = vmatpush2.bf16.msra.mxu0 %v900
        %1025 = vmatprep.subr.bf16.mxu0 %v899
        %1026 = vmatpush2.bf16.msra.mxu0 %v898
        %1027 = vmatprep.subr.bf16.mxu0 %v897
        %1028 = vmatpush2.bf16.msra.mxu0 %v896
        %1029 = vmatprep.subr.bf16.mxu0 %v895
        %1030 = vmatpush2.bf16.msra.mxu0 %v894
        %1031 = vmatprep.subr.bf16.mxu0 %v893
        %1032 = vmatpush2.bf16.msra.mxu0 %v892
        %1033 = vmatprep.subr.bf16.mxu0 %v891
        %1034 = vmatpush2.bf16.msra.mxu0 %v890
        %1035 = vmatprep.subr.bf16.mxu0 %v889
        %1036 = vmatpush2.bf16.msra.mxu0 %v888
        %1037 = vmatprep.subr.bf16.mxu0 %v887
        %1038 = vmatpush2.bf16.msra.mxu0 %v886
        %1039 = vmatprep.mubr.bf16.mxu0 %v641
        %1040 = vmatmul.mubr.bf16.gmra.mxu0 %v640
        %v1041 = vpop.f32.mrf.mxu0
        %v1042 = vadd.f32 %v1001, %v1041
        %v1043 = vpop.f32.mrf.mxu0
        %v1044 = vadd.f32 %v1003, %v1043
        %v1045 = vpop.f32.mrf.mxu0
        %v1046 = vpop.f32.mrf.mxu0
        %1047 = vdwg.mxu0
        %v1050 = vcombine.low %v1042, %v1044
        %v1052 = vunpack.c.l.s4 1983009808
        %v1053 = vunpack.c.0.s8 %v1052
        %v1054 = vlaneseq
        %v1055 = vshrl.u32 %v1054, 7
        %v1056 = vsub.s32 %v1053, %v1055
        %v1057 = vrot.slane %v1050, %v1056
        %v1059 = vadd.f32 %v551, %v1057
        %1060 = vst [vmem:[#allocation2] sm:$0xf] %v1059
        // Predicated region
        $region75: #{model_forward.10} parent=65 // pred_check
          %p1061 = pneg %p546
        $region76: #{model_forward.10} parent=65 // pred_check_branch
          %1063 = sbr.rel (%p1061) target = $region78
        $region77: #{model_forward.10} parent=65 // pred_region
          %v1064 = vld [vmem:[#allocation2] sm:$0xf]
          %v1065 = vld [vmem:[%s535] sm:$0x3]
          %v1067 = vlaneseq
          %v1068 = vshrl.u32 %v1067, 7
          %v1069 = vsub.s32 0, %v1068
          %v1070 = vrot.slane %v1065, %v1069
          %v1071 = vlaneseq
          %v1072 = vshrl.u32 %v1071, 7
          %v1073 = vsub.s32 1, %v1072
          %v1074 = vrot.slane %v1065, %v1073
          %v1075 = vcombine.low %v1070, %v1074
          %v1077 = vunpack.c.l.s4 1983009808
          %v1078 = vunpack.c.0.s8 %v1077
          %v1079 = vlaneseq
          %v1080 = vshrl.u32 %v1079, 7
          %v1081 = vsub.s32 %v1078, %v1080
          %v1082 = vrot.slane %v1075, %v1081
          %v1084 = vadd.f32 %v1064, %v1082
          %v1085 = vmax.f32 %v1084, 0.0
          %v1088 = vunpack.c.l.s4 1983009808
          %v1089 = vunpack.c.0.s8 %v1088
          %v1090 = vlaneseq
          %v1091 = vshrl.u32 %v1090, 7
          %v1092 = vsub.s32 %v1089, %v1091
          %v1093 = vrot.slane %v1085, %v1092
          %v1094 = vcombine.high %v1093, %v1093
          %v1097 = vpack.c.bf16 %v1093, %v1093
          %v1098 = vpack.c.bf16 %v1094, %v1094
          %v1101 = vcombine.low %v1097, %v1098
          %v1103 = vunpack.c.l.s4 1966171168
          %v1104 = vunpack.c.0.s8 %v1103
          %v1105 = vlaneseq
          %v1106 = vshrl.u32 %v1105, 7
          %v1107 = vsub.s32 %v1104, %v1106
          %v1108 = vrot.slane %v1101, %v1107
          %v1110 = vunpack.c.l.s4 1966171168
          %v1111 = vunpack.c.0.s8 %v1110
          %v1112 = vlaneseq
          %v1113 = vshrl.u32 %v1112, 7
          %v1114 = vsub.s32 %v1111, %v1113
          %v1115 = vrot.slane %v1108, %v1114
          %1117 = vst [vmem:[%s544] sm:$0x3] %v1115
        $region78: #{model_forward.10} parent=65 // pred_fallthru
          _
        %s1118 = smul.u32 2, %s20
        %p1119 = scmp.lt.s32.totalorder %s19, 0
        %s1120 = scalar_select %p1119, %s19, 0
        %p1121 = scmp.lt.s32.totalorder %s1118, 7
        %s1122 = scalar_select %p1121, %s1118, 7
        %s1123 = smul.addr %s1120, 8
        %s1124 = sadd.s32 %s1122, %s1123
        %s1125 = scalar_lea.vmem %s3, %s1124
        // Predicated region
        $region79: #{model_forward.10} parent=65 // pred_check
          %p1126 = pneg %p135
        $region80: #{model_forward.10} parent=65 // pred_check_branch
          %1128 = sbr.rel (%p1126) target = $region82
        $region81: #{model_forward.10} parent=65 // pred_region
          %s1129 = smul.u32 2, %s20
        $region82: #{model_forward.10} parent=65 // pred_fallthru
          _
      $region66: #{model_forward.10} parent=5 // pred_fallthru
        _
      %p1130 = scmp.le.s32.totalorder 2, %s9
      // Predicated region
      $region83: #{model_forward.10} parent=5 // pred_check
        %p1131 = pneg %p1130
      $region84: #{model_forward.10} parent=5 // pred_check_branch
        %1133 = sbr.rel (%p1131) target = $region86
      $region85: #{model_forward.10} parent=5 // pred_region
        %s1134 = ssub.s32 %s9, 2
        // Predicated region
        $region87: #{model_forward.10} parent=85 // pred_check
          %p1135 = pneg %p141
        $region88: #{model_forward.10} parent=85 // pred_check_branch
          %1137 = sbr.rel (%p1135) target = $region90
        $region89: #{model_forward.10} parent=85 // pred_region
          %s1138 = smul.u32 2, %s23
          %p1139 = scmp.lt.s32.totalorder %s22, 0
          %s1140 = scalar_select %p1139, %s22, 0
          %p1141 = scmp.lt.s32.totalorder %s1138, 7
          %s1142 = scalar_select %p1141, %s1138, 7
          %s1143 = smul.addr %s1140, 8
          %s1144 = sadd.s32 %s1142, %s1143
          %s1145 = scalar_lea.vmem %s3, %s1144
        $region90: #{model_forward.10} parent=85 // pred_fallthru
          _
      $region86: #{model_forward.10} parent=5 // pred_fallthru
        _
    $region6: #{model_forward.10} parent=1 // loop_footer
      %s13 = sadd.s32 1, %s9
    $region7: #{model_forward.10} parent=1 // loop_footer_branch
      %8 = sbr.rel target = $region3
    $region8: #{model_forward.10} parent=1 // loop_exit
      _

// kernel: model_forward.9
$region0: #{model_forward.9}
  #allocation0 [shape = 'u32[]', space=smem, size = 0x4, offset = 0x4, fixed_abs, tag = 'smem constant byte address 0x4 - core index']
  #allocation1 [shape = 'u32[144,128]{1,0:T(1,128)}', space=vmem, size = 0x12000, scoped, tag = 'internal scratch']
  %s0 = inlined_call_operand.vmem [shape: bf16[36,8,128], index: 0, kind: input, shape index: {}]
  %s1 = inlined_call_operand.vmem [shape: bf16[36,128,128], index: 1, kind: input, shape index: {}]
  %s2 = inlined_call_operand.vmem [shape: f32[1,128], index: 2, kind: input, shape index: {}]
  %s3 = inlined_call_operand.vmem [shape: bf16[8,128], index: 3, kind: output, shape index: {}]
  %s4 = sld [smem:[#allocation0]]
  $region22: #{model_forward.9} parent=0
    _
  %s6 = ssub.s32 1, %s4
  %s7 = scalar_select 0, %s6, %s4
  // Predicated region
  $region2: #{model_forward.9} parent=0 // pred_check
    _
  $region3: #{model_forward.9} parent=0 // pred_check_branch
    %9 = sbr.rel (0) target = $region5
  $region4: #{model_forward.9} parent=0 // pred_region
    _
  $region5: #{model_forward.9} parent=0 // pred_fallthru
    _
  // Predicated region
  $region6: #{model_forward.9} parent=0 // pred_check
    _
  $region7: #{model_forward.9} parent=0 // pred_check_branch
    %11 = sbr.rel (0) target = $region9
  $region8: #{model_forward.9} parent=0 // pred_region
    _
  $region9: #{model_forward.9} parent=0 // pred_fallthru
    _
  // Predicated region
  $region10: #{model_forward.9} parent=0 // pred_check
    _
  $region11: #{model_forward.9} parent=0 // pred_check_branch
    %13 = sbr.rel (0) target = $region13
  $region12: #{model_forward.9} parent=0 // pred_region
    _
  $region13: #{model_forward.9} parent=0 // pred_fallthru
    _
  %v15 = vld [vmem:[%s0] sm:$0xf]
  %v16 = vld [vmem:[%s1] sm:$0xf]
  %v17 = vld [vmem:[%s1 + $0x4] sm:$0xf]
  %v18 = vld [vmem:[%s1 + $0x8] sm:$0xf]
  %v19 = vld [vmem:[%s1 + $0xc] sm:$0xf]
  %v20 = vld [vmem:[%s1 + $0x10] sm:$0xf]
  %v21 = vld [vmem:[%s1 + $0x14] sm:$0xf]
  %v22 = vld [vmem:[%s1 + $0x18] sm:$0xf]
  %v23 = vld [vmem:[%s1 + $0x1c] sm:$0xf]
  %v24 = vld [vmem:[%s1 + $0x20] sm:$0xf]
  %v25 = vld [vmem:[%s1 + $0x24] sm:$0xf]
  %v26 = vld [vmem:[%s1 + $0x28] sm:$0xf]
  %v27 = vld [vmem:[%s1 + $0x2c] sm:$0xf]
  %v28 = vld [vmem:[%s1 + $0x30] sm:$0xf]
  %v29 = vld [vmem:[%s1 + $0x34] sm:$0xf]
  %v30 = vld [vmem:[%s1 + $0x38] sm:$0xf]
  %v31 = vld [vmem:[%s1 + $0x3c] sm:$0xf]
  %s32 = scalar_lea.vmem %s0, 4
  %v33 = vld [vmem:[%s32] sm:$0xf]
  %s34 = scalar_lea.vmem %s1, 64
  %v35 = vld [vmem:[%s34] sm:$0xf]
  %v36 = vld [vmem:[%s34 + $0x4] sm:$0xf]
  %v37 = vld [vmem:[%s34 + $0x8] sm:$0xf]
  %v38 = vld [vmem:[%s34 + $0xc] sm:$0xf]
  %v39 = vld [vmem:[%s34 + $0x10] sm:$0xf]
  %v40 = vld [vmem:[%s34 + $0x14] sm:$0xf]
  %v41 = vld [vmem:[%s34 + $0x18] sm:$0xf]
  %v42 = vld [vmem:[%s34 + $0x1c] sm:$0xf]
  %v43 = vld [vmem:[%s34 + $0x20] sm:$0xf]
  %v44 = vld [vmem:[%s34 + $0x24] sm:$0xf]
  %v45 = vld [vmem:[%s34 + $0x28] sm:$0xf]
  %v46 = vld [vmem:[%s34 + $0x2c] sm:$0xf]
  %v47 = vld [vmem:[%s34 + $0x30] sm:$0xf]
  %v48 = vld [vmem:[%s34 + $0x34] sm:$0xf]
  %v49 = vld [vmem:[%s34 + $0x38] sm:$0xf]
  %v50 = vld [vmem:[%s34 + $0x3c] sm:$0xf]
  %v67 = vunpack.c.l.b16 %v35
  %v68 = vunpack.c.l.b16 %v36
  %v69 = vunpack.c.l.b16 %v37
  %v70 = vunpack.c.l.b16 %v38
  %v71 = vunpack.c.l.b16 %v39
  %v72 = vunpack.c.l.b16 %v40
  %v73 = vunpack.c.l.b16 %v41
  %v74 = vunpack.c.l.b16 %v42
  %v75 = vunpack.c.l.b16 %v43
  %v76 = vunpack.c.l.b16 %v44
  %v77 = vunpack.c.l.b16 %v45
  %v78 = vunpack.c.l.b16 %v46
  %v79 = vunpack.c.l.b16 %v47
  %v80 = vunpack.c.l.b16 %v48
  %v81 = vunpack.c.l.b16 %v49
  %v82 = vunpack.c.l.b16 %v50
  %v83 = vpack.c.b16 %v68, %v67
  %v84 = vpack.c.b16 %v70, %v69
  %v85 = vpack.c.b16 %v72, %v71
  %v86 = vpack.c.b16 %v74, %v73
  %v87 = vpack.c.b16 %v76, %v75
  %v88 = vpack.c.b16 %v78, %v77
  %v89 = vpack.c.b16 %v80, %v79
  %v90 = vpack.c.b16 %v82, %v81
  %99 = vmatprep.subr.bf16.mxu0 0
  %100 = vmatpush1.bf16.msra.mxu0 %v90
  %101 = vmatprep.subr.bf16.mxu0 0
  %102 = vmatpush1.bf16.msra.mxu0 %v89
  %103 = vmatprep.subr.bf16.mxu0 0
  %104 = vmatpush1.bf16.msra.mxu0 %v88
  %105 = vmatprep.subr.bf16.mxu0 0
  %106 = vmatpush1.bf16.msra.mxu0 %v87
  %107 = vmatprep.subr.bf16.mxu0 0
  %108 = vmatpush1.bf16.msra.mxu0 %v86
  %109 = vmatprep.subr.bf16.mxu0 0
  %110 = vmatpush1.bf16.msra.mxu0 %v85
  %111 = vmatprep.subr.bf16.mxu0 0
  %112 = vmatpush1.bf16.msra.mxu0 %v84
  %113 = vmatprep.subr.bf16.mxu0 0
  %114 = vmatpush1.bf16.msra.mxu0 %v83
  %115 = vmatprep.subr.bf16.mxu0 0
  %116 = vmatpush2.bf16.msra.mxu0 0
  %117 = vmatprep.subr.bf16.mxu0 0
  %118 = vmatpush2.bf16.msra.mxu0 0
  %119 = vmatprep.subr.bf16.mxu0 0
  %120 = vmatpush2.bf16.msra.mxu0 0
  %121 = vmatprep.subr.bf16.mxu0 0
  %122 = vmatpush2.bf16.msra.mxu0 0
  %123 = vmatprep.subr.bf16.mxu0 0
  %124 = vmatpush2.bf16.msra.mxu0 0
  %125 = vmatprep.subr.bf16.mxu0 0
  %126 = vmatpush2.bf16.msra.mxu0 0
  %127 = vmatprep.subr.bf16.mxu0 0
  %128 = vmatpush2.bf16.msra.mxu0 0
  %129 = vmatprep.subr.bf16.mxu0 0
  %130 = vmatpush2.bf16.msra.mxu0 0
  %131 = vmatprep.mubr.bf16.mxu0 0
  %132 = vmatmul.mubr.bf16.gmra.mxu0 %v33
  %v133 = vpop.f32.mrf.mxu0
  %v134 = vadd.f32 0.0, %v133
  %v135 = vpop.f32.mrf.mxu0
  %v136 = vpop.f32.mrf.mxu0
  %v137 = vpop.f32.mrf.mxu0
  %138 = vdwg.mxu0
  %v155 = vunpack.c.l.b16 %v16
  %v156 = vunpack.c.l.b16 %v17
  %v157 = vunpack.c.l.b16 %v18
  %v158 = vunpack.c.l.b16 %v19
  %v159 = vunpack.c.l.b16 %v20
  %v160 = vunpack.c.l.b16 %v21
  %v161 = vunpack.c.l.b16 %v22
  %v162 = vunpack.c.l.b16 %v23
  %v163 = vunpack.c.l.b16 %v24
  %v164 = vunpack.c.l.b16 %v25
  %v165 = vunpack.c.l.b16 %v26
  %v166 = vunpack.c.l.b16 %v27
  %v167 = vunpack.c.l.b16 %v28
  %v168 = vunpack.c.l.b16 %v29
  %v169 = vunpack.c.l.b16 %v30
  %v170 = vunpack.c.l.b16 %v31
  %v171 = vpack.c.b16 %v156, %v155
  %v172 = vpack.c.b16 %v158, %v157
  %v173 = vpack.c.b16 %v160, %v159
  %v174 = vpack.c.b16 %v162, %v161
  %v175 = vpack.c.b16 %v164, %v163
  %v176 = vpack.c.b16 %v166, %v165
  %v177 = vpack.c.b16 %v168, %v167
  %v178 = vpack.c.b16 %v170, %v169
  %187 = vmatprep.subr.bf16.mxu0 0
  %188 = vmatpush1.bf16.msra.mxu0 %v178
  %189 = vmatprep.subr.bf16.mxu0 0
  %190 = vmatpush1.bf16.msra.mxu0 %v177
  %191 = vmatprep.subr.bf16.mxu0 0
  %192 = vmatpush1.bf16.msra.mxu0 %v176
  %193 = vmatprep.subr.bf16.mxu0 0
  %194 = vmatpush1.bf16.msra.mxu0 %v175
  %195 = vmatprep.subr.bf16.mxu0 0
  %196 = vmatpush1.bf16.msra.mxu0 %v174
  %197 = vmatprep.subr.bf16.mxu0 0
  %198 = vmatpush1.bf16.msra.mxu0 %v173
  %199 = vmatprep.subr.bf16.mxu0 0
  %200 = vmatpush1.bf16.msra.mxu0 %v172
  %201 = vmatprep.subr.bf16.mxu0 0
  %202 = vmatpush1.bf16.msra.mxu0 %v171
  %203 = vmatprep.subr.bf16.mxu0 0
  %204 = vmatpush2.bf16.msra.mxu0 0
  %205 = vmatprep.subr.bf16.mxu0 0
  %206 = vmatpush2.bf16.msra.mxu0 0
  %207 = vmatprep.subr.bf16.mxu0 0
  %208 = vmatpush2.bf16.msra.mxu0 0
  %209 = vmatprep.subr.bf16.mxu0 0
  %210 = vmatpush2.bf16.msra.mxu0 0
  %211 = vmatprep.subr.bf16.mxu0 0
  %212 = vmatpush2.bf16.msra.mxu0 0
  %213 = vmatprep.subr.bf16.mxu0 0
  %214 = vmatpush2.bf16.msra.mxu0 0
  %215 = vmatprep.subr.bf16.mxu0 0
  %216 = vmatpush2.bf16.msra.mxu0 0
  %217 = vmatprep.subr.bf16.mxu0 0
  %218 = vmatpush2.bf16.msra.mxu0 0
  %219 = vmatprep.mubr.bf16.mxu0 0
  %220 = vmatmul.mubr.bf16.gmra.mxu0 %v15
  %v221 = vpop.f32.mrf.mxu0
  %v222 = vadd.f32 %v134, %v221
  %v223 = vpop.f32.mrf.mxu0
  %v224 = vpop.f32.mrf.mxu0
  %v225 = vpop.f32.mrf.mxu0
  %226 = vdwg.mxu0
  %s227 = scalar_lea.vmem %s0, 8
  %v228 = vld [vmem:[%s227] sm:$0xf]
  %s229 = scalar_lea.vmem %s1, 128
  %v230 = vld [vmem:[%s229] sm:$0xf]
  %v231 = vld [vmem:[%s229 + $0x4] sm:$0xf]
  %v232 = vld [vmem:[%s229 + $0x8] sm:$0xf]
  %v233 = vld [vmem:[%s229 + $0xc] sm:$0xf]
  %v234 = vld [vmem:[%s229 + $0x10] sm:$0xf]
  %v235 = vld [vmem:[%s229 + $0x14] sm:$0xf]
  %v236 = vld [vmem:[%s229 + $0x18] sm:$0xf]
  %v237 = vld [vmem:[%s229 + $0x1c] sm:$0xf]
  %v238 = vld [vmem:[%s229 + $0x20] sm:$0xf]
  %v239 = vld [vmem:[%s229 + $0x24] sm:$0xf]
  %v240 = vld [vmem:[%s229 + $0x28] sm:$0xf]
  %v241 = vld [vmem:[%s229 + $0x2c] sm:$0xf]
  %v242 = vld [vmem:[%s229 + $0x30] sm:$0xf]
  %v243 = vld [vmem:[%s229 + $0x34] sm:$0xf]
  %v244 = vld [vmem:[%s229 + $0x38] sm:$0xf]
  %v245 = vld [vmem:[%s229 + $0x3c] sm:$0xf]
  %v262 = vunpack.c.l.b16 %v230
  %v263 = vunpack.c.l.b16 %v231
  %v264 = vunpack.c.l.b16 %v232
  %v265 = vunpack.c.l.b16 %v233
  %v266 = vunpack.c.l.b16 %v234
  %v267 = vunpack.c.l.b16 %v235
  %v268 = vunpack.c.l.b16 %v236
  %v269 = vunpack.c.l.b16 %v237
  %v270 = vunpack.c.l.b16 %v238
  %v271 = vunpack.c.l.b16 %v239
  %v272 = vunpack.c.l.b16 %v240
  %v273 = vunpack.c.l.b16 %v241
  %v274 = vunpack.c.l.b16 %v242
  %v275 = vunpack.c.l.b16 %v243
  %v276 = vunpack.c.l.b16 %v244
  %v277 = vunpack.c.l.b16 %v245
  %v278 = vpack.c.b16 %v263, %v262
  %v279 = vpack.c.b16 %v265, %v264
  %v280 = vpack.c.b16 %v267, %v266
  %v281 = vpack.c.b16 %v269, %v268
  %v282 = vpack.c.b16 %v271, %v270
  %v283 = vpack.c.b16 %v273, %v272
  %v284 = vpack.c.b16 %v275, %v274
  %v285 = vpack.c.b16 %v277, %v276
  %294 = vmatprep.subr.bf16.mxu0 0
  %295 = vmatpush1.bf16.msra.mxu0 %v285
  %296 = vmatprep.subr.bf16.mxu0 0
  %297 = vmatpush1.bf16.msra.mxu0 %v284
  %298 = vmatprep.subr.bf16.mxu0 0
  %299 = vmatpush1.bf16.msra.mxu0 %v283
  %300 = vmatprep.subr.bf16.mxu0 0
  %301 = vmatpush1.bf16.msra.mxu0 %v282
  %302 = vmatprep.subr.bf16.mxu0 0
  %303 = vmatpush1.bf16.msra.mxu0 %v281
  %304 = vmatprep.subr.bf16.mxu0 0
  %305 = vmatpush1.bf16.msra.mxu0 %v280
  %306 = vmatprep.subr.bf16.mxu0 0
  %307 = vmatpush1.bf16.msra.mxu0 %v279
  %308 = vmatprep.subr.bf16.mxu0 0
  %309 = vmatpush1.bf16.msra.mxu0 %v278
  %310 = vmatprep.subr.bf16.mxu0 0
  %311 = vmatpush2.bf16.msra.mxu0 0
  %312 = vmatprep.subr.bf16.mxu0 0
  %313 = vmatpush2.bf16.msra.mxu0 0
  %314 = vmatprep.subr.bf16.mxu0 0
  %315 = vmatpush2.bf16.msra.mxu0 0
  %316 = vmatprep.subr.bf16.mxu0 0
  %317 = vmatpush2.bf16.msra.mxu0 0
  %318 = vmatprep.subr.bf16.mxu0 0
  %319 = vmatpush2.bf16.msra.mxu0 0
  %320 = vmatprep.subr.bf16.mxu0 0
  %321 = vmatpush2.bf16.msra.mxu0 0
  %322 = vmatprep.subr.bf16.mxu0 0
  %323 = vmatpush2.bf16.msra.mxu0 0
  %324 = vmatprep.subr.bf16.mxu0 0
  %325 = vmatpush2.bf16.msra.mxu0 0
  %326 = vmatprep.mubr.bf16.mxu0 0
  %327 = vmatmul.mubr.bf16.gmra.mxu0 %v228
  %v328 = vpop.f32.mrf.mxu0
  %v329 = vadd.f32 0.0, %v328
  %v330 = vpop.f32.mrf.mxu0
  %v331 = vpop.f32.mrf.mxu0
  %v332 = vpop.f32.mrf.mxu0
  %333 = vdwg.mxu0
  %v334 = vadd.f32 %v222, %v329
  %s335 = scalar_lea.vmem %s0, 12
  %v336 = vld [vmem:[%s335] sm:$0xf]
  %s337 = scalar_lea.vmem %s1, 192
  %v338 = vld [vmem:[%s337] sm:$0xf]
  %v339 = vld [vmem:[%s337 + $0x4] sm:$0xf]
  %v340 = vld [vmem:[%s337 + $0x8] sm:$0xf]
  %v341 = vld [vmem:[%s337 + $0xc] sm:$0xf]
  %v342 = vld [vmem:[%s337 + $0x10] sm:$0xf]
  %v343 = vld [vmem:[%s337 + $0x14] sm:$0xf]
  %v344 = vld [vmem:[%s337 + $0x18] sm:$0xf]
  %v345 = vld [vmem:[%s337 + $0x1c] sm:$0xf]
  %v346 = vld [vmem:[%s337 + $0x20] sm:$0xf]
  %v347 = vld [vmem:[%s337 + $0x24] sm:$0xf]
  %v348 = vld [vmem:[%s337 + $0x28] sm:$0xf]
  %v349 = vld [vmem:[%s337 + $0x2c] sm:$0xf]
  %v350 = vld [vmem:[%s337 + $0x30] sm:$0xf]
  %v351 = vld [vmem:[%s337 + $0x34] sm:$0xf]
  %v352 = vld [vmem:[%s337 + $0x38] sm:$0xf]
  %v353 = vld [vmem:[%s337 + $0x3c] sm:$0xf]
  %v370 = vunpack.c.l.b16 %v338
  %v371 = vunpack.c.l.b16 %v339
  %v372 = vunpack.c.l.b16 %v340
  %v373 = vunpack.c.l.b16 %v341
  %v374 = vunpack.c.l.b16 %v342
  %v375 = vunpack.c.l.b16 %v343
  %v376 = vunpack.c.l.b16 %v344
  %v377 = vunpack.c.l.b16 %v345
  %v378 = vunpack.c.l.b16 %v346
  %v379 = vunpack.c.l.b16 %v347
  %v380 = vunpack.c.l.b16 %v348
  %v381 = vunpack.c.l.b16 %v349
  %v382 = vunpack.c.l.b16 %v350
  %v383 = vunpack.c.l.b16 %v351
  %v384 = vunpack.c.l.b16 %v352
  %v385 = vunpack.c.l.b16 %v353
  %v386 = vpack.c.b16 %v371, %v370
  %v387 = vpack.c.b16 %v373, %v372
  %v388 = vpack.c.b16 %v375, %v374
  %v389 = vpack.c.b16 %v377, %v376
  %v390 = vpack.c.b16 %v379, %v378
  %v391 = vpack.c.b16 %v381, %v380
  %v392 = vpack.c.b16 %v383, %v382
  %v393 = vpack.c.b16 %v385, %v384
  %402 = vmatprep.subr.bf16.mxu0 0
  %403 = vmatpush1.bf16.msra.mxu0 %v393
  %404 = vmatprep.subr.bf16.mxu0 0
  %405 = vmatpush1.bf16.msra.mxu0 %v392
  %406 = vmatprep.subr.bf16.mxu0 0
  %407 = vmatpush1.bf16.msra.mxu0 %v391
  %408 = vmatprep.subr.bf16.mxu0 0
  %409 = vmatpush1.bf16.msra.mxu0 %v390
  %410 = vmatprep.subr.bf16.mxu0 0
  %411 = vmatpush1.bf16.msra.mxu0 %v389
  %412 = vmatprep.subr.bf16.mxu0 0
  %413 = vmatpush1.bf16.msra.mxu0 %v388
  %414 = vmatprep.subr.bf16.mxu0 0
  %415 = vmatpush1.bf16.msra.mxu0 %v387
  %416 = vmatprep.subr.bf16.mxu0 0
  %417 = vmatpush1.bf16.msra.mxu0 %v386
  %418 = vmatprep.subr.bf16.mxu0 0
  %419 = vmatpush2.bf16.msra.mxu0 0
  %420 = vmatprep.subr.bf16.mxu0 0
  %421 = vmatpush2.bf16.msra.mxu0 0
  %422 = vmatprep.subr.bf16.mxu0 0
  %423 = vmatpush2.bf16.msra.mxu0 0
  %424 = vmatprep.subr.bf16.mxu0 0
  %425 = vmatpush2.bf16.msra.mxu0 0
  %426 = vmatprep.subr.bf16.mxu0 0
  %427 = vmatpush2.bf16.msra.mxu0 0
  %428 = vmatprep.subr.bf16.mxu0 0
  %429 = vmatpush2.bf16.msra.mxu0 0
  %430 = vmatprep.subr.bf16.mxu0 0
  %431 = vmatpush2.bf16.msra.mxu0 0
  %432 = vmatprep.subr.bf16.mxu0 0
  %433 = vmatpush2.bf16.msra.mxu0 0
  %434 = vmatprep.mubr.bf16.mxu0 0
  %435 = vmatmul.mubr.bf16.gmra.mxu0 %v336
  %v436 = vpop.f32.mrf.mxu0
  %v437 = vadd.f32 0.0, %v436
  %v438 = vpop.f32.mrf.mxu0
  %v439 = vpop.f32.mrf.mxu0
  %v440 = vpop.f32.mrf.mxu0
  %441 = vdwg.mxu0
  %v442 = vadd.f32 %v334, %v437
  %s443 = scalar_lea.vmem %s0, 16
  %v444 = vld [vmem:[%s443] sm:$0xf]
  %s445 = scalar_lea.vmem %s1, 256
  %v446 = vld [vmem:[%s445] sm:$0xf]
  %v447 = vld [vmem:[%s445 + $0x4] sm:$0xf]
  %v448 = vld [vmem:[%s445 + $0x8] sm:$0xf]
  %v449 = vld [vmem:[%s445 + $0xc] sm:$0xf]
  %v450 = vld [vmem:[%s445 + $0x10] sm:$0xf]
  %v451 = vld [vmem:[%s445 + $0x14] sm:$0xf]
  %v452 = vld [vmem:[%s445 + $0x18] sm:$0xf]
  %v453 = vld [vmem:[%s445 + $0x1c] sm:$0xf]
  %v454 = vld [vmem:[%s445 + $0x20] sm:$0xf]
  %v455 = vld [vmem:[%s445 + $0x24] sm:$0xf]
  %v456 = vld [vmem:[%s445 + $0x28] sm:$0xf]
  %v457 = vld [vmem:[%s445 + $0x2c] sm:$0xf]
  %v458 = vld [vmem:[%s445 + $0x30] sm:$0xf]
  %v459 = vld [vmem:[%s445 + $0x34] sm:$0xf]
  %v460 = vld [vmem:[%s445 + $0x38] sm:$0xf]
  %v461 = vld [vmem:[%s445 + $0x3c] sm:$0xf]
  %v478 = vunpack.c.l.b16 %v446
  %v479 = vunpack.c.l.b16 %v447
  %v480 = vunpack.c.l.b16 %v448
  %v481 = vunpack.c.l.b16 %v449
  %v482 = vunpack.c.l.b16 %v450
  %v483 = vunpack.c.l.b16 %v451
  %v484 = vunpack.c.l.b16 %v452
  %v485 = vunpack.c.l.b16 %v453
  %v486 = vunpack.c.l.b16 %v454
  %v487 = vunpack.c.l.b16 %v455
  %v488 = vunpack.c.l.b16 %v456
  %v489 = vunpack.c.l.b16 %v457
  %v490 = vunpack.c.l.b16 %v458
  %v491 = vunpack.c.l.b16 %v459
  %v492 = vunpack.c.l.b16 %v460
  %v493 = vunpack.c.l.b16 %v461
  %v494 = vpack.c.b16 %v479, %v478
  %v495 = vpack.c.b16 %v481, %v480
  %v496 = vpack.c.b16 %v483, %v482
  %v497 = vpack.c.b16 %v485, %v484
  %v498 = vpack.c.b16 %v487, %v486
  %v499 = vpack.c.b16 %v489, %v488
  %v500 = vpack.c.b16 %v491, %v490
  %v501 = vpack.c.b16 %v493, %v492
  %510 = vmatprep.subr.bf16.mxu0 0
  %511 = vmatpush1.bf16.msra.mxu0 %v501
  %512 = vmatprep.subr.bf16.mxu0 0
  %513 = vmatpush1.bf16.msra.mxu0 %v500
  %514 = vmatprep.subr.bf16.mxu0 0
  %515 = vmatpush1.bf16.msra.mxu0 %v499
  %516 = vmatprep.subr.bf16.mxu0 0
  %517 = vmatpush1.bf16.msra.mxu0 %v498
  %518 = vmatprep.subr.bf16.mxu0 0
  %519 = vmatpush1.bf16.msra.mxu0 %v497
  %520 = vmatprep.subr.bf16.mxu0 0
  %521 = vmatpush1.bf16.msra.mxu0 %v496
  %522 = vmatprep.subr.bf16.mxu0 0
  %523 = vmatpush1.bf16.msra.mxu0 %v495
  %524 = vmatprep.subr.bf16.mxu0 0
  %525 = vmatpush1.bf16.msra.mxu0 %v494
  %526 = vmatprep.subr.bf16.mxu0 0
  %527 = vmatpush2.bf16.msra.mxu0 0
  %528 = vmatprep.subr.bf16.mxu0 0
  %529 = vmatpush2.bf16.msra.mxu0 0
  %530 = vmatprep.subr.bf16.mxu0 0
  %531 = vmatpush2.bf16.msra.mxu0 0
  %532 = vmatprep.subr.bf16.mxu0 0
  %533 = vmatpush2.bf16.msra.mxu0 0
  %534 = vmatprep.subr.bf16.mxu0 0
  %535 = vmatpush2.bf16.msra.mxu0 0
  %536 = vmatprep.subr.bf16.mxu0 0
  %537 = vmatpush2.bf16.msra.mxu0 0
  %538 = vmatprep.subr.bf16.mxu0 0
  %539 = vmatpush2.bf16.msra.mxu0 0
  %540 = vmatprep.subr.bf16.mxu0 0
  %541 = vmatpush2.bf16.msra.mxu0 0
  %542 = vmatprep.mubr.bf16.mxu0 0
  %543 = vmatmul.mubr.bf16.gmra.mxu0 %v444
  %v544 = vpop.f32.mrf.mxu0
  %v545 = vadd.f32 0.0, %v544
  %v546 = vpop.f32.mrf.mxu0
  %v547 = vpop.f32.mrf.mxu0
  %v548 = vpop.f32.mrf.mxu0
  %549 = vdwg.mxu0
  %v550 = vadd.f32 %v442, %v545
  %s551 = scalar_lea.vmem %s0, 20
  %v552 = vld [vmem:[%s551] sm:$0xf]
  %s553 = scalar_lea.vmem %s1, 320
  %v554 = vld [vmem:[%s553] sm:$0xf]
  %v555 = vld [vmem:[%s553 + $0x4] sm:$0xf]
  %v556 = vld [vmem:[%s553 + $0x8] sm:$0xf]
  %v557 = vld [vmem:[%s553 + $0xc] sm:$0xf]
  %v558 = vld [vmem:[%s553 + $0x10] sm:$0xf]
  %v559 = vld [vmem:[%s553 + $0x14] sm:$0xf]
  %v560 = vld [vmem:[%s553 + $0x18] sm:$0xf]
  %v561 = vld [vmem:[%s553 + $0x1c] sm:$0xf]
  %v562 = vld [vmem:[%s553 + $0x20] sm:$0xf]
  %v563 = vld [vmem:[%s553 + $0x24] sm:$0xf]
  %v564 = vld [vmem:[%s553 + $0x28] sm:$0xf]
  %v565 = vld [vmem:[%s553 + $0x2c] sm:$0xf]
  %v566 = vld [vmem:[%s553 + $0x30] sm:$0xf]
  %v567 = vld [vmem:[%s553 + $0x34] sm:$0xf]
  %v568 = vld [vmem:[%s553 + $0x38] sm:$0xf]
  %v569 = vld [vmem:[%s553 + $0x3c] sm:$0xf]
  %v586 = vunpack.c.l.b16 %v554
  %v587 = vunpack.c.l.b16 %v555
  %v588 = vunpack.c.l.b16 %v556
  %v589 = vunpack.c.l.b16 %v557
  %v590 = vunpack.c.l.b16 %v558
  %v591 = vunpack.c.l.b16 %v559
  %v592 = vunpack.c.l.b16 %v560
  %v593 = vunpack.c.l.b16 %v561
  %v594 = vunpack.c.l.b16 %v562
  %v595 = vunpack.c.l.b16 %v563
  %v596 = vunpack.c.l.b16 %v564
  %v597 = vunpack.c.l.b16 %v565
  %v598 = vunpack.c.l.b16 %v566
  %v599 = vunpack.c.l.b16 %v567
  %v600 = vunpack.c.l.b16 %v568
  %v601 = vunpack.c.l.b16 %v569
  %v602 = vpack.c.b16 %v587, %v586
  %v603 = vpack.c.b16 %v589, %v588
  %v604 = vpack.c.b16 %v591, %v590
  %v605 = vpack.c.b16 %v593, %v592
  %v606 = vpack.c.b16 %v595, %v594
  %v607 = vpack.c.b16 %v597, %v596
  %v608 = vpack.c.b16 %v599, %v598
  %v609 = vpack.c.b16 %v601, %v600
  %618 = vmatprep.subr.bf16.mxu0 0
  %619 = vmatpush1.bf16.msra.mxu0 %v609
  %620 = vmatprep.subr.bf16.mxu0 0
  %621 = vmatpush1.bf16.msra.mxu0 %v608
  %622 = vmatprep.subr.bf16.mxu0 0
  %623 = vmatpush1.bf16.msra.mxu0 %v607
  %624 = vmatprep.subr.bf16.mxu0 0
  %625 = vmatpush1.bf16.msra.mxu0 %v606
  %626 = vmatprep.subr.bf16.mxu0 0
  %627 = vmatpush1.bf16.msra.mxu0 %v605
  %628 = vmatprep.subr.bf16.mxu0 0
  %629 = vmatpush1.bf16.msra.mxu0 %v604
  %630 = vmatprep.subr.bf16.mxu0 0
  %631 = vmatpush1.bf16.msra.mxu0 %v603
  %632 = vmatprep.subr.bf16.mxu0 0
  %633 = vmatpush1.bf16.msra.mxu0 %v602
  %634 = vmatprep.subr.bf16.mxu0 0
  %635 = vmatpush2.bf16.msra.mxu0 0
  %636 = vmatprep.subr.bf16.mxu0 0
  %637 = vmatpush2.bf16.msra.mxu0 0
  %638 = vmatprep.subr.bf16.mxu0 0
  %639 = vmatpush2.bf16.msra.mxu0 0
  %640 = vmatprep.subr.bf16.mxu0 0
  %641 = vmatpush2.bf16.msra.mxu0 0
  %642 = vmatprep.subr.bf16.mxu0 0
  %643 = vmatpush2.bf16.msra.mxu0 0
  %644 = vmatprep.subr.bf16.mxu0 0
  %645 = vmatpush2.bf16.msra.mxu0 0
  %646 = vmatprep.subr.bf16.mxu0 0
  %647 = vmatpush2.bf16.msra.mxu0 0
  %648 = vmatprep.subr.bf16.mxu0 0
  %649 = vmatpush2.bf16.msra.mxu0 0
  %650 = vmatprep.mubr.bf16.mxu0 0
  %651 = vmatmul.mubr.bf16.gmra.mxu0 %v552
  %v652 = vpop.f32.mrf.mxu0
  %v653 = vadd.f32 0.0, %v652
  %v654 = vpop.f32.mrf.mxu0
  %v655 = vpop.f32.mrf.mxu0
  %v656 = vpop.f32.mrf.mxu0
  %657 = vdwg.mxu0
  %v658 = vadd.f32 %v550, %v653
  %s659 = scalar_lea.vmem %s0, 24
  %v660 = vld [vmem:[%s659] sm:$0xf]
  %s661 = scalar_lea.vmem %s1, 384
  %v662 = vld [vmem:[%s661] sm:$0xf]
  %v663 = vld [vmem:[%s661 + $0x4] sm:$0xf]
  %v664 = vld [vmem:[%s661 + $0x8] sm:$0xf]
  %v665 = vld [vmem:[%s661 + $0xc] sm:$0xf]
  %v666 = vld [vmem:[%s661 + $0x10] sm:$0xf]
  %v667 = vld [vmem:[%s661 + $0x14] sm:$0xf]
  %v668 = vld [vmem:[%s661 + $0x18] sm:$0xf]
  %v669 = vld [vmem:[%s661 + $0x1c] sm:$0xf]
  %v670 = vld [vmem:[%s661 + $0x20] sm:$0xf]
  %v671 = vld [vmem:[%s661 + $0x24] sm:$0xf]
  %v672 = vld [vmem:[%s661 + $0x28] sm:$0xf]
  %v673 = vld [vmem:[%s661 + $0x2c] sm:$0xf]
  %v674 = vld [vmem:[%s661 + $0x30] sm:$0xf]
  %v675 = vld [vmem:[%s661 + $0x34] sm:$0xf]
  %v676 = vld [vmem:[%s661 + $0x38] sm:$0xf]
  %v677 = vld [vmem:[%s661 + $0x3c] sm:$0xf]
  %v694 = vunpack.c.l.b16 %v662
  %v695 = vunpack.c.l.b16 %v663
  %v696 = vunpack.c.l.b16 %v664
  %v697 = vunpack.c.l.b16 %v665
  %v698 = vunpack.c.l.b16 %v666
  %v699 = vunpack.c.l.b16 %v667
  %v700 = vunpack.c.l.b16 %v668
  %v701 = vunpack.c.l.b16 %v669
  %v702 = vunpack.c.l.b16 %v670
  %v703 = vunpack.c.l.b16 %v671
  %v704 = vunpack.c.l.b16 %v672
  %v705 = vunpack.c.l.b16 %v673
  %v706 = vunpack.c.l.b16 %v674
  %v707 = vunpack.c.l.b16 %v675
  %v708 = vunpack.c.l.b16 %v676
  %v709 = vunpack.c.l.b16 %v677
  %v710 = vpack.c.b16 %v695, %v694
  %v711 = vpack.c.b16 %v697, %v696
  %v712 = vpack.c.b16 %v699, %v698
  %v713 = vpack.c.b16 %v701, %v700
  %v714 = vpack.c.b16 %v703, %v702
  %v715 = vpack.c.b16 %v705, %v704
  %v716 = vpack.c.b16 %v707, %v706
  %v717 = vpack.c.b16 %v709, %v708
  %726 = vmatprep.subr.bf16.mxu0 0
  %727 = vmatpush1.bf16.msra.mxu0 %v717
  %728 = vmatprep.subr.bf16.mxu0 0
  %729 = vmatpush1.bf16.msra.mxu0 %v716
  %730 = vmatprep.subr.bf16.mxu0 0
  %731 = vmatpush1.bf16.msra.mxu0 %v715
  %732 = vmatprep.subr.bf16.mxu0 0
  %733 = vmatpush1.bf16.msra.mxu0 %v714
  %734 = vmatprep.subr.bf16.mxu0 0
  %735 = vmatpush1.bf16.msra.mxu0 %v713
  %736 = vmatprep.subr.bf16.mxu0 0
  %737 = vmatpush1.bf16.msra.mxu0 %v712
  %738 = vmatprep.subr.bf16.mxu0 0
  %739 = vmatpush1.bf16.msra.mxu0 %v711
  %740 = vmatprep.subr.bf16.mxu0 0
  %741 = vmatpush1.bf16.msra.mxu0 %v710
  %742 = vmatprep.subr.bf16.mxu0 0
  %743 = vmatpush2.bf16.msra.mxu0 0
  %744 = vmatprep.subr.bf16.mxu0 0
  %745 = vmatpush2.bf16.msra.mxu0 0
  %746 = vmatprep.subr.bf16.mxu0 0
  %747 = vmatpush2.bf16.msra.mxu0 0
  %748 = vmatprep.subr.bf16.mxu0 0
  %749 = vmatpush2.bf16.msra.mxu0 0
  %750 = vmatprep.subr.bf16.mxu0 0
  %751 = vmatpush2.bf16.msra.mxu0 0
  %752 = vmatprep.subr.bf16.mxu0 0
  %753 = vmatpush2.bf16.msra.mxu0 0
  %754 = vmatprep.subr.bf16.mxu0 0
  %755 = vmatpush2.bf16.msra.mxu0 0
  %756 = vmatprep.subr.bf16.mxu0 0
  %757 = vmatpush2.bf16.msra.mxu0 0
  %758 = vmatprep.mubr.bf16.mxu0 0
  %759 = vmatmul.mubr.bf16.gmra.mxu0 %v660
  %v760 = vpop.f32.mrf.mxu0
  %v761 = vadd.f32 0.0, %v760
  %v762 = vpop.f32.mrf.mxu0
  %v763 = vpop.f32.mrf.mxu0
  %v764 = vpop.f32.mrf.mxu0
  %765 = vdwg.mxu0
  %v766 = vadd.f32 %v658, %v761
  %s767 = scalar_lea.vmem %s0, 28
  %v768 = vld [vmem:[%s767] sm:$0xf]
  %s769 = scalar_lea.vmem %s1, 448
  %v770 = vld [vmem:[%s769] sm:$0xf]
  %v771 = vld [vmem:[%s769 + $0x4] sm:$0xf]
  %v772 = vld [vmem:[%s769 + $0x8] sm:$0xf]
  %v773 = vld [vmem:[%s769 + $0xc] sm:$0xf]
  %v774 = vld [vmem:[%s769 + $0x10] sm:$0xf]
  %v775 = vld [vmem:[%s769 + $0x14] sm:$0xf]
  %v776 = vld [vmem:[%s769 + $0x18] sm:$0xf]
  %v777 = vld [vmem:[%s769 + $0x1c] sm:$0xf]
  %v778 = vld [vmem:[%s769 + $0x20] sm:$0xf]
  %v779 = vld [vmem:[%s769 + $0x24] sm:$0xf]
  %v780 = vld [vmem:[%s769 + $0x28] sm:$0xf]
  %v781 = vld [vmem:[%s769 + $0x2c] sm:$0xf]
  %v782 = vld [vmem:[%s769 + $0x30] sm:$0xf]
  %v783 = vld [vmem:[%s769 + $0x34] sm:$0xf]
  %v784 = vld [vmem:[%s769 + $0x38] sm:$0xf]
  %v785 = vld [vmem:[%s769 + $0x3c] sm:$0xf]
  %v802 = vunpack.c.l.b16 %v770
  %v803 = vunpack.c.l.b16 %v771
  %v804 = vunpack.c.l.b16 %v772
  %v805 = vunpack.c.l.b16 %v773
  %v806 = vunpack.c.l.b16 %v774
  %v807 = vunpack.c.l.b16 %v775
  %v808 = vunpack.c.l.b16 %v776
  %v809 = vunpack.c.l.b16 %v777
  %v810 = vunpack.c.l.b16 %v778
  %v811 = vunpack.c.l.b16 %v779
  %v812 = vunpack.c.l.b16 %v780
  %v813 = vunpack.c.l.b16 %v781
  %v814 = vunpack.c.l.b16 %v782
  %v815 = vunpack.c.l.b16 %v783
  %v816 = vunpack.c.l.b16 %v784
  %v817 = vunpack.c.l.b16 %v785
  %v818 = vpack.c.b16 %v803, %v802
  %v819 = vpack.c.b16 %v805, %v804
  %v820 = vpack.c.b16 %v807, %v806
  %v821 = vpack.c.b16 %v809, %v808
  %v822 = vpack.c.b16 %v811, %v810
  %v823 = vpack.c.b16 %v813, %v812
  %v824 = vpack.c.b16 %v815, %v814
  %v825 = vpack.c.b16 %v817, %v816
  %834 = vmatprep.subr.bf16.mxu0 0
  %835 = vmatpush1.bf16.msra.mxu0 %v825
  %836 = vmatprep.subr.bf16.mxu0 0
  %837 = vmatpush1.bf16.msra.mxu0 %v824
  %838 = vmatprep.subr.bf16.mxu0 0
  %839 = vmatpush1.bf16.msra.mxu0 %v823
  %840 = vmatprep.subr.bf16.mxu0 0
  %841 = vmatpush1.bf16.msra.mxu0 %v822
  %842 = vmatprep.subr.bf16.mxu0 0
  %843 = vmatpush1.bf16.msra.mxu0 %v821
  %844 = vmatprep.subr.bf16.mxu0 0
  %845 = vmatpush1.bf16.msra.mxu0 %v820
  %846 = vmatprep.subr.bf16.mxu0 0
  %847 = vmatpush1.bf16.msra.mxu0 %v819
  %848 = vmatprep.subr.bf16.mxu0 0
  %849 = vmatpush1.bf16.msra.mxu0 %v818
  %850 = vmatprep.subr.bf16.mxu0 0
  %851 = vmatpush2.bf16.msra.mxu0 0
  %852 = vmatprep.subr.bf16.mxu0 0
  %853 = vmatpush2.bf16.msra.mxu0 0
  %854 = vmatprep.subr.bf16.mxu0 0
  %855 = vmatpush2.bf16.msra.mxu0 0
  %856 = vmatprep.subr.bf16.mxu0 0
  %857 = vmatpush2.bf16.msra.mxu0 0
  %858 = vmatprep.subr.bf16.mxu0 0
  %859 = vmatpush2.bf16.msra.mxu0 0
  %860 = vmatprep.subr.bf16.mxu0 0
  %861 = vmatpush2.bf16.msra.mxu0 0
  %862 = vmatprep.subr.bf16.mxu0 0
  %863 = vmatpush2.bf16.msra.mxu0 0
  %864 = vmatprep.subr.bf16.mxu0 0
  %865 = vmatpush2.bf16.msra.mxu0 0
  %866 = vmatprep.mubr.bf16.mxu0 0
  %867 = vmatmul.mubr.bf16.gmra.mxu0 %v768
  %v868 = vpop.f32.mrf.mxu0
  %v869 = vadd.f32 0.0, %v868
  %v870 = vpop.f32.mrf.mxu0
  %v871 = vpop.f32.mrf.mxu0
  %v872 = vpop.f32.mrf.mxu0
  %873 = vdwg.mxu0
  %v874 = vadd.f32 %v766, %v869
  %s875 = scalar_lea.vmem %s0, 32
  %v876 = vld [vmem:[%s875] sm:$0xf]
  %s877 = scalar_lea.vmem %s1, 512
  %v878 = vld [vmem:[%s877] sm:$0xf]
  %v879 = vld [vmem:[%s877 + $0x4] sm:$0xf]
  %v880 = vld [vmem:[%s877 + $0x8] sm:$0xf]
  %v881 = vld [vmem:[%s877 + $0xc] sm:$0xf]
  %v882 = vld [vmem:[%s877 + $0x10] sm:$0xf]
  %v883 = vld [vmem:[%s877 + $0x14] sm:$0xf]
  %v884 = vld [vmem:[%s877 + $0x18] sm:$0xf]
  %v885 = vld [vmem:[%s877 + $0x1c] sm:$0xf]
  %v886 = vld [vmem:[%s877 + $0x20] sm:$0xf]
  %v887 = vld [vmem:[%s877 + $0x24] sm:$0xf]
  %v888 = vld [vmem:[%s877 + $0x28] sm:$0xf]
  %v889 = vld [vmem:[%s877 + $0x2c] sm:$0xf]
  %v890 = vld [vmem:[%s877 + $0x30] sm:$0xf]
  %v891 = vld [vmem:[%s877 + $0x34] sm:$0xf]
  %v892 = vld [vmem:[%s877 + $0x38] sm:$0xf]
  %v893 = vld [vmem:[%s877 + $0x3c] sm:$0xf]
  %v910 = vunpack.c.l.b16 %v878
  %v911 = vunpack.c.l.b16 %v879
  %v912 = vunpack.c.l.b16 %v880
  %v913 = vunpack.c.l.b16 %v881
  %v914 = vunpack.c.l.b16 %v882
  %v915 = vunpack.c.l.b16 %v883
  %v916 = vunpack.c.l.b16 %v884
  %v917 = vunpack.c.l.b16 %v885
  %v918 = vunpack.c.l.b16 %v886
  %v919 = vunpack.c.l.b16 %v887
  %v920 = vunpack.c.l.b16 %v888
  %v921 = vunpack.c.l.b16 %v889
  %v922 = vunpack.c.l.b16 %v890
  %v923 = vunpack.c.l.b16 %v891
  %v924 = vunpack.c.l.b16 %v892
  %v925 = vunpack.c.l.b16 %v893
  %v926 = vpack.c.b16 %v911, %v910
  %v927 = vpack.c.b16 %v913, %v912
  %v928 = vpack.c.b16 %v915, %v914
  %v929 = vpack.c.b16 %v917, %v916
  %v930 = vpack.c.b16 %v919, %v918
  %v931 = vpack.c.b16 %v921, %v920
  %v932 = vpack.c.b16 %v923, %v922
  %v933 = vpack.c.b16 %v925, %v924
  %942 = vmatprep.subr.bf16.mxu0 0
  %943 = vmatpush1.bf16.msra.mxu0 %v933
  %944 = vmatprep.subr.bf16.mxu0 0
  %945 = vmatpush1.bf16.msra.mxu0 %v932
  %946 = vmatprep.subr.bf16.mxu0 0
  %947 = vmatpush1.bf16.msra.mxu0 %v931
  %948 = vmatprep.subr.bf16.mxu0 0
  %949 = vmatpush1.bf16.msra.mxu0 %v930
  %950 = vmatprep.subr.bf16.mxu0 0
  %951 = vmatpush1.bf16.msra.mxu0 %v929
  %952 = vmatprep.subr.bf16.mxu0 0
  %953 = vmatpush1.bf16.msra.mxu0 %v928
  %954 = vmatprep.subr.bf16.mxu0 0
  %955 = vmatpush1.bf16.msra.mxu0 %v927
  %956 = vmatprep.subr.bf16.mxu0 0
  %957 = vmatpush1.bf16.msra.mxu0 %v926
  %958 = vmatprep.subr.bf16.mxu0 0
  %959 = vmatpush2.bf16.msra.mxu0 0
  %960 = vmatprep.subr.bf16.mxu0 0
  %961 = vmatpush2.bf16.msra.mxu0 0
  %962 = vmatprep.subr.bf16.mxu0 0
  %963 = vmatpush2.bf16.msra.mxu0 0
  %964 = vmatprep.subr.bf16.mxu0 0
  %965 = vmatpush2.bf16.msra.mxu0 0
  %966 = vmatprep.subr.bf16.mxu0 0
  %967 = vmatpush2.bf16.msra.mxu0 0
  %968 = vmatprep.subr.bf16.mxu0 0
  %969 = vmatpush2.bf16.msra.mxu0 0
  %970 = vmatprep.subr.bf16.mxu0 0
  %971 = vmatpush2.bf16.msra.mxu0 0
  %972 = vmatprep.subr.bf16.mxu0 0
  %973 = vmatpush2.bf16.msra.mxu0 0
  %974 = vmatprep.mubr.bf16.mxu0 0
  %975 = vmatmul.mubr.bf16.gmra.mxu0 %v876
  %v976 = vpop.f32.mrf.mxu0
  %v977 = vadd.f32 0.0, %v976
  %v978 = vpop.f32.mrf.mxu0
  %v979 = vpop.f32.mrf.mxu0
  %v980 = vpop.f32.mrf.mxu0
  %981 = vdwg.mxu0
  %v982 = vadd.f32 %v874, %v977
  %s983 = scalar_lea.vmem %s0, 36
  %v984 = vld [vmem:[%s983] sm:$0xf]
  %s985 = scalar_lea.vmem %s1, 576
  %v986 = vld [vmem:[%s985] sm:$0xf]
  %v987 = vld [vmem:[%s985 + $0x4] sm:$0xf]
  %v988 = vld [vmem:[%s985 + $0x8] sm:$0xf]
  %v989 = vld [vmem:[%s985 + $0xc] sm:$0xf]
  %v990 = vld [vmem:[%s985 + $0x10] sm:$0xf]
  %v991 = vld [vmem:[%s985 + $0x14] sm:$0xf]
  %v992 = vld [vmem:[%s985 + $0x18] sm:$0xf]
  %v993 = vld [vmem:[%s985 + $0x1c] sm:$0xf]
  %v994 = vld [vmem:[%s985 + $0x20] sm:$0xf]
  %v995 = vld [vmem:[%s985 + $0x24] sm:$0xf]
  %v996 = vld [vmem:[%s985 + $0x28] sm:$0xf]
  %v997 = vld [vmem:[%s985 + $0x2c] sm:$0xf]
  %v998 = vld [vmem:[%s985 + $0x30] sm:$0xf]
  %v999 = vld [vmem:[%s985 + $0x34] sm:$0xf]
  %v1000 = vld [vmem:[%s985 + $0x38] sm:$0xf]
  %v1001 = vld [vmem:[%s985 + $0x3c] sm:$0xf]
  %v1018 = vunpack.c.l.b16 %v986
  %v1019 = vunpack.c.l.b16 %v987
  %v1020 = vunpack.c.l.b16 %v988
  %v1021 = vunpack.c.l.b16 %v989
  %v1022 = vunpack.c.l.b16 %v990
  %v1023 = vunpack.c.l.b16 %v991
  %v1024 = vunpack.c.l.b16 %v992
  %v1025 = vunpack.c.l.b16 %v993
  %v1026 = vunpack.c.l.b16 %v994
  %v1027 = vunpack.c.l.b16 %v995
  %v1028 = vunpack.c.l.b16 %v996
  %v1029 = vunpack.c.l.b16 %v997
  %v1030 = vunpack.c.l.b16 %v998
  %v1031 = vunpack.c.l.b16 %v999
  %v1032 = vunpack.c.l.b16 %v1000
  %v1033 = vunpack.c.l.b16 %v1001
  %v1034 = vpack.c.b16 %v1019, %v1018
  %v1035 = vpack.c.b16 %v1021, %v1020
  %v1036 = vpack.c.b16 %v1023, %v1022
  %v1037 = vpack.c.b16 %v1025, %v1024
  %v1038 = vpack.c.b16 %v1027, %v1026
  %v1039 = vpack.c.b16 %v1029, %v1028
  %v1040 = vpack.c.b16 %v1031, %v1030
  %v1041 = vpack.c.b16 %v1033, %v1032
  %1050 = vmatprep.subr.bf16.mxu0 0
  %1051 = vmatpush1.bf16.msra.mxu0 %v1041
  %1052 = vmatprep.subr.bf16.mxu0 0
  %1053 = vmatpush1.bf16.msra.mxu0 %v1040
  %1054 = vmatprep.subr.bf16.mxu0 0
  %1055 = vmatpush1.bf16.msra.mxu0 %v1039
  %1056 = vmatprep.subr.bf16.mxu0 0
  %1057 = vmatpush1.bf16.msra.mxu0 %v1038
  %1058 = vmatprep.subr.bf16.mxu0 0
  %1059 = vmatpush1.bf16.msra.mxu0 %v1037
  %1060 = vmatprep.subr.bf16.mxu0 0
  %1061 = vmatpush1.bf16.msra.mxu0 %v1036
  %1062 = vmatprep.subr.bf16.mxu0 0
  %1063 = vmatpush1.bf16.msra.mxu0 %v1035
  %1064 = vmatprep.subr.bf16.mxu0 0
  %1065 = vmatpush1.bf16.msra.mxu0 %v1034
  %1066 = vmatprep.subr.bf16.mxu0 0
  %1067 = vmatpush2.bf16.msra.mxu0 0
  %1068 = vmatprep.subr.bf16.mxu0 0
  %1069 = vmatpush2.bf16.msra.mxu0 0
  %1070 = vmatprep.subr.bf16.mxu0 0
  %1071 = vmatpush2.bf16.msra.mxu0 0
  %1072 = vmatprep.subr.bf16.mxu0 0
  %1073 = vmatpush2.bf16.msra.mxu0 0
  %1074 = vmatprep.subr.bf16.mxu0 0
  %1075 = vmatpush2.bf16.msra.mxu0 0
  %1076 = vmatprep.subr.bf16.mxu0 0
  %1077 = vmatpush2.bf16.msra.mxu0 0
  %1078 = vmatprep.subr.bf16.mxu0 0
  %1079 = vmatpush2.bf16.msra.mxu0 0
  %1080 = vmatprep.subr.bf16.mxu0 0
  %1081 = vmatpush2.bf16.msra.mxu0 0
  %1082 = vmatprep.mubr.bf16.mxu0 0
  %1083 = vmatmul.mubr.bf16.gmra.mxu0 %v984
  %v1084 = vpop.f32.mrf.mxu0
  %v1085 = vadd.f32 0.0, %v1084
  %v1086 = vpop.f32.mrf.mxu0
  %v1087 = vpop.f32.mrf.mxu0
  %v1088 = vpop.f32.mrf.mxu0
  %1089 = vdwg.mxu0
  %v1090 = vadd.f32 %v982, %v1085
  %s1091 = scalar_lea.vmem %s0, 40
  %v1092 = vld [vmem:[%s1091] sm:$0xf]
  %s1093 = scalar_lea.vmem %s1, 640
  %v1094 = vld [vmem:[%s1093] sm:$0xf]
  %v1095 = vld [vmem:[%s1093 + $0x4] sm:$0xf]
  %v1096 = vld [vmem:[%s1093 + $0x8] sm:$0xf]
  %v1097 = vld [vmem:[%s1093 + $0xc] sm:$0xf]
  %v1098 = vld [vmem:[%s1093 + $0x10] sm:$0xf]
  %v1099 = vld [vmem:[%s1093 + $0x14] sm:$0xf]
  %v1100 = vld [vmem:[%s1093 + $0x18] sm:$0xf]
  %v1101 = vld [vmem:[%s1093 + $0x1c] sm:$0xf]
  %v1102 = vld [vmem:[%s1093 + $0x20] sm:$0xf]
  %v1103 = vld [vmem:[%s1093 + $0x24] sm:$0xf]
  %v1104 = vld [vmem:[%s1093 + $0x28] sm:$0xf]
  %v1105 = vld [vmem:[%s1093 + $0x2c] sm:$0xf]
  %v1106 = vld [vmem:[%s1093 + $0x30] sm:$0xf]
  %v1107 = vld [vmem:[%s1093 + $0x34] sm:$0xf]
  %v1108 = vld [vmem:[%s1093 + $0x38] sm:$0xf]
  %v1109 = vld [vmem:[%s1093 + $0x3c] sm:$0xf]
  %v1126 = vunpack.c.l.b16 %v1094
  %v1127 = vunpack.c.l.b16 %v1095
  %v1128 = vunpack.c.l.b16 %v1096
  %v1129 = vunpack.c.l.b16 %v1097
  %v1130 = vunpack.c.l.b16 %v1098
  %v1131 = vunpack.c.l.b16 %v1099
  %v1132 = vunpack.c.l.b16 %v1100
  %v1133 = vunpack.c.l.b16 %v1101
  %v1134 = vunpack.c.l.b16 %v1102
  %v1135 = vunpack.c.l.b16 %v1103
  %v1136 = vunpack.c.l.b16 %v1104
  %v1137 = vunpack.c.l.b16 %v1105
  %v1138 = vunpack.c.l.b16 %v1106
  %v1139 = vunpack.c.l.b16 %v1107
  %v1140 = vunpack.c.l.b16 %v1108
  %v1141 = vunpack.c.l.b16 %v1109
  %v1142 = vpack.c.b16 %v1127, %v1126
  %v1143 = vpack.c.b16 %v1129, %v1128
  %v1144 = vpack.c.b16 %v1131, %v1130
  %v1145 = vpack.c.b16 %v1133, %v1132
  %v1146 = vpack.c.b16 %v1135, %v1134
  %v1147 = vpack.c.b16 %v1137, %v1136
  %v1148 = vpack.c.b16 %v1139, %v1138
  %v1149 = vpack.c.b16 %v1141, %v1140
  %1158 = vmatprep.subr.bf16.mxu0 0
  %1159 = vmatpush1.bf16.msra.mxu0 %v1149
  %1160 = vmatprep.subr.bf16.mxu0 0
  %1161 = vmatpush1.bf16.msra.mxu0 %v1148
  %1162 = vmatprep.subr.bf16.mxu0 0
  %1163 = vmatpush1.bf16.msra.mxu0 %v1147
  %1164 = vmatprep.subr.bf16.mxu0 0
  %1165 = vmatpush1.bf16.msra.mxu0 %v1146
  %1166 = vmatprep.subr.bf16.mxu0 0
  %1167 = vmatpush1.bf16.msra.mxu0 %v1145
  %1168 = vmatprep.subr.bf16.mxu0 0
  %1169 = vmatpush1.bf16.msra.mxu0 %v1144
  %1170 = vmatprep.subr.bf16.mxu0 0
  %1171 = vmatpush1.bf16.msra.mxu0 %v1143
  %1172 = vmatprep.subr.bf16.mxu0 0
  %1173 = vmatpush1.bf16.msra.mxu0 %v1142
  %1174 = vmatprep.subr.bf16.mxu0 0
  %1175 = vmatpush2.bf16.msra.mxu0 0
  %1176 = vmatprep.subr.bf16.mxu0 0
  %1177 = vmatpush2.bf16.msra.mxu0 0
  %1178 = vmatprep.subr.bf16.mxu0 0
  %1179 = vmatpush2.bf16.msra.mxu0 0
  %1180 = vmatprep.subr.bf16.mxu0 0
  %1181 = vmatpush2.bf16.msra.mxu0 0
  %1182 = vmatprep.subr.bf16.mxu0 0
  %1183 = vmatpush2.bf16.msra.mxu0 0
  %1184 = vmatprep.subr.bf16.mxu0 0
  %1185 = vmatpush2.bf16.msra.mxu0 0
  %1186 = vmatprep.subr.bf16.mxu0 0
  %1187 = vmatpush2.bf16.msra.mxu0 0
  %1188 = vmatprep.subr.bf16.mxu0 0
  %1189 = vmatpush2.bf16.msra.mxu0 0
  %1190 = vmatprep.mubr.bf16.mxu0 0
  %1191 = vmatmul.mubr.bf16.gmra.mxu0 %v1092
  %v1192 = vpop.f32.mrf.mxu0
  %v1193 = vadd.f32 0.0, %v1192
  %v1194 = vpop.f32.mrf.mxu0
  %v1195 = vpop.f32.mrf.mxu0
  %v1196 = vpop.f32.mrf.mxu0
  %1197 = vdwg.mxu0
  %v1198 = vadd.f32 %v1090, %v1193
  %s1199 = scalar_lea.vmem %s0, 44
  %v1200 = vld [vmem:[%s1199] sm:$0xf]
  %s1201 = scalar_lea.vmem %s1, 704
  %v1202 = vld [vmem:[%s1201] sm:$0xf]
  %v1203 = vld [vmem:[%s1201 + $0x4] sm:$0xf]
  %v1204 = vld [vmem:[%s1201 + $0x8] sm:$0xf]
  %v1205 = vld [vmem:[%s1201 + $0xc] sm:$0xf]
  %v1206 = vld [vmem:[%s1201 + $0x10] sm:$0xf]
  %v1207 = vld [vmem:[%s1201 + $0x14] sm:$0xf]
  %v1208 = vld [vmem:[%s1201 + $0x18] sm:$0xf]
  %v1209 = vld [vmem:[%s1201 + $0x1c] sm:$0xf]
  %v1210 = vld [vmem:[%s1201 + $0x20] sm:$0xf]
  %v1211 = vld [vmem:[%s1201 + $0x24] sm:$0xf]
  %v1212 = vld [vmem:[%s1201 + $0x28] sm:$0xf]
  %v1213 = vld [vmem:[%s1201 + $0x2c] sm:$0xf]
  %v1214 = vld [vmem:[%s1201 + $0x30] sm:$0xf]
  %v1215 = vld [vmem:[%s1201 + $0x34] sm:$0xf]
  %v1216 = vld [vmem:[%s1201 + $0x38] sm:$0xf]
  %v1217 = vld [vmem:[%s1201 + $0x3c] sm:$0xf]
  %v1234 = vunpack.c.l.b16 %v1202
  %v1235 = vunpack.c.l.b16 %v1203
  %v1236 = vunpack.c.l.b16 %v1204
  %v1237 = vunpack.c.l.b16 %v1205
  %v1238 = vunpack.c.l.b16 %v1206
  %v1239 = vunpack.c.l.b16 %v1207
  %v1240 = vunpack.c.l.b16 %v1208
  %v1241 = vunpack.c.l.b16 %v1209
  %v1242 = vunpack.c.l.b16 %v1210
  %v1243 = vunpack.c.l.b16 %v1211
  %v1244 = vunpack.c.l.b16 %v1212
  %v1245 = vunpack.c.l.b16 %v1213
  %v1246 = vunpack.c.l.b16 %v1214
  %v1247 = vunpack.c.l.b16 %v1215
  %v1248 = vunpack.c.l.b16 %v1216
  %v1249 = vunpack.c.l.b16 %v1217
  %v1250 = vpack.c.b16 %v1235, %v1234
  %v1251 = vpack.c.b16 %v1237, %v1236
  %v1252 = vpack.c.b16 %v1239, %v1238
  %v1253 = vpack.c.b16 %v1241, %v1240
  %v1254 = vpack.c.b16 %v1243, %v1242
  %v1255 = vpack.c.b16 %v1245, %v1244
  %v1256 = vpack.c.b16 %v1247, %v1246
  %v1257 = vpack.c.b16 %v1249, %v1248
  %1266 = vmatprep.subr.bf16.mxu0 0
  %1267 = vmatpush1.bf16.msra.mxu0 %v1257
  %1268 = vmatprep.subr.bf16.mxu0 0
  %1269 = vmatpush1.bf16.msra.mxu0 %v1256
  %1270 = vmatprep.subr.bf16.mxu0 0
  %1271 = vmatpush1.bf16.msra.mxu0 %v1255
  %1272 = vmatprep.subr.bf16.mxu0 0
  %1273 = vmatpush1.bf16.msra.mxu0 %v1254
  %1274 = vmatprep.subr.bf16.mxu0 0
  %1275 = vmatpush1.bf16.msra.mxu0 %v1253
  %1276 = vmatprep.subr.bf16.mxu0 0
  %1277 = vmatpush1.bf16.msra.mxu0 %v1252
  %1278 = vmatprep.subr.bf16.mxu0 0
  %1279 = vmatpush1.bf16.msra.mxu0 %v1251
  %1280 = vmatprep.subr.bf16.mxu0 0
  %1281 = vmatpush1.bf16.msra.mxu0 %v1250
  %1282 = vmatprep.subr.bf16.mxu0 0
  %1283 = vmatpush2.bf16.msra.mxu0 0
  %1284 = vmatprep.subr.bf16.mxu0 0
  %1285 = vmatpush2.bf16.msra.mxu0 0
  %1286 = vmatprep.subr.bf16.mxu0 0
  %1287 = vmatpush2.bf16.msra.mxu0 0
  %1288 = vmatprep.subr.bf16.mxu0 0
  %1289 = vmatpush2.bf16.msra.mxu0 0
  %1290 = vmatprep.subr.bf16.mxu0 0
  %1291 = vmatpush2.bf16.msra.mxu0 0
  %1292 = vmatprep.subr.bf16.mxu0 0
  %1293 = vmatpush2.bf16.msra.mxu0 0
  %1294 = vmatprep.subr.bf16.mxu0 0
  %1295 = vmatpush2.bf16.msra.mxu0 0
  %1296 = vmatprep.subr.bf16.mxu0 0
  %1297 = vmatpush2.bf16.msra.mxu0 0
  %1298 = vmatprep.mubr.bf16.mxu0 0
  %1299 = vmatmul.mubr.bf16.gmra.mxu0 %v1200
  %v1300 = vpop.f32.mrf.mxu0
  %v1301 = vadd.f32 0.0, %v1300
  %v1302 = vpop.f32.mrf.mxu0
  %v1303 = vpop.f32.mrf.mxu0
  %v1304 = vpop.f32.mrf.mxu0
  %1305 = vdwg.mxu0
  %v1306 = vadd.f32 %v1198, %v1301
  %s1307 = scalar_lea.vmem %s0, 48
  %v1308 = vld [vmem:[%s1307] sm:$0xf]
  %s1309 = scalar_lea.vmem %s1, 768
  %v1310 = vld [vmem:[%s1309] sm:$0xf]
  %v1311 = vld [vmem:[%s1309 + $0x4] sm:$0xf]
  %v1312 = vld [vmem:[%s1309 + $0x8] sm:$0xf]
  %v1313 = vld [vmem:[%s1309 + $0xc] sm:$0xf]
  %v1314 = vld [vmem:[%s1309 + $0x10] sm:$0xf]
  %v1315 = vld [vmem:[%s1309 + $0x14] sm:$0xf]
  %v1316 = vld [vmem:[%s1309 + $0x18] sm:$0xf]
  %v1317 = vld [vmem:[%s1309 + $0x1c] sm:$0xf]
  %v1318 = vld [vmem:[%s1309 + $0x20] sm:$0xf]
  %v1319 = vld [vmem:[%s1309 + $0x24] sm:$0xf]
  %v1320 = vld [vmem:[%s1309 + $0x28] sm:$0xf]
  %v1321 = vld [vmem:[%s1309 + $0x2c] sm:$0xf]
  %v1322 = vld [vmem:[%s1309 + $0x30] sm:$0xf]
  %v1323 = vld [vmem:[%s1309 + $0x34] sm:$0xf]
  %v1324 = vld [vmem:[%s1309 + $0x38] sm:$0xf]
  %v1325 = vld [vmem:[%s1309 + $0x3c] sm:$0xf]
  %v1342 = vunpack.c.l.b16 %v1310
  %v1343 = vunpack.c.l.b16 %v1311
  %v1344 = vunpack.c.l.b16 %v1312
  %v1345 = vunpack.c.l.b16 %v1313
  %v1346 = vunpack.c.l.b16 %v1314
  %v1347 = vunpack.c.l.b16 %v1315
  %v1348 = vunpack.c.l.b16 %v1316
  %v1349 = vunpack.c.l.b16 %v1317
  %v1350 = vunpack.c.l.b16 %v1318
  %v1351 = vunpack.c.l.b16 %v1319
  %v1352 = vunpack.c.l.b16 %v1320
  %v1353 = vunpack.c.l.b16 %v1321
  %v1354 = vunpack.c.l.b16 %v1322
  %v1355 = vunpack.c.l.b16 %v1323
  %v1356 = vunpack.c.l.b16 %v1324
  %v1357 = vunpack.c.l.b16 %v1325
  %v1358 = vpack.c.b16 %v1343, %v1342
  %v1359 = vpack.c.b16 %v1345, %v1344
  %v1360 = vpack.c.b16 %v1347, %v1346
  %v1361 = vpack.c.b16 %v1349, %v1348
  %v1362 = vpack.c.b16 %v1351, %v1350
  %v1363 = vpack.c.b16 %v1353, %v1352
  %v1364 = vpack.c.b16 %v1355, %v1354
  %v1365 = vpack.c.b16 %v1357, %v1356
  %1374 = vmatprep.subr.bf16.mxu0 0
  %1375 = vmatpush1.bf16.msra.mxu0 %v1365
  %1376 = vmatprep.subr.bf16.mxu0 0
  %1377 = vmatpush1.bf16.msra.mxu0 %v1364
  %1378 = vmatprep.subr.bf16.mxu0 0
  %1379 = vmatpush1.bf16.msra.mxu0 %v1363
  %1380 = vmatprep.subr.bf16.mxu0 0
  %1381 = vmatpush1.bf16.msra.mxu0 %v1362
  %1382 = vmatprep.subr.bf16.mxu0 0
  %1383 = vmatpush1.bf16.msra.mxu0 %v1361
  %1384 = vmatprep.subr.bf16.mxu0 0
  %1385 = vmatpush1.bf16.msra.mxu0 %v1360
  %1386 = vmatprep.subr.bf16.mxu0 0
  %1387 = vmatpush1.bf16.msra.mxu0 %v1359
  %1388 = vmatprep.subr.bf16.mxu0 0
  %1389 = vmatpush1.bf16.msra.mxu0 %v1358
  %1390 = vmatprep.subr.bf16.mxu0 0
  %1391 = vmatpush2.bf16.msra.mxu0 0
  %1392 = vmatprep.subr.bf16.mxu0 0
  %1393 = vmatpush2.bf16.msra.mxu0 0
  %1394 = vmatprep.subr.bf16.mxu0 0
  %1395 = vmatpush2.bf16.msra.mxu0 0
  %1396 = vmatprep.subr.bf16.mxu0 0
  %1397 = vmatpush2.bf16.msra.mxu0 0
  %1398 = vmatprep.subr.bf16.mxu0 0
  %1399 = vmatpush2.bf16.msra.mxu0 0
  %1400 = vmatprep.subr.bf16.mxu0 0
  %1401 = vmatpush2.bf16.msra.mxu0 0
  %1402 = vmatprep.subr.bf16.mxu0 0
  %1403 = vmatpush2.bf16.msra.mxu0 0
  %1404 = vmatprep.subr.bf16.mxu0 0
  %1405 = vmatpush2.bf16.msra.mxu0 0
  %1406 = vmatprep.mubr.bf16.mxu0 0
  %1407 = vmatmul.mubr.bf16.gmra.mxu0 %v1308
  %v1408 = vpop.f32.mrf.mxu0
  %v1409 = vadd.f32 0.0, %v1408
  %v1410 = vpop.f32.mrf.mxu0
  %v1411 = vpop.f32.mrf.mxu0
  %v1412 = vpop.f32.mrf.mxu0
  %1413 = vdwg.mxu0
  %v1414 = vadd.f32 %v1306, %v1409
  %s1415 = scalar_lea.vmem %s0, 52
  %v1416 = vld [vmem:[%s1415] sm:$0xf]
  %s1417 = scalar_lea.vmem %s1, 832
  %v1418 = vld [vmem:[%s1417] sm:$0xf]
  %v1419 = vld [vmem:[%s1417 + $0x4] sm:$0xf]
  %v1420 = vld [vmem:[%s1417 + $0x8] sm:$0xf]
  %v1421 = vld [vmem:[%s1417 + $0xc] sm:$0xf]
  %v1422 = vld [vmem:[%s1417 + $0x10] sm:$0xf]
  %v1423 = vld [vmem:[%s1417 + $0x14] sm:$0xf]
  %v1424 = vld [vmem:[%s1417 + $0x18] sm:$0xf]
  %v1425 = vld [vmem:[%s1417 + $0x1c] sm:$0xf]
  %v1426 = vld [vmem:[%s1417 + $0x20] sm:$0xf]
  %v1427 = vld [vmem:[%s1417 + $0x24] sm:$0xf]
  %v1428 = vld [vmem:[%s1417 + $0x28] sm:$0xf]
  %v1429 = vld [vmem:[%s1417 + $0x2c] sm:$0xf]
  %v1430 = vld [vmem:[%s1417 + $0x30] sm:$0xf]
  %v1431 = vld [vmem:[%s1417 + $0x34] sm:$0xf]
  %v1432 = vld [vmem:[%s1417 + $0x38] sm:$0xf]
  %v1433 = vld [vmem:[%s1417 + $0x3c] sm:$0xf]
  %v1450 = vunpack.c.l.b16 %v1418
  %v1451 = vunpack.c.l.b16 %v1419
  %v1452 = vunpack.c.l.b16 %v1420
  %v1453 = vunpack.c.l.b16 %v1421
  %v1454 = vunpack.c.l.b16 %v1422
  %v1455 = vunpack.c.l.b16 %v1423
  %v1456 = vunpack.c.l.b16 %v1424
  %v1457 = vunpack.c.l.b16 %v1425
  %v1458 = vunpack.c.l.b16 %v1426
  %v1459 = vunpack.c.l.b16 %v1427
  %v1460 = vunpack.c.l.b16 %v1428
  %v1461 = vunpack.c.l.b16 %v1429
  %v1462 = vunpack.c.l.b16 %v1430
  %v1463 = vunpack.c.l.b16 %v1431
  %v1464 = vunpack.c.l.b16 %v1432
  %v1465 = vunpack.c.l.b16 %v1433
  %v1466 = vpack.c.b16 %v1451, %v1450
  %v1467 = vpack.c.b16 %v1453, %v1452
  %v1468 = vpack.c.b16 %v1455, %v1454
  %v1469 = vpack.c.b16 %v1457, %v1456
  %v1470 = vpack.c.b16 %v1459, %v1458
  %v1471 = vpack.c.b16 %v1461, %v1460
  %v1472 = vpack.c.b16 %v1463, %v1462
  %v1473 = vpack.c.b16 %v1465, %v1464
  %1482 = vmatprep.subr.bf16.mxu0 0
  %1483 = vmatpush1.bf16.msra.mxu0 %v1473
  %1484 = vmatprep.subr.bf16.mxu0 0
  %1485 = vmatpush1.bf16.msra.mxu0 %v1472
  %1486 = vmatprep.subr.bf16.mxu0 0
  %1487 = vmatpush1.bf16.msra.mxu0 %v1471
  %1488 = vmatprep.subr.bf16.mxu0 0
  %1489 = vmatpush1.bf16.msra.mxu0 %v1470
  %1490 = vmatprep.subr.bf16.mxu0 0
  %1491 = vmatpush1.bf16.msra.mxu0 %v1469
  %1492 = vmatprep.subr.bf16.mxu0 0
  %1493 = vmatpush1.bf16.msra.mxu0 %v1468
  %1494 = vmatprep.subr.bf16.mxu0 0
  %1495 = vmatpush1.bf16.msra.mxu0 %v1467
  %1496 = vmatprep.subr.bf16.mxu0 0
  %1497 = vmatpush1.bf16.msra.mxu0 %v1466
  %1498 = vmatprep.subr.bf16.mxu0 0
  %1499 = vmatpush2.bf16.msra.mxu0 0
  %1500 = vmatprep.subr.bf16.mxu0 0
  %1501 = vmatpush2.bf16.msra.mxu0 0
  %1502 = vmatprep.subr.bf16.mxu0 0
  %1503 = vmatpush2.bf16.msra.mxu0 0
  %1504 = vmatprep.subr.bf16.mxu0 0
  %1505 = vmatpush2.bf16.msra.mxu0 0
  %1506 = vmatprep.subr.bf16.mxu0 0
  %1507 = vmatpush2.bf16.msra.mxu0 0
  %1508 = vmatprep.subr.bf16.mxu0 0
  %1509 = vmatpush2.bf16.msra.mxu0 0
  %1510 = vmatprep.subr.bf16.mxu0 0
  %1511 = vmatpush2.bf16.msra.mxu0 0
  %1512 = vmatprep.subr.bf16.mxu0 0
  %1513 = vmatpush2.bf16.msra.mxu0 0
  %1514 = vmatprep.mubr.bf16.mxu0 0
  %1515 = vmatmul.mubr.bf16.gmra.mxu0 %v1416
  %v1516 = vpop.f32.mrf.mxu0
  %v1517 = vadd.f32 0.0, %v1516
  %v1518 = vpop.f32.mrf.mxu0
  %v1519 = vpop.f32.mrf.mxu0
  %v1520 = vpop.f32.mrf.mxu0
  %1521 = vdwg.mxu0
  %v1522 = vadd.f32 %v1414, %v1517
  %s1523 = scalar_lea.vmem %s0, 56
  %v1524 = vld [vmem:[%s1523] sm:$0xf]
  %s1525 = scalar_lea.vmem %s1, 896
  %v1526 = vld [vmem:[%s1525] sm:$0xf]
  %v1527 = vld [vmem:[%s1525 + $0x4] sm:$0xf]
  %v1528 = vld [vmem:[%s1525 + $0x8] sm:$0xf]
  %v1529 = vld [vmem:[%s1525 + $0xc] sm:$0xf]
  %v1530 = vld [vmem:[%s1525 + $0x10] sm:$0xf]
  %v1531 = vld [vmem:[%s1525 + $0x14] sm:$0xf]
  %v1532 = vld [vmem:[%s1525 + $0x18] sm:$0xf]
  %v1533 = vld [vmem:[%s1525 + $0x1c] sm:$0xf]
  %v1534 = vld [vmem:[%s1525 + $0x20] sm:$0xf]
  %v1535 = vld [vmem:[%s1525 + $0x24] sm:$0xf]
  %v1536 = vld [vmem:[%s1525 + $0x28] sm:$0xf]
  %v1537 = vld [vmem:[%s1525 + $0x2c] sm:$0xf]
  %v1538 = vld [vmem:[%s1525 + $0x30] sm:$0xf]
  %v1539 = vld [vmem:[%s1525 + $0x34] sm:$0xf]
  %v1540 = vld [vmem:[%s1525 + $0x38] sm:$0xf]
  %v1541 = vld [vmem:[%s1525 + $0x3c] sm:$0xf]
  %v1558 = vunpack.c.l.b16 %v1526
  %v1559 = vunpack.c.l.b16 %v1527
  %v1560 = vunpack.c.l.b16 %v1528
  %v1561 = vunpack.c.l.b16 %v1529
  %v1562 = vunpack.c.l.b16 %v1530
  %v1563 = vunpack.c.l.b16 %v1531
  %v1564 = vunpack.c.l.b16 %v1532
  %v1565 = vunpack.c.l.b16 %v1533
  %v1566 = vunpack.c.l.b16 %v1534
  %v1567 = vunpack.c.l.b16 %v1535
  %v1568 = vunpack.c.l.b16 %v1536
  %v1569 = vunpack.c.l.b16 %v1537
  %v1570 = vunpack.c.l.b16 %v1538
  %v1571 = vunpack.c.l.b16 %v1539
  %v1572 = vunpack.c.l.b16 %v1540
  %v1573 = vunpack.c.l.b16 %v1541
  %v1574 = vpack.c.b16 %v1559, %v1558
  %v1575 = vpack.c.b16 %v1561, %v1560
  %v1576 = vpack.c.b16 %v1563, %v1562
  %v1577 = vpack.c.b16 %v1565, %v1564
  %v1578 = vpack.c.b16 %v1567, %v1566
  %v1579 = vpack.c.b16 %v1569, %v1568
  %v1580 = vpack.c.b16 %v1571, %v1570
  %v1581 = vpack.c.b16 %v1573, %v1572
  %1590 = vmatprep.subr.bf16.mxu0 0
  %1591 = vmatpush1.bf16.msra.mxu0 %v1581
  %1592 = vmatprep.subr.bf16.mxu0 0
  %1593 = vmatpush1.bf16.msra.mxu0 %v1580
  %1594 = vmatprep.subr.bf16.mxu0 0
  %1595 = vmatpush1.bf16.msra.mxu0 %v1579
  %1596 = vmatprep.subr.bf16.mxu0 0
  %1597 = vmatpush1.bf16.msra.mxu0 %v1578
  %1598 = vmatprep.subr.bf16.mxu0 0
  %1599 = vmatpush1.bf16.msra.mxu0 %v1577
  %1600 = vmatprep.subr.bf16.mxu0 0
  %1601 = vmatpush1.bf16.msra.mxu0 %v1576
  %1602 = vmatprep.subr.bf16.mxu0 0
  %1603 = vmatpush1.bf16.msra.mxu0 %v1575
  %1604 = vmatprep.subr.bf16.mxu0 0
  %1605 = vmatpush1.bf16.msra.mxu0 %v1574
  %1606 = vmatprep.subr.bf16.mxu0 0
  %1607 = vmatpush2.bf16.msra.mxu0 0
  %1608 = vmatprep.subr.bf16.mxu0 0
  %1609 = vmatpush2.bf16.msra.mxu0 0
  %1610 = vmatprep.subr.bf16.mxu0 0
  %1611 = vmatpush2.bf16.msra.mxu0 0
  %1612 = vmatprep.subr.bf16.mxu0 0
  %1613 = vmatpush2.bf16.msra.mxu0 0
  %1614 = vmatprep.subr.bf16.mxu0 0
  %1615 = vmatpush2.bf16.msra.mxu0 0
  %1616 = vmatprep.subr.bf16.mxu0 0
  %1617 = vmatpush2.bf16.msra.mxu0 0
  %1618 = vmatprep.subr.bf16.mxu0 0
  %1619 = vmatpush2.bf16.msra.mxu0 0
  %1620 = vmatprep.subr.bf16.mxu0 0
  %1621 = vmatpush2.bf16.msra.mxu0 0
  %1622 = vmatprep.mubr.bf16.mxu0 0
  %1623 = vmatmul.mubr.bf16.gmra.mxu0 %v1524
  %v1624 = vpop.f32.mrf.mxu0
  %v1625 = vadd.f32 0.0, %v1624
  %v1626 = vpop.f32.mrf.mxu0
  %v1627 = vpop.f32.mrf.mxu0
  %v1628 = vpop.f32.mrf.mxu0
  %1629 = vdwg.mxu0
  %v1630 = vadd.f32 %v1522, %v1625
  %s1631 = scalar_lea.vmem %s0, 60
  %v1632 = vld [vmem:[%s1631] sm:$0xf]
  %s1633 = scalar_lea.vmem %s1, 960
  %v1634 = vld [vmem:[%s1633] sm:$0xf]
  %v1635 = vld [vmem:[%s1633 + $0x4] sm:$0xf]
  %v1636 = vld [vmem:[%s1633 + $0x8] sm:$0xf]
  %v1637 = vld [vmem:[%s1633 + $0xc] sm:$0xf]
  %v1638 = vld [vmem:[%s1633 + $0x10] sm:$0xf]
  %v1639 = vld [vmem:[%s1633 + $0x14] sm:$0xf]
  %v1640 = vld [vmem:[%s1633 + $0x18] sm:$0xf]
  %v1641 = vld [vmem:[%s1633 + $0x1c] sm:$0xf]
  %v1642 = vld [vmem:[%s1633 + $0x20] sm:$0xf]
  %v1643 = vld [vmem:[%s1633 + $0x24] sm:$0xf]
  %v1644 = vld [vmem:[%s1633 + $0x28] sm:$0xf]
  %v1645 = vld [vmem:[%s1633 + $0x2c] sm:$0xf]
  %v1646 = vld [vmem:[%s1633 + $0x30] sm:$0xf]
  %v1647 = vld [vmem:[%s1633 + $0x34] sm:$0xf]
  %v1648 = vld [vmem:[%s1633 + $0x38] sm:$0xf]
  %v1649 = vld [vmem:[%s1633 + $0x3c] sm:$0xf]
  %v1666 = vunpack.c.l.b16 %v1634
  %v1667 = vunpack.c.l.b16 %v1635
  %v1668 = vunpack.c.l.b16 %v1636
  %v1669 = vunpack.c.l.b16 %v1637
  %v1670 = vunpack.c.l.b16 %v1638
  %v1671 = vunpack.c.l.b16 %v1639
  %v1672 = vunpack.c.l.b16 %v1640
  %v1673 = vunpack.c.l.b16 %v1641
  %v1674 = vunpack.c.l.b16 %v1642
  %v1675 = vunpack.c.l.b16 %v1643
  %v1676 = vunpack.c.l.b16 %v1644
  %v1677 = vunpack.c.l.b16 %v1645
  %v1678 = vunpack.c.l.b16 %v1646
  %v1679 = vunpack.c.l.b16 %v1647
  %v1680 = vunpack.c.l.b16 %v1648
  %v1681 = vunpack.c.l.b16 %v1649
  %v1682 = vpack.c.b16 %v1667, %v1666
  %v1683 = vpack.c.b16 %v1669, %v1668
  %v1684 = vpack.c.b16 %v1671, %v1670
  %v1685 = vpack.c.b16 %v1673, %v1672
  %v1686 = vpack.c.b16 %v1675, %v1674
  %v1687 = vpack.c.b16 %v1677, %v1676
  %v1688 = vpack.c.b16 %v1679, %v1678
  %v1689 = vpack.c.b16 %v1681, %v1680
  %1698 = vmatprep.subr.bf16.mxu0 0
  %1699 = vmatpush1.bf16.msra.mxu0 %v1689
  %1700 = vmatprep.subr.bf16.mxu0 0
  %1701 = vmatpush1.bf16.msra.mxu0 %v1688
  %1702 = vmatprep.subr.bf16.mxu0 0
  %1703 = vmatpush1.bf16.msra.mxu0 %v1687
  %1704 = vmatprep.subr.bf16.mxu0 0
  %1705 = vmatpush1.bf16.msra.mxu0 %v1686
  %1706 = vmatprep.subr.bf16.mxu0 0
  %1707 = vmatpush1.bf16.msra.mxu0 %v1685
  %1708 = vmatprep.subr.bf16.mxu0 0
  %1709 = vmatpush1.bf16.msra.mxu0 %v1684
  %1710 = vmatprep.subr.bf16.mxu0 0
  %1711 = vmatpush1.bf16.msra.mxu0 %v1683
  %1712 = vmatprep.subr.bf16.mxu0 0
  %1713 = vmatpush1.bf16.msra.mxu0 %v1682
  %1714 = vmatprep.subr.bf16.mxu0 0
  %1715 = vmatpush2.bf16.msra.mxu0 0
  %1716 = vmatprep.subr.bf16.mxu0 0
  %1717 = vmatpush2.bf16.msra.mxu0 0
  %1718 = vmatprep.subr.bf16.mxu0 0
  %1719 = vmatpush2.bf16.msra.mxu0 0
  %1720 = vmatprep.subr.bf16.mxu0 0
  %1721 = vmatpush2.bf16.msra.mxu0 0
  %1722 = vmatprep.subr.bf16.mxu0 0
  %1723 = vmatpush2.bf16.msra.mxu0 0
  %1724 = vmatprep.subr.bf16.mxu0 0
  %1725 = vmatpush2.bf16.msra.mxu0 0
  %1726 = vmatprep.subr.bf16.mxu0 0
  %1727 = vmatpush2.bf16.msra.mxu0 0
  %1728 = vmatprep.subr.bf16.mxu0 0
  %1729 = vmatpush2.bf16.msra.mxu0 0
  %1730 = vmatprep.mubr.bf16.mxu0 0
  %1731 = vmatmul.mubr.bf16.gmra.mxu0 %v1632
  %v1732 = vpop.f32.mrf.mxu0
  %v1733 = vadd.f32 0.0, %v1732
  %v1734 = vpop.f32.mrf.mxu0
  %v1735 = vpop.f32.mrf.mxu0
  %v1736 = vpop.f32.mrf.mxu0
  %1737 = vdwg.mxu0
  %v1738 = vadd.f32 %v1630, %v1733
  %s1739 = scalar_lea.vmem %s0, 64
  %v1740 = vld [vmem:[%s1739] sm:$0xf]
  %s1741 = scalar_lea.vmem %s1, 1024
  %v1742 = vld [vmem:[%s1741] sm:$0xf]
  %v1743 = vld [vmem:[%s1741 + $0x4] sm:$0xf]
  %v1744 = vld [vmem:[%s1741 + $0x8] sm:$0xf]
  %v1745 = vld [vmem:[%s1741 + $0xc] sm:$0xf]
  %v1746 = vld [vmem:[%s1741 + $0x10] sm:$0xf]
  %v1747 = vld [vmem:[%s1741 + $0x14] sm:$0xf]
  %v1748 = vld [vmem:[%s1741 + $0x18] sm:$0xf]
  %v1749 = vld [vmem:[%s1741 + $0x1c] sm:$0xf]
  %v1750 = vld [vmem:[%s1741 + $0x20] sm:$0xf]
  %v1751 = vld [vmem:[%s1741 + $0x24] sm:$0xf]
  %v1752 = vld [vmem:[%s1741 + $0x28] sm:$0xf]
  %v1753 = vld [vmem:[%s1741 + $0x2c] sm:$0xf]
  %v1754 = vld [vmem:[%s1741 + $0x30] sm:$0xf]
  %v1755 = vld [vmem:[%s1741 + $0x34] sm:$0xf]
  %v1756 = vld [vmem:[%s1741 + $0x38] sm:$0xf]
  %v1757 = vld [vmem:[%s1741 + $0x3c] sm:$0xf]
  %v1774 = vunpack.c.l.b16 %v1742
  %v1775 = vunpack.c.l.b16 %v1743
  %v1776 = vunpack.c.l.b16 %v1744
  %v1777 = vunpack.c.l.b16 %v1745
  %v1778 = vunpack.c.l.b16 %v1746
  %v1779 = vunpack.c.l.b16 %v1747
  %v1780 = vunpack.c.l.b16 %v1748
  %v1781 = vunpack.c.l.b16 %v1749
  %v1782 = vunpack.c.l.b16 %v1750
  %v1783 = vunpack.c.l.b16 %v1751
  %v1784 = vunpack.c.l.b16 %v1752
  %v1785 = vunpack.c.l.b16 %v1753
  %v1786 = vunpack.c.l.b16 %v1754
  %v1787 = vunpack.c.l.b16 %v1755
  %v1788 = vunpack.c.l.b16 %v1756
  %v1789 = vunpack.c.l.b16 %v1757
  %v1790 = vpack.c.b16 %v1775, %v1774
  %v1791 = vpack.c.b16 %v1777, %v1776
  %v1792 = vpack.c.b16 %v1779, %v1778
  %v1793 = vpack.c.b16 %v1781, %v1780
  %v1794 = vpack.c.b16 %v1783, %v1782
  %v1795 = vpack.c.b16 %v1785, %v1784
  %v1796 = vpack.c.b16 %v1787, %v1786
  %v1797 = vpack.c.b16 %v1789, %v1788
  %1806 = vmatprep.subr.bf16.mxu0 0
  %1807 = vmatpush1.bf16.msra.mxu0 %v1797
  %1808 = vmatprep.subr.bf16.mxu0 0
  %1809 = vmatpush1.bf16.msra.mxu0 %v1796
  %1810 = vmatprep.subr.bf16.mxu0 0
  %1811 = vmatpush1.bf16.msra.mxu0 %v1795
  %1812 = vmatprep.subr.bf16.mxu0 0
  %1813 = vmatpush1.bf16.msra.mxu0 %v1794
  %1814 = vmatprep.subr.bf16.mxu0 0
  %1815 = vmatpush1.bf16.msra.mxu0 %v1793
  %1816 = vmatprep.subr.bf16.mxu0 0
  %1817 = vmatpush1.bf16.msra.mxu0 %v1792
  %1818 = vmatprep.subr.bf16.mxu0 0
  %1819 = vmatpush1.bf16.msra.mxu0 %v1791
  %1820 = vmatprep.subr.bf16.mxu0 0
  %1821 = vmatpush1.bf16.msra.mxu0 %v1790
  %1822 = vmatprep.subr.bf16.mxu0 0
  %1823 = vmatpush2.bf16.msra.mxu0 0
  %1824 = vmatprep.subr.bf16.mxu0 0
  %1825 = vmatpush2.bf16.msra.mxu0 0
  %1826 = vmatprep.subr.bf16.mxu0 0
  %1827 = vmatpush2.bf16.msra.mxu0 0
  %1828 = vmatprep.subr.bf16.mxu0 0
  %1829 = vmatpush2.bf16.msra.mxu0 0
  %1830 = vmatprep.subr.bf16.mxu0 0
  %1831 = vmatpush2.bf16.msra.mxu0 0
  %1832 = vmatprep.subr.bf16.mxu0 0
  %1833 = vmatpush2.bf16.msra.mxu0 0
  %1834 = vmatprep.subr.bf16.mxu0 0
  %1835 = vmatpush2.bf16.msra.mxu0 0
  %1836 = vmatprep.subr.bf16.mxu0 0
  %1837 = vmatpush2.bf16.msra.mxu0 0
  %1838 = vmatprep.mubr.bf16.mxu0 0
  %1839 = vmatmul.mubr.bf16.gmra.mxu0 %v1740
  %v1840 = vpop.f32.mrf.mxu0
  %v1841 = vadd.f32 0.0, %v1840
  %v1842 = vpop.f32.mrf.mxu0
  %v1843 = vpop.f32.mrf.mxu0
  %v1844 = vpop.f32.mrf.mxu0
  %1845 = vdwg.mxu0
  %v1846 = vadd.f32 %v1738, %v1841
  %s1847 = scalar_lea.vmem %s0, 68
  %v1848 = vld [vmem:[%s1847] sm:$0xf]
  %s1849 = scalar_lea.vmem %s1, 1088
  %v1850 = vld [vmem:[%s1849] sm:$0xf]
  %v1851 = vld [vmem:[%s1849 + $0x4] sm:$0xf]
  %v1852 = vld [vmem:[%s1849 + $0x8] sm:$0xf]
  %v1853 = vld [vmem:[%s1849 + $0xc] sm:$0xf]
  %v1854 = vld [vmem:[%s1849 + $0x10] sm:$0xf]
  %v1855 = vld [vmem:[%s1849 + $0x14] sm:$0xf]
  %v1856 = vld [vmem:[%s1849 + $0x18] sm:$0xf]
  %v1857 = vld [vmem:[%s1849 + $0x1c] sm:$0xf]
  %v1858 = vld [vmem:[%s1849 + $0x20] sm:$0xf]
  %v1859 = vld [vmem:[%s1849 + $0x24] sm:$0xf]
  %v1860 = vld [vmem:[%s1849 + $0x28] sm:$0xf]
  %v1861 = vld [vmem:[%s1849 + $0x2c] sm:$0xf]
  %v1862 = vld [vmem:[%s1849 + $0x30] sm:$0xf]
  %v1863 = vld [vmem:[%s1849 + $0x34] sm:$0xf]
  %v1864 = vld [vmem:[%s1849 + $0x38] sm:$0xf]
  %v1865 = vld [vmem:[%s1849 + $0x3c] sm:$0xf]
  %v1882 = vunpack.c.l.b16 %v1850
  %v1883 = vunpack.c.l.b16 %v1851
  %v1884 = vunpack.c.l.b16 %v1852
  %v1885 = vunpack.c.l.b16 %v1853
  %v1886 = vunpack.c.l.b16 %v1854
  %v1887 = vunpack.c.l.b16 %v1855
  %v1888 = vunpack.c.l.b16 %v1856
  %v1889 = vunpack.c.l.b16 %v1857
  %v1890 = vunpack.c.l.b16 %v1858
  %v1891 = vunpack.c.l.b16 %v1859
  %v1892 = vunpack.c.l.b16 %v1860
  %v1893 = vunpack.c.l.b16 %v1861
  %v1894 = vunpack.c.l.b16 %v1862
  %v1895 = vunpack.c.l.b16 %v1863
  %v1896 = vunpack.c.l.b16 %v1864
  %v1897 = vunpack.c.l.b16 %v1865
  %v1898 = vpack.c.b16 %v1883, %v1882
  %v1899 = vpack.c.b16 %v1885, %v1884
  %v1900 = vpack.c.b16 %v1887, %v1886
  %v1901 = vpack.c.b16 %v1889, %v1888
  %v1902 = vpack.c.b16 %v1891, %v1890
  %v1903 = vpack.c.b16 %v1893, %v1892
  %v1904 = vpack.c.b16 %v1895, %v1894
  %v1905 = vpack.c.b16 %v1897, %v1896
  %1914 = vmatprep.subr.bf16.mxu0 0
  %1915 = vmatpush1.bf16.msra.mxu0 %v1905
  %1916 = vmatprep.subr.bf16.mxu0 0
  %1917 = vmatpush1.bf16.msra.mxu0 %v1904
  %1918 = vmatprep.subr.bf16.mxu0 0
  %1919 = vmatpush1.bf16.msra.mxu0 %v1903
  %1920 = vmatprep.subr.bf16.mxu0 0
  %1921 = vmatpush1.bf16.msra.mxu0 %v1902
  %1922 = vmatprep.subr.bf16.mxu0 0
  %1923 = vmatpush1.bf16.msra.mxu0 %v1901
  %1924 = vmatprep.subr.bf16.mxu0 0
  %1925 = vmatpush1.bf16.msra.mxu0 %v1900
  %1926 = vmatprep.subr.bf16.mxu0 0
  %1927 = vmatpush1.bf16.msra.mxu0 %v1899
  %1928 = vmatprep.subr.bf16.mxu0 0
  %1929 = vmatpush1.bf16.msra.mxu0 %v1898
  %1930 = vmatprep.subr.bf16.mxu0 0
  %1931 = vmatpush2.bf16.msra.mxu0 0
  %1932 = vmatprep.subr.bf16.mxu0 0
  %1933 = vmatpush2.bf16.msra.mxu0 0
  %1934 = vmatprep.subr.bf16.mxu0 0
  %1935 = vmatpush2.bf16.msra.mxu0 0
  %1936 = vmatprep.subr.bf16.mxu0 0
  %1937 = vmatpush2.bf16.msra.mxu0 0
  %1938 = vmatprep.subr.bf16.mxu0 0
  %1939 = vmatpush2.bf16.msra.mxu0 0
  %1940 = vmatprep.subr.bf16.mxu0 0
  %1941 = vmatpush2.bf16.msra.mxu0 0
  %1942 = vmatprep.subr.bf16.mxu0 0
  %1943 = vmatpush2.bf16.msra.mxu0 0
  %1944 = vmatprep.subr.bf16.mxu0 0
  %1945 = vmatpush2.bf16.msra.mxu0 0
  %1946 = vmatprep.mubr.bf16.mxu0 0
  %1947 = vmatmul.mubr.bf16.gmra.mxu0 %v1848
  %v1948 = vpop.f32.mrf.mxu0
  %v1949 = vadd.f32 0.0, %v1948
  %v1950 = vpop.f32.mrf.mxu0
  %v1951 = vpop.f32.mrf.mxu0
  %v1952 = vpop.f32.mrf.mxu0
  %1953 = vdwg.mxu0
  %v1954 = vadd.f32 %v1846, %v1949
  %s1955 = scalar_lea.vmem %s0, 72
  %v1956 = vld [vmem:[%s1955] sm:$0xf]
  %s1957 = scalar_lea.vmem %s1, 1152
  %v1958 = vld [vmem:[%s1957] sm:$0xf]
  %v1959 = vld [vmem:[%s1957 + $0x4] sm:$0xf]
  %v1960 = vld [vmem:[%s1957 + $0x8] sm:$0xf]
  %v1961 = vld [vmem:[%s1957 + $0xc] sm:$0xf]
  %v1962 = vld [vmem:[%s1957 + $0x10] sm:$0xf]
  %v1963 = vld [vmem:[%s1957 + $0x14] sm:$0xf]
  %v1964 = vld [vmem:[%s1957 + $0x18] sm:$0xf]
  %v1965 = vld [vmem:[%s1957 + $0x1c] sm:$0xf]
  %v1966 = vld [vmem:[%s1957 + $0x20] sm:$0xf]
  %v1967 = vld [vmem:[%s1957 + $0x24] sm:$0xf]
  %v1968 = vld [vmem:[%s1957 + $0x28] sm:$0xf]
  %v1969 = vld [vmem:[%s1957 + $0x2c] sm:$0xf]
  %v1970 = vld [vmem:[%s1957 + $0x30] sm:$0xf]
  %v1971 = vld [vmem:[%s1957 + $0x34] sm:$0xf]
  %v1972 = vld [vmem:[%s1957 + $0x38] sm:$0xf]
  %v1973 = vld [vmem:[%s1957 + $0x3c] sm:$0xf]
  %v1990 = vunpack.c.l.b16 %v1958
  %v1991 = vunpack.c.l.b16 %v1959
  %v1992 = vunpack.c.l.b16 %v1960
  %v1993 = vunpack.c.l.b16 %v1961
  %v1994 = vunpack.c.l.b16 %v1962
  %v1995 = vunpack.c.l.b16 %v1963
  %v1996 = vunpack.c.l.b16 %v1964
  %v1997 = vunpack.c.l.b16 %v1965
  %v1998 = vunpack.c.l.b16 %v1966
  %v1999 = vunpack.c.l.b16 %v1967
  %v2000 = vunpack.c.l.b16 %v1968
  %v2001 = vunpack.c.l.b16 %v1969
  %v2002 = vunpack.c.l.b16 %v1970
  %v2003 = vunpack.c.l.b16 %v1971
  %v2004 = vunpack.c.l.b16 %v1972
  %v2005 = vunpack.c.l.b16 %v1973
  %v2006 = vpack.c.b16 %v1991, %v1990
  %v2007 = vpack.c.b16 %v1993, %v1992
  %v2008 = vpack.c.b16 %v1995, %v1994
  %v2009 = vpack.c.b16 %v1997, %v1996
  %v2010 = vpack.c.b16 %v1999, %v1998
  %v2011 = vpack.c.b16 %v2001, %v2000
  %v2012 = vpack.c.b16 %v2003, %v2002
  %v2013 = vpack.c.b16 %v2005, %v2004
  %2022 = vmatprep.subr.bf16.mxu0 0
  %2023 = vmatpush1.bf16.msra.mxu0 %v2013
  %2024 = vmatprep.subr.bf16.mxu0 0
  %2025 = vmatpush1.bf16.msra.mxu0 %v2012
  %2026 = vmatprep.subr.bf16.mxu0 0
  %2027 = vmatpush1.bf16.msra.mxu0 %v2011
  %2028 = vmatprep.subr.bf16.mxu0 0
  %2029 = vmatpush1.bf16.msra.mxu0 %v2010
  %2030 = vmatprep.subr.bf16.mxu0 0
  %2031 = vmatpush1.bf16.msra.mxu0 %v2009
  %2032 = vmatprep.subr.bf16.mxu0 0
  %2033 = vmatpush1.bf16.msra.mxu0 %v2008
  %2034 = vmatprep.subr.bf16.mxu0 0
  %2035 = vmatpush1.bf16.msra.mxu0 %v2007
  %2036 = vmatprep.subr.bf16.mxu0 0
  %2037 = vmatpush1.bf16.msra.mxu0 %v2006
  %2038 = vmatprep.subr.bf16.mxu0 0
  %2039 = vmatpush2.bf16.msra.mxu0 0
  %2040 = vmatprep.subr.bf16.mxu0 0
  %2041 = vmatpush2.bf16.msra.mxu0 0
  %2042 = vmatprep.subr.bf16.mxu0 0
  %2043 = vmatpush2.bf16.msra.mxu0 0
  %2044 = vmatprep.subr.bf16.mxu0 0
  %2045 = vmatpush2.bf16.msra.mxu0 0
  %2046 = vmatprep.subr.bf16.mxu0 0
  %2047 = vmatpush2.bf16.msra.mxu0 0
  %2048 = vmatprep.subr.bf16.mxu0 0
  %2049 = vmatpush2.bf16.msra.mxu0 0
  %2050 = vmatprep.subr.bf16.mxu0 0
  %2051 = vmatpush2.bf16.msra.mxu0 0
  %2052 = vmatprep.subr.bf16.mxu0 0
  %2053 = vmatpush2.bf16.msra.mxu0 0
  %2054 = vmatprep.mubr.bf16.mxu0 0
  %2055 = vmatmul.mubr.bf16.gmra.mxu0 %v1956
  %v2056 = vpop.f32.mrf.mxu0
  %v2057 = vadd.f32 0.0, %v2056
  %v2058 = vpop.f32.mrf.mxu0
  %v2059 = vpop.f32.mrf.mxu0
  %v2060 = vpop.f32.mrf.mxu0
  %2061 = vdwg.mxu0
  %v2062 = vadd.f32 %v1954, %v2057
  %s2063 = scalar_lea.vmem %s0, 76
  %v2064 = vld [vmem:[%s2063] sm:$0xf]
  %s2065 = scalar_lea.vmem %s1, 1216
  %v2066 = vld [vmem:[%s2065] sm:$0xf]
  %v2067 = vld [vmem:[%s2065 + $0x4] sm:$0xf]
  %v2068 = vld [vmem:[%s2065 + $0x8] sm:$0xf]
  %v2069 = vld [vmem:[%s2065 + $0xc] sm:$0xf]
  %v2070 = vld [vmem:[%s2065 + $0x10] sm:$0xf]
  %v2071 = vld [vmem:[%s2065 + $0x14] sm:$0xf]
  %v2072 = vld [vmem:[%s2065 + $0x18] sm:$0xf]
  %v2073 = vld [vmem:[%s2065 + $0x1c] sm:$0xf]
  %v2074 = vld [vmem:[%s2065 + $0x20] sm:$0xf]
  %v2075 = vld [vmem:[%s2065 + $0x24] sm:$0xf]
  %v2076 = vld [vmem:[%s2065 + $0x28] sm:$0xf]
  %v2077 = vld [vmem:[%s2065 + $0x2c] sm:$0xf]
  %v2078 = vld [vmem:[%s2065 + $0x30] sm:$0xf]
  %v2079 = vld [vmem:[%s2065 + $0x34] sm:$0xf]
  %v2080 = vld [vmem:[%s2065 + $0x38] sm:$0xf]
  %v2081 = vld [vmem:[%s2065 + $0x3c] sm:$0xf]
  %v2098 = vunpack.c.l.b16 %v2066
  %v2099 = vunpack.c.l.b16 %v2067
  %v2100 = vunpack.c.l.b16 %v2068
  %v2101 = vunpack.c.l.b16 %v2069
  %v2102 = vunpack.c.l.b16 %v2070
  %v2103 = vunpack.c.l.b16 %v2071
  %v2104 = vunpack.c.l.b16 %v2072
  %v2105 = vunpack.c.l.b16 %v2073
  %v2106 = vunpack.c.l.b16 %v2074
  %v2107 = vunpack.c.l.b16 %v2075
  %v2108 = vunpack.c.l.b16 %v2076
  %v2109 = vunpack.c.l.b16 %v2077
  %v2110 = vunpack.c.l.b16 %v2078
  %v2111 = vunpack.c.l.b16 %v2079
  %v2112 = vunpack.c.l.b16 %v2080
  %v2113 = vunpack.c.l.b16 %v2081
  %v2114 = vpack.c.b16 %v2099, %v2098
  %v2115 = vpack.c.b16 %v2101, %v2100
  %v2116 = vpack.c.b16 %v2103, %v2102
  %v2117 = vpack.c.b16 %v2105, %v2104
  %v2118 = vpack.c.b16 %v2107, %v2106
  %v2119 = vpack.c.b16 %v2109, %v2108
  %v2120 = vpack.c.b16 %v2111, %v2110
  %v2121 = vpack.c.b16 %v2113, %v2112
  %2130 = vmatprep.subr.bf16.mxu0 0
  %2131 = vmatpush1.bf16.msra.mxu0 %v2121
  %2132 = vmatprep.subr.bf16.mxu0 0
  %2133 = vmatpush1.bf16.msra.mxu0 %v2120
  %2134 = vmatprep.subr.bf16.mxu0 0
  %2135 = vmatpush1.bf16.msra.mxu0 %v2119
  %2136 = vmatprep.subr.bf16.mxu0 0
  %2137 = vmatpush1.bf16.msra.mxu0 %v2118
  %2138 = vmatprep.subr.bf16.mxu0 0
  %2139 = vmatpush1.bf16.msra.mxu0 %v2117
  %2140 = vmatprep.subr.bf16.mxu0 0
  %2141 = vmatpush1.bf16.msra.mxu0 %v2116
  %2142 = vmatprep.subr.bf16.mxu0 0
  %2143 = vmatpush1.bf16.msra.mxu0 %v2115
  %2144 = vmatprep.subr.bf16.mxu0 0
  %2145 = vmatpush1.bf16.msra.mxu0 %v2114
  %2146 = vmatprep.subr.bf16.mxu0 0
  %2147 = vmatpush2.bf16.msra.mxu0 0
  %2148 = vmatprep.subr.bf16.mxu0 0
  %2149 = vmatpush2.bf16.msra.mxu0 0
  %2150 = vmatprep.subr.bf16.mxu0 0
  %2151 = vmatpush2.bf16.msra.mxu0 0
  %2152 = vmatprep.subr.bf16.mxu0 0
  %2153 = vmatpush2.bf16.msra.mxu0 0
  %2154 = vmatprep.subr.bf16.mxu0 0
  %2155 = vmatpush2.bf16.msra.mxu0 0
  %2156 = vmatprep.subr.bf16.mxu0 0
  %2157 = vmatpush2.bf16.msra.mxu0 0
  %2158 = vmatprep.subr.bf16.mxu0 0
  %2159 = vmatpush2.bf16.msra.mxu0 0
  %2160 = vmatprep.subr.bf16.mxu0 0
  %2161 = vmatpush2.bf16.msra.mxu0 0
  %2162 = vmatprep.mubr.bf16.mxu0 0
  %2163 = vmatmul.mubr.bf16.gmra.mxu0 %v2064
  %v2164 = vpop.f32.mrf.mxu0
  %v2165 = vadd.f32 0.0, %v2164
  %v2166 = vpop.f32.mrf.mxu0
  %v2167 = vpop.f32.mrf.mxu0
  %v2168 = vpop.f32.mrf.mxu0
  %2169 = vdwg.mxu0
  %v2170 = vadd.f32 %v2062, %v2165
  %s2171 = scalar_lea.vmem %s0, 80
  %v2172 = vld [vmem:[%s2171] sm:$0xf]
  %s2173 = scalar_lea.vmem %s1, 1280
  %v2174 = vld [vmem:[%s2173] sm:$0xf]
  %v2175 = vld [vmem:[%s2173 + $0x4] sm:$0xf]
  %v2176 = vld [vmem:[%s2173 + $0x8] sm:$0xf]
  %v2177 = vld [vmem:[%s2173 + $0xc] sm:$0xf]
  %v2178 = vld [vmem:[%s2173 + $0x10] sm:$0xf]
  %v2179 = vld [vmem:[%s2173 + $0x14] sm:$0xf]
  %v2180 = vld [vmem:[%s2173 + $0x18] sm:$0xf]
  %v2181 = vld [vmem:[%s2173 + $0x1c] sm:$0xf]
  %v2182 = vld [vmem:[%s2173 + $0x20] sm:$0xf]
  %v2183 = vld [vmem:[%s2173 + $0x24] sm:$0xf]
  %v2184 = vld [vmem:[%s2173 + $0x28] sm:$0xf]
  %v2185 = vld [vmem:[%s2173 + $0x2c] sm:$0xf]
  %v2186 = vld [vmem:[%s2173 + $0x30] sm:$0xf]
  %v2187 = vld [vmem:[%s2173 + $0x34] sm:$0xf]
  %v2188 = vld [vmem:[%s2173 + $0x38] sm:$0xf]
  %v2189 = vld [vmem:[%s2173 + $0x3c] sm:$0xf]
  %v2206 = vunpack.c.l.b16 %v2174
  %v2207 = vunpack.c.l.b16 %v2175
  %v2208 = vunpack.c.l.b16 %v2176
  %v2209 = vunpack.c.l.b16 %v2177
  %v2210 = vunpack.c.l.b16 %v2178
  %v2211 = vunpack.c.l.b16 %v2179
  %v2212 = vunpack.c.l.b16 %v2180
  %v2213 = vunpack.c.l.b16 %v2181
  %v2214 = vunpack.c.l.b16 %v2182
  %v2215 = vunpack.c.l.b16 %v2183
  %v2216 = vunpack.c.l.b16 %v2184
  %v2217 = vunpack.c.l.b16 %v2185
  %v2218 = vunpack.c.l.b16 %v2186
  %v2219 = vunpack.c.l.b16 %v2187
  %v2220 = vunpack.c.l.b16 %v2188
  %v2221 = vunpack.c.l.b16 %v2189
  %v2222 = vpack.c.b16 %v2207, %v2206
  %v2223 = vpack.c.b16 %v2209, %v2208
  %v2224 = vpack.c.b16 %v2211, %v2210
  %v2225 = vpack.c.b16 %v2213, %v2212
  %v2226 = vpack.c.b16 %v2215, %v2214
  %v2227 = vpack.c.b16 %v2217, %v2216
  %v2228 = vpack.c.b16 %v2219, %v2218
  %v2229 = vpack.c.b16 %v2221, %v2220
  %2238 = vmatprep.subr.bf16.mxu0 0
  %2239 = vmatpush1.bf16.msra.mxu0 %v2229
  %2240 = vmatprep.subr.bf16.mxu0 0
  %2241 = vmatpush1.bf16.msra.mxu0 %v2228
  %2242 = vmatprep.subr.bf16.mxu0 0
  %2243 = vmatpush1.bf16.msra.mxu0 %v2227
  %2244 = vmatprep.subr.bf16.mxu0 0
  %2245 = vmatpush1.bf16.msra.mxu0 %v2226
  %2246 = vmatprep.subr.bf16.mxu0 0
  %2247 = vmatpush1.bf16.msra.mxu0 %v2225
  %2248 = vmatprep.subr.bf16.mxu0 0
  %2249 = vmatpush1.bf16.msra.mxu0 %v2224
  %2250 = vmatprep.subr.bf16.mxu0 0
  %2251 = vmatpush1.bf16.msra.mxu0 %v2223
  %2252 = vmatprep.subr.bf16.mxu0 0
  %2253 = vmatpush1.bf16.msra.mxu0 %v2222
  %2254 = vmatprep.subr.bf16.mxu0 0
  %2255 = vmatpush2.bf16.msra.mxu0 0
  %2256 = vmatprep.subr.bf16.mxu0 0
  %2257 = vmatpush2.bf16.msra.mxu0 0
  %2258 = vmatprep.subr.bf16.mxu0 0
  %2259 = vmatpush2.bf16.msra.mxu0 0
  %2260 = vmatprep.subr.bf16.mxu0 0
  %2261 = vmatpush2.bf16.msra.mxu0 0
  %2262 = vmatprep.subr.bf16.mxu0 0
  %2263 = vmatpush2.bf16.msra.mxu0 0
  %2264 = vmatprep.subr.bf16.mxu0 0
  %2265 = vmatpush2.bf16.msra.mxu0 0
  %2266 = vmatprep.subr.bf16.mxu0 0
  %2267 = vmatpush2.bf16.msra.mxu0 0
  %2268 = vmatprep.subr.bf16.mxu0 0
  %2269 = vmatpush2.bf16.msra.mxu0 0
  %2270 = vmatprep.mubr.bf16.mxu0 0
  %2271 = vmatmul.mubr.bf16.gmra.mxu0 %v2172
  %v2272 = vpop.f32.mrf.mxu0
  %v2273 = vadd.f32 0.0, %v2272
  %v2274 = vpop.f32.mrf.mxu0
  %v2275 = vpop.f32.mrf.mxu0
  %v2276 = vpop.f32.mrf.mxu0
  %2277 = vdwg.mxu0
  %v2278 = vadd.f32 %v2170, %v2273
  %s2279 = scalar_lea.vmem %s0, 84
  %v2280 = vld [vmem:[%s2279] sm:$0xf]
  %s2281 = scalar_lea.vmem %s1, 1344
  %v2282 = vld [vmem:[%s2281] sm:$0xf]
  %v2283 = vld [vmem:[%s2281 + $0x4] sm:$0xf]
  %v2284 = vld [vmem:[%s2281 + $0x8] sm:$0xf]
  %v2285 = vld [vmem:[%s2281 + $0xc] sm:$0xf]
  %v2286 = vld [vmem:[%s2281 + $0x10] sm:$0xf]
  %v2287 = vld [vmem:[%s2281 + $0x14] sm:$0xf]
  %v2288 = vld [vmem:[%s2281 + $0x18] sm:$0xf]
  %v2289 = vld [vmem:[%s2281 + $0x1c] sm:$0xf]
  %v2290 = vld [vmem:[%s2281 + $0x20] sm:$0xf]
  %v2291 = vld [vmem:[%s2281 + $0x24] sm:$0xf]
  %v2292 = vld [vmem:[%s2281 + $0x28] sm:$0xf]
  %v2293 = vld [vmem:[%s2281 + $0x2c] sm:$0xf]
  %v2294 = vld [vmem:[%s2281 + $0x30] sm:$0xf]
  %v2295 = vld [vmem:[%s2281 + $0x34] sm:$0xf]
  %v2296 = vld [vmem:[%s2281 + $0x38] sm:$0xf]
  %v2297 = vld [vmem:[%s2281 + $0x3c] sm:$0xf]
  %v2314 = vunpack.c.l.b16 %v2282
  %v2315 = vunpack.c.l.b16 %v2283
  %v2316 = vunpack.c.l.b16 %v2284
  %v2317 = vunpack.c.l.b16 %v2285
  %v2318 = vunpack.c.l.b16 %v2286
  %v2319 = vunpack.c.l.b16 %v2287
  %v2320 = vunpack.c.l.b16 %v2288
  %v2321 = vunpack.c.l.b16 %v2289
  %v2322 = vunpack.c.l.b16 %v2290
  %v2323 = vunpack.c.l.b16 %v2291
  %v2324 = vunpack.c.l.b16 %v2292
  %v2325 = vunpack.c.l.b16 %v2293
  %v2326 = vunpack.c.l.b16 %v2294
  %v2327 = vunpack.c.l.b16 %v2295
  %v2328 = vunpack.c.l.b16 %v2296
  %v2329 = vunpack.c.l.b16 %v2297
  %v2330 = vpack.c.b16 %v2315, %v2314
  %v2331 = vpack.c.b16 %v2317, %v2316
  %v2332 = vpack.c.b16 %v2319, %v2318
  %v2333 = vpack.c.b16 %v2321, %v2320
  %v2334 = vpack.c.b16 %v2323, %v2322
  %v2335 = vpack.c.b16 %v2325, %v2324
  %v2336 = vpack.c.b16 %v2327, %v2326
  %v2337 = vpack.c.b16 %v2329, %v2328
  %2346 = vmatprep.subr.bf16.mxu0 0
  %2347 = vmatpush1.bf16.msra.mxu0 %v2337
  %2348 = vmatprep.subr.bf16.mxu0 0
  %2349 = vmatpush1.bf16.msra.mxu0 %v2336
  %2350 = vmatprep.subr.bf16.mxu0 0
  %2351 = vmatpush1.bf16.msra.mxu0 %v2335
  %2352 = vmatprep.subr.bf16.mxu0 0
  %2353 = vmatpush1.bf16.msra.mxu0 %v2334
  %2354 = vmatprep.subr.bf16.mxu0 0
  %2355 = vmatpush1.bf16.msra.mxu0 %v2333
  %2356 = vmatprep.subr.bf16.mxu0 0
  %2357 = vmatpush1.bf16.msra.mxu0 %v2332
  %2358 = vmatprep.subr.bf16.mxu0 0
  %2359 = vmatpush1.bf16.msra.mxu0 %v2331
  %2360 = vmatprep.subr.bf16.mxu0 0
  %2361 = vmatpush1.bf16.msra.mxu0 %v2330
  %2362 = vmatprep.subr.bf16.mxu0 0
  %2363 = vmatpush2.bf16.msra.mxu0 0
  %2364 = vmatprep.subr.bf16.mxu0 0
  %2365 = vmatpush2.bf16.msra.mxu0 0
  %2366 = vmatprep.subr.bf16.mxu0 0
  %2367 = vmatpush2.bf16.msra.mxu0 0
  %2368 = vmatprep.subr.bf16.mxu0 0
  %2369 = vmatpush2.bf16.msra.mxu0 0
  %2370 = vmatprep.subr.bf16.mxu0 0
  %2371 = vmatpush2.bf16.msra.mxu0 0
  %2372 = vmatprep.subr.bf16.mxu0 0
  %2373 = vmatpush2.bf16.msra.mxu0 0
  %2374 = vmatprep.subr.bf16.mxu0 0
  %2375 = vmatpush2.bf16.msra.mxu0 0
  %2376 = vmatprep.subr.bf16.mxu0 0
  %2377 = vmatpush2.bf16.msra.mxu0 0
  %2378 = vmatprep.mubr.bf16.mxu0 0
  %2379 = vmatmul.mubr.bf16.gmra.mxu0 %v2280
  %v2380 = vpop.f32.mrf.mxu0
  %v2381 = vadd.f32 0.0, %v2380
  %v2382 = vpop.f32.mrf.mxu0
  %v2383 = vpop.f32.mrf.mxu0
  %v2384 = vpop.f32.mrf.mxu0
  %2385 = vdwg.mxu0
  %v2386 = vadd.f32 %v2278, %v2381
  %s2387 = scalar_lea.vmem %s0, 88
  %v2388 = vld [vmem:[%s2387] sm:$0xf]
  %s2389 = scalar_lea.vmem %s1, 1408
  %v2390 = vld [vmem:[%s2389] sm:$0xf]
  %v2391 = vld [vmem:[%s2389 + $0x4] sm:$0xf]
  %v2392 = vld [vmem:[%s2389 + $0x8] sm:$0xf]
  %v2393 = vld [vmem:[%s2389 + $0xc] sm:$0xf]
  %v2394 = vld [vmem:[%s2389 + $0x10] sm:$0xf]
  %v2395 = vld [vmem:[%s2389 + $0x14] sm:$0xf]
  %v2396 = vld [vmem:[%s2389 + $0x18] sm:$0xf]
  %v2397 = vld [vmem:[%s2389 + $0x1c] sm:$0xf]
  %v2398 = vld [vmem:[%s2389 + $0x20] sm:$0xf]
  %v2399 = vld [vmem:[%s2389 + $0x24] sm:$0xf]
  %v2400 = vld [vmem:[%s2389 + $0x28] sm:$0xf]
  %v2401 = vld [vmem:[%s2389 + $0x2c] sm:$0xf]
  %v2402 = vld [vmem:[%s2389 + $0x30] sm:$0xf]
  %v2403 = vld [vmem:[%s2389 + $0x34] sm:$0xf]
  %v2404 = vld [vmem:[%s2389 + $0x38] sm:$0xf]
  %v2405 = vld [vmem:[%s2389 + $0x3c] sm:$0xf]
  %v2422 = vunpack.c.l.b16 %v2390
  %v2423 = vunpack.c.l.b16 %v2391
  %v2424 = vunpack.c.l.b16 %v2392
  %v2425 = vunpack.c.l.b16 %v2393
  %v2426 = vunpack.c.l.b16 %v2394
  %v2427 = vunpack.c.l.b16 %v2395
  %v2428 = vunpack.c.l.b16 %v2396
  %v2429 = vunpack.c.l.b16 %v2397
  %v2430 = vunpack.c.l.b16 %v2398
  %v2431 = vunpack.c.l.b16 %v2399
  %v2432 = vunpack.c.l.b16 %v2400
  %v2433 = vunpack.c.l.b16 %v2401
  %v2434 = vunpack.c.l.b16 %v2402
  %v2435 = vunpack.c.l.b16 %v2403
  %v2436 = vunpack.c.l.b16 %v2404
  %v2437 = vunpack.c.l.b16 %v2405
  %v2438 = vpack.c.b16 %v2423, %v2422
  %v2439 = vpack.c.b16 %v2425, %v2424
  %v2440 = vpack.c.b16 %v2427, %v2426
  %v2441 = vpack.c.b16 %v2429, %v2428
  %v2442 = vpack.c.b16 %v2431, %v2430
  %v2443 = vpack.c.b16 %v2433, %v2432
  %v2444 = vpack.c.b16 %v2435, %v2434
  %v2445 = vpack.c.b16 %v2437, %v2436
  %2454 = vmatprep.subr.bf16.mxu0 0
  %2455 = vmatpush1.bf16.msra.mxu0 %v2445
  %2456 = vmatprep.subr.bf16.mxu0 0
  %2457 = vmatpush1.bf16.msra.mxu0 %v2444
  %2458 = vmatprep.subr.bf16.mxu0 0
  %2459 = vmatpush1.bf16.msra.mxu0 %v2443
  %2460 = vmatprep.subr.bf16.mxu0 0
  %2461 = vmatpush1.bf16.msra.mxu0 %v2442
  %2462 = vmatprep.subr.bf16.mxu0 0
  %2463 = vmatpush1.bf16.msra.mxu0 %v2441
  %2464 = vmatprep.subr.bf16.mxu0 0
  %2465 = vmatpush1.bf16.msra.mxu0 %v2440
  %2466 = vmatprep.subr.bf16.mxu0 0
  %2467 = vmatpush1.bf16.msra.mxu0 %v2439
  %2468 = vmatprep.subr.bf16.mxu0 0
  %2469 = vmatpush1.bf16.msra.mxu0 %v2438
  %2470 = vmatprep.subr.bf16.mxu0 0
  %2471 = vmatpush2.bf16.msra.mxu0 0
  %2472 = vmatprep.subr.bf16.mxu0 0
  %2473 = vmatpush2.bf16.msra.mxu0 0
  %2474 = vmatprep.subr.bf16.mxu0 0
  %2475 = vmatpush2.bf16.msra.mxu0 0
  %2476 = vmatprep.subr.bf16.mxu0 0
  %2477 = vmatpush2.bf16.msra.mxu0 0
  %2478 = vmatprep.subr.bf16.mxu0 0
  %2479 = vmatpush2.bf16.msra.mxu0 0
  %2480 = vmatprep.subr.bf16.mxu0 0
  %2481 = vmatpush2.bf16.msra.mxu0 0
  %2482 = vmatprep.subr.bf16.mxu0 0
  %2483 = vmatpush2.bf16.msra.mxu0 0
  %2484 = vmatprep.subr.bf16.mxu0 0
  %2485 = vmatpush2.bf16.msra.mxu0 0
  %2486 = vmatprep.mubr.bf16.mxu0 0
  %2487 = vmatmul.mubr.bf16.gmra.mxu0 %v2388
  %v2488 = vpop.f32.mrf.mxu0
  %v2489 = vadd.f32 0.0, %v2488
  %v2490 = vpop.f32.mrf.mxu0
  %v2491 = vpop.f32.mrf.mxu0
  %v2492 = vpop.f32.mrf.mxu0
  %2493 = vdwg.mxu0
  %v2494 = vadd.f32 %v2386, %v2489
  %s2495 = scalar_lea.vmem %s0, 92
  %v2496 = vld [vmem:[%s2495] sm:$0xf]
  %s2497 = scalar_lea.vmem %s1, 1472
  %v2498 = vld [vmem:[%s2497] sm:$0xf]
  %v2499 = vld [vmem:[%s2497 + $0x4] sm:$0xf]
  %v2500 = vld [vmem:[%s2497 + $0x8] sm:$0xf]
  %v2501 = vld [vmem:[%s2497 + $0xc] sm:$0xf]
  %v2502 = vld [vmem:[%s2497 + $0x10] sm:$0xf]
  %v2503 = vld [vmem:[%s2497 + $0x14] sm:$0xf]
  %v2504 = vld [vmem:[%s2497 + $0x18] sm:$0xf]
  %v2505 = vld [vmem:[%s2497 + $0x1c] sm:$0xf]
  %v2506 = vld [vmem:[%s2497 + $0x20] sm:$0xf]
  %v2507 = vld [vmem:[%s2497 + $0x24] sm:$0xf]
  %v2508 = vld [vmem:[%s2497 + $0x28] sm:$0xf]
  %v2509 = vld [vmem:[%s2497 + $0x2c] sm:$0xf]
  %v2510 = vld [vmem:[%s2497 + $0x30] sm:$0xf]
  %v2511 = vld [vmem:[%s2497 + $0x34] sm:$0xf]
  %v2512 = vld [vmem:[%s2497 + $0x38] sm:$0xf]
  %v2513 = vld [vmem:[%s2497 + $0x3c] sm:$0xf]
  %v2530 = vunpack.c.l.b16 %v2498
  %v2531 = vunpack.c.l.b16 %v2499
  %v2532 = vunpack.c.l.b16 %v2500
  %v2533 = vunpack.c.l.b16 %v2501
  %v2534 = vunpack.c.l.b16 %v2502
  %v2535 = vunpack.c.l.b16 %v2503
  %v2536 = vunpack.c.l.b16 %v2504
  %v2537 = vunpack.c.l.b16 %v2505
  %v2538 = vunpack.c.l.b16 %v2506
  %v2539 = vunpack.c.l.b16 %v2507
  %v2540 = vunpack.c.l.b16 %v2508
  %v2541 = vunpack.c.l.b16 %v2509
  %v2542 = vunpack.c.l.b16 %v2510
  %v2543 = vunpack.c.l.b16 %v2511
  %v2544 = vunpack.c.l.b16 %v2512
  %v2545 = vunpack.c.l.b16 %v2513
  %v2546 = vpack.c.b16 %v2531, %v2530
  %v2547 = vpack.c.b16 %v2533, %v2532
  %v2548 = vpack.c.b16 %v2535, %v2534
  %v2549 = vpack.c.b16 %v2537, %v2536
  %v2550 = vpack.c.b16 %v2539, %v2538
  %v2551 = vpack.c.b16 %v2541, %v2540
  %v2552 = vpack.c.b16 %v2543, %v2542
  %v2553 = vpack.c.b16 %v2545, %v2544
  %2562 = vmatprep.subr.bf16.mxu0 0
  %2563 = vmatpush1.bf16.msra.mxu0 %v2553
  %2564 = vmatprep.subr.bf16.mxu0 0
  %2565 = vmatpush1.bf16.msra.mxu0 %v2552
  %2566 = vmatprep.subr.bf16.mxu0 0
  %2567 = vmatpush1.bf16.msra.mxu0 %v2551
  %2568 = vmatprep.subr.bf16.mxu0 0
  %2569 = vmatpush1.bf16.msra.mxu0 %v2550
  %2570 = vmatprep.subr.bf16.mxu0 0
  %2571 = vmatpush1.bf16.msra.mxu0 %v2549
  %2572 = vmatprep.subr.bf16.mxu0 0
  %2573 = vmatpush1.bf16.msra.mxu0 %v2548
  %2574 = vmatprep.subr.bf16.mxu0 0
  %2575 = vmatpush1.bf16.msra.mxu0 %v2547
  %2576 = vmatprep.subr.bf16.mxu0 0
  %2577 = vmatpush1.bf16.msra.mxu0 %v2546
  %2578 = vmatprep.subr.bf16.mxu0 0
  %2579 = vmatpush2.bf16.msra.mxu0 0
  %2580 = vmatprep.subr.bf16.mxu0 0
  %2581 = vmatpush2.bf16.msra.mxu0 0
  %2582 = vmatprep.subr.bf16.mxu0 0
  %2583 = vmatpush2.bf16.msra.mxu0 0
  %2584 = vmatprep.subr.bf16.mxu0 0
  %2585 = vmatpush2.bf16.msra.mxu0 0
  %2586 = vmatprep.subr.bf16.mxu0 0
  %2587 = vmatpush2.bf16.msra.mxu0 0
  %2588 = vmatprep.subr.bf16.mxu0 0
  %2589 = vmatpush2.bf16.msra.mxu0 0
  %2590 = vmatprep.subr.bf16.mxu0 0
  %2591 = vmatpush2.bf16.msra.mxu0 0
  %2592 = vmatprep.subr.bf16.mxu0 0
  %2593 = vmatpush2.bf16.msra.mxu0 0
  %2594 = vmatprep.mubr.bf16.mxu0 0
  %2595 = vmatmul.mubr.bf16.gmra.mxu0 %v2496
  %v2596 = vpop.f32.mrf.mxu0
  %v2597 = vadd.f32 0.0, %v2596
  %v2598 = vpop.f32.mrf.mxu0
  %v2599 = vpop.f32.mrf.mxu0
  %v2600 = vpop.f32.mrf.mxu0
  %2601 = vdwg.mxu0
  %v2602 = vadd.f32 %v2494, %v2597
  %s2603 = scalar_lea.vmem %s0, 96
  %v2604 = vld [vmem:[%s2603] sm:$0xf]
  %s2605 = scalar_lea.vmem %s1, 1536
  %v2606 = vld [vmem:[%s2605] sm:$0xf]
  %v2607 = vld [vmem:[%s2605 + $0x4] sm:$0xf]
  %v2608 = vld [vmem:[%s2605 + $0x8] sm:$0xf]
  %v2609 = vld [vmem:[%s2605 + $0xc] sm:$0xf]
  %v2610 = vld [vmem:[%s2605 + $0x10] sm:$0xf]
  %v2611 = vld [vmem:[%s2605 + $0x14] sm:$0xf]
  %v2612 = vld [vmem:[%s2605 + $0x18] sm:$0xf]
  %v2613 = vld [vmem:[%s2605 + $0x1c] sm:$0xf]
  %v2614 = vld [vmem:[%s2605 + $0x20] sm:$0xf]
  %v2615 = vld [vmem:[%s2605 + $0x24] sm:$0xf]
  %v2616 = vld [vmem:[%s2605 + $0x28] sm:$0xf]
  %v2617 = vld [vmem:[%s2605 + $0x2c] sm:$0xf]
  %v2618 = vld [vmem:[%s2605 + $0x30] sm:$0xf]
  %v2619 = vld [vmem:[%s2605 + $0x34] sm:$0xf]
  %v2620 = vld [vmem:[%s2605 + $0x38] sm:$0xf]
  %v2621 = vld [vmem:[%s2605 + $0x3c] sm:$0xf]
  %v2638 = vunpack.c.l.b16 %v2606
  %v2639 = vunpack.c.l.b16 %v2607
  %v2640 = vunpack.c.l.b16 %v2608
  %v2641 = vunpack.c.l.b16 %v2609
  %v2642 = vunpack.c.l.b16 %v2610
  %v2643 = vunpack.c.l.b16 %v2611
  %v2644 = vunpack.c.l.b16 %v2612
  %v2645 = vunpack.c.l.b16 %v2613
  %v2646 = vunpack.c.l.b16 %v2614
  %v2647 = vunpack.c.l.b16 %v2615
  %v2648 = vunpack.c.l.b16 %v2616
  %v2649 = vunpack.c.l.b16 %v2617
  %v2650 = vunpack.c.l.b16 %v2618
  %v2651 = vunpack.c.l.b16 %v2619
  %v2652 = vunpack.c.l.b16 %v2620
  %v2653 = vunpack.c.l.b16 %v2621
  %v2654 = vpack.c.b16 %v2639, %v2638
  %v2655 = vpack.c.b16 %v2641, %v2640
  %v2656 = vpack.c.b16 %v2643, %v2642
  %v2657 = vpack.c.b16 %v2645, %v2644
  %v2658 = vpack.c.b16 %v2647, %v2646
  %v2659 = vpack.c.b16 %v2649, %v2648
  %v2660 = vpack.c.b16 %v2651, %v2650
  %v2661 = vpack.c.b16 %v2653, %v2652
  %2670 = vmatprep.subr.bf16.mxu0 0
  %2671 = vmatpush1.bf16.msra.mxu0 %v2661
  %2672 = vmatprep.subr.bf16.mxu0 0
  %2673 = vmatpush1.bf16.msra.mxu0 %v2660
  %2674 = vmatprep.subr.bf16.mxu0 0
  %2675 = vmatpush1.bf16.msra.mxu0 %v2659
  %2676 = vmatprep.subr.bf16.mxu0 0
  %2677 = vmatpush1.bf16.msra.mxu0 %v2658
  %2678 = vmatprep.subr.bf16.mxu0 0
  %2679 = vmatpush1.bf16.msra.mxu0 %v2657
  %2680 = vmatprep.subr.bf16.mxu0 0
  %2681 = vmatpush1.bf16.msra.mxu0 %v2656
  %2682 = vmatprep.subr.bf16.mxu0 0
  %2683 = vmatpush1.bf16.msra.mxu0 %v2655
  %2684 = vmatprep.subr.bf16.mxu0 0
  %2685 = vmatpush1.bf16.msra.mxu0 %v2654
  %2686 = vmatprep.subr.bf16.mxu0 0
  %2687 = vmatpush2.bf16.msra.mxu0 0
  %2688 = vmatprep.subr.bf16.mxu0 0
  %2689 = vmatpush2.bf16.msra.mxu0 0
  %2690 = vmatprep.subr.bf16.mxu0 0
  %2691 = vmatpush2.bf16.msra.mxu0 0
  %2692 = vmatprep.subr.bf16.mxu0 0
  %2693 = vmatpush2.bf16.msra.mxu0 0
  %2694 = vmatprep.subr.bf16.mxu0 0
  %2695 = vmatpush2.bf16.msra.mxu0 0
  %2696 = vmatprep.subr.bf16.mxu0 0
  %2697 = vmatpush2.bf16.msra.mxu0 0
  %2698 = vmatprep.subr.bf16.mxu0 0
  %2699 = vmatpush2.bf16.msra.mxu0 0
  %2700 = vmatprep.subr.bf16.mxu0 0
  %2701 = vmatpush2.bf16.msra.mxu0 0
  %2702 = vmatprep.mubr.bf16.mxu0 0
  %2703 = vmatmul.mubr.bf16.gmra.mxu0 %v2604
  %v2704 = vpop.f32.mrf.mxu0
  %v2705 = vadd.f32 0.0, %v2704
  %v2706 = vpop.f32.mrf.mxu0
  %v2707 = vpop.f32.mrf.mxu0
  %v2708 = vpop.f32.mrf.mxu0
  %2709 = vdwg.mxu0
  %v2710 = vadd.f32 %v2602, %v2705
  %s2711 = scalar_lea.vmem %s0, 100
  %v2712 = vld [vmem:[%s2711] sm:$0xf]
  %s2713 = scalar_lea.vmem %s1, 1600
  %v2714 = vld [vmem:[%s2713] sm:$0xf]
  %v2715 = vld [vmem:[%s2713 + $0x4] sm:$0xf]
  %v2716 = vld [vmem:[%s2713 + $0x8] sm:$0xf]
  %v2717 = vld [vmem:[%s2713 + $0xc] sm:$0xf]
  %v2718 = vld [vmem:[%s2713 + $0x10] sm:$0xf]
  %v2719 = vld [vmem:[%s2713 + $0x14] sm:$0xf]
  %v2720 = vld [vmem:[%s2713 + $0x18] sm:$0xf]
  %v2721 = vld [vmem:[%s2713 + $0x1c] sm:$0xf]
  %v2722 = vld [vmem:[%s2713 + $0x20] sm:$0xf]
  %v2723 = vld [vmem:[%s2713 + $0x24] sm:$0xf]
  %v2724 = vld [vmem:[%s2713 + $0x28] sm:$0xf]
  %v2725 = vld [vmem:[%s2713 + $0x2c] sm:$0xf]
  %v2726 = vld [vmem:[%s2713 + $0x30] sm:$0xf]
  %v2727 = vld [vmem:[%s2713 + $0x34] sm:$0xf]
  %v2728 = vld [vmem:[%s2713 + $0x38] sm:$0xf]
  %v2729 = vld [vmem:[%s2713 + $0x3c] sm:$0xf]
  %v2746 = vunpack.c.l.b16 %v2714
  %v2747 = vunpack.c.l.b16 %v2715
  %v2748 = vunpack.c.l.b16 %v2716
  %v2749 = vunpack.c.l.b16 %v2717
  %v2750 = vunpack.c.l.b16 %v2718
  %v2751 = vunpack.c.l.b16 %v2719
  %v2752 = vunpack.c.l.b16 %v2720
  %v2753 = vunpack.c.l.b16 %v2721
  %v2754 = vunpack.c.l.b16 %v2722
  %v2755 = vunpack.c.l.b16 %v2723
  %v2756 = vunpack.c.l.b16 %v2724
  %v2757 = vunpack.c.l.b16 %v2725
  %v2758 = vunpack.c.l.b16 %v2726
  %v2759 = vunpack.c.l.b16 %v2727
  %v2760 = vunpack.c.l.b16 %v2728
  %v2761 = vunpack.c.l.b16 %v2729
  %v2762 = vpack.c.b16 %v2747, %v2746
  %v2763 = vpack.c.b16 %v2749, %v2748
  %v2764 = vpack.c.b16 %v2751, %v2750
  %v2765 = vpack.c.b16 %v2753, %v2752
  %v2766 = vpack.c.b16 %v2755, %v2754
  %v2767 = vpack.c.b16 %v2757, %v2756
  %v2768 = vpack.c.b16 %v2759, %v2758
  %v2769 = vpack.c.b16 %v2761, %v2760
  %2778 = vmatprep.subr.bf16.mxu0 0
  %2779 = vmatpush1.bf16.msra.mxu0 %v2769
  %2780 = vmatprep.subr.bf16.mxu0 0
  %2781 = vmatpush1.bf16.msra.mxu0 %v2768
  %2782 = vmatprep.subr.bf16.mxu0 0
  %2783 = vmatpush1.bf16.msra.mxu0 %v2767
  %2784 = vmatprep.subr.bf16.mxu0 0
  %2785 = vmatpush1.bf16.msra.mxu0 %v2766
  %2786 = vmatprep.subr.bf16.mxu0 0
  %2787 = vmatpush1.bf16.msra.mxu0 %v2765
  %2788 = vmatprep.subr.bf16.mxu0 0
  %2789 = vmatpush1.bf16.msra.mxu0 %v2764
  %2790 = vmatprep.subr.bf16.mxu0 0
  %2791 = vmatpush1.bf16.msra.mxu0 %v2763
  %2792 = vmatprep.subr.bf16.mxu0 0
  %2793 = vmatpush1.bf16.msra.mxu0 %v2762
  %2794 = vmatprep.subr.bf16.mxu0 0
  %2795 = vmatpush2.bf16.msra.mxu0 0
  %2796 = vmatprep.subr.bf16.mxu0 0
  %2797 = vmatpush2.bf16.msra.mxu0 0
  %2798 = vmatprep.subr.bf16.mxu0 0
  %2799 = vmatpush2.bf16.msra.mxu0 0
  %2800 = vmatprep.subr.bf16.mxu0 0
  %2801 = vmatpush2.bf16.msra.mxu0 0
  %2802 = vmatprep.subr.bf16.mxu0 0
  %2803 = vmatpush2.bf16.msra.mxu0 0
  %2804 = vmatprep.subr.bf16.mxu0 0
  %2805 = vmatpush2.bf16.msra.mxu0 0
  %2806 = vmatprep.subr.bf16.mxu0 0
  %2807 = vmatpush2.bf16.msra.mxu0 0
  %2808 = vmatprep.subr.bf16.mxu0 0
  %2809 = vmatpush2.bf16.msra.mxu0 0
  %2810 = vmatprep.mubr.bf16.mxu0 0
  %2811 = vmatmul.mubr.bf16.gmra.mxu0 %v2712
  %v2812 = vpop.f32.mrf.mxu0
  %v2813 = vadd.f32 0.0, %v2812
  %v2814 = vpop.f32.mrf.mxu0
  %v2815 = vpop.f32.mrf.mxu0
  %v2816 = vpop.f32.mrf.mxu0
  %2817 = vdwg.mxu0
  %v2818 = vadd.f32 %v2710, %v2813
  %s2819 = scalar_lea.vmem %s0, 104
  %v2820 = vld [vmem:[%s2819] sm:$0xf]
  %s2821 = scalar_lea.vmem %s1, 1664
  %v2822 = vld [vmem:[%s2821] sm:$0xf]
  %v2823 = vld [vmem:[%s2821 + $0x4] sm:$0xf]
  %v2824 = vld [vmem:[%s2821 + $0x8] sm:$0xf]
  %v2825 = vld [vmem:[%s2821 + $0xc] sm:$0xf]
  %v2826 = vld [vmem:[%s2821 + $0x10] sm:$0xf]
  %v2827 = vld [vmem:[%s2821 + $0x14] sm:$0xf]
  %v2828 = vld [vmem:[%s2821 + $0x18] sm:$0xf]
  %v2829 = vld [vmem:[%s2821 + $0x1c] sm:$0xf]
  %v2830 = vld [vmem:[%s2821 + $0x20] sm:$0xf]
  %v2831 = vld [vmem:[%s2821 + $0x24] sm:$0xf]
  %v2832 = vld [vmem:[%s2821 + $0x28] sm:$0xf]
  %v2833 = vld [vmem:[%s2821 + $0x2c] sm:$0xf]
  %v2834 = vld [vmem:[%s2821 + $0x30] sm:$0xf]
  %v2835 = vld [vmem:[%s2821 + $0x34] sm:$0xf]
  %v2836 = vld [vmem:[%s2821 + $0x38] sm:$0xf]
  %v2837 = vld [vmem:[%s2821 + $0x3c] sm:$0xf]
  %v2854 = vunpack.c.l.b16 %v2822
  %v2855 = vunpack.c.l.b16 %v2823
  %v2856 = vunpack.c.l.b16 %v2824
  %v2857 = vunpack.c.l.b16 %v2825
  %v2858 = vunpack.c.l.b16 %v2826
  %v2859 = vunpack.c.l.b16 %v2827
  %v2860 = vunpack.c.l.b16 %v2828
  %v2861 = vunpack.c.l.b16 %v2829
  %v2862 = vunpack.c.l.b16 %v2830
  %v2863 = vunpack.c.l.b16 %v2831
  %v2864 = vunpack.c.l.b16 %v2832
  %v2865 = vunpack.c.l.b16 %v2833
  %v2866 = vunpack.c.l.b16 %v2834
  %v2867 = vunpack.c.l.b16 %v2835
  %v2868 = vunpack.c.l.b16 %v2836
  %v2869 = vunpack.c.l.b16 %v2837
  %v2870 = vpack.c.b16 %v2855, %v2854
  %v2871 = vpack.c.b16 %v2857, %v2856
  %v2872 = vpack.c.b16 %v2859, %v2858
  %v2873 = vpack.c.b16 %v2861, %v2860
  %v2874 = vpack.c.b16 %v2863, %v2862
  %v2875 = vpack.c.b16 %v2865, %v2864
  %v2876 = vpack.c.b16 %v2867, %v2866
  %v2877 = vpack.c.b16 %v2869, %v2868
  %2886 = vmatprep.subr.bf16.mxu0 0
  %2887 = vmatpush1.bf16.msra.mxu0 %v2877
  %2888 = vmatprep.subr.bf16.mxu0 0
  %2889 = vmatpush1.bf16.msra.mxu0 %v2876
  %2890 = vmatprep.subr.bf16.mxu0 0
  %2891 = vmatpush1.bf16.msra.mxu0 %v2875
  %2892 = vmatprep.subr.bf16.mxu0 0
  %2893 = vmatpush1.bf16.msra.mxu0 %v2874
  %2894 = vmatprep.subr.bf16.mxu0 0
  %2895 = vmatpush1.bf16.msra.mxu0 %v2873
  %2896 = vmatprep.subr.bf16.mxu0 0
  %2897 = vmatpush1.bf16.msra.mxu0 %v2872
  %2898 = vmatprep.subr.bf16.mxu0 0
  %2899 = vmatpush1.bf16.msra.mxu0 %v2871
  %2900 = vmatprep.subr.bf16.mxu0 0
  %2901 = vmatpush1.bf16.msra.mxu0 %v2870
  %2902 = vmatprep.subr.bf16.mxu0 0
  %2903 = vmatpush2.bf16.msra.mxu0 0
  %2904 = vmatprep.subr.bf16.mxu0 0
  %2905 = vmatpush2.bf16.msra.mxu0 0
  %2906 = vmatprep.subr.bf16.mxu0 0
  %2907 = vmatpush2.bf16.msra.mxu0 0
  %2908 = vmatprep.subr.bf16.mxu0 0
  %2909 = vmatpush2.bf16.msra.mxu0 0
  %2910 = vmatprep.subr.bf16.mxu0 0
  %2911 = vmatpush2.bf16.msra.mxu0 0
  %2912 = vmatprep.subr.bf16.mxu0 0
  %2913 = vmatpush2.bf16.msra.mxu0 0
  %2914 = vmatprep.subr.bf16.mxu0 0
  %2915 = vmatpush2.bf16.msra.mxu0 0
  %2916 = vmatprep.subr.bf16.mxu0 0
  %2917 = vmatpush2.bf16.msra.mxu0 0
  %2918 = vmatprep.mubr.bf16.mxu0 0
  %2919 = vmatmul.mubr.bf16.gmra.mxu0 %v2820
  %v2920 = vpop.f32.mrf.mxu0
  %v2921 = vadd.f32 0.0, %v2920
  %v2922 = vpop.f32.mrf.mxu0
  %v2923 = vpop.f32.mrf.mxu0
  %v2924 = vpop.f32.mrf.mxu0
  %2925 = vdwg.mxu0
  %v2926 = vadd.f32 %v2818, %v2921
  %s2927 = scalar_lea.vmem %s0, 108
  %v2928 = vld [vmem:[%s2927] sm:$0xf]
  %s2929 = scalar_lea.vmem %s1, 1728
  %v2930 = vld [vmem:[%s2929] sm:$0xf]
  %v2931 = vld [vmem:[%s2929 + $0x4] sm:$0xf]
  %v2932 = vld [vmem:[%s2929 + $0x8] sm:$0xf]
  %v2933 = vld [vmem:[%s2929 + $0xc] sm:$0xf]
  %v2934 = vld [vmem:[%s2929 + $0x10] sm:$0xf]
  %v2935 = vld [vmem:[%s2929 + $0x14] sm:$0xf]
  %v2936 = vld [vmem:[%s2929 + $0x18] sm:$0xf]
  %v2937 = vld [vmem:[%s2929 + $0x1c] sm:$0xf]
  %v2938 = vld [vmem:[%s2929 + $0x20] sm:$0xf]
  %v2939 = vld [vmem:[%s2929 + $0x24] sm:$0xf]
  %v2940 = vld [vmem:[%s2929 + $0x28] sm:$0xf]
  %v2941 = vld [vmem:[%s2929 + $0x2c] sm:$0xf]
  %v2942 = vld [vmem:[%s2929 + $0x30] sm:$0xf]
  %v2943 = vld [vmem:[%s2929 + $0x34] sm:$0xf]
  %v2944 = vld [vmem:[%s2929 + $0x38] sm:$0xf]
  %v2945 = vld [vmem:[%s2929 + $0x3c] sm:$0xf]
  %v2962 = vunpack.c.l.b16 %v2930
  %v2963 = vunpack.c.l.b16 %v2931
  %v2964 = vunpack.c.l.b16 %v2932
  %v2965 = vunpack.c.l.b16 %v2933
  %v2966 = vunpack.c.l.b16 %v2934
  %v2967 = vunpack.c.l.b16 %v2935
  %v2968 = vunpack.c.l.b16 %v2936
  %v2969 = vunpack.c.l.b16 %v2937
  %v2970 = vunpack.c.l.b16 %v2938
  %v2971 = vunpack.c.l.b16 %v2939
  %v2972 = vunpack.c.l.b16 %v2940
  %v2973 = vunpack.c.l.b16 %v2941
  %v2974 = vunpack.c.l.b16 %v2942
  %v2975 = vunpack.c.l.b16 %v2943
  %v2976 = vunpack.c.l.b16 %v2944
  %v2977 = vunpack.c.l.b16 %v2945
  %v2978 = vpack.c.b16 %v2963, %v2962
  %v2979 = vpack.c.b16 %v2965, %v2964
  %v2980 = vpack.c.b16 %v2967, %v2966
  %v2981 = vpack.c.b16 %v2969, %v2968
  %v2982 = vpack.c.b16 %v2971, %v2970
  %v2983 = vpack.c.b16 %v2973, %v2972
  %v2984 = vpack.c.b16 %v2975, %v2974
  %v2985 = vpack.c.b16 %v2977, %v2976
  %2994 = vmatprep.subr.bf16.mxu0 0
  %2995 = vmatpush1.bf16.msra.mxu0 %v2985
  %2996 = vmatprep.subr.bf16.mxu0 0
  %2997 = vmatpush1.bf16.msra.mxu0 %v2984
  %2998 = vmatprep.subr.bf16.mxu0 0
  %2999 = vmatpush1.bf16.msra.mxu0 %v2983
  %3000 = vmatprep.subr.bf16.mxu0 0
  %3001 = vmatpush1.bf16.msra.mxu0 %v2982
  %3002 = vmatprep.subr.bf16.mxu0 0
  %3003 = vmatpush1.bf16.msra.mxu0 %v2981
  %3004 = vmatprep.subr.bf16.mxu0 0
  %3005 = vmatpush1.bf16.msra.mxu0 %v2980
  %3006 = vmatprep.subr.bf16.mxu0 0
  %3007 = vmatpush1.bf16.msra.mxu0 %v2979
  %3008 = vmatprep.subr.bf16.mxu0 0
  %3009 = vmatpush1.bf16.msra.mxu0 %v2978
  %3010 = vmatprep.subr.bf16.mxu0 0
  %3011 = vmatpush2.bf16.msra.mxu0 0
  %3012 = vmatprep.subr.bf16.mxu0 0
  %3013 = vmatpush2.bf16.msra.mxu0 0
  %3014 = vmatprep.subr.bf16.mxu0 0
  %3015 = vmatpush2.bf16.msra.mxu0 0
  %3016 = vmatprep.subr.bf16.mxu0 0
  %3017 = vmatpush2.bf16.msra.mxu0 0
  %3018 = vmatprep.subr.bf16.mxu0 0
  %3019 = vmatpush2.bf16.msra.mxu0 0
  %3020 = vmatprep.subr.bf16.mxu0 0
  %3021 = vmatpush2.bf16.msra.mxu0 0
  %3022 = vmatprep.subr.bf16.mxu0 0
  %3023 = vmatpush2.bf16.msra.mxu0 0
  %3024 = vmatprep.subr.bf16.mxu0 0
  %3025 = vmatpush2.bf16.msra.mxu0 0
  %3026 = vmatprep.mubr.bf16.mxu0 0
  %3027 = vmatmul.mubr.bf16.gmra.mxu0 %v2928
  %v3028 = vpop.f32.mrf.mxu0
  %v3029 = vadd.f32 0.0, %v3028
  %v3030 = vpop.f32.mrf.mxu0
  %v3031 = vpop.f32.mrf.mxu0
  %v3032 = vpop.f32.mrf.mxu0
  %3033 = vdwg.mxu0
  %v3034 = vadd.f32 %v2926, %v3029
  %s3035 = scalar_lea.vmem %s0, 112
  %v3036 = vld [vmem:[%s3035] sm:$0xf]
  %s3037 = scalar_lea.vmem %s1, 1792
  %v3038 = vld [vmem:[%s3037] sm:$0xf]
  %v3039 = vld [vmem:[%s3037 + $0x4] sm:$0xf]
  %v3040 = vld [vmem:[%s3037 + $0x8] sm:$0xf]
  %v3041 = vld [vmem:[%s3037 + $0xc] sm:$0xf]
  %v3042 = vld [vmem:[%s3037 + $0x10] sm:$0xf]
  %v3043 = vld [vmem:[%s3037 + $0x14] sm:$0xf]
  %v3044 = vld [vmem:[%s3037 + $0x18] sm:$0xf]
  %v3045 = vld [vmem:[%s3037 + $0x1c] sm:$0xf]
  %v3046 = vld [vmem:[%s3037 + $0x20] sm:$0xf]
  %v3047 = vld [vmem:[%s3037 + $0x24] sm:$0xf]
  %v3048 = vld [vmem:[%s3037 + $0x28] sm:$0xf]
  %v3049 = vld [vmem:[%s3037 + $0x2c] sm:$0xf]
  %v3050 = vld [vmem:[%s3037 + $0x30] sm:$0xf]
  %v3051 = vld [vmem:[%s3037 + $0x34] sm:$0xf]
  %v3052 = vld [vmem:[%s3037 + $0x38] sm:$0xf]
  %v3053 = vld [vmem:[%s3037 + $0x3c] sm:$0xf]
  %v3070 = vunpack.c.l.b16 %v3038
  %v3071 = vunpack.c.l.b16 %v3039
  %v3072 = vunpack.c.l.b16 %v3040
  %v3073 = vunpack.c.l.b16 %v3041
  %v3074 = vunpack.c.l.b16 %v3042
  %v3075 = vunpack.c.l.b16 %v3043
  %v3076 = vunpack.c.l.b16 %v3044
  %v3077 = vunpack.c.l.b16 %v3045
  %v3078 = vunpack.c.l.b16 %v3046
  %v3079 = vunpack.c.l.b16 %v3047
  %v3080 = vunpack.c.l.b16 %v3048
  %v3081 = vunpack.c.l.b16 %v3049
  %v3082 = vunpack.c.l.b16 %v3050
  %v3083 = vunpack.c.l.b16 %v3051
  %v3084 = vunpack.c.l.b16 %v3052
  %v3085 = vunpack.c.l.b16 %v3053
  %v3086 = vpack.c.b16 %v3071, %v3070
  %v3087 = vpack.c.b16 %v3073, %v3072
  %v3088 = vpack.c.b16 %v3075, %v3074
  %v3089 = vpack.c.b16 %v3077, %v3076
  %v3090 = vpack.c.b16 %v3079, %v3078
  %v3091 = vpack.c.b16 %v3081, %v3080
  %v3092 = vpack.c.b16 %v3083, %v3082
  %v3093 = vpack.c.b16 %v3085, %v3084
  %3102 = vmatprep.subr.bf16.mxu0 0
  %3103 = vmatpush1.bf16.msra.mxu0 %v3093
  %3104 = vmatprep.subr.bf16.mxu0 0
  %3105 = vmatpush1.bf16.msra.mxu0 %v3092
  %3106 = vmatprep.subr.bf16.mxu0 0
  %3107 = vmatpush1.bf16.msra.mxu0 %v3091
  %3108 = vmatprep.subr.bf16.mxu0 0
  %3109 = vmatpush1.bf16.msra.mxu0 %v3090
  %3110 = vmatprep.subr.bf16.mxu0 0
  %3111 = vmatpush1.bf16.msra.mxu0 %v3089
  %3112 = vmatprep.subr.bf16.mxu0 0
  %3113 = vmatpush1.bf16.msra.mxu0 %v3088
  %3114 = vmatprep.subr.bf16.mxu0 0
  %3115 = vmatpush1.bf16.msra.mxu0 %v3087
  %3116 = vmatprep.subr.bf16.mxu0 0
  %3117 = vmatpush1.bf16.msra.mxu0 %v3086
  %3118 = vmatprep.subr.bf16.mxu0 0
  %3119 = vmatpush2.bf16.msra.mxu0 0
  %3120 = vmatprep.subr.bf16.mxu0 0
  %3121 = vmatpush2.bf16.msra.mxu0 0
  %3122 = vmatprep.subr.bf16.mxu0 0
  %3123 = vmatpush2.bf16.msra.mxu0 0
  %3124 = vmatprep.subr.bf16.mxu0 0
  %3125 = vmatpush2.bf16.msra.mxu0 0
  %3126 = vmatprep.subr.bf16.mxu0 0
  %3127 = vmatpush2.bf16.msra.mxu0 0
  %3128 = vmatprep.subr.bf16.mxu0 0
  %3129 = vmatpush2.bf16.msra.mxu0 0
  %3130 = vmatprep.subr.bf16.mxu0 0
  %3131 = vmatpush2.bf16.msra.mxu0 0
  %3132 = vmatprep.subr.bf16.mxu0 0
  %3133 = vmatpush2.bf16.msra.mxu0 0
  %3134 = vmatprep.mubr.bf16.mxu0 0
  %3135 = vmatmul.mubr.bf16.gmra.mxu0 %v3036
  %v3136 = vpop.f32.mrf.mxu0
  %v3137 = vadd.f32 0.0, %v3136
  %v3138 = vpop.f32.mrf.mxu0
  %v3139 = vpop.f32.mrf.mxu0
  %v3140 = vpop.f32.mrf.mxu0
  %3141 = vdwg.mxu0
  %v3142 = vadd.f32 %v3034, %v3137
  %s3143 = scalar_lea.vmem %s0, 116
  %v3144 = vld [vmem:[%s3143] sm:$0xf]
  %s3145 = scalar_lea.vmem %s1, 1856
  %v3146 = vld [vmem:[%s3145] sm:$0xf]
  %v3147 = vld [vmem:[%s3145 + $0x4] sm:$0xf]
  %v3148 = vld [vmem:[%s3145 + $0x8] sm:$0xf]
  %v3149 = vld [vmem:[%s3145 + $0xc] sm:$0xf]
  %v3150 = vld [vmem:[%s3145 + $0x10] sm:$0xf]
  %v3151 = vld [vmem:[%s3145 + $0x14] sm:$0xf]
  %v3152 = vld [vmem:[%s3145 + $0x18] sm:$0xf]
  %v3153 = vld [vmem:[%s3145 + $0x1c] sm:$0xf]
  %v3154 = vld [vmem:[%s3145 + $0x20] sm:$0xf]
  %v3155 = vld [vmem:[%s3145 + $0x24] sm:$0xf]
  %v3156 = vld [vmem:[%s3145 + $0x28] sm:$0xf]
  %v3157 = vld [vmem:[%s3145 + $0x2c] sm:$0xf]
  %v3158 = vld [vmem:[%s3145 + $0x30] sm:$0xf]
  %v3159 = vld [vmem:[%s3145 + $0x34] sm:$0xf]
  %v3160 = vld [vmem:[%s3145 + $0x38] sm:$0xf]
  %v3161 = vld [vmem:[%s3145 + $0x3c] sm:$0xf]
  %v3178 = vunpack.c.l.b16 %v3146
  %v3179 = vunpack.c.l.b16 %v3147
  %v3180 = vunpack.c.l.b16 %v3148
  %v3181 = vunpack.c.l.b16 %v3149
  %v3182 = vunpack.c.l.b16 %v3150
  %v3183 = vunpack.c.l.b16 %v3151
  %v3184 = vunpack.c.l.b16 %v3152
  %v3185 = vunpack.c.l.b16 %v3153
  %v3186 = vunpack.c.l.b16 %v3154
  %v3187 = vunpack.c.l.b16 %v3155
  %v3188 = vunpack.c.l.b16 %v3156
  %v3189 = vunpack.c.l.b16 %v3157
  %v3190 = vunpack.c.l.b16 %v3158
  %v3191 = vunpack.c.l.b16 %v3159
  %v3192 = vunpack.c.l.b16 %v3160
  %v3193 = vunpack.c.l.b16 %v3161
  %v3194 = vpack.c.b16 %v3179, %v3178
  %v3195 = vpack.c.b16 %v3181, %v3180
  %v3196 = vpack.c.b16 %v3183, %v3182
  %v3197 = vpack.c.b16 %v3185, %v3184
  %v3198 = vpack.c.b16 %v3187, %v3186
  %v3199 = vpack.c.b16 %v3189, %v3188
  %v3200 = vpack.c.b16 %v3191, %v3190
  %v3201 = vpack.c.b16 %v3193, %v3192
  %3210 = vmatprep.subr.bf16.mxu0 0
  %3211 = vmatpush1.bf16.msra.mxu0 %v3201
  %3212 = vmatprep.subr.bf16.mxu0 0
  %3213 = vmatpush1.bf16.msra.mxu0 %v3200
  %3214 = vmatprep.subr.bf16.mxu0 0
  %3215 = vmatpush1.bf16.msra.mxu0 %v3199
  %3216 = vmatprep.subr.bf16.mxu0 0
  %3217 = vmatpush1.bf16.msra.mxu0 %v3198
  %3218 = vmatprep.subr.bf16.mxu0 0
  %3219 = vmatpush1.bf16.msra.mxu0 %v3197
  %3220 = vmatprep.subr.bf16.mxu0 0
  %3221 = vmatpush1.bf16.msra.mxu0 %v3196
  %3222 = vmatprep.subr.bf16.mxu0 0
  %3223 = vmatpush1.bf16.msra.mxu0 %v3195
  %3224 = vmatprep.subr.bf16.mxu0 0
  %3225 = vmatpush1.bf16.msra.mxu0 %v3194
  %3226 = vmatprep.subr.bf16.mxu0 0
  %3227 = vmatpush2.bf16.msra.mxu0 0
  %3228 = vmatprep.subr.bf16.mxu0 0
  %3229 = vmatpush2.bf16.msra.mxu0 0
  %3230 = vmatprep.subr.bf16.mxu0 0
  %3231 = vmatpush2.bf16.msra.mxu0 0
  %3232 = vmatprep.subr.bf16.mxu0 0
  %3233 = vmatpush2.bf16.msra.mxu0 0
  %3234 = vmatprep.subr.bf16.mxu0 0
  %3235 = vmatpush2.bf16.msra.mxu0 0
  %3236 = vmatprep.subr.bf16.mxu0 0
  %3237 = vmatpush2.bf16.msra.mxu0 0
  %3238 = vmatprep.subr.bf16.mxu0 0
  %3239 = vmatpush2.bf16.msra.mxu0 0
  %3240 = vmatprep.subr.bf16.mxu0 0
  %3241 = vmatpush2.bf16.msra.mxu0 0
  %3242 = vmatprep.mubr.bf16.mxu0 0
  %3243 = vmatmul.mubr.bf16.gmra.mxu0 %v3144
  %v3244 = vpop.f32.mrf.mxu0
  %v3245 = vadd.f32 0.0, %v3244
  %v3246 = vpop.f32.mrf.mxu0
  %v3247 = vpop.f32.mrf.mxu0
  %v3248 = vpop.f32.mrf.mxu0
  %3249 = vdwg.mxu0
  %v3250 = vadd.f32 %v3142, %v3245
  %s3251 = scalar_lea.vmem %s0, 120
  %v3252 = vld [vmem:[%s3251] sm:$0xf]
  %s3253 = scalar_lea.vmem %s1, 1920
  %v3254 = vld [vmem:[%s3253] sm:$0xf]
  %v3255 = vld [vmem:[%s3253 + $0x4] sm:$0xf]
  %v3256 = vld [vmem:[%s3253 + $0x8] sm:$0xf]
  %v3257 = vld [vmem:[%s3253 + $0xc] sm:$0xf]
  %v3258 = vld [vmem:[%s3253 + $0x10] sm:$0xf]
  %v3259 = vld [vmem:[%s3253 + $0x14] sm:$0xf]
  %v3260 = vld [vmem:[%s3253 + $0x18] sm:$0xf]
  %v3261 = vld [vmem:[%s3253 + $0x1c] sm:$0xf]
  %v3262 = vld [vmem:[%s3253 + $0x20] sm:$0xf]
  %v3263 = vld [vmem:[%s3253 + $0x24] sm:$0xf]
  %v3264 = vld [vmem:[%s3253 + $0x28] sm:$0xf]
  %v3265 = vld [vmem:[%s3253 + $0x2c] sm:$0xf]
  %v3266 = vld [vmem:[%s3253 + $0x30] sm:$0xf]
  %v3267 = vld [vmem:[%s3253 + $0x34] sm:$0xf]
  %v3268 = vld [vmem:[%s3253 + $0x38] sm:$0xf]
  %v3269 = vld [vmem:[%s3253 + $0x3c] sm:$0xf]
  %v3286 = vunpack.c.l.b16 %v3254
  %v3287 = vunpack.c.l.b16 %v3255
  %v3288 = vunpack.c.l.b16 %v3256
  %v3289 = vunpack.c.l.b16 %v3257
  %v3290 = vunpack.c.l.b16 %v3258
  %v3291 = vunpack.c.l.b16 %v3259
  %v3292 = vunpack.c.l.b16 %v3260
  %v3293 = vunpack.c.l.b16 %v3261
  %v3294 = vunpack.c.l.b16 %v3262
  %v3295 = vunpack.c.l.b16 %v3263
  %v3296 = vunpack.c.l.b16 %v3264
  %v3297 = vunpack.c.l.b16 %v3265
  %v3298 = vunpack.c.l.b16 %v3266
  %v3299 = vunpack.c.l.b16 %v3267
  %v3300 = vunpack.c.l.b16 %v3268
  %v3301 = vunpack.c.l.b16 %v3269
  %v3302 = vpack.c.b16 %v3287, %v3286
  %v3303 = vpack.c.b16 %v3289, %v3288
  %v3304 = vpack.c.b16 %v3291, %v3290
  %v3305 = vpack.c.b16 %v3293, %v3292
  %v3306 = vpack.c.b16 %v3295, %v3294
  %v3307 = vpack.c.b16 %v3297, %v3296
  %v3308 = vpack.c.b16 %v3299, %v3298
  %v3309 = vpack.c.b16 %v3301, %v3300
  %3318 = vmatprep.subr.bf16.mxu0 0
  %3319 = vmatpush1.bf16.msra.mxu0 %v3309
  %3320 = vmatprep.subr.bf16.mxu0 0
  %3321 = vmatpush1.bf16.msra.mxu0 %v3308
  %3322 = vmatprep.subr.bf16.mxu0 0
  %3323 = vmatpush1.bf16.msra.mxu0 %v3307
  %3324 = vmatprep.subr.bf16.mxu0 0
  %3325 = vmatpush1.bf16.msra.mxu0 %v3306
  %3326 = vmatprep.subr.bf16.mxu0 0
  %3327 = vmatpush1.bf16.msra.mxu0 %v3305
  %3328 = vmatprep.subr.bf16.mxu0 0
  %3329 = vmatpush1.bf16.msra.mxu0 %v3304
  %3330 = vmatprep.subr.bf16.mxu0 0
  %3331 = vmatpush1.bf16.msra.mxu0 %v3303
  %3332 = vmatprep.subr.bf16.mxu0 0
  %3333 = vmatpush1.bf16.msra.mxu0 %v3302
  %3334 = vmatprep.subr.bf16.mxu0 0
  %3335 = vmatpush2.bf16.msra.mxu0 0
  %3336 = vmatprep.subr.bf16.mxu0 0
  %3337 = vmatpush2.bf16.msra.mxu0 0
  %3338 = vmatprep.subr.bf16.mxu0 0
  %3339 = vmatpush2.bf16.msra.mxu0 0
  %3340 = vmatprep.subr.bf16.mxu0 0
  %3341 = vmatpush2.bf16.msra.mxu0 0
  %3342 = vmatprep.subr.bf16.mxu0 0
  %3343 = vmatpush2.bf16.msra.mxu0 0
  %3344 = vmatprep.subr.bf16.mxu0 0
  %3345 = vmatpush2.bf16.msra.mxu0 0
  %3346 = vmatprep.subr.bf16.mxu0 0
  %3347 = vmatpush2.bf16.msra.mxu0 0
  %3348 = vmatprep.subr.bf16.mxu0 0
  %3349 = vmatpush2.bf16.msra.mxu0 0
  %3350 = vmatprep.mubr.bf16.mxu0 0
  %3351 = vmatmul.mubr.bf16.gmra.mxu0 %v3252
  %v3352 = vpop.f32.mrf.mxu0
  %v3353 = vadd.f32 0.0, %v3352
  %v3354 = vpop.f32.mrf.mxu0
  %v3355 = vpop.f32.mrf.mxu0
  %v3356 = vpop.f32.mrf.mxu0
  %3357 = vdwg.mxu0
  %v3358 = vadd.f32 %v3250, %v3353
  %s3359 = scalar_lea.vmem %s0, 124
  %v3360 = vld [vmem:[%s3359] sm:$0xf]
  %s3361 = scalar_lea.vmem %s1, 1984
  %v3362 = vld [vmem:[%s3361] sm:$0xf]
  %v3363 = vld [vmem:[%s3361 + $0x4] sm:$0xf]
  %v3364 = vld [vmem:[%s3361 + $0x8] sm:$0xf]
  %v3365 = vld [vmem:[%s3361 + $0xc] sm:$0xf]
  %v3366 = vld [vmem:[%s3361 + $0x10] sm:$0xf]
  %v3367 = vld [vmem:[%s3361 + $0x14] sm:$0xf]
  %v3368 = vld [vmem:[%s3361 + $0x18] sm:$0xf]
  %v3369 = vld [vmem:[%s3361 + $0x1c] sm:$0xf]
  %v3370 = vld [vmem:[%s3361 + $0x20] sm:$0xf]
  %v3371 = vld [vmem:[%s3361 + $0x24] sm:$0xf]
  %v3372 = vld [vmem:[%s3361 + $0x28] sm:$0xf]
  %v3373 = vld [vmem:[%s3361 + $0x2c] sm:$0xf]
  %v3374 = vld [vmem:[%s3361 + $0x30] sm:$0xf]
  %v3375 = vld [vmem:[%s3361 + $0x34] sm:$0xf]
  %v3376 = vld [vmem:[%s3361 + $0x38] sm:$0xf]
  %v3377 = vld [vmem:[%s3361 + $0x3c] sm:$0xf]
  %v3394 = vunpack.c.l.b16 %v3362
  %v3395 = vunpack.c.l.b16 %v3363
  %v3396 = vunpack.c.l.b16 %v3364
  %v3397 = vunpack.c.l.b16 %v3365
  %v3398 = vunpack.c.l.b16 %v3366
  %v3399 = vunpack.c.l.b16 %v3367
  %v3400 = vunpack.c.l.b16 %v3368
  %v3401 = vunpack.c.l.b16 %v3369
  %v3402 = vunpack.c.l.b16 %v3370
  %v3403 = vunpack.c.l.b16 %v3371
  %v3404 = vunpack.c.l.b16 %v3372
  %v3405 = vunpack.c.l.b16 %v3373
  %v3406 = vunpack.c.l.b16 %v3374
  %v3407 = vunpack.c.l.b16 %v3375
  %v3408 = vunpack.c.l.b16 %v3376
  %v3409 = vunpack.c.l.b16 %v3377
  %v3410 = vpack.c.b16 %v3395, %v3394
  %v3411 = vpack.c.b16 %v3397, %v3396
  %v3412 = vpack.c.b16 %v3399, %v3398
  %v3413 = vpack.c.b16 %v3401, %v3400
  %v3414 = vpack.c.b16 %v3403, %v3402
  %v3415 = vpack.c.b16 %v3405, %v3404
  %v3416 = vpack.c.b16 %v3407, %v3406
  %v3417 = vpack.c.b16 %v3409, %v3408
  %3426 = vmatprep.subr.bf16.mxu0 0
  %3427 = vmatpush1.bf16.msra.mxu0 %v3417
  %3428 = vmatprep.subr.bf16.mxu0 0
  %3429 = vmatpush1.bf16.msra.mxu0 %v3416
  %3430 = vmatprep.subr.bf16.mxu0 0
  %3431 = vmatpush1.bf16.msra.mxu0 %v3415
  %3432 = vmatprep.subr.bf16.mxu0 0
  %3433 = vmatpush1.bf16.msra.mxu0 %v3414
  %3434 = vmatprep.subr.bf16.mxu0 0
  %3435 = vmatpush1.bf16.msra.mxu0 %v3413
  %3436 = vmatprep.subr.bf16.mxu0 0
  %3437 = vmatpush1.bf16.msra.mxu0 %v3412
  %3438 = vmatprep.subr.bf16.mxu0 0
  %3439 = vmatpush1.bf16.msra.mxu0 %v3411
  %3440 = vmatprep.subr.bf16.mxu0 0
  %3441 = vmatpush1.bf16.msra.mxu0 %v3410
  %3442 = vmatprep.subr.bf16.mxu0 0
  %3443 = vmatpush2.bf16.msra.mxu0 0
  %3444 = vmatprep.subr.bf16.mxu0 0
  %3445 = vmatpush2.bf16.msra.mxu0 0
  %3446 = vmatprep.subr.bf16.mxu0 0
  %3447 = vmatpush2.bf16.msra.mxu0 0
  %3448 = vmatprep.subr.bf16.mxu0 0
  %3449 = vmatpush2.bf16.msra.mxu0 0
  %3450 = vmatprep.subr.bf16.mxu0 0
  %3451 = vmatpush2.bf16.msra.mxu0 0
  %3452 = vmatprep.subr.bf16.mxu0 0
  %3453 = vmatpush2.bf16.msra.mxu0 0
  %3454 = vmatprep.subr.bf16.mxu0 0
  %3455 = vmatpush2.bf16.msra.mxu0 0
  %3456 = vmatprep.subr.bf16.mxu0 0
  %3457 = vmatpush2.bf16.msra.mxu0 0
  %3458 = vmatprep.mubr.bf16.mxu0 0
  %3459 = vmatmul.mubr.bf16.gmra.mxu0 %v3360
  %v3460 = vpop.f32.mrf.mxu0
  %v3461 = vadd.f32 0.0, %v3460
  %v3462 = vpop.f32.mrf.mxu0
  %v3463 = vpop.f32.mrf.mxu0
  %v3464 = vpop.f32.mrf.mxu0
  %3465 = vdwg.mxu0
  %v3466 = vadd.f32 %v3358, %v3461
  %s3467 = scalar_lea.vmem %s0, 128
  %v3468 = vld [vmem:[%s3467] sm:$0xf]
  %s3469 = scalar_lea.vmem %s1, 2048
  %v3470 = vld [vmem:[%s3469] sm:$0xf]
  %v3471 = vld [vmem:[%s3469 + $0x4] sm:$0xf]
  %v3472 = vld [vmem:[%s3469 + $0x8] sm:$0xf]
  %v3473 = vld [vmem:[%s3469 + $0xc] sm:$0xf]
  %v3474 = vld [vmem:[%s3469 + $0x10] sm:$0xf]
  %v3475 = vld [vmem:[%s3469 + $0x14] sm:$0xf]
  %v3476 = vld [vmem:[%s3469 + $0x18] sm:$0xf]
  %v3477 = vld [vmem:[%s3469 + $0x1c] sm:$0xf]
  %v3478 = vld [vmem:[%s3469 + $0x20] sm:$0xf]
  %v3479 = vld [vmem:[%s3469 + $0x24] sm:$0xf]
  %v3480 = vld [vmem:[%s3469 + $0x28] sm:$0xf]
  %v3481 = vld [vmem:[%s3469 + $0x2c] sm:$0xf]
  %v3482 = vld [vmem:[%s3469 + $0x30] sm:$0xf]
  %v3483 = vld [vmem:[%s3469 + $0x34] sm:$0xf]
  %v3484 = vld [vmem:[%s3469 + $0x38] sm:$0xf]
  %v3485 = vld [vmem:[%s3469 + $0x3c] sm:$0xf]
  %v3502 = vunpack.c.l.b16 %v3470
  %v3503 = vunpack.c.l.b16 %v3471
  %v3504 = vunpack.c.l.b16 %v3472
  %v3505 = vunpack.c.l.b16 %v3473
  %v3506 = vunpack.c.l.b16 %v3474
  %v3507 = vunpack.c.l.b16 %v3475
  %v3508 = vunpack.c.l.b16 %v3476
  %v3509 = vunpack.c.l.b16 %v3477
  %v3510 = vunpack.c.l.b16 %v3478
  %v3511 = vunpack.c.l.b16 %v3479
  %v3512 = vunpack.c.l.b16 %v3480
  %v3513 = vunpack.c.l.b16 %v3481
  %v3514 = vunpack.c.l.b16 %v3482
  %v3515 = vunpack.c.l.b16 %v3483
  %v3516 = vunpack.c.l.b16 %v3484
  %v3517 = vunpack.c.l.b16 %v3485
  %v3518 = vpack.c.b16 %v3503, %v3502
  %v3519 = vpack.c.b16 %v3505, %v3504
  %v3520 = vpack.c.b16 %v3507, %v3506
  %v3521 = vpack.c.b16 %v3509, %v3508
  %v3522 = vpack.c.b16 %v3511, %v3510
  %v3523 = vpack.c.b16 %v3513, %v3512
  %v3524 = vpack.c.b16 %v3515, %v3514
  %v3525 = vpack.c.b16 %v3517, %v3516
  %3534 = vmatprep.subr.bf16.mxu0 0
  %3535 = vmatpush1.bf16.msra.mxu0 %v3525
  %3536 = vmatprep.subr.bf16.mxu0 0
  %3537 = vmatpush1.bf16.msra.mxu0 %v3524
  %3538 = vmatprep.subr.bf16.mxu0 0
  %3539 = vmatpush1.bf16.msra.mxu0 %v3523
  %3540 = vmatprep.subr.bf16.mxu0 0
  %3541 = vmatpush1.bf16.msra.mxu0 %v3522
  %3542 = vmatprep.subr.bf16.mxu0 0
  %3543 = vmatpush1.bf16.msra.mxu0 %v3521
  %3544 = vmatprep.subr.bf16.mxu0 0
  %3545 = vmatpush1.bf16.msra.mxu0 %v3520
  %3546 = vmatprep.subr.bf16.mxu0 0
  %3547 = vmatpush1.bf16.msra.mxu0 %v3519
  %3548 = vmatprep.subr.bf16.mxu0 0
  %3549 = vmatpush1.bf16.msra.mxu0 %v3518
  %3550 = vmatprep.subr.bf16.mxu0 0
  %3551 = vmatpush2.bf16.msra.mxu0 0
  %3552 = vmatprep.subr.bf16.mxu0 0
  %3553 = vmatpush2.bf16.msra.mxu0 0
  %3554 = vmatprep.subr.bf16.mxu0 0
  %3555 = vmatpush2.bf16.msra.mxu0 0
  %3556 = vmatprep.subr.bf16.mxu0 0
  %3557 = vmatpush2.bf16.msra.mxu0 0
  %3558 = vmatprep.subr.bf16.mxu0 0
  %3559 = vmatpush2.bf16.msra.mxu0 0
  %3560 = vmatprep.subr.bf16.mxu0 0
  %3561 = vmatpush2.bf16.msra.mxu0 0
  %3562 = vmatprep.subr.bf16.mxu0 0
  %3563 = vmatpush2.bf16.msra.mxu0 0
  %3564 = vmatprep.subr.bf16.mxu0 0
  %3565 = vmatpush2.bf16.msra.mxu0 0
  %3566 = vmatprep.mubr.bf16.mxu0 0
  %3567 = vmatmul.mubr.bf16.gmra.mxu0 %v3468
  %v3568 = vpop.f32.mrf.mxu0
  %v3569 = vadd.f32 0.0, %v3568
  %v3570 = vpop.f32.mrf.mxu0
  %v3571 = vpop.f32.mrf.mxu0
  %v3572 = vpop.f32.mrf.mxu0
  %3573 = vdwg.mxu0
  %v3574 = vadd.f32 %v3466, %v3569
  %s3575 = scalar_lea.vmem %s0, 132
  %v3576 = vld [vmem:[%s3575] sm:$0xf]
  %s3577 = scalar_lea.vmem %s1, 2112
  %v3578 = vld [vmem:[%s3577] sm:$0xf]
  %v3579 = vld [vmem:[%s3577 + $0x4] sm:$0xf]
  %v3580 = vld [vmem:[%s3577 + $0x8] sm:$0xf]
  %v3581 = vld [vmem:[%s3577 + $0xc] sm:$0xf]
  %v3582 = vld [vmem:[%s3577 + $0x10] sm:$0xf]
  %v3583 = vld [vmem:[%s3577 + $0x14] sm:$0xf]
  %v3584 = vld [vmem:[%s3577 + $0x18] sm:$0xf]
  %v3585 = vld [vmem:[%s3577 + $0x1c] sm:$0xf]
  %v3586 = vld [vmem:[%s3577 + $0x20] sm:$0xf]
  %v3587 = vld [vmem:[%s3577 + $0x24] sm:$0xf]
  %v3588 = vld [vmem:[%s3577 + $0x28] sm:$0xf]
  %v3589 = vld [vmem:[%s3577 + $0x2c] sm:$0xf]
  %v3590 = vld [vmem:[%s3577 + $0x30] sm:$0xf]
  %v3591 = vld [vmem:[%s3577 + $0x34] sm:$0xf]
  %v3592 = vld [vmem:[%s3577 + $0x38] sm:$0xf]
  %v3593 = vld [vmem:[%s3577 + $0x3c] sm:$0xf]
  %v3610 = vunpack.c.l.b16 %v3578
  %v3611 = vunpack.c.l.b16 %v3579
  %v3612 = vunpack.c.l.b16 %v3580
  %v3613 = vunpack.c.l.b16 %v3581
  %v3614 = vunpack.c.l.b16 %v3582
  %v3615 = vunpack.c.l.b16 %v3583
  %v3616 = vunpack.c.l.b16 %v3584
  %v3617 = vunpack.c.l.b16 %v3585
  %v3618 = vunpack.c.l.b16 %v3586
  %v3619 = vunpack.c.l.b16 %v3587
  %v3620 = vunpack.c.l.b16 %v3588
  %v3621 = vunpack.c.l.b16 %v3589
  %v3622 = vunpack.c.l.b16 %v3590
  %v3623 = vunpack.c.l.b16 %v3591
  %v3624 = vunpack.c.l.b16 %v3592
  %v3625 = vunpack.c.l.b16 %v3593
  %v3626 = vpack.c.b16 %v3611, %v3610
  %v3627 = vpack.c.b16 %v3613, %v3612
  %v3628 = vpack.c.b16 %v3615, %v3614
  %v3629 = vpack.c.b16 %v3617, %v3616
  %v3630 = vpack.c.b16 %v3619, %v3618
  %v3631 = vpack.c.b16 %v3621, %v3620
  %v3632 = vpack.c.b16 %v3623, %v3622
  %v3633 = vpack.c.b16 %v3625, %v3624
  %3642 = vmatprep.subr.bf16.mxu0 0
  %3643 = vmatpush1.bf16.msra.mxu0 %v3633
  %3644 = vmatprep.subr.bf16.mxu0 0
  %3645 = vmatpush1.bf16.msra.mxu0 %v3632
  %3646 = vmatprep.subr.bf16.mxu0 0
  %3647 = vmatpush1.bf16.msra.mxu0 %v3631
  %3648 = vmatprep.subr.bf16.mxu0 0
  %3649 = vmatpush1.bf16.msra.mxu0 %v3630
  %3650 = vmatprep.subr.bf16.mxu0 0
  %3651 = vmatpush1.bf16.msra.mxu0 %v3629
  %3652 = vmatprep.subr.bf16.mxu0 0
  %3653 = vmatpush1.bf16.msra.mxu0 %v3628
  %3654 = vmatprep.subr.bf16.mxu0 0
  %3655 = vmatpush1.bf16.msra.mxu0 %v3627
  %3656 = vmatprep.subr.bf16.mxu0 0
  %3657 = vmatpush1.bf16.msra.mxu0 %v3626
  %3658 = vmatprep.subr.bf16.mxu0 0
  %3659 = vmatpush2.bf16.msra.mxu0 0
  %3660 = vmatprep.subr.bf16.mxu0 0
  %3661 = vmatpush2.bf16.msra.mxu0 0
  %3662 = vmatprep.subr.bf16.mxu0 0
  %3663 = vmatpush2.bf16.msra.mxu0 0
  %3664 = vmatprep.subr.bf16.mxu0 0
  %3665 = vmatpush2.bf16.msra.mxu0 0
  %3666 = vmatprep.subr.bf16.mxu0 0
  %3667 = vmatpush2.bf16.msra.mxu0 0
  %3668 = vmatprep.subr.bf16.mxu0 0
  %3669 = vmatpush2.bf16.msra.mxu0 0
  %3670 = vmatprep.subr.bf16.mxu0 0
  %3671 = vmatpush2.bf16.msra.mxu0 0
  %3672 = vmatprep.subr.bf16.mxu0 0
  %3673 = vmatpush2.bf16.msra.mxu0 0
  %3674 = vmatprep.mubr.bf16.mxu0 0
  %3675 = vmatmul.mubr.bf16.gmra.mxu0 %v3576
  %v3676 = vpop.f32.mrf.mxu0
  %v3677 = vadd.f32 0.0, %v3676
  %v3678 = vpop.f32.mrf.mxu0
  %v3679 = vpop.f32.mrf.mxu0
  %v3680 = vpop.f32.mrf.mxu0
  %3681 = vdwg.mxu0
  %v3682 = vadd.f32 %v3574, %v3677
  %s3683 = scalar_lea.vmem %s0, 136
  %v3684 = vld [vmem:[%s3683] sm:$0xf]
  %s3685 = scalar_lea.vmem %s1, 2176
  %v3686 = vld [vmem:[%s3685] sm:$0xf]
  %v3687 = vld [vmem:[%s3685 + $0x4] sm:$0xf]
  %v3688 = vld [vmem:[%s3685 + $0x8] sm:$0xf]
  %v3689 = vld [vmem:[%s3685 + $0xc] sm:$0xf]
  %v3690 = vld [vmem:[%s3685 + $0x10] sm:$0xf]
  %v3691 = vld [vmem:[%s3685 + $0x14] sm:$0xf]
  %v3692 = vld [vmem:[%s3685 + $0x18] sm:$0xf]
  %v3693 = vld [vmem:[%s3685 + $0x1c] sm:$0xf]
  %v3694 = vld [vmem:[%s3685 + $0x20] sm:$0xf]
  %v3695 = vld [vmem:[%s3685 + $0x24] sm:$0xf]
  %v3696 = vld [vmem:[%s3685 + $0x28] sm:$0xf]
  %v3697 = vld [vmem:[%s3685 + $0x2c] sm:$0xf]
  %v3698 = vld [vmem:[%s3685 + $0x30] sm:$0xf]
  %v3699 = vld [vmem:[%s3685 + $0x34] sm:$0xf]
  %v3700 = vld [vmem:[%s3685 + $0x38] sm:$0xf]
  %v3701 = vld [vmem:[%s3685 + $0x3c] sm:$0xf]
  %v3718 = vunpack.c.l.b16 %v3686
  %v3719 = vunpack.c.l.b16 %v3687
  %v3720 = vunpack.c.l.b16 %v3688
  %v3721 = vunpack.c.l.b16 %v3689
  %v3722 = vunpack.c.l.b16 %v3690
  %v3723 = vunpack.c.l.b16 %v3691
  %v3724 = vunpack.c.l.b16 %v3692
  %v3725 = vunpack.c.l.b16 %v3693
  %v3726 = vunpack.c.l.b16 %v3694
  %v3727 = vunpack.c.l.b16 %v3695
  %v3728 = vunpack.c.l.b16 %v3696
  %v3729 = vunpack.c.l.b16 %v3697
  %v3730 = vunpack.c.l.b16 %v3698
  %v3731 = vunpack.c.l.b16 %v3699
  %v3732 = vunpack.c.l.b16 %v3700
  %v3733 = vunpack.c.l.b16 %v3701
  %v3734 = vpack.c.b16 %v3719, %v3718
  %v3735 = vpack.c.b16 %v3721, %v3720
  %v3736 = vpack.c.b16 %v3723, %v3722
  %v3737 = vpack.c.b16 %v3725, %v3724
  %v3738 = vpack.c.b16 %v3727, %v3726
  %v3739 = vpack.c.b16 %v3729, %v3728
  %v3740 = vpack.c.b16 %v3731, %v3730
  %v3741 = vpack.c.b16 %v3733, %v3732
  %3750 = vmatprep.subr.bf16.mxu0 0
  %3751 = vmatpush1.bf16.msra.mxu0 %v3741
  %3752 = vmatprep.subr.bf16.mxu0 0
  %3753 = vmatpush1.bf16.msra.mxu0 %v3740
  %3754 = vmatprep.subr.bf16.mxu0 0
  %3755 = vmatpush1.bf16.msra.mxu0 %v3739
  %3756 = vmatprep.subr.bf16.mxu0 0
  %3757 = vmatpush1.bf16.msra.mxu0 %v3738
  %3758 = vmatprep.subr.bf16.mxu0 0
  %3759 = vmatpush1.bf16.msra.mxu0 %v3737
  %3760 = vmatprep.subr.bf16.mxu0 0
  %3761 = vmatpush1.bf16.msra.mxu0 %v3736
  %3762 = vmatprep.subr.bf16.mxu0 0
  %3763 = vmatpush1.bf16.msra.mxu0 %v3735
  %3764 = vmatprep.subr.bf16.mxu0 0
  %3765 = vmatpush1.bf16.msra.mxu0 %v3734
  %3766 = vmatprep.subr.bf16.mxu0 0
  %3767 = vmatpush2.bf16.msra.mxu0 0
  %3768 = vmatprep.subr.bf16.mxu0 0
  %3769 = vmatpush2.bf16.msra.mxu0 0
  %3770 = vmatprep.subr.bf16.mxu0 0
  %3771 = vmatpush2.bf16.msra.mxu0 0
  %3772 = vmatprep.subr.bf16.mxu0 0
  %3773 = vmatpush2.bf16.msra.mxu0 0
  %3774 = vmatprep.subr.bf16.mxu0 0
  %3775 = vmatpush2.bf16.msra.mxu0 0
  %3776 = vmatprep.subr.bf16.mxu0 0
  %3777 = vmatpush2.bf16.msra.mxu0 0
  %3778 = vmatprep.subr.bf16.mxu0 0
  %3779 = vmatpush2.bf16.msra.mxu0 0
  %3780 = vmatprep.subr.bf16.mxu0 0
  %3781 = vmatpush2.bf16.msra.mxu0 0
  %3782 = vmatprep.mubr.bf16.mxu0 0
  %3783 = vmatmul.mubr.bf16.gmra.mxu0 %v3684
  %v3784 = vpop.f32.mrf.mxu0
  %v3785 = vadd.f32 0.0, %v3784
  %v3786 = vpop.f32.mrf.mxu0
  %v3787 = vpop.f32.mrf.mxu0
  %v3788 = vpop.f32.mrf.mxu0
  %3789 = vdwg.mxu0
  %v3790 = vadd.f32 %v3682, %v3785
  %s3791 = scalar_lea.vmem %s0, 140
  %v3792 = vld [vmem:[%s3791] sm:$0xf]
  %s3793 = scalar_lea.vmem %s1, 2240
  %v3794 = vld [vmem:[%s3793] sm:$0xf]
  %v3795 = vld [vmem:[%s3793 + $0x4] sm:$0xf]
  %v3796 = vld [vmem:[%s3793 + $0x8] sm:$0xf]
  %v3797 = vld [vmem:[%s3793 + $0xc] sm:$0xf]
  %v3798 = vld [vmem:[%s3793 + $0x10] sm:$0xf]
  %v3799 = vld [vmem:[%s3793 + $0x14] sm:$0xf]
  %v3800 = vld [vmem:[%s3793 + $0x18] sm:$0xf]
  %v3801 = vld [vmem:[%s3793 + $0x1c] sm:$0xf]
  %v3802 = vld [vmem:[%s3793 + $0x20] sm:$0xf]
  %v3803 = vld [vmem:[%s3793 + $0x24] sm:$0xf]
  %v3804 = vld [vmem:[%s3793 + $0x28] sm:$0xf]
  %v3805 = vld [vmem:[%s3793 + $0x2c] sm:$0xf]
  %v3806 = vld [vmem:[%s3793 + $0x30] sm:$0xf]
  %v3807 = vld [vmem:[%s3793 + $0x34] sm:$0xf]
  %v3808 = vld [vmem:[%s3793 + $0x38] sm:$0xf]
  %v3809 = vld [vmem:[%s3793 + $0x3c] sm:$0xf]
  %v3826 = vunpack.c.l.b16 %v3794
  %v3827 = vunpack.c.l.b16 %v3795
  %v3828 = vunpack.c.l.b16 %v3796
  %v3829 = vunpack.c.l.b16 %v3797
  %v3830 = vunpack.c.l.b16 %v3798
  %v3831 = vunpack.c.l.b16 %v3799
  %v3832 = vunpack.c.l.b16 %v3800
  %v3833 = vunpack.c.l.b16 %v3801
  %v3834 = vunpack.c.l.b16 %v3802
  %v3835 = vunpack.c.l.b16 %v3803
  %v3836 = vunpack.c.l.b16 %v3804
  %v3837 = vunpack.c.l.b16 %v3805
  %v3838 = vunpack.c.l.b16 %v3806
  %v3839 = vunpack.c.l.b16 %v3807
  %v3840 = vunpack.c.l.b16 %v3808
  %v3841 = vunpack.c.l.b16 %v3809
  %v3842 = vpack.c.b16 %v3827, %v3826
  %v3843 = vpack.c.b16 %v3829, %v3828
  %v3844 = vpack.c.b16 %v3831, %v3830
  %v3845 = vpack.c.b16 %v3833, %v3832
  %v3846 = vpack.c.b16 %v3835, %v3834
  %v3847 = vpack.c.b16 %v3837, %v3836
  %v3848 = vpack.c.b16 %v3839, %v3838
  %v3849 = vpack.c.b16 %v3841, %v3840
  %3858 = vmatprep.subr.bf16.mxu0 0
  %3859 = vmatpush1.bf16.msra.mxu0 %v3849
  %3860 = vmatprep.subr.bf16.mxu0 0
  %3861 = vmatpush1.bf16.msra.mxu0 %v3848
  %3862 = vmatprep.subr.bf16.mxu0 0
  %3863 = vmatpush1.bf16.msra.mxu0 %v3847
  %3864 = vmatprep.subr.bf16.mxu0 0
  %3865 = vmatpush1.bf16.msra.mxu0 %v3846
  %3866 = vmatprep.subr.bf16.mxu0 0
  %3867 = vmatpush1.bf16.msra.mxu0 %v3845
  %3868 = vmatprep.subr.bf16.mxu0 0
  %3869 = vmatpush1.bf16.msra.mxu0 %v3844
  %3870 = vmatprep.subr.bf16.mxu0 0
  %3871 = vmatpush1.bf16.msra.mxu0 %v3843
  %3872 = vmatprep.subr.bf16.mxu0 0
  %3873 = vmatpush1.bf16.msra.mxu0 %v3842
  %3874 = vmatprep.subr.bf16.mxu0 0
  %3875 = vmatpush2.bf16.msra.mxu0 0
  %3876 = vmatprep.subr.bf16.mxu0 0
  %3877 = vmatpush2.bf16.msra.mxu0 0
  %3878 = vmatprep.subr.bf16.mxu0 0
  %3879 = vmatpush2.bf16.msra.mxu0 0
  %3880 = vmatprep.subr.bf16.mxu0 0
  %3881 = vmatpush2.bf16.msra.mxu0 0
  %3882 = vmatprep.subr.bf16.mxu0 0
  %3883 = vmatpush2.bf16.msra.mxu0 0
  %3884 = vmatprep.subr.bf16.mxu0 0
  %3885 = vmatpush2.bf16.msra.mxu0 0
  %3886 = vmatprep.subr.bf16.mxu0 0
  %3887 = vmatpush2.bf16.msra.mxu0 0
  %3888 = vmatprep.subr.bf16.mxu0 0
  %3889 = vmatpush2.bf16.msra.mxu0 0
  %3890 = vmatprep.mubr.bf16.mxu0 0
  %3891 = vmatmul.mubr.bf16.gmra.mxu0 %v3792
  %v3892 = vpop.f32.mrf.mxu0
  %v3893 = vadd.f32 0.0, %v3892
  %v3894 = vpop.f32.mrf.mxu0
  %v3895 = vpop.f32.mrf.mxu0
  %v3896 = vpop.f32.mrf.mxu0
  %3897 = vdwg.mxu0
  %v3898 = vadd.f32 %v3790, %v3893
  %v3899 = vld [vmem:[%s2] sm:$0x1]
  %v3901 = vlaneseq
  %v3902 = vshrl.u32 %v3901, 7
  %v3903 = vsub.s32 0, %v3902
  %v3904 = vrot.slane %v3899, %v3903
  %v3906 = vadd.f32 %v3898, %v3904
  %v3907 = vmax.f32 %v3906, 0.0
  %v3908 = vpack.c.bf16 %v3907, %v3907
  %3909 = vst [vmem:[%s3] sm:$0xf] %v3908
  // Predicated region
  $region14: #{model_forward.9} parent=0 // pred_check
    _
  $region15: #{model_forward.9} parent=0 // pred_check_branch
    %3911 = sbr.rel (0) target = $region17
  $region16: #{model_forward.9} parent=0 // pred_region
    _
  $region17: #{model_forward.9} parent=0 // pred_fallthru
    _
  // Predicated region
  $region18: #{model_forward.9} parent=0 // pred_check
    _
  $region19: #{model_forward.9} parent=0 // pred_check_branch
    %3913 = sbr.rel (0) target = $region21
  $region20: #{model_forward.9} parent=0 // pred_region
    _
  $region21: #{model_forward.9} parent=0 // pred_fallthru
    _

</llo_original>
